<compile_context>
chip_gen: v6e
topology: v6e:2x2x1
jax: 0.10.0
libtpu: 0.0.40
codegen_flags: <defaults>
</compile_context>

<pallas_src>
import math
from functools import partial

import jax
import jax.numpy as jnp
from jax.experimental import pallas as pl
from jax.experimental.pallas import tpu as pltpu


# --------------------------- fused decoder-stack kernel ----------------------

def _dec_stack_kernel(src_len_ref,               # SMEM [B] int32 (scalar prefetch)
                      x_ref,                     # [B, T, D] f32 (tgt emb + PE)
                      mem_ref,                   # [B, S, D] f32 (encoder memory)
                      wqkv_s_ref, bqkv_s_ref,    # [L,D,3D] mxu_dt / [L,1,3D] f32
                      wo_s_ref, bo_s_ref,        # [L,D,D]  mxu_dt / [L,1,D]  f32
                      wq_c_ref, bq_c_ref,        # [L,D,D]  mxu_dt / [L,1,D]  f32
                      wkv_c_ref, bkv_c_ref,      # [L,D,2D] mxu_dt / [L,1,2D] f32
                      wo_c_ref, bo_c_ref,        # [L,D,D]  mxu_dt / [L,1,D]  f32
                      w1_ref, b1_ref,            # [L,D,F]  mxu_dt / [L,1,F]  f32
                      w2_ref, b2_ref,            # [L,F,D]  mxu_dt / [L,1,D]  f32
                      lng_ref, lnb_ref,          # [L,3,1,D] f32
                      ow_ref, ob_ref,            # [D,Vp]   mxu_dt / [1,Vp]   f32
                      o_ref,                     # [B, T, Vp] f32 (lane-dense)
                      *, nlayers, nhead, eps):
    B, T, D = x_ref.shape
    S = mem_ref.shape[1]
    dh = D // nhead
    cdt = wqkv_s_ref.dtype            # MXU operand dtype (bf16)

    x = x_ref[...].reshape(B * T, D)                     # [BT, D] f32
    mem_c = mem_ref[...].reshape(B * S, D).astype(cdt)   # [BS, D] cast once

    # ---- attention biases generated on the VPU (nothing streamed from HBM) ----
    t_row = jax.lax.broadcasted_iota(jnp.int32, (T, T), 0)
    t_col = jax.lax.broadcasted_iota(jnp.int32, (T, T), 1)
    causal_bias = jnp.where(t_col > t_row,
                            jnp.float32(-1e9), jnp.float32(0.0))        # [T, T]
    s_col = jax.lax.broadcasted_iota(jnp.int32, (T, S), 1)
    pad_bias = [jnp.where(s_col >= src_len_ref[b],
                          jnp.float32(-1e9), jnp.float32(0.0))           # [T, S]
                for b in range(B)]

    def layer_norm(h, g, bb):                            # f32 math
        mu = jnp.mean(h, axis=-1, keepdims=True)
        var = jnp.mean(jnp.square(h - mu), axis=-1, keepdims=True)
        return (h - mu) * jax.lax.rsqrt(var + eps) * g + bb

    def heads_attend(q, k, v, bias):
        # q:[Tq,D], k/v:[Tk,D] f32; 1/sqrt(dh) already folded into q.
        outs = []
        for h in range(nhead):
            sl = slice(h * dh, (h + 1) * dh)
            q_h = q[:, sl].astype(cdt)
            k_h = k[:, sl].astype(cdt)
            v_h = v[:, sl].astype(cdt)
            # scores: contract over dh without an explicit transpose
            s = jax.lax.dot_general(q_h, k_h, (((1,), (1,)), ((), ())),
                                    preferred_element_type=jnp.float32) + bias
            m = jnp.max(s, axis=-1, keepdims=True)
            p = jnp.exp(s - m)
            p = p * pl.reciprocal(jnp.sum(p, axis=-1, keepdims=True), approx=True)
            outs.append(jnp.dot(p.astype(cdt), v_h,
                                preferred_element_type=jnp.float32))      # [Tq, dh]
        return jnp.concatenate(outs, axis=-1)            # [Tq, D] (head-major)

    h_act = x                                            # [BT, D] f32
    for l in range(nlayers):
        # --- self attention (causal) + post-LN residual ---
        xc = h_act.astype(cdt)
        qkv = jnp.dot(xc, wqkv_s_ref[l],
                      preferred_element_type=jnp.float32) + bqkv_s_ref[l]  # [BT,3D]
        sa_rows = []
        for b in range(B):
            rows = slice(b * T, (b + 1) * T)
            sa_rows.append(heads_attend(qkv[rows, 0:D],
                                        qkv[rows, D:2 * D],
                                        qkv[rows, 2 * D:3 * D],
                                        causal_bias))
        sa_cat = jnp.concatenate(sa_rows, axis=0)                          # [BT,D]
        sa = jnp.dot(sa_cat.astype(cdt), wo_s_ref[l],
                     preferred_element_type=jnp.float32) + bo_s_ref[l]
        h_act = layer_norm(h_act + sa, lng_ref[l, 0], lnb_ref[l, 0])

        # --- cross attention over memory (key-padding mask) ---
        xc = h_act.astype(cdt)
        q_all = jnp.dot(xc, wq_c_ref[l],
                        preferred_element_type=jnp.float32) + bq_c_ref[l]    # [BT,D]
        kv_all = jnp.dot(mem_c, wkv_c_ref[l],
                         preferred_element_type=jnp.float32) + bkv_c_ref[l]  # [BS,2D]
        ca_rows = []
        for b in range(B):
            qrows = slice(b * T, (b + 1) * T)
            krows = slice(b * S, (b + 1) * S)
            ca_rows.append(heads_attend(q_all[qrows, :],
                                        kv_all[krows, 0:D],
                                        kv_all[krows, D:2 * D],
                                        pad_bias[b]))
        ca_cat = jnp.concatenate(ca_rows, axis=0)
        ca = jnp.dot(ca_cat.astype(cdt), wo_c_ref[l],
                     preferred_element_type=jnp.float32) + bo_c_ref[l]
        h_act = layer_norm(h_act + ca, lng_ref[l, 1], lnb_ref[l, 1])

        # --- feed forward ---
        xc = h_act.astype(cdt)
        hidden = jnp.dot(xc, w1_ref[l],
                         preferred_element_type=jnp.float32) + b1_ref[l]
        hidden = jnp.maximum(hidden, 0.0)                 # ReLU in f32
        ff = jnp.dot(hidden.astype(cdt), w2_ref[l],
                     preferred_element_type=jnp.float32) + b2_ref[l]
        h_act = layer_norm(h_act + ff, lng_ref[l, 2], lnb_ref[l, 2])

    # --- fused, lane-dense output head (Vp is a multiple of 128) ---
    logits = jnp.dot(h_act.astype(cdt), ow_ref[...],
                     preferred_element_type=jnp.float32) + ob_ref[...]     # [BT,Vp]
    o_ref[...] = logits.reshape(B, T, o_ref.shape[-1])


def decoder_stack(params, tgt_emb, memory, src_len, cfg):
    """tgt_emb:[B,T,D], memory:[B,S,D], src_len:[B] int32 -> logits [B,T,V]."""
    B, T, D = tgt_emb.shape
    S = memory.shape[1]
    Vp = params['out_b'].shape[-1]                # lane-padded vocab (128)
    V = cfg['n_out_tokens'] + 1
    L, H = cfg['nlayers'], cfg['nhead']

    weights = [params['wqkv_s'], params['bqkv_s'], params['wo_s'], params['bo_s'],
               params['wq_c'], params['bq_c'], params['wkv_c'], params['bkv_c'],
               params['wo_c'], params['bo_c'],
               params['w1'], params['b1'], params['w2'], params['b2'],
               params['ln_g'], params['ln_b'], params['out_w'], params['out_b']]

    def full_spec(a):
        nd = a.ndim
        # weights: full-array block, constant index -> stays resident in VMEM
        return pl.BlockSpec(a.shape, lambda i, sl, nd=nd: (0,) * nd)

    grid_spec = pltpu.PrefetchScalarGridSpec(
        num_scalar_prefetch=1,                    # src_len -> SMEM
        grid=(1,),                                # whole batch in one step
        in_specs=[pl.BlockSpec((B, T, D), lambda i, sl: (0, 0, 0)),
                  pl.BlockSpec((B, S, D), lambda i, sl: (0, 0, 0))]
                 + [full_spec(w) for w in weights],
        out_specs=pl.BlockSpec((B, T, Vp), lambda i, sl: (0, 0, 0)),
    )

    kernel = partial(_dec_stack_kernel, nlayers=L, nhead=H, eps=1e-5)
    logits_p = pl.pallas_call(
        kernel,
        grid_spec=grid_spec,
        out_shape=jax.ShapeDtypeStruct((B, T, Vp), jnp.float32),
        compiler_params=pltpu.CompilerParams(
            dimension_semantics=("arbitrary",),
            vmem_limit_bytes=64 * 1024 * 1024),
    )(src_len, tgt_emb, memory, *weights)
    return logits_p[..., :V]                      # drop lane padding


# --------------------------- model glue (plain JAX) --------------------------

def run_teacher_forcing(params, src, src_len, target, target_len, cfg):
    B, S, D = src.shape
    T = target.shape[1]
    sos = cfg['n_out_tokens']                     # decoder_sos_eos
    # shift-right with SOS: F.pad(target[:, :-1], (1,0), value=sos)
    tgt_in = jnp.concatenate(
        [jnp.full((B, 1), sos, target.dtype), target[:, :-1]], axis=1)
    tgt_emb = jnp.take(params['out_emb'], tgt_in, axis=0) \
        + params['pe'][None, :T, :]               # scale_mode='none'
    # is_null_encoder=True: encoder is identity on the pre-extracted features
    logits = decoder_stack(params, tgt_emb, src, src_len.astype(jnp.int32), cfg)
    return {'data': logits, 'length': target_len}


def run_greedy(params, src, src_len, max_len, cfg):
    """Greedy decoding with a fixed-length token buffer (static shapes, one
    compile).  Full-prefix re-decode each step is mathematically equivalent to
    the reference's cached one_step_forward."""
    # TODO(synk): incremental KV cache with input_output_aliases for O(T) work.
    B, S, D = src.shape
    sos = cfg['n_out_tokens']
    V = cfg['n_out_tokens'] + 1
    T = max_len
    src_len = src_len.astype(jnp.int32)
    pe = params['pe'][None, :T, :]

    tokens0 = jnp.full((B, T), sos, jnp.int32)    # pos 0 = SOS; later slots inert
    outputs0 = jnp.zeros((B, T, V), jnp.float32)
    running0 = jnp.ones((B,), bool)
    out_len0 = jnp.zeros((B,), jnp.int32)

    def step(i, carry):
        tokens, outputs, running, out_len = carry
        emb = jnp.take(params['out_emb'], tokens, axis=0) + pe
        logits = decoder_stack(params, emb, src, src_len, cfg)        # [B,T,V]
        step_logits = jax.lax.dynamic_slice_in_dim(logits, i, 1, axis=1)[:, 0]
        outputs = jax.lax.dynamic_update_slice_in_dim(
            outputs, step_logits[:, None, :], i, axis=1)
        out_token = jnp.argmax(step_logits, -1).astype(jnp.int32)
        running = running & (out_token != sos)
        out_len = jnp.where(running, i + 1, out_len)
        tokens = jnp.where(jnp.arange(T)[None, :] == (i + 1),
                           out_token[:, None], tokens)
        return tokens, outputs, running, out_len

    _, outputs, _, out_len = jax.lax.fori_loop(
        0, T, step, (tokens0, outputs0, running0, out_len0))
    return {'data': outputs, 'length': out_len}


def forward(params, src, src_len, target, target_len, teacher_forcing, cfg,
            max_len=None):
    if teacher_forcing:
        return run_teacher_forcing(params, src, src_len, target, target_len, cfg)
    ml = max_len if max_len is not None else int(jnp.max(target_len))
    return run_greedy(params, src, src_len, ml, cfg)


# --------------------------- parameter init ---------------------------------

def sinusoidal_pe(max_len, d_model):
    pos = jnp.arange(max_len, dtype=jnp.float32)[:, None]
    div = jnp.exp(jnp.arange(0, d_model, 2, dtype=jnp.float32) *
                  (-math.log(10000.0) / d_model))
    pe = jnp.zeros((max_len, d_model), jnp.float32)
    pe = pe.at[:, 0::2].set(jnp.sin(pos * div))
    pe = pe.at[:, 1::2].set(jnp.cos(pos * div))
    return pe


def xavier_uniform(key, shape):
    limit = math.sqrt(6.0 / (shape[0] + shape[1]))
    return jax.random.uniform(key, shape, jnp.float32, -limit, limit)


def init_params(key, cfg, mxu_dtype=jnp.bfloat16):
    """Weights are pre-packed on the host into fused, lane-dense layouts:
    Q/K/V concatenated head-major along the output (lane) dim, attention score
    scale folded into Q, and the output-head vocab padded to 128 lanes."""
    D = cfg['state_size']
    F = int(cfg['ff_multiplier'] * D)
    H = cfg['nhead']
    L = cfg['nlayers']
    dh = D // H
    V = cfg['n_out_tokens'] + 1
    Vp = max(128, ((V + 127) // 128) * 128)       # lane-dense padded vocab
    scale = 1.0 / math.sqrt(dh)

    keys = jax.random.split(key, 2 + 10 * L)

    wqkv_s, wo_s = [], []
    wq_c, wkv_c, wo_c = [], [], []
    w1s, w2s = [], []
    for li in range(L):
        ks = keys[2 + 10 * li: 2 + 10 * (li + 1)]
        sq, sk, sv, so = (xavier_uniform(k_, (D, D)) for k_ in ks[0:4])
        cq, ck, cv, co = (xavier_uniform(k_, (D, D)) for k_ in ks[4:8])
        # fold 1/sqrt(dh) into Q; concat Q|K|V head-major along the lane dim
        wqkv_s.append(jnp.concatenate([sq * scale, sk, sv], axis=1))   # [D, 3D]
        wo_s.append(so)                                                # [D, D]
        wq_c.append(cq * scale)                                        # [D, D]
        wkv_c.append(jnp.concatenate([ck, cv], axis=1))                # [D, 2D]
        wo_c.append(co)
        w1s.append(xavier_uniform(ks[8], (D, F)))
        w2s.append(xavier_uniform(ks[9], (F, D)))

    out_w = jnp.zeros((D, Vp), jnp.float32).at[:, :V].set(
        xavier_uniform(keys[1], (D, V)))                               # output_map

    return {
        'out_emb': jax.random.normal(keys[0], (V, D), jnp.float32),    # N(0,1)
        'pe': sinusoidal_pe(cfg['max_len'], D),
        # MXU operands stored in bf16 (accumulation stays f32 in-kernel)
        'wqkv_s': jnp.stack(wqkv_s).astype(mxu_dtype),                 # [L,D,3D]
        'bqkv_s': jnp.zeros((L, 1, 3 * D), jnp.float32),
        'wo_s': jnp.stack(wo_s).astype(mxu_dtype),                     # [L,D,D]
        'bo_s': jnp.zeros((L, 1, D), jnp.float32),
        'wq_c': jnp.stack(wq_c).astype(mxu_dtype),                     # [L,D,D]
        'bq_c': jnp.zeros((L, 1, D), jnp.float32),
        'wkv_c': jnp.stack(wkv_c).astype(mxu_dtype),                   # [L,D,2D]
        'bkv_c': jnp.zeros((L, 1, 2 * D), jnp.float32),
        'wo_c': jnp.stack(wo_c).astype(mxu_dtype),                     # [L,D,D]
        'bo_c': jnp.zeros((L, 1, D), jnp.float32),
        'w1': jnp.stack(w1s).astype(mxu_dtype),                        # [L,D,F]
        'b1': jnp.zeros((L, 1, F), jnp.float32),
        'w2': jnp.stack(w2s).astype(mxu_dtype),                        # [L,F,D]
        'b2': jnp.zeros((L, 1, D), jnp.float32),
        'ln_g': jnp.ones((L, 3, 1, D), jnp.float32),
        'ln_b': jnp.zeros((L, 3, 1, D), jnp.float32),
        'out_w': out_w.astype(mxu_dtype),                              # [D,Vp]
        'out_b': jnp.zeros((1, Vp), jnp.float32),
    }


# --------------------------- main --------------------------------------------

if __name__ == "__main__":
    cfg = {
        'n_input_tokens': 10,
        'n_out_tokens': 10,      # decoder_sos_eos = 10, vocab = 11
        'state_size': 32,
        'ff_multiplier': 1,
        'nhead': 4,
        'nlayers': 2,
        'max_len': 64,
    }
    key = jax.random.PRNGKey(0)
    kp, ks, kt = jax.random.split(key, 3)
    params = init_params(kp, cfg)

    B, S, T, D = 2, 8, 8, cfg['state_size']
    src = jax.random.normal(ks, (B, S, D), jnp.float32)     # pre-trained features
    src_len = jnp.array([8, 5], jnp.int32)
    target = jax.random.randint(kt, (B, T), 0, cfg['n_out_tokens'], jnp.int32)
    target_len = jnp.array([8, 6], jnp.int32)

    res = forward(params, src, src_len, target, target_len,
                  teacher_forcing=True, cfg=cfg)
    jax.block_until_ready(res['data'])
    assert res['data'].shape == (B, T, cfg['n_out_tokens'] + 1)
    assert bool(jnp.all(jnp.isfinite(res['data'])))
    print("KERNEL_OK")
</pallas_src>

<mosaic_0001>
module attributes {stable_mosaic.version = 11 : i64} {
  func.func @_dec_stack_kernel(%arg0: i32, %arg1: memref<2xi32, #tpu.memory_space<smem>>, %arg2: memref<2x8x32xf32, #tpu.memory_space<vmem>>, %arg3: memref<2x8x32xf32, #tpu.memory_space<vmem>>, %arg4: memref<2x32x96xbf16, #tpu.memory_space<vmem>>, %arg5: memref<2x1x96xf32, #tpu.memory_space<vmem>>, %arg6: memref<2x32x32xbf16, #tpu.memory_space<vmem>>, %arg7: memref<2x1x32xf32, #tpu.memory_space<vmem>>, %arg8: memref<2x32x32xbf16, #tpu.memory_space<vmem>>, %arg9: memref<2x1x32xf32, #tpu.memory_space<vmem>>, %arg10: memref<2x32x64xbf16, #tpu.memory_space<vmem>>, %arg11: memref<2x1x64xf32, #tpu.memory_space<vmem>>, %arg12: memref<2x32x32xbf16, #tpu.memory_space<vmem>>, %arg13: memref<2x1x32xf32, #tpu.memory_space<vmem>>, %arg14: memref<2x32x32xbf16, #tpu.memory_space<vmem>>, %arg15: memref<2x1x32xf32, #tpu.memory_space<vmem>>, %arg16: memref<2x32x32xbf16, #tpu.memory_space<vmem>>, %arg17: memref<2x1x32xf32, #tpu.memory_space<vmem>>, %arg18: memref<2x3x1x32xf32, #tpu.memory_space<vmem>>, %arg19: memref<2x3x1x32xf32, #tpu.memory_space<vmem>>, %arg20: memref<32x128xbf16, #tpu.memory_space<vmem>>, %arg21: memref<1x128xf32, #tpu.memory_space<vmem>>, %arg22: memref<2x8x128xf32, #tpu.memory_space<vmem>>) attributes {dimension_semantics = [#tpu.dimension_semantics<arbitrary>], iteration_bounds = array<i64: 1>, scalar_prefetch = 1 : i64, scratch_operands = 0 : i64, tpu.core_type = #tpu.core_type<tc>, window_params = [{pipeline_mode = #tpu.pipeline_mode<synchronous>, transform_indices = @transform_0, window_bounds = array<i64: 2, 8, 32>}, {pipeline_mode = #tpu.pipeline_mode<synchronous>, transform_indices = @transform_1, window_bounds = array<i64: 2, 8, 32>}, {pipeline_mode = #tpu.pipeline_mode<synchronous>, transform_indices = @transform_2, window_bounds = array<i64: 2, 32, 96>}, {pipeline_mode = #tpu.pipeline_mode<synchronous>, transform_indices = @transform_3, window_bounds = array<i64: 2, 1, 96>}, {pipeline_mode = #tpu.pipeline_mode<synchronous>, transform_indices = @transform_4, window_bounds = array<i64: 2, 32, 32>}, {pipeline_mode = #tpu.pipeline_mode<synchronous>, transform_indices = @transform_5, window_bounds = array<i64: 2, 1, 32>}, {pipeline_mode = #tpu.pipeline_mode<synchronous>, transform_indices = @transform_6, window_bounds = array<i64: 2, 32, 32>}, {pipeline_mode = #tpu.pipeline_mode<synchronous>, transform_indices = @transform_7, window_bounds = array<i64: 2, 1, 32>}, {pipeline_mode = #tpu.pipeline_mode<synchronous>, transform_indices = @transform_8, window_bounds = array<i64: 2, 32, 64>}, {pipeline_mode = #tpu.pipeline_mode<synchronous>, transform_indices = @transform_9, window_bounds = array<i64: 2, 1, 64>}, {pipeline_mode = #tpu.pipeline_mode<synchronous>, transform_indices = @transform_10, window_bounds = array<i64: 2, 32, 32>}, {pipeline_mode = #tpu.pipeline_mode<synchronous>, transform_indices = @transform_11, window_bounds = array<i64: 2, 1, 32>}, {pipeline_mode = #tpu.pipeline_mode<synchronous>, transform_indices = @transform_12, window_bounds = array<i64: 2, 32, 32>}, {pipeline_mode = #tpu.pipeline_mode<synchronous>, transform_indices = @transform_13, window_bounds = array<i64: 2, 1, 32>}, {pipeline_mode = #tpu.pipeline_mode<synchronous>, transform_indices = @transform_14, window_bounds = array<i64: 2, 32, 32>}, {pipeline_mode = #tpu.pipeline_mode<synchronous>, transform_indices = @transform_15, window_bounds = array<i64: 2, 1, 32>}, {pipeline_mode = #tpu.pipeline_mode<synchronous>, transform_indices = @transform_16, window_bounds = array<i64: 2, 3, 1, 32>}, {pipeline_mode = #tpu.pipeline_mode<synchronous>, transform_indices = @transform_17, window_bounds = array<i64: 2, 3, 1, 32>}, {pipeline_mode = #tpu.pipeline_mode<synchronous>, transform_indices = @transform_18, window_bounds = array<i64: 32, 128>}, {pipeline_mode = #tpu.pipeline_mode<synchronous>, transform_indices = @transform_19, window_bounds = array<i64: 1, 128>}, {pipeline_mode = #tpu.pipeline_mode<synchronous>, transform_indices = @transform_20, window_bounds = array<i64: 2, 8, 128>}]} {
    %c0 = arith.constant 0 : index
    %c0_0 = arith.constant 0 : index
    %c0_1 = arith.constant 0 : index
    %0 = vector.load %arg2[%c0, %c0_0, %c0_1] : memref<2x8x32xf32, #tpu.memory_space<vmem>>, vector<2x8x32xf32>
    %1 = vector.shape_cast %0 : vector<2x8x32xf32> to vector<16x32xf32>
    %c0_2 = arith.constant 0 : index
    %c0_3 = arith.constant 0 : index
    %c0_4 = arith.constant 0 : index
    %2 = vector.load %arg3[%c0_2, %c0_3, %c0_4] : memref<2x8x32xf32, #tpu.memory_space<vmem>>, vector<2x8x32xf32>
    %3 = vector.shape_cast %2 : vector<2x8x32xf32> to vector<16x32xf32>
    %4 = arith.truncf %3 : vector<16x32xf32> to vector<16x32xbf16>
    %5 = tpu.iota {dimensions = array<i32: 0>} : vector<8x8xi32>
    %6 = tpu.iota {dimensions = array<i32: 1>} : vector<8x8xi32>
    %7 = arith.cmpi sgt, %6, %5 : vector<8x8xi32>
    %cst = arith.constant -1.000000e+09 : f32
    %cst_5 = arith.constant 0.000000e+00 : f32
    %8 = vector.broadcast %cst : f32 to vector<8x8xf32>
    %9 = vector.broadcast %cst_5 : f32 to vector<8x8xf32>
    %10 = arith.select %7, %8, %9 : vector<8x8xi1>, vector<8x8xf32>
    %11 = tpu.iota {dimensions = array<i32: 1>} : vector<8x8xi32>
    %c0_6 = arith.constant 0 : index
    %12 = memref.load %arg1[%c0_6] : memref<2xi32, #tpu.memory_space<smem>>
    %13 = vector.broadcast %12 : i32 to vector<8x8xi32>
    %14 = arith.cmpi sge, %11, %13 : vector<8x8xi32>
    %cst_7 = arith.constant -1.000000e+09 : f32
    %cst_8 = arith.constant 0.000000e+00 : f32
    %15 = vector.broadcast %cst_7 : f32 to vector<8x8xf32>
    %16 = vector.broadcast %cst_8 : f32 to vector<8x8xf32>
    %17 = arith.select %14, %15, %16 : vector<8x8xi1>, vector<8x8xf32>
    %c1 = arith.constant 1 : index
    %18 = memref.load %arg1[%c1] : memref<2xi32, #tpu.memory_space<smem>>
    %19 = vector.broadcast %18 : i32 to vector<8x8xi32>
    %20 = arith.cmpi sge, %11, %19 : vector<8x8xi32>
    %cst_9 = arith.constant -1.000000e+09 : f32
    %cst_10 = arith.constant 0.000000e+00 : f32
    %21 = vector.broadcast %cst_9 : f32 to vector<8x8xf32>
    %22 = vector.broadcast %cst_10 : f32 to vector<8x8xf32>
    %23 = arith.select %20, %21, %22 : vector<8x8xi1>, vector<8x8xf32>
    %24 = arith.truncf %1 : vector<16x32xf32> to vector<16x32xbf16>
    %c0_11 = arith.constant 0 : index
    %c0_12 = arith.constant 0 : index
    %c0_13 = arith.constant 0 : index
    %25 = vector.load %arg4[%c0_11, %c0_12, %c0_13] : memref<2x32x96xbf16, #tpu.memory_space<vmem>>, vector<1x32x96xbf16>
    %26 = vector.shape_cast %25 : vector<1x32x96xbf16> to vector<32x96xbf16>
    %cst_14 = arith.constant dense<0.000000e+00> : vector<16x96xf32>
    %27 = tpu.matmul %24, %26, %cst_14 {dimension_numbers = #tpu.dot_dimension_numbers<[1], [0], [0], [1], [0, 0, 1, 1], [], []>} : vector<16x32xbf16>, vector<32x96xbf16>, vector<16x96xf32> -> vector<16x96xf32>
    %c0_15 = arith.constant 0 : index
    %c0_16 = arith.constant 0 : index
    %c0_17 = arith.constant 0 : index
    %28 = vector.load %arg5[%c0_15, %c0_16, %c0_17] : memref<2x1x96xf32, #tpu.memory_space<vmem>>, vector<1x1x96xf32>
    %29 = vector.shape_cast %28 : vector<1x1x96xf32> to vector<1x96xf32>
    %30 = vector.broadcast %29 : vector<1x96xf32> to vector<16x96xf32>
    %31 = arith.addf %27, %30 : vector<16x96xf32>
    %32 = vector.extract_strided_slice %31 {offsets = [0, 0], sizes = [8, 32], strides = [1, 1]} : vector<16x96xf32> to vector<8x32xf32>
    %33 = vector.extract_strided_slice %31 {offsets = [0, 32], sizes = [8, 32], strides = [1, 1]} : vector<16x96xf32> to vector<8x32xf32>
    %34 = vector.extract_strided_slice %31 {offsets = [0, 64], sizes = [8, 32], strides = [1, 1]} : vector<16x96xf32> to vector<8x32xf32>
    %35 = vector.extract_strided_slice %32 {offsets = [0, 0], sizes = [8, 8], strides = [1, 1]} : vector<8x32xf32> to vector<8x8xf32>
    %36 = arith.truncf %35 : vector<8x8xf32> to vector<8x8xbf16>
    %37 = vector.extract_strided_slice %33 {offsets = [0, 0], sizes = [8, 8], strides = [1, 1]} : vector<8x32xf32> to vector<8x8xf32>
    %38 = arith.truncf %37 : vector<8x8xf32> to vector<8x8xbf16>
    %39 = vector.extract_strided_slice %34 {offsets = [0, 0], sizes = [8, 8], strides = [1, 1]} : vector<8x32xf32> to vector<8x8xf32>
    %40 = arith.truncf %39 : vector<8x8xf32> to vector<8x8xbf16>
    %cst_18 = arith.constant dense<0.000000e+00> : vector<8x8xf32>
    %41 = tpu.matmul %36, %38, %cst_18 {dimension_numbers = #tpu.dot_dimension_numbers<[1], [1], [0], [0], [0, 0, 1, 0], [], []>} : vector<8x8xbf16>, vector<8x8xbf16>, vector<8x8xf32> -> vector<8x8xf32>
    %42 = arith.addf %41, %10 : vector<8x8xf32>
    %cst_19 = arith.constant dense<0xFF800000> : vector<8xf32>
    %43 = vector.multi_reduction <maximumf>, %42, %cst_19 [1] : vector<8x8xf32> to vector<8xf32>
    %44 = vector.shape_cast %43 : vector<8xf32> to vector<8x1xf32>
    %45 = vector.broadcast %44 : vector<8x1xf32> to vector<8x8xf32>
    %46 = arith.subf %42, %45 : vector<8x8xf32>
    %47 = math.exp %46 : vector<8x8xf32>
    %cst_20 = arith.constant dense<0.000000e+00> : vector<8xf32>
    %48 = vector.multi_reduction <add>, %47, %cst_20 [1] : vector<8x8xf32> to vector<8xf32>
    %49 = vector.shape_cast %48 : vector<8xf32> to vector<8x1xf32>
    %50 = tpu.reciprocal %49 {approx = true} : vector<8x1xf32> -> vector<8x1xf32>
    %51 = vector.broadcast %50 : vector<8x1xf32> to vector<8x8xf32>
    %52 = arith.mulf %47, %51 : vector<8x8xf32>
    %53 = arith.truncf %52 : vector<8x8xf32> to vector<8x8xbf16>
    %cst_21 = arith.constant dense<0.000000e+00> : vector<8x8xf32>
    %54 = tpu.matmul %53, %40, %cst_21 {dimension_numbers = #tpu.dot_dimension_numbers<[1], [0], [0], [1], [0, 0, 1, 1], [], []>} : vector<8x8xbf16>, vector<8x8xbf16>, vector<8x8xf32> -> vector<8x8xf32>
    %55 = vector.extract_strided_slice %32 {offsets = [0, 8], sizes = [8, 8], strides = [1, 1]} : vector<8x32xf32> to vector<8x8xf32>
    %56 = arith.truncf %55 : vector<8x8xf32> to vector<8x8xbf16>
    %57 = vector.extract_strided_slice %33 {offsets = [0, 8], sizes = [8, 8], strides = [1, 1]} : vector<8x32xf32> to vector<8x8xf32>
    %58 = arith.truncf %57 : vector<8x8xf32> to vector<8x8xbf16>
    %59 = vector.extract_strided_slice %34 {offsets = [0, 8], sizes = [8, 8], strides = [1, 1]} : vector<8x32xf32> to vector<8x8xf32>
    %60 = arith.truncf %59 : vector<8x8xf32> to vector<8x8xbf16>
    %cst_22 = arith.constant dense<0.000000e+00> : vector<8x8xf32>
    %61 = tpu.matmul %56, %58, %cst_22 {dimension_numbers = #tpu.dot_dimension_numbers<[1], [1], [0], [0], [0, 0, 1, 0], [], []>} : vector<8x8xbf16>, vector<8x8xbf16>, vector<8x8xf32> -> vector<8x8xf32>
    %62 = arith.addf %61, %10 : vector<8x8xf32>
    %cst_23 = arith.constant dense<0xFF800000> : vector<8xf32>
    %63 = vector.multi_reduction <maximumf>, %62, %cst_23 [1] : vector<8x8xf32> to vector<8xf32>
    %64 = vector.shape_cast %63 : vector<8xf32> to vector<8x1xf32>
    %65 = vector.broadcast %64 : vector<8x1xf32> to vector<8x8xf32>
    %66 = arith.subf %62, %65 : vector<8x8xf32>
    %67 = math.exp %66 : vector<8x8xf32>
    %cst_24 = arith.constant dense<0.000000e+00> : vector<8xf32>
    %68 = vector.multi_reduction <add>, %67, %cst_24 [1] : vector<8x8xf32> to vector<8xf32>
    %69 = vector.shape_cast %68 : vector<8xf32> to vector<8x1xf32>
    %70 = tpu.reciprocal %69 {approx = true} : vector<8x1xf32> -> vector<8x1xf32>
    %71 = vector.broadcast %70 : vector<8x1xf32> to vector<8x8xf32>
    %72 = arith.mulf %67, %71 : vector<8x8xf32>
    %73 = arith.truncf %72 : vector<8x8xf32> to vector<8x8xbf16>
    %cst_25 = arith.constant dense<0.000000e+00> : vector<8x8xf32>
    %74 = tpu.matmul %73, %60, %cst_25 {dimension_numbers = #tpu.dot_dimension_numbers<[1], [0], [0], [1], [0, 0, 1, 1], [], []>} : vector<8x8xbf16>, vector<8x8xbf16>, vector<8x8xf32> -> vector<8x8xf32>
    %75 = vector.extract_strided_slice %32 {offsets = [0, 16], sizes = [8, 8], strides = [1, 1]} : vector<8x32xf32> to vector<8x8xf32>
    %76 = arith.truncf %75 : vector<8x8xf32> to vector<8x8xbf16>
    %77 = vector.extract_strided_slice %33 {offsets = [0, 16], sizes = [8, 8], strides = [1, 1]} : vector<8x32xf32> to vector<8x8xf32>
    %78 = arith.truncf %77 : vector<8x8xf32> to vector<8x8xbf16>
    %79 = vector.extract_strided_slice %34 {offsets = [0, 16], sizes = [8, 8], strides = [1, 1]} : vector<8x32xf32> to vector<8x8xf32>
    %80 = arith.truncf %79 : vector<8x8xf32> to vector<8x8xbf16>
    %cst_26 = arith.constant dense<0.000000e+00> : vector<8x8xf32>
    %81 = tpu.matmul %76, %78, %cst_26 {dimension_numbers = #tpu.dot_dimension_numbers<[1], [1], [0], [0], [0, 0, 1, 0], [], []>} : vector<8x8xbf16>, vector<8x8xbf16>, vector<8x8xf32> -> vector<8x8xf32>
    %82 = arith.addf %81, %10 : vector<8x8xf32>
    %cst_27 = arith.constant dense<0xFF800000> : vector<8xf32>
    %83 = vector.multi_reduction <maximumf>, %82, %cst_27 [1] : vector<8x8xf32> to vector<8xf32>
    %84 = vector.shape_cast %83 : vector<8xf32> to vector<8x1xf32>
    %85 = vector.broadcast %84 : vector<8x1xf32> to vector<8x8xf32>
    %86 = arith.subf %82, %85 : vector<8x8xf32>
    %87 = math.exp %86 : vector<8x8xf32>
    %cst_28 = arith.constant dense<0.000000e+00> : vector<8xf32>
    %88 = vector.multi_reduction <add>, %87, %cst_28 [1] : vector<8x8xf32> to vector<8xf32>
    %89 = vector.shape_cast %88 : vector<8xf32> to vector<8x1xf32>
    %90 = tpu.reciprocal %89 {approx = true} : vector<8x1xf32> -> vector<8x1xf32>
    %91 = vector.broadcast %90 : vector<8x1xf32> to vector<8x8xf32>
    %92 = arith.mulf %87, %91 : vector<8x8xf32>
    %93 = arith.truncf %92 : vector<8x8xf32> to vector<8x8xbf16>
    %cst_29 = arith.constant dense<0.000000e+00> : vector<8x8xf32>
    %94 = tpu.matmul %93, %80, %cst_29 {dimension_numbers = #tpu.dot_dimension_numbers<[1], [0], [0], [1], [0, 0, 1, 1], [], []>} : vector<8x8xbf16>, vector<8x8xbf16>, vector<8x8xf32> -> vector<8x8xf32>
    %95 = vector.extract_strided_slice %32 {offsets = [0, 24], sizes = [8, 8], strides = [1, 1]} : vector<8x32xf32> to vector<8x8xf32>
    %96 = arith.truncf %95 : vector<8x8xf32> to vector<8x8xbf16>
    %97 = vector.extract_strided_slice %33 {offsets = [0, 24], sizes = [8, 8], strides = [1, 1]} : vector<8x32xf32> to vector<8x8xf32>
    %98 = arith.truncf %97 : vector<8x8xf32> to vector<8x8xbf16>
    %99 = vector.extract_strided_slice %34 {offsets = [0, 24], sizes = [8, 8], strides = [1, 1]} : vector<8x32xf32> to vector<8x8xf32>
    %100 = arith.truncf %99 : vector<8x8xf32> to vector<8x8xbf16>
    %cst_30 = arith.constant dense<0.000000e+00> : vector<8x8xf32>
    %101 = tpu.matmul %96, %98, %cst_30 {dimension_numbers = #tpu.dot_dimension_numbers<[1], [1], [0], [0], [0, 0, 1, 0], [], []>} : vector<8x8xbf16>, vector<8x8xbf16>, vector<8x8xf32> -> vector<8x8xf32>
    %102 = arith.addf %101, %10 : vector<8x8xf32>
    %cst_31 = arith.constant dense<0xFF800000> : vector<8xf32>
    %103 = vector.multi_reduction <maximumf>, %102, %cst_31 [1] : vector<8x8xf32> to vector<8xf32>
    %104 = vector.shape_cast %103 : vector<8xf32> to vector<8x1xf32>
    %105 = vector.broadcast %104 : vector<8x1xf32> to vector<8x8xf32>
    %106 = arith.subf %102, %105 : vector<8x8xf32>
    %107 = math.exp %106 : vector<8x8xf32>
    %cst_32 = arith.constant dense<0.000000e+00> : vector<8xf32>
    %108 = vector.multi_reduction <add>, %107, %cst_32 [1] : vector<8x8xf32> to vector<8xf32>
    %109 = vector.shape_cast %108 : vector<8xf32> to vector<8x1xf32>
    %110 = tpu.reciprocal %109 {approx = true} : vector<8x1xf32> -> vector<8x1xf32>
    %111 = vector.broadcast %110 : vector<8x1xf32> to vector<8x8xf32>
    %112 = arith.mulf %107, %111 : vector<8x8xf32>
    %113 = arith.truncf %112 : vector<8x8xf32> to vector<8x8xbf16>
    %cst_33 = arith.constant dense<0.000000e+00> : vector<8x8xf32>
    %114 = tpu.matmul %113, %100, %cst_33 {dimension_numbers = #tpu.dot_dimension_numbers<[1], [0], [0], [1], [0, 0, 1, 1], [], []>} : vector<8x8xbf16>, vector<8x8xbf16>, vector<8x8xf32> -> vector<8x8xf32>
    %115 = tpu.concatenate %54, %74, %94, %114 in 1 : vector<8x8xf32>, vector<8x8xf32>, vector<8x8xf32>, vector<8x8xf32> -> vector<8x32xf32>
    %116 = vector.extract_strided_slice %31 {offsets = [8, 0], sizes = [8, 32], strides = [1, 1]} : vector<16x96xf32> to vector<8x32xf32>
    %117 = vector.extract_strided_slice %31 {offsets = [8, 32], sizes = [8, 32], strides = [1, 1]} : vector<16x96xf32> to vector<8x32xf32>
    %118 = vector.extract_strided_slice %31 {offsets = [8, 64], sizes = [8, 32], strides = [1, 1]} : vector<16x96xf32> to vector<8x32xf32>
    %119 = vector.extract_strided_slice %116 {offsets = [0, 0], sizes = [8, 8], strides = [1, 1]} : vector<8x32xf32> to vector<8x8xf32>
    %120 = arith.truncf %119 : vector<8x8xf32> to vector<8x8xbf16>
    %121 = vector.extract_strided_slice %117 {offsets = [0, 0], sizes = [8, 8], strides = [1, 1]} : vector<8x32xf32> to vector<8x8xf32>
    %122 = arith.truncf %121 : vector<8x8xf32> to vector<8x8xbf16>
    %123 = vector.extract_strided_slice %118 {offsets = [0, 0], sizes = [8, 8], strides = [1, 1]} : vector<8x32xf32> to vector<8x8xf32>
    %124 = arith.truncf %123 : vector<8x8xf32> to vector<8x8xbf16>
    %cst_34 = arith.constant dense<0.000000e+00> : vector<8x8xf32>
    %125 = tpu.matmul %120, %122, %cst_34 {dimension_numbers = #tpu.dot_dimension_numbers<[1], [1], [0], [0], [0, 0, 1, 0], [], []>} : vector<8x8xbf16>, vector<8x8xbf16>, vector<8x8xf32> -> vector<8x8xf32>
    %126 = arith.addf %125, %10 : vector<8x8xf32>
    %cst_35 = arith.constant dense<0xFF800000> : vector<8xf32>
    %127 = vector.multi_reduction <maximumf>, %126, %cst_35 [1] : vector<8x8xf32> to vector<8xf32>
    %128 = vector.shape_cast %127 : vector<8xf32> to vector<8x1xf32>
    %129 = vector.broadcast %128 : vector<8x1xf32> to vector<8x8xf32>
    %130 = arith.subf %126, %129 : vector<8x8xf32>
    %131 = math.exp %130 : vector<8x8xf32>
    %cst_36 = arith.constant dense<0.000000e+00> : vector<8xf32>
    %132 = vector.multi_reduction <add>, %131, %cst_36 [1] : vector<8x8xf32> to vector<8xf32>
    %133 = vector.shape_cast %132 : vector<8xf32> to vector<8x1xf32>
    %134 = tpu.reciprocal %133 {approx = true} : vector<8x1xf32> -> vector<8x1xf32>
    %135 = vector.broadcast %134 : vector<8x1xf32> to vector<8x8xf32>
    %136 = arith.mulf %131, %135 : vector<8x8xf32>
    %137 = arith.truncf %136 : vector<8x8xf32> to vector<8x8xbf16>
    %cst_37 = arith.constant dense<0.000000e+00> : vector<8x8xf32>
    %138 = tpu.matmul %137, %124, %cst_37 {dimension_numbers = #tpu.dot_dimension_numbers<[1], [0], [0], [1], [0, 0, 1, 1], [], []>} : vector<8x8xbf16>, vector<8x8xbf16>, vector<8x8xf32> -> vector<8x8xf32>
    %139 = vector.extract_strided_slice %116 {offsets = [0, 8], sizes = [8, 8], strides = [1, 1]} : vector<8x32xf32> to vector<8x8xf32>
    %140 = arith.truncf %139 : vector<8x8xf32> to vector<8x8xbf16>
    %141 = vector.extract_strided_slice %117 {offsets = [0, 8], sizes = [8, 8], strides = [1, 1]} : vector<8x32xf32> to vector<8x8xf32>
    %142 = arith.truncf %141 : vector<8x8xf32> to vector<8x8xbf16>
    %143 = vector.extract_strided_slice %118 {offsets = [0, 8], sizes = [8, 8], strides = [1, 1]} : vector<8x32xf32> to vector<8x8xf32>
    %144 = arith.truncf %143 : vector<8x8xf32> to vector<8x8xbf16>
    %cst_38 = arith.constant dense<0.000000e+00> : vector<8x8xf32>
    %145 = tpu.matmul %140, %142, %cst_38 {dimension_numbers = #tpu.dot_dimension_numbers<[1], [1], [0], [0], [0, 0, 1, 0], [], []>} : vector<8x8xbf16>, vector<8x8xbf16>, vector<8x8xf32> -> vector<8x8xf32>
    %146 = arith.addf %145, %10 : vector<8x8xf32>
    %cst_39 = arith.constant dense<0xFF800000> : vector<8xf32>
    %147 = vector.multi_reduction <maximumf>, %146, %cst_39 [1] : vector<8x8xf32> to vector<8xf32>
    %148 = vector.shape_cast %147 : vector<8xf32> to vector<8x1xf32>
    %149 = vector.broadcast %148 : vector<8x1xf32> to vector<8x8xf32>
    %150 = arith.subf %146, %149 : vector<8x8xf32>
    %151 = math.exp %150 : vector<8x8xf32>
    %cst_40 = arith.constant dense<0.000000e+00> : vector<8xf32>
    %152 = vector.multi_reduction <add>, %151, %cst_40 [1] : vector<8x8xf32> to vector<8xf32>
    %153 = vector.shape_cast %152 : vector<8xf32> to vector<8x1xf32>
    %154 = tpu.reciprocal %153 {approx = true} : vector<8x1xf32> -> vector<8x1xf32>
    %155 = vector.broadcast %154 : vector<8x1xf32> to vector<8x8xf32>
    %156 = arith.mulf %151, %155 : vector<8x8xf32>
    %157 = arith.truncf %156 : vector<8x8xf32> to vector<8x8xbf16>
    %cst_41 = arith.constant dense<0.000000e+00> : vector<8x8xf32>
    %158 = tpu.matmul %157, %144, %cst_41 {dimension_numbers = #tpu.dot_dimension_numbers<[1], [0], [0], [1], [0, 0, 1, 1], [], []>} : vector<8x8xbf16>, vector<8x8xbf16>, vector<8x8xf32> -> vector<8x8xf32>
    %159 = vector.extract_strided_slice %116 {offsets = [0, 16], sizes = [8, 8], strides = [1, 1]} : vector<8x32xf32> to vector<8x8xf32>
    %160 = arith.truncf %159 : vector<8x8xf32> to vector<8x8xbf16>
    %161 = vector.extract_strided_slice %117 {offsets = [0, 16], sizes = [8, 8], strides = [1, 1]} : vector<8x32xf32> to vector<8x8xf32>
    %162 = arith.truncf %161 : vector<8x8xf32> to vector<8x8xbf16>
    %163 = vector.extract_strided_slice %118 {offsets = [0, 16], sizes = [8, 8], strides = [1, 1]} : vector<8x32xf32> to vector<8x8xf32>
    %164 = arith.truncf %163 : vector<8x8xf32> to vector<8x8xbf16>
    %cst_42 = arith.constant dense<0.000000e+00> : vector<8x8xf32>
    %165 = tpu.matmul %160, %162, %cst_42 {dimension_numbers = #tpu.dot_dimension_numbers<[1], [1], [0], [0], [0, 0, 1, 0], [], []>} : vector<8x8xbf16>, vector<8x8xbf16>, vector<8x8xf32> -> vector<8x8xf32>
    %166 = arith.addf %165, %10 : vector<8x8xf32>
    %cst_43 = arith.constant dense<0xFF800000> : vector<8xf32>
    %167 = vector.multi_reduction <maximumf>, %166, %cst_43 [1] : vector<8x8xf32> to vector<8xf32>
    %168 = vector.shape_cast %167 : vector<8xf32> to vector<8x1xf32>
    %169 = vector.broadcast %168 : vector<8x1xf32> to vector<8x8xf32>
    %170 = arith.subf %166, %169 : vector<8x8xf32>
    %171 = math.exp %170 : vector<8x8xf32>
    %cst_44 = arith.constant dense<0.000000e+00> : vector<8xf32>
    %172 = vector.multi_reduction <add>, %171, %cst_44 [1] : vector<8x8xf32> to vector<8xf32>
    %173 = vector.shape_cast %172 : vector<8xf32> to vector<8x1xf32>
    %174 = tpu.reciprocal %173 {approx = true} : vector<8x1xf32> -> vector<8x1xf32>
    %175 = vector.broadcast %174 : vector<8x1xf32> to vector<8x8xf32>
    %176 = arith.mulf %171, %175 : vector<8x8xf32>
    %177 = arith.truncf %176 : vector<8x8xf32> to vector<8x8xbf16>
    %cst_45 = arith.constant dense<0.000000e+00> : vector<8x8xf32>
    %178 = tpu.matmul %177, %164, %cst_45 {dimension_numbers = #tpu.dot_dimension_numbers<[1], [0], [0], [1], [0, 0, 1, 1], [], []>} : vector<8x8xbf16>, vector<8x8xbf16>, vector<8x8xf32> -> vector<8x8xf32>
    %179 = vector.extract_strided_slice %116 {offsets = [0, 24], sizes = [8, 8], strides = [1, 1]} : vector<8x32xf32> to vector<8x8xf32>
    %180 = arith.truncf %179 : vector<8x8xf32> to vector<8x8xbf16>
    %181 = vector.extract_strided_slice %117 {offsets = [0, 24], sizes = [8, 8], strides = [1, 1]} : vector<8x32xf32> to vector<8x8xf32>
    %182 = arith.truncf %181 : vector<8x8xf32> to vector<8x8xbf16>
    %183 = vector.extract_strided_slice %118 {offsets = [0, 24], sizes = [8, 8], strides = [1, 1]} : vector<8x32xf32> to vector<8x8xf32>
    %184 = arith.truncf %183 : vector<8x8xf32> to vector<8x8xbf16>
    %cst_46 = arith.constant dense<0.000000e+00> : vector<8x8xf32>
    %185 = tpu.matmul %180, %182, %cst_46 {dimension_numbers = #tpu.dot_dimension_numbers<[1], [1], [0], [0], [0, 0, 1, 0], [], []>} : vector<8x8xbf16>, vector<8x8xbf16>, vector<8x8xf32> -> vector<8x8xf32>
    %186 = arith.addf %185, %10 : vector<8x8xf32>
    %cst_47 = arith.constant dense<0xFF800000> : vector<8xf32>
    %187 = vector.multi_reduction <maximumf>, %186, %cst_47 [1] : vector<8x8xf32> to vector<8xf32>
    %188 = vector.shape_cast %187 : vector<8xf32> to vector<8x1xf32>
    %189 = vector.broadcast %188 : vector<8x1xf32> to vector<8x8xf32>
    %190 = arith.subf %186, %189 : vector<8x8xf32>
    %191 = math.exp %190 : vector<8x8xf32>
    %cst_48 = arith.constant dense<0.000000e+00> : vector<8xf32>
    %192 = vector.multi_reduction <add>, %191, %cst_48 [1] : vector<8x8xf32> to vector<8xf32>
    %193 = vector.shape_cast %192 : vector<8xf32> to vector<8x1xf32>
    %194 = tpu.reciprocal %193 {approx = true} : vector<8x1xf32> -> vector<8x1xf32>
    %195 = vector.broadcast %194 : vector<8x1xf32> to vector<8x8xf32>
    %196 = arith.mulf %191, %195 : vector<8x8xf32>
    %197 = arith.truncf %196 : vector<8x8xf32> to vector<8x8xbf16>
    %cst_49 = arith.constant dense<0.000000e+00> : vector<8x8xf32>
    %198 = tpu.matmul %197, %184, %cst_49 {dimension_numbers = #tpu.dot_dimension_numbers<[1], [0], [0], [1], [0, 0, 1, 1], [], []>} : vector<8x8xbf16>, vector<8x8xbf16>, vector<8x8xf32> -> vector<8x8xf32>
    %199 = tpu.concatenate %138, %158, %178, %198 in 1 : vector<8x8xf32>, vector<8x8xf32>, vector<8x8xf32>, vector<8x8xf32> -> vector<8x32xf32>
    %200 = tpu.concatenate %115, %199 in 0 : vector<8x32xf32>, vector<8x32xf32> -> vector<16x32xf32>
    %201 = arith.truncf %200 : vector<16x32xf32> to vector<16x32xbf16>
    %c0_50 = arith.constant 0 : index
    %c0_51 = arith.constant 0 : index
    %c0_52 = arith.constant 0 : index
    %202 = vector.load %arg6[%c0_50, %c0_51, %c0_52] : memref<2x32x32xbf16, #tpu.memory_space<vmem>>, vector<1x32x32xbf16>
    %203 = vector.shape_cast %202 : vector<1x32x32xbf16> to vector<32x32xbf16>
    %cst_53 = arith.constant dense<0.000000e+00> : vector<16x32xf32>
    %204 = tpu.matmul %201, %203, %cst_53 {dimension_numbers = #tpu.dot_dimension_numbers<[1], [0], [0], [1], [0, 0, 1, 1], [], []>} : vector<16x32xbf16>, vector<32x32xbf16>, vector<16x32xf32> -> vector<16x32xf32>
    %c0_54 = arith.constant 0 : index
    %c0_55 = arith.constant 0 : index
    %c0_56 = arith.constant 0 : index
    %205 = vector.load %arg7[%c0_54, %c0_55, %c0_56] : memref<2x1x32xf32, #tpu.memory_space<vmem>>, vector<1x1x32xf32>
    %206 = vector.shape_cast %205 : vector<1x1x32xf32> to vector<1x32xf32>
    %207 = vector.broadcast %206 : vector<1x32xf32> to vector<16x32xf32>
    %208 = arith.addf %204, %207 : vector<16x32xf32>
    %209 = arith.addf %1, %208 : vector<16x32xf32>
    %c0_57 = arith.constant 0 : index
    %c0_58 = arith.constant 0 : index
    %c0_59 = arith.constant 0 : index
    %c0_60 = arith.constant 0 : index
    %210 = vector.load %arg18[%c0_57, %c0_58, %c0_59, %c0_60] : memref<2x3x1x32xf32, #tpu.memory_space<vmem>>, vector<1x1x1x32xf32>
    %211 = vector.shape_cast %210 : vector<1x1x1x32xf32> to vector<1x32xf32>
    %c0_61 = arith.constant 0 : index
    %c0_62 = arith.constant 0 : index
    %c0_63 = arith.constant 0 : index
    %c0_64 = arith.constant 0 : index
    %212 = vector.load %arg19[%c0_61, %c0_62, %c0_63, %c0_64] : memref<2x3x1x32xf32, #tpu.memory_space<vmem>>, vector<1x1x1x32xf32>
    %213 = vector.shape_cast %212 : vector<1x1x1x32xf32> to vector<1x32xf32>
    %cst_65 = arith.constant dense<0.000000e+00> : vector<16xf32>
    %214 = vector.multi_reduction <add>, %209, %cst_65 [1] : vector<16x32xf32> to vector<16xf32>
    %215 = vector.shape_cast %214 : vector<16xf32> to vector<16x1xf32>
    %cst_66 = arith.constant 3.200000e+01 : f32
    %216 = vector.broadcast %cst_66 : f32 to vector<16x1xf32>
    %217 = arith.divf %215, %216 : vector<16x1xf32>
    %218 = vector.broadcast %217 : vector<16x1xf32> to vector<16x32xf32>
    %219 = arith.subf %209, %218 : vector<16x32xf32>
    %220 = arith.mulf %219, %219 : vector<16x32xf32>
    %cst_67 = arith.constant dense<0.000000e+00> : vector<16xf32>
    %221 = vector.multi_reduction <add>, %220, %cst_67 [1] : vector<16x32xf32> to vector<16xf32>
    %222 = vector.shape_cast %221 : vector<16xf32> to vector<16x1xf32>
    %cst_68 = arith.constant 3.200000e+01 : f32
    %223 = vector.broadcast %cst_68 : f32 to vector<16x1xf32>
    %224 = arith.divf %222, %223 : vector<16x1xf32>
    %225 = vector.broadcast %217 : vector<16x1xf32> to vector<16x32xf32>
    %226 = arith.subf %209, %225 : vector<16x32xf32>
    %cst_69 = arith.constant 9.99999974E-6 : f32
    %227 = vector.broadcast %cst_69 : f32 to vector<16x1xf32>
    %228 = arith.addf %224, %227 : vector<16x1xf32>
    %229 = math.rsqrt %228 : vector<16x1xf32>
    %230 = vector.broadcast %229 : vector<16x1xf32> to vector<16x32xf32>
    %231 = arith.mulf %226, %230 : vector<16x32xf32>
    %232 = vector.broadcast %211 : vector<1x32xf32> to vector<16x32xf32>
    %233 = arith.mulf %231, %232 : vector<16x32xf32>
    %234 = vector.broadcast %213 : vector<1x32xf32> to vector<16x32xf32>
    %235 = arith.addf %233, %234 : vector<16x32xf32>
    %236 = arith.truncf %235 : vector<16x32xf32> to vector<16x32xbf16>
    %c0_70 = arith.constant 0 : index
    %c0_71 = arith.constant 0 : index
    %c0_72 = arith.constant 0 : index
    %237 = vector.load %arg8[%c0_70, %c0_71, %c0_72] : memref<2x32x32xbf16, #tpu.memory_space<vmem>>, vector<1x32x32xbf16>
    %238 = vector.shape_cast %237 : vector<1x32x32xbf16> to vector<32x32xbf16>
    %cst_73 = arith.constant dense<0.000000e+00> : vector<16x32xf32>
    %239 = tpu.matmul %236, %238, %cst_73 {dimension_numbers = #tpu.dot_dimension_numbers<[1], [0], [0], [1], [0, 0, 1, 1], [], []>} : vector<16x32xbf16>, vector<32x32xbf16>, vector<16x32xf32> -> vector<16x32xf32>
    %c0_74 = arith.constant 0 : index
    %c0_75 = arith.constant 0 : index
    %c0_76 = arith.constant 0 : index
    %240 = vector.load %arg9[%c0_74, %c0_75, %c0_76] : memref<2x1x32xf32, #tpu.memory_space<vmem>>, vector<1x1x32xf32>
    %241 = vector.shape_cast %240 : vector<1x1x32xf32> to vector<1x32xf32>
    %242 = vector.broadcast %241 : vector<1x32xf32> to vector<16x32xf32>
    %243 = arith.addf %239, %242 : vector<16x32xf32>
    %c0_77 = arith.constant 0 : index
    %c0_78 = arith.constant 0 : index
    %c0_79 = arith.constant 0 : index
    %244 = vector.load %arg10[%c0_77, %c0_78, %c0_79] : memref<2x32x64xbf16, #tpu.memory_space<vmem>>, vector<1x32x64xbf16>
    %245 = vector.shape_cast %244 : vector<1x32x64xbf16> to vector<32x64xbf16>
    %cst_80 = arith.constant dense<0.000000e+00> : vector<16x64xf32>
    %246 = tpu.matmul %4, %245, %cst_80 {dimension_numbers = #tpu.dot_dimension_numbers<[1], [0], [0], [1], [0, 0, 1, 1], [], []>} : vector<16x32xbf16>, vector<32x64xbf16>, vector<16x64xf32> -> vector<16x64xf32>
    %c0_81 = arith.constant 0 : index
    %c0_82 = arith.constant 0 : index
    %c0_83 = arith.constant 0 : index
    %247 = vector.load %arg11[%c0_81, %c0_82, %c0_83] : memref<2x1x64xf32, #tpu.memory_space<vmem>>, vector<1x1x64xf32>
    %248 = vector.shape_cast %247 : vector<1x1x64xf32> to vector<1x64xf32>
    %249 = vector.broadcast %248 : vector<1x64xf32> to vector<16x64xf32>
    %250 = arith.addf %246, %249 : vector<16x64xf32>
    %251 = vector.extract_strided_slice %243 {offsets = [0, 0], sizes = [8, 32], strides = [1, 1]} : vector<16x32xf32> to vector<8x32xf32>
    %252 = vector.extract_strided_slice %250 {offsets = [0, 0], sizes = [8, 32], strides = [1, 1]} : vector<16x64xf32> to vector<8x32xf32>
    %253 = vector.extract_strided_slice %250 {offsets = [0, 32], sizes = [8, 32], strides = [1, 1]} : vector<16x64xf32> to vector<8x32xf32>
    %254 = vector.extract_strided_slice %251 {offsets = [0, 0], sizes = [8, 8], strides = [1, 1]} : vector<8x32xf32> to vector<8x8xf32>
    %255 = arith.truncf %254 : vector<8x8xf32> to vector<8x8xbf16>
    %256 = vector.extract_strided_slice %252 {offsets = [0, 0], sizes = [8, 8], strides = [1, 1]} : vector<8x32xf32> to vector<8x8xf32>
    %257 = arith.truncf %256 : vector<8x8xf32> to vector<8x8xbf16>
    %258 = vector.extract_strided_slice %253 {offsets = [0, 0], sizes = [8, 8], strides = [1, 1]} : vector<8x32xf32> to vector<8x8xf32>
    %259 = arith.truncf %258 : vector<8x8xf32> to vector<8x8xbf16>
    %cst_84 = arith.constant dense<0.000000e+00> : vector<8x8xf32>
    %260 = tpu.matmul %255, %257, %cst_84 {dimension_numbers = #tpu.dot_dimension_numbers<[1], [1], [0], [0], [0, 0, 1, 0], [], []>} : vector<8x8xbf16>, vector<8x8xbf16>, vector<8x8xf32> -> vector<8x8xf32>
    %261 = arith.addf %260, %17 : vector<8x8xf32>
    %cst_85 = arith.constant dense<0xFF800000> : vector<8xf32>
    %262 = vector.multi_reduction <maximumf>, %261, %cst_85 [1] : vector<8x8xf32> to vector<8xf32>
    %263 = vector.shape_cast %262 : vector<8xf32> to vector<8x1xf32>
    %264 = vector.broadcast %263 : vector<8x1xf32> to vector<8x8xf32>
    %265 = arith.subf %261, %264 : vector<8x8xf32>
    %266 = math.exp %265 : vector<8x8xf32>
    %cst_86 = arith.constant dense<0.000000e+00> : vector<8xf32>
    %267 = vector.multi_reduction <add>, %266, %cst_86 [1] : vector<8x8xf32> to vector<8xf32>
    %268 = vector.shape_cast %267 : vector<8xf32> to vector<8x1xf32>
    %269 = tpu.reciprocal %268 {approx = true} : vector<8x1xf32> -> vector<8x1xf32>
    %270 = vector.broadcast %269 : vector<8x1xf32> to vector<8x8xf32>
    %271 = arith.mulf %266, %270 : vector<8x8xf32>
    %272 = arith.truncf %271 : vector<8x8xf32> to vector<8x8xbf16>
    %cst_87 = arith.constant dense<0.000000e+00> : vector<8x8xf32>
    %273 = tpu.matmul %272, %259, %cst_87 {dimension_numbers = #tpu.dot_dimension_numbers<[1], [0], [0], [1], [0, 0, 1, 1], [], []>} : vector<8x8xbf16>, vector<8x8xbf16>, vector<8x8xf32> -> vector<8x8xf32>
    %274 = vector.extract_strided_slice %251 {offsets = [0, 8], sizes = [8, 8], strides = [1, 1]} : vector<8x32xf32> to vector<8x8xf32>
    %275 = arith.truncf %274 : vector<8x8xf32> to vector<8x8xbf16>
    %276 = vector.extract_strided_slice %252 {offsets = [0, 8], sizes = [8, 8], strides = [1, 1]} : vector<8x32xf32> to vector<8x8xf32>
    %277 = arith.truncf %276 : vector<8x8xf32> to vector<8x8xbf16>
    %278 = vector.extract_strided_slice %253 {offsets = [0, 8], sizes = [8, 8], strides = [1, 1]} : vector<8x32xf32> to vector<8x8xf32>
    %279 = arith.truncf %278 : vector<8x8xf32> to vector<8x8xbf16>
    %cst_88 = arith.constant dense<0.000000e+00> : vector<8x8xf32>
    %280 = tpu.matmul %275, %277, %cst_88 {dimension_numbers = #tpu.dot_dimension_numbers<[1], [1], [0], [0], [0, 0, 1, 0], [], []>} : vector<8x8xbf16>, vector<8x8xbf16>, vector<8x8xf32> -> vector<8x8xf32>
    %281 = arith.addf %280, %17 : vector<8x8xf32>
    %cst_89 = arith.constant dense<0xFF800000> : vector<8xf32>
    %282 = vector.multi_reduction <maximumf>, %281, %cst_89 [1] : vector<8x8xf32> to vector<8xf32>
    %283 = vector.shape_cast %282 : vector<8xf32> to vector<8x1xf32>
    %284 = vector.broadcast %283 : vector<8x1xf32> to vector<8x8xf32>
    %285 = arith.subf %281, %284 : vector<8x8xf32>
    %286 = math.exp %285 : vector<8x8xf32>
    %cst_90 = arith.constant dense<0.000000e+00> : vector<8xf32>
    %287 = vector.multi_reduction <add>, %286, %cst_90 [1] : vector<8x8xf32> to vector<8xf32>
    %288 = vector.shape_cast %287 : vector<8xf32> to vector<8x1xf32>
    %289 = tpu.reciprocal %288 {approx = true} : vector<8x1xf32> -> vector<8x1xf32>
    %290 = vector.broadcast %289 : vector<8x1xf32> to vector<8x8xf32>
    %291 = arith.mulf %286, %290 : vector<8x8xf32>
    %292 = arith.truncf %291 : vector<8x8xf32> to vector<8x8xbf16>
    %cst_91 = arith.constant dense<0.000000e+00> : vector<8x8xf32>
    %293 = tpu.matmul %292, %279, %cst_91 {dimension_numbers = #tpu.dot_dimension_numbers<[1], [0], [0], [1], [0, 0, 1, 1], [], []>} : vector<8x8xbf16>, vector<8x8xbf16>, vector<8x8xf32> -> vector<8x8xf32>
    %294 = vector.extract_strided_slice %251 {offsets = [0, 16], sizes = [8, 8], strides = [1, 1]} : vector<8x32xf32> to vector<8x8xf32>
    %295 = arith.truncf %294 : vector<8x8xf32> to vector<8x8xbf16>
    %296 = vector.extract_strided_slice %252 {offsets = [0, 16], sizes = [8, 8], strides = [1, 1]} : vector<8x32xf32> to vector<8x8xf32>
    %297 = arith.truncf %296 : vector<8x8xf32> to vector<8x8xbf16>
    %298 = vector.extract_strided_slice %253 {offsets = [0, 16], sizes = [8, 8], strides = [1, 1]} : vector<8x32xf32> to vector<8x8xf32>
    %299 = arith.truncf %298 : vector<8x8xf32> to vector<8x8xbf16>
    %cst_92 = arith.constant dense<0.000000e+00> : vector<8x8xf32>
    %300 = tpu.matmul %295, %297, %cst_92 {dimension_numbers = #tpu.dot_dimension_numbers<[1], [1], [0], [0], [0, 0, 1, 0], [], []>} : vector<8x8xbf16>, vector<8x8xbf16>, vector<8x8xf32> -> vector<8x8xf32>
    %301 = arith.addf %300, %17 : vector<8x8xf32>
    %cst_93 = arith.constant dense<0xFF800000> : vector<8xf32>
    %302 = vector.multi_reduction <maximumf>, %301, %cst_93 [1] : vector<8x8xf32> to vector<8xf32>
    %303 = vector.shape_cast %302 : vector<8xf32> to vector<8x1xf32>
    %304 = vector.broadcast %303 : vector<8x1xf32> to vector<8x8xf32>
    %305 = arith.subf %301, %304 : vector<8x8xf32>
    %306 = math.exp %305 : vector<8x8xf32>
    %cst_94 = arith.constant dense<0.000000e+00> : vector<8xf32>
    %307 = vector.multi_reduction <add>, %306, %cst_94 [1] : vector<8x8xf32> to vector<8xf32>
    %308 = vector.shape_cast %307 : vector<8xf32> to vector<8x1xf32>
    %309 = tpu.reciprocal %308 {approx = true} : vector<8x1xf32> -> vector<8x1xf32>
    %310 = vector.broadcast %309 : vector<8x1xf32> to vector<8x8xf32>
    %311 = arith.mulf %306, %310 : vector<8x8xf32>
    %312 = arith.truncf %311 : vector<8x8xf32> to vector<8x8xbf16>
    %cst_95 = arith.constant dense<0.000000e+00> : vector<8x8xf32>
    %313 = tpu.matmul %312, %299, %cst_95 {dimension_numbers = #tpu.dot_dimension_numbers<[1], [0], [0], [1], [0, 0, 1, 1], [], []>} : vector<8x8xbf16>, vector<8x8xbf16>, vector<8x8xf32> -> vector<8x8xf32>
    %314 = vector.extract_strided_slice %251 {offsets = [0, 24], sizes = [8, 8], strides = [1, 1]} : vector<8x32xf32> to vector<8x8xf32>
    %315 = arith.truncf %314 : vector<8x8xf32> to vector<8x8xbf16>
    %316 = vector.extract_strided_slice %252 {offsets = [0, 24], sizes = [8, 8], strides = [1, 1]} : vector<8x32xf32> to vector<8x8xf32>
    %317 = arith.truncf %316 : vector<8x8xf32> to vector<8x8xbf16>
    %318 = vector.extract_strided_slice %253 {offsets = [0, 24], sizes = [8, 8], strides = [1, 1]} : vector<8x32xf32> to vector<8x8xf32>
    %319 = arith.truncf %318 : vector<8x8xf32> to vector<8x8xbf16>
    %cst_96 = arith.constant dense<0.000000e+00> : vector<8x8xf32>
    %320 = tpu.matmul %315, %317, %cst_96 {dimension_numbers = #tpu.dot_dimension_numbers<[1], [1], [0], [0], [0, 0, 1, 0], [], []>} : vector<8x8xbf16>, vector<8x8xbf16>, vector<8x8xf32> -> vector<8x8xf32>
    %321 = arith.addf %320, %17 : vector<8x8xf32>
    %cst_97 = arith.constant dense<0xFF800000> : vector<8xf32>
    %322 = vector.multi_reduction <maximumf>, %321, %cst_97 [1] : vector<8x8xf32> to vector<8xf32>
    %323 = vector.shape_cast %322 : vector<8xf32> to vector<8x1xf32>
    %324 = vector.broadcast %323 : vector<8x1xf32> to vector<8x8xf32>
    %325 = arith.subf %321, %324 : vector<8x8xf32>
    %326 = math.exp %325 : vector<8x8xf32>
    %cst_98 = arith.constant dense<0.000000e+00> : vector<8xf32>
    %327 = vector.multi_reduction <add>, %326, %cst_98 [1] : vector<8x8xf32> to vector<8xf32>
    %328 = vector.shape_cast %327 : vector<8xf32> to vector<8x1xf32>
    %329 = tpu.reciprocal %328 {approx = true} : vector<8x1xf32> -> vector<8x1xf32>
    %330 = vector.broadcast %329 : vector<8x1xf32> to vector<8x8xf32>
    %331 = arith.mulf %326, %330 : vector<8x8xf32>
    %332 = arith.truncf %331 : vector<8x8xf32> to vector<8x8xbf16>
    %cst_99 = arith.constant dense<0.000000e+00> : vector<8x8xf32>
    %333 = tpu.matmul %332, %319, %cst_99 {dimension_numbers = #tpu.dot_dimension_numbers<[1], [0], [0], [1], [0, 0, 1, 1], [], []>} : vector<8x8xbf16>, vector<8x8xbf16>, vector<8x8xf32> -> vector<8x8xf32>
    %334 = tpu.concatenate %273, %293, %313, %333 in 1 : vector<8x8xf32>, vector<8x8xf32>, vector<8x8xf32>, vector<8x8xf32> -> vector<8x32xf32>
    %335 = vector.extract_strided_slice %243 {offsets = [8, 0], sizes = [8, 32], strides = [1, 1]} : vector<16x32xf32> to vector<8x32xf32>
    %336 = vector.extract_strided_slice %250 {offsets = [8, 0], sizes = [8, 32], strides = [1, 1]} : vector<16x64xf32> to vector<8x32xf32>
    %337 = vector.extract_strided_slice %250 {offsets = [8, 32], sizes = [8, 32], strides = [1, 1]} : vector<16x64xf32> to vector<8x32xf32>
    %338 = vector.extract_strided_slice %335 {offsets = [0, 0], sizes = [8, 8], strides = [1, 1]} : vector<8x32xf32> to vector<8x8xf32>
    %339 = arith.truncf %338 : vector<8x8xf32> to vector<8x8xbf16>
    %340 = vector.extract_strided_slice %336 {offsets = [0, 0], sizes = [8, 8], strides = [1, 1]} : vector<8x32xf32> to vector<8x8xf32>
    %341 = arith.truncf %340 : vector<8x8xf32> to vector<8x8xbf16>
    %342 = vector.extract_strided_slice %337 {offsets = [0, 0], sizes = [8, 8], strides = [1, 1]} : vector<8x32xf32> to vector<8x8xf32>
    %343 = arith.truncf %342 : vector<8x8xf32> to vector<8x8xbf16>
    %cst_100 = arith.constant dense<0.000000e+00> : vector<8x8xf32>
    %344 = tpu.matmul %339, %341, %cst_100 {dimension_numbers = #tpu.dot_dimension_numbers<[1], [1], [0], [0], [0, 0, 1, 0], [], []>} : vector<8x8xbf16>, vector<8x8xbf16>, vector<8x8xf32> -> vector<8x8xf32>
    %345 = arith.addf %344, %23 : vector<8x8xf32>
    %cst_101 = arith.constant dense<0xFF800000> : vector<8xf32>
    %346 = vector.multi_reduction <maximumf>, %345, %cst_101 [1] : vector<8x8xf32> to vector<8xf32>
    %347 = vector.shape_cast %346 : vector<8xf32> to vector<8x1xf32>
    %348 = vector.broadcast %347 : vector<8x1xf32> to vector<8x8xf32>
    %349 = arith.subf %345, %348 : vector<8x8xf32>
    %350 = math.exp %349 : vector<8x8xf32>
    %cst_102 = arith.constant dense<0.000000e+00> : vector<8xf32>
    %351 = vector.multi_reduction <add>, %350, %cst_102 [1] : vector<8x8xf32> to vector<8xf32>
    %352 = vector.shape_cast %351 : vector<8xf32> to vector<8x1xf32>
    %353 = tpu.reciprocal %352 {approx = true} : vector<8x1xf32> -> vector<8x1xf32>
    %354 = vector.broadcast %353 : vector<8x1xf32> to vector<8x8xf32>
    %355 = arith.mulf %350, %354 : vector<8x8xf32>
    %356 = arith.truncf %355 : vector<8x8xf32> to vector<8x8xbf16>
    %cst_103 = arith.constant dense<0.000000e+00> : vector<8x8xf32>
    %357 = tpu.matmul %356, %343, %cst_103 {dimension_numbers = #tpu.dot_dimension_numbers<[1], [0], [0], [1], [0, 0, 1, 1], [], []>} : vector<8x8xbf16>, vector<8x8xbf16>, vector<8x8xf32> -> vector<8x8xf32>
    %358 = vector.extract_strided_slice %335 {offsets = [0, 8], sizes = [8, 8], strides = [1, 1]} : vector<8x32xf32> to vector<8x8xf32>
    %359 = arith.truncf %358 : vector<8x8xf32> to vector<8x8xbf16>
    %360 = vector.extract_strided_slice %336 {offsets = [0, 8], sizes = [8, 8], strides = [1, 1]} : vector<8x32xf32> to vector<8x8xf32>
    %361 = arith.truncf %360 : vector<8x8xf32> to vector<8x8xbf16>
    %362 = vector.extract_strided_slice %337 {offsets = [0, 8], sizes = [8, 8], strides = [1, 1]} : vector<8x32xf32> to vector<8x8xf32>
    %363 = arith.truncf %362 : vector<8x8xf32> to vector<8x8xbf16>
    %cst_104 = arith.constant dense<0.000000e+00> : vector<8x8xf32>
    %364 = tpu.matmul %359, %361, %cst_104 {dimension_numbers = #tpu.dot_dimension_numbers<[1], [1], [0], [0], [0, 0, 1, 0], [], []>} : vector<8x8xbf16>, vector<8x8xbf16>, vector<8x8xf32> -> vector<8x8xf32>
    %365 = arith.addf %364, %23 : vector<8x8xf32>
    %cst_105 = arith.constant dense<0xFF800000> : vector<8xf32>
    %366 = vector.multi_reduction <maximumf>, %365, %cst_105 [1] : vector<8x8xf32> to vector<8xf32>
    %367 = vector.shape_cast %366 : vector<8xf32> to vector<8x1xf32>
    %368 = vector.broadcast %367 : vector<8x1xf32> to vector<8x8xf32>
    %369 = arith.subf %365, %368 : vector<8x8xf32>
    %370 = math.exp %369 : vector<8x8xf32>
    %cst_106 = arith.constant dense<0.000000e+00> : vector<8xf32>
    %371 = vector.multi_reduction <add>, %370, %cst_106 [1] : vector<8x8xf32> to vector<8xf32>
    %372 = vector.shape_cast %371 : vector<8xf32> to vector<8x1xf32>
    %373 = tpu.reciprocal %372 {approx = true} : vector<8x1xf32> -> vector<8x1xf32>
    %374 = vector.broadcast %373 : vector<8x1xf32> to vector<8x8xf32>
    %375 = arith.mulf %370, %374 : vector<8x8xf32>
    %376 = arith.truncf %375 : vector<8x8xf32> to vector<8x8xbf16>
    %cst_107 = arith.constant dense<0.000000e+00> : vector<8x8xf32>
    %377 = tpu.matmul %376, %363, %cst_107 {dimension_numbers = #tpu.dot_dimension_numbers<[1], [0], [0], [1], [0, 0, 1, 1], [], []>} : vector<8x8xbf16>, vector<8x8xbf16>, vector<8x8xf32> -> vector<8x8xf32>
    %378 = vector.extract_strided_slice %335 {offsets = [0, 16], sizes = [8, 8], strides = [1, 1]} : vector<8x32xf32> to vector<8x8xf32>
    %379 = arith.truncf %378 : vector<8x8xf32> to vector<8x8xbf16>
    %380 = vector.extract_strided_slice %336 {offsets = [0, 16], sizes = [8, 8], strides = [1, 1]} : vector<8x32xf32> to vector<8x8xf32>
    %381 = arith.truncf %380 : vector<8x8xf32> to vector<8x8xbf16>
    %382 = vector.extract_strided_slice %337 {offsets = [0, 16], sizes = [8, 8], strides = [1, 1]} : vector<8x32xf32> to vector<8x8xf32>
    %383 = arith.truncf %382 : vector<8x8xf32> to vector<8x8xbf16>
    %cst_108 = arith.constant dense<0.000000e+00> : vector<8x8xf32>
    %384 = tpu.matmul %379, %381, %cst_108 {dimension_numbers = #tpu.dot_dimension_numbers<[1], [1], [0], [0], [0, 0, 1, 0], [], []>} : vector<8x8xbf16>, vector<8x8xbf16>, vector<8x8xf32> -> vector<8x8xf32>
    %385 = arith.addf %384, %23 : vector<8x8xf32>
    %cst_109 = arith.constant dense<0xFF800000> : vector<8xf32>
    %386 = vector.multi_reduction <maximumf>, %385, %cst_109 [1] : vector<8x8xf32> to vector<8xf32>
    %387 = vector.shape_cast %386 : vector<8xf32> to vector<8x1xf32>
    %388 = vector.broadcast %387 : vector<8x1xf32> to vector<8x8xf32>
    %389 = arith.subf %385, %388 : vector<8x8xf32>
    %390 = math.exp %389 : vector<8x8xf32>
    %cst_110 = arith.constant dense<0.000000e+00> : vector<8xf32>
    %391 = vector.multi_reduction <add>, %390, %cst_110 [1] : vector<8x8xf32> to vector<8xf32>
    %392 = vector.shape_cast %391 : vector<8xf32> to vector<8x1xf32>
    %393 = tpu.reciprocal %392 {approx = true} : vector<8x1xf32> -> vector<8x1xf32>
    %394 = vector.broadcast %393 : vector<8x1xf32> to vector<8x8xf32>
    %395 = arith.mulf %390, %394 : vector<8x8xf32>
    %396 = arith.truncf %395 : vector<8x8xf32> to vector<8x8xbf16>
    %cst_111 = arith.constant dense<0.000000e+00> : vector<8x8xf32>
    %397 = tpu.matmul %396, %383, %cst_111 {dimension_numbers = #tpu.dot_dimension_numbers<[1], [0], [0], [1], [0, 0, 1, 1], [], []>} : vector<8x8xbf16>, vector<8x8xbf16>, vector<8x8xf32> -> vector<8x8xf32>
    %398 = vector.extract_strided_slice %335 {offsets = [0, 24], sizes = [8, 8], strides = [1, 1]} : vector<8x32xf32> to vector<8x8xf32>
    %399 = arith.truncf %398 : vector<8x8xf32> to vector<8x8xbf16>
    %400 = vector.extract_strided_slice %336 {offsets = [0, 24], sizes = [8, 8], strides = [1, 1]} : vector<8x32xf32> to vector<8x8xf32>
    %401 = arith.truncf %400 : vector<8x8xf32> to vector<8x8xbf16>
    %402 = vector.extract_strided_slice %337 {offsets = [0, 24], sizes = [8, 8], strides = [1, 1]} : vector<8x32xf32> to vector<8x8xf32>
    %403 = arith.truncf %402 : vector<8x8xf32> to vector<8x8xbf16>
    %cst_112 = arith.constant dense<0.000000e+00> : vector<8x8xf32>
    %404 = tpu.matmul %399, %401, %cst_112 {dimension_numbers = #tpu.dot_dimension_numbers<[1], [1], [0], [0], [0, 0, 1, 0], [], []>} : vector<8x8xbf16>, vector<8x8xbf16>, vector<8x8xf32> -> vector<8x8xf32>
    %405 = arith.addf %404, %23 : vector<8x8xf32>
    %cst_113 = arith.constant dense<0xFF800000> : vector<8xf32>
    %406 = vector.multi_reduction <maximumf>, %405, %cst_113 [1] : vector<8x8xf32> to vector<8xf32>
    %407 = vector.shape_cast %406 : vector<8xf32> to vector<8x1xf32>
    %408 = vector.broadcast %407 : vector<8x1xf32> to vector<8x8xf32>
    %409 = arith.subf %405, %408 : vector<8x8xf32>
    %410 = math.exp %409 : vector<8x8xf32>
    %cst_114 = arith.constant dense<0.000000e+00> : vector<8xf32>
    %411 = vector.multi_reduction <add>, %410, %cst_114 [1] : vector<8x8xf32> to vector<8xf32>
    %412 = vector.shape_cast %411 : vector<8xf32> to vector<8x1xf32>
    %413 = tpu.reciprocal %412 {approx = true} : vector<8x1xf32> -> vector<8x1xf32>
    %414 = vector.broadcast %413 : vector<8x1xf32> to vector<8x8xf32>
    %415 = arith.mulf %410, %414 : vector<8x8xf32>
    %416 = arith.truncf %415 : vector<8x8xf32> to vector<8x8xbf16>
    %cst_115 = arith.constant dense<0.000000e+00> : vector<8x8xf32>
    %417 = tpu.matmul %416, %403, %cst_115 {dimension_numbers = #tpu.dot_dimension_numbers<[1], [0], [0], [1], [0, 0, 1, 1], [], []>} : vector<8x8xbf16>, vector<8x8xbf16>, vector<8x8xf32> -> vector<8x8xf32>
    %418 = tpu.concatenate %357, %377, %397, %417 in 1 : vector<8x8xf32>, vector<8x8xf32>, vector<8x8xf32>, vector<8x8xf32> -> vector<8x32xf32>
    %419 = tpu.concatenate %334, %418 in 0 : vector<8x32xf32>, vector<8x32xf32> -> vector<16x32xf32>
    %420 = arith.truncf %419 : vector<16x32xf32> to vector<16x32xbf16>
    %c0_116 = arith.constant 0 : index
    %c0_117 = arith.constant 0 : index
    %c0_118 = arith.constant 0 : index
    %421 = vector.load %arg12[%c0_116, %c0_117, %c0_118] : memref<2x32x32xbf16, #tpu.memory_space<vmem>>, vector<1x32x32xbf16>
    %422 = vector.shape_cast %421 : vector<1x32x32xbf16> to vector<32x32xbf16>
    %cst_119 = arith.constant dense<0.000000e+00> : vector<16x32xf32>
    %423 = tpu.matmul %420, %422, %cst_119 {dimension_numbers = #tpu.dot_dimension_numbers<[1], [0], [0], [1], [0, 0, 1, 1], [], []>} : vector<16x32xbf16>, vector<32x32xbf16>, vector<16x32xf32> -> vector<16x32xf32>
    %c0_120 = arith.constant 0 : index
    %c0_121 = arith.constant 0 : index
    %c0_122 = arith.constant 0 : index
    %424 = vector.load %arg13[%c0_120, %c0_121, %c0_122] : memref<2x1x32xf32, #tpu.memory_space<vmem>>, vector<1x1x32xf32>
    %425 = vector.shape_cast %424 : vector<1x1x32xf32> to vector<1x32xf32>
    %426 = vector.broadcast %425 : vector<1x32xf32> to vector<16x32xf32>
    %427 = arith.addf %423, %426 : vector<16x32xf32>
    %428 = arith.addf %235, %427 : vector<16x32xf32>
    %c0_123 = arith.constant 0 : index
    %c1_124 = arith.constant 1 : index
    %c0_125 = arith.constant 0 : index
    %c0_126 = arith.constant 0 : index
    %429 = vector.load %arg18[%c0_123, %c1_124, %c0_125, %c0_126] : memref<2x3x1x32xf32, #tpu.memory_space<vmem>>, vector<1x1x1x32xf32>
    %430 = vector.shape_cast %429 : vector<1x1x1x32xf32> to vector<1x32xf32>
    %c0_127 = arith.constant 0 : index
    %c1_128 = arith.constant 1 : index
    %c0_129 = arith.constant 0 : index
    %c0_130 = arith.constant 0 : index
    %431 = vector.load %arg19[%c0_127, %c1_128, %c0_129, %c0_130] : memref<2x3x1x32xf32, #tpu.memory_space<vmem>>, vector<1x1x1x32xf32>
    %432 = vector.shape_cast %431 : vector<1x1x1x32xf32> to vector<1x32xf32>
    %cst_131 = arith.constant dense<0.000000e+00> : vector<16xf32>
    %433 = vector.multi_reduction <add>, %428, %cst_131 [1] : vector<16x32xf32> to vector<16xf32>
    %434 = vector.shape_cast %433 : vector<16xf32> to vector<16x1xf32>
    %cst_132 = arith.constant 3.200000e+01 : f32
    %435 = vector.broadcast %cst_132 : f32 to vector<16x1xf32>
    %436 = arith.divf %434, %435 : vector<16x1xf32>
    %437 = vector.broadcast %436 : vector<16x1xf32> to vector<16x32xf32>
    %438 = arith.subf %428, %437 : vector<16x32xf32>
    %439 = arith.mulf %438, %438 : vector<16x32xf32>
    %cst_133 = arith.constant dense<0.000000e+00> : vector<16xf32>
    %440 = vector.multi_reduction <add>, %439, %cst_133 [1] : vector<16x32xf32> to vector<16xf32>
    %441 = vector.shape_cast %440 : vector<16xf32> to vector<16x1xf32>
    %cst_134 = arith.constant 3.200000e+01 : f32
    %442 = vector.broadcast %cst_134 : f32 to vector<16x1xf32>
    %443 = arith.divf %441, %442 : vector<16x1xf32>
    %444 = vector.broadcast %436 : vector<16x1xf32> to vector<16x32xf32>
    %445 = arith.subf %428, %444 : vector<16x32xf32>
    %cst_135 = arith.constant 9.99999974E-6 : f32
    %446 = vector.broadcast %cst_135 : f32 to vector<16x1xf32>
    %447 = arith.addf %443, %446 : vector<16x1xf32>
    %448 = math.rsqrt %447 : vector<16x1xf32>
    %449 = vector.broadcast %448 : vector<16x1xf32> to vector<16x32xf32>
    %450 = arith.mulf %445, %449 : vector<16x32xf32>
    %451 = vector.broadcast %430 : vector<1x32xf32> to vector<16x32xf32>
    %452 = arith.mulf %450, %451 : vector<16x32xf32>
    %453 = vector.broadcast %432 : vector<1x32xf32> to vector<16x32xf32>
    %454 = arith.addf %452, %453 : vector<16x32xf32>
    %455 = arith.truncf %454 : vector<16x32xf32> to vector<16x32xbf16>
    %c0_136 = arith.constant 0 : index
    %c0_137 = arith.constant 0 : index
    %c0_138 = arith.constant 0 : index
    %456 = vector.load %arg14[%c0_136, %c0_137, %c0_138] : memref<2x32x32xbf16, #tpu.memory_space<vmem>>, vector<1x32x32xbf16>
    %457 = vector.shape_cast %456 : vector<1x32x32xbf16> to vector<32x32xbf16>
    %cst_139 = arith.constant dense<0.000000e+00> : vector<16x32xf32>
    %458 = tpu.matmul %455, %457, %cst_139 {dimension_numbers = #tpu.dot_dimension_numbers<[1], [0], [0], [1], [0, 0, 1, 1], [], []>} : vector<16x32xbf16>, vector<32x32xbf16>, vector<16x32xf32> -> vector<16x32xf32>
    %c0_140 = arith.constant 0 : index
    %c0_141 = arith.constant 0 : index
    %c0_142 = arith.constant 0 : index
    %459 = vector.load %arg15[%c0_140, %c0_141, %c0_142] : memref<2x1x32xf32, #tpu.memory_space<vmem>>, vector<1x1x32xf32>
    %460 = vector.shape_cast %459 : vector<1x1x32xf32> to vector<1x32xf32>
    %461 = vector.broadcast %460 : vector<1x32xf32> to vector<16x32xf32>
    %462 = arith.addf %458, %461 : vector<16x32xf32>
    %cst_143 = arith.constant 0.000000e+00 : f32
    %463 = vector.broadcast %cst_143 : f32 to vector<16x32xf32>
    %464 = arith.maximumf %462, %463 : vector<16x32xf32>
    %465 = arith.truncf %464 : vector<16x32xf32> to vector<16x32xbf16>
    %c0_144 = arith.constant 0 : index
    %c0_145 = arith.constant 0 : index
    %c0_146 = arith.constant 0 : index
    %466 = vector.load %arg16[%c0_144, %c0_145, %c0_146] : memref<2x32x32xbf16, #tpu.memory_space<vmem>>, vector<1x32x32xbf16>
    %467 = vector.shape_cast %466 : vector<1x32x32xbf16> to vector<32x32xbf16>
    %cst_147 = arith.constant dense<0.000000e+00> : vector<16x32xf32>
    %468 = tpu.matmul %465, %467, %cst_147 {dimension_numbers = #tpu.dot_dimension_numbers<[1], [0], [0], [1], [0, 0, 1, 1], [], []>} : vector<16x32xbf16>, vector<32x32xbf16>, vector<16x32xf32> -> vector<16x32xf32>
    %c0_148 = arith.constant 0 : index
    %c0_149 = arith.constant 0 : index
    %c0_150 = arith.constant 0 : index
    %469 = vector.load %arg17[%c0_148, %c0_149, %c0_150] : memref<2x1x32xf32, #tpu.memory_space<vmem>>, vector<1x1x32xf32>
    %470 = vector.shape_cast %469 : vector<1x1x32xf32> to vector<1x32xf32>
    %471 = vector.broadcast %470 : vector<1x32xf32> to vector<16x32xf32>
    %472 = arith.addf %468, %471 : vector<16x32xf32>
    %473 = arith.addf %454, %472 : vector<16x32xf32>
    %c0_151 = arith.constant 0 : index
    %c2 = arith.constant 2 : index
    %c0_152 = arith.constant 0 : index
    %c0_153 = arith.constant 0 : index
    %474 = vector.load %arg18[%c0_151, %c2, %c0_152, %c0_153] : memref<2x3x1x32xf32, #tpu.memory_space<vmem>>, vector<1x1x1x32xf32>
    %475 = vector.shape_cast %474 : vector<1x1x1x32xf32> to vector<1x32xf32>
    %c0_154 = arith.constant 0 : index
    %c2_155 = arith.constant 2 : index
    %c0_156 = arith.constant 0 : index
    %c0_157 = arith.constant 0 : index
    %476 = vector.load %arg19[%c0_154, %c2_155, %c0_156, %c0_157] : memref<2x3x1x32xf32, #tpu.memory_space<vmem>>, vector<1x1x1x32xf32>
    %477 = vector.shape_cast %476 : vector<1x1x1x32xf32> to vector<1x32xf32>
    %cst_158 = arith.constant dense<0.000000e+00> : vector<16xf32>
    %478 = vector.multi_reduction <add>, %473, %cst_158 [1] : vector<16x32xf32> to vector<16xf32>
    %479 = vector.shape_cast %478 : vector<16xf32> to vector<16x1xf32>
    %cst_159 = arith.constant 3.200000e+01 : f32
    %480 = vector.broadcast %cst_159 : f32 to vector<16x1xf32>
    %481 = arith.divf %479, %480 : vector<16x1xf32>
    %482 = vector.broadcast %481 : vector<16x1xf32> to vector<16x32xf32>
    %483 = arith.subf %473, %482 : vector<16x32xf32>
    %484 = arith.mulf %483, %483 : vector<16x32xf32>
    %cst_160 = arith.constant dense<0.000000e+00> : vector<16xf32>
    %485 = vector.multi_reduction <add>, %484, %cst_160 [1] : vector<16x32xf32> to vector<16xf32>
    %486 = vector.shape_cast %485 : vector<16xf32> to vector<16x1xf32>
    %cst_161 = arith.constant 3.200000e+01 : f32
    %487 = vector.broadcast %cst_161 : f32 to vector<16x1xf32>
    %488 = arith.divf %486, %487 : vector<16x1xf32>
    %489 = vector.broadcast %481 : vector<16x1xf32> to vector<16x32xf32>
    %490 = arith.subf %473, %489 : vector<16x32xf32>
    %cst_162 = arith.constant 9.99999974E-6 : f32
    %491 = vector.broadcast %cst_162 : f32 to vector<16x1xf32>
    %492 = arith.addf %488, %491 : vector<16x1xf32>
    %493 = math.rsqrt %492 : vector<16x1xf32>
    %494 = vector.broadcast %493 : vector<16x1xf32> to vector<16x32xf32>
    %495 = arith.mulf %490, %494 : vector<16x32xf32>
    %496 = vector.broadcast %475 : vector<1x32xf32> to vector<16x32xf32>
    %497 = arith.mulf %495, %496 : vector<16x32xf32>
    %498 = vector.broadcast %477 : vector<1x32xf32> to vector<16x32xf32>
    %499 = arith.addf %497, %498 : vector<16x32xf32>
    %500 = arith.truncf %499 : vector<16x32xf32> to vector<16x32xbf16>
    %c1_163 = arith.constant 1 : index
    %c0_164 = arith.constant 0 : index
    %c0_165 = arith.constant 0 : index
    %501 = vector.load %arg4[%c1_163, %c0_164, %c0_165] : memref<2x32x96xbf16, #tpu.memory_space<vmem>>, vector<1x32x96xbf16>
    %502 = vector.shape_cast %501 : vector<1x32x96xbf16> to vector<32x96xbf16>
    %cst_166 = arith.constant dense<0.000000e+00> : vector<16x96xf32>
    %503 = tpu.matmul %500, %502, %cst_166 {dimension_numbers = #tpu.dot_dimension_numbers<[1], [0], [0], [1], [0, 0, 1, 1], [], []>} : vector<16x32xbf16>, vector<32x96xbf16>, vector<16x96xf32> -> vector<16x96xf32>
    %c1_167 = arith.constant 1 : index
    %c0_168 = arith.constant 0 : index
    %c0_169 = arith.constant 0 : index
    %504 = vector.load %arg5[%c1_167, %c0_168, %c0_169] : memref<2x1x96xf32, #tpu.memory_space<vmem>>, vector<1x1x96xf32>
    %505 = vector.shape_cast %504 : vector<1x1x96xf32> to vector<1x96xf32>
    %506 = vector.broadcast %505 : vector<1x96xf32> to vector<16x96xf32>
    %507 = arith.addf %503, %506 : vector<16x96xf32>
    %508 = vector.extract_strided_slice %507 {offsets = [0, 0], sizes = [8, 32], strides = [1, 1]} : vector<16x96xf32> to vector<8x32xf32>
    %509 = vector.extract_strided_slice %507 {offsets = [0, 32], sizes = [8, 32], strides = [1, 1]} : vector<16x96xf32> to vector<8x32xf32>
    %510 = vector.extract_strided_slice %507 {offsets = [0, 64], sizes = [8, 32], strides = [1, 1]} : vector<16x96xf32> to vector<8x32xf32>
    %511 = vector.extract_strided_slice %508 {offsets = [0, 0], sizes = [8, 8], strides = [1, 1]} : vector<8x32xf32> to vector<8x8xf32>
    %512 = arith.truncf %511 : vector<8x8xf32> to vector<8x8xbf16>
    %513 = vector.extract_strided_slice %509 {offsets = [0, 0], sizes = [8, 8], strides = [1, 1]} : vector<8x32xf32> to vector<8x8xf32>
    %514 = arith.truncf %513 : vector<8x8xf32> to vector<8x8xbf16>
    %515 = vector.extract_strided_slice %510 {offsets = [0, 0], sizes = [8, 8], strides = [1, 1]} : vector<8x32xf32> to vector<8x8xf32>
    %516 = arith.truncf %515 : vector<8x8xf32> to vector<8x8xbf16>
    %cst_170 = arith.constant dense<0.000000e+00> : vector<8x8xf32>
    %517 = tpu.matmul %512, %514, %cst_170 {dimension_numbers = #tpu.dot_dimension_numbers<[1], [1], [0], [0], [0, 0, 1, 0], [], []>} : vector<8x8xbf16>, vector<8x8xbf16>, vector<8x8xf32> -> vector<8x8xf32>
    %518 = arith.addf %517, %10 : vector<8x8xf32>
    %cst_171 = arith.constant dense<0xFF800000> : vector<8xf32>
    %519 = vector.multi_reduction <maximumf>, %518, %cst_171 [1] : vector<8x8xf32> to vector<8xf32>
    %520 = vector.shape_cast %519 : vector<8xf32> to vector<8x1xf32>
    %521 = vector.broadcast %520 : vector<8x1xf32> to vector<8x8xf32>
    %522 = arith.subf %518, %521 : vector<8x8xf32>
    %523 = math.exp %522 : vector<8x8xf32>
    %cst_172 = arith.constant dense<0.000000e+00> : vector<8xf32>
    %524 = vector.multi_reduction <add>, %523, %cst_172 [1] : vector<8x8xf32> to vector<8xf32>
    %525 = vector.shape_cast %524 : vector<8xf32> to vector<8x1xf32>
    %526 = tpu.reciprocal %525 {approx = true} : vector<8x1xf32> -> vector<8x1xf32>
    %527 = vector.broadcast %526 : vector<8x1xf32> to vector<8x8xf32>
    %528 = arith.mulf %523, %527 : vector<8x8xf32>
    %529 = arith.truncf %528 : vector<8x8xf32> to vector<8x8xbf16>
    %cst_173 = arith.constant dense<0.000000e+00> : vector<8x8xf32>
    %530 = tpu.matmul %529, %516, %cst_173 {dimension_numbers = #tpu.dot_dimension_numbers<[1], [0], [0], [1], [0, 0, 1, 1], [], []>} : vector<8x8xbf16>, vector<8x8xbf16>, vector<8x8xf32> -> vector<8x8xf32>
    %531 = vector.extract_strided_slice %508 {offsets = [0, 8], sizes = [8, 8], strides = [1, 1]} : vector<8x32xf32> to vector<8x8xf32>
    %532 = arith.truncf %531 : vector<8x8xf32> to vector<8x8xbf16>
    %533 = vector.extract_strided_slice %509 {offsets = [0, 8], sizes = [8, 8], strides = [1, 1]} : vector<8x32xf32> to vector<8x8xf32>
    %534 = arith.truncf %533 : vector<8x8xf32> to vector<8x8xbf16>
    %535 = vector.extract_strided_slice %510 {offsets = [0, 8], sizes = [8, 8], strides = [1, 1]} : vector<8x32xf32> to vector<8x8xf32>
    %536 = arith.truncf %535 : vector<8x8xf32> to vector<8x8xbf16>
    %cst_174 = arith.constant dense<0.000000e+00> : vector<8x8xf32>
    %537 = tpu.matmul %532, %534, %cst_174 {dimension_numbers = #tpu.dot_dimension_numbers<[1], [1], [0], [0], [0, 0, 1, 0], [], []>} : vector<8x8xbf16>, vector<8x8xbf16>, vector<8x8xf32> -> vector<8x8xf32>
    %538 = arith.addf %537, %10 : vector<8x8xf32>
    %cst_175 = arith.constant dense<0xFF800000> : vector<8xf32>
    %539 = vector.multi_reduction <maximumf>, %538, %cst_175 [1] : vector<8x8xf32> to vector<8xf32>
    %540 = vector.shape_cast %539 : vector<8xf32> to vector<8x1xf32>
    %541 = vector.broadcast %540 : vector<8x1xf32> to vector<8x8xf32>
    %542 = arith.subf %538, %541 : vector<8x8xf32>
    %543 = math.exp %542 : vector<8x8xf32>
    %cst_176 = arith.constant dense<0.000000e+00> : vector<8xf32>
    %544 = vector.multi_reduction <add>, %543, %cst_176 [1] : vector<8x8xf32> to vector<8xf32>
    %545 = vector.shape_cast %544 : vector<8xf32> to vector<8x1xf32>
    %546 = tpu.reciprocal %545 {approx = true} : vector<8x1xf32> -> vector<8x1xf32>
    %547 = vector.broadcast %546 : vector<8x1xf32> to vector<8x8xf32>
    %548 = arith.mulf %543, %547 : vector<8x8xf32>
    %549 = arith.truncf %548 : vector<8x8xf32> to vector<8x8xbf16>
    %cst_177 = arith.constant dense<0.000000e+00> : vector<8x8xf32>
    %550 = tpu.matmul %549, %536, %cst_177 {dimension_numbers = #tpu.dot_dimension_numbers<[1], [0], [0], [1], [0, 0, 1, 1], [], []>} : vector<8x8xbf16>, vector<8x8xbf16>, vector<8x8xf32> -> vector<8x8xf32>
    %551 = vector.extract_strided_slice %508 {offsets = [0, 16], sizes = [8, 8], strides = [1, 1]} : vector<8x32xf32> to vector<8x8xf32>
    %552 = arith.truncf %551 : vector<8x8xf32> to vector<8x8xbf16>
    %553 = vector.extract_strided_slice %509 {offsets = [0, 16], sizes = [8, 8], strides = [1, 1]} : vector<8x32xf32> to vector<8x8xf32>
    %554 = arith.truncf %553 : vector<8x8xf32> to vector<8x8xbf16>
    %555 = vector.extract_strided_slice %510 {offsets = [0, 16], sizes = [8, 8], strides = [1, 1]} : vector<8x32xf32> to vector<8x8xf32>
    %556 = arith.truncf %555 : vector<8x8xf32> to vector<8x8xbf16>
    %cst_178 = arith.constant dense<0.000000e+00> : vector<8x8xf32>
    %557 = tpu.matmul %552, %554, %cst_178 {dimension_numbers = #tpu.dot_dimension_numbers<[1], [1], [0], [0], [0, 0, 1, 0], [], []>} : vector<8x8xbf16>, vector<8x8xbf16>, vector<8x8xf32> -> vector<8x8xf32>
    %558 = arith.addf %557, %10 : vector<8x8xf32>
    %cst_179 = arith.constant dense<0xFF800000> : vector<8xf32>
    %559 = vector.multi_reduction <maximumf>, %558, %cst_179 [1] : vector<8x8xf32> to vector<8xf32>
    %560 = vector.shape_cast %559 : vector<8xf32> to vector<8x1xf32>
    %561 = vector.broadcast %560 : vector<8x1xf32> to vector<8x8xf32>
    %562 = arith.subf %558, %561 : vector<8x8xf32>
    %563 = math.exp %562 : vector<8x8xf32>
    %cst_180 = arith.constant dense<0.000000e+00> : vector<8xf32>
    %564 = vector.multi_reduction <add>, %563, %cst_180 [1] : vector<8x8xf32> to vector<8xf32>
    %565 = vector.shape_cast %564 : vector<8xf32> to vector<8x1xf32>
    %566 = tpu.reciprocal %565 {approx = true} : vector<8x1xf32> -> vector<8x1xf32>
    %567 = vector.broadcast %566 : vector<8x1xf32> to vector<8x8xf32>
    %568 = arith.mulf %563, %567 : vector<8x8xf32>
    %569 = arith.truncf %568 : vector<8x8xf32> to vector<8x8xbf16>
    %cst_181 = arith.constant dense<0.000000e+00> : vector<8x8xf32>
    %570 = tpu.matmul %569, %556, %cst_181 {dimension_numbers = #tpu.dot_dimension_numbers<[1], [0], [0], [1], [0, 0, 1, 1], [], []>} : vector<8x8xbf16>, vector<8x8xbf16>, vector<8x8xf32> -> vector<8x8xf32>
    %571 = vector.extract_strided_slice %508 {offsets = [0, 24], sizes = [8, 8], strides = [1, 1]} : vector<8x32xf32> to vector<8x8xf32>
    %572 = arith.truncf %571 : vector<8x8xf32> to vector<8x8xbf16>
    %573 = vector.extract_strided_slice %509 {offsets = [0, 24], sizes = [8, 8], strides = [1, 1]} : vector<8x32xf32> to vector<8x8xf32>
    %574 = arith.truncf %573 : vector<8x8xf32> to vector<8x8xbf16>
    %575 = vector.extract_strided_slice %510 {offsets = [0, 24], sizes = [8, 8], strides = [1, 1]} : vector<8x32xf32> to vector<8x8xf32>
    %576 = arith.truncf %575 : vector<8x8xf32> to vector<8x8xbf16>
    %cst_182 = arith.constant dense<0.000000e+00> : vector<8x8xf32>
    %577 = tpu.matmul %572, %574, %cst_182 {dimension_numbers = #tpu.dot_dimension_numbers<[1], [1], [0], [0], [0, 0, 1, 0], [], []>} : vector<8x8xbf16>, vector<8x8xbf16>, vector<8x8xf32> -> vector<8x8xf32>
    %578 = arith.addf %577, %10 : vector<8x8xf32>
    %cst_183 = arith.constant dense<0xFF800000> : vector<8xf32>
    %579 = vector.multi_reduction <maximumf>, %578, %cst_183 [1] : vector<8x8xf32> to vector<8xf32>
    %580 = vector.shape_cast %579 : vector<8xf32> to vector<8x1xf32>
    %581 = vector.broadcast %580 : vector<8x1xf32> to vector<8x8xf32>
    %582 = arith.subf %578, %581 : vector<8x8xf32>
    %583 = math.exp %582 : vector<8x8xf32>
    %cst_184 = arith.constant dense<0.000000e+00> : vector<8xf32>
    %584 = vector.multi_reduction <add>, %583, %cst_184 [1] : vector<8x8xf32> to vector<8xf32>
    %585 = vector.shape_cast %584 : vector<8xf32> to vector<8x1xf32>
    %586 = tpu.reciprocal %585 {approx = true} : vector<8x1xf32> -> vector<8x1xf32>
    %587 = vector.broadcast %586 : vector<8x1xf32> to vector<8x8xf32>
    %588 = arith.mulf %583, %587 : vector<8x8xf32>
    %589 = arith.truncf %588 : vector<8x8xf32> to vector<8x8xbf16>
    %cst_185 = arith.constant dense<0.000000e+00> : vector<8x8xf32>
    %590 = tpu.matmul %589, %576, %cst_185 {dimension_numbers = #tpu.dot_dimension_numbers<[1], [0], [0], [1], [0, 0, 1, 1], [], []>} : vector<8x8xbf16>, vector<8x8xbf16>, vector<8x8xf32> -> vector<8x8xf32>
    %591 = tpu.concatenate %530, %550, %570, %590 in 1 : vector<8x8xf32>, vector<8x8xf32>, vector<8x8xf32>, vector<8x8xf32> -> vector<8x32xf32>
    %592 = vector.extract_strided_slice %507 {offsets = [8, 0], sizes = [8, 32], strides = [1, 1]} : vector<16x96xf32> to vector<8x32xf32>
    %593 = vector.extract_strided_slice %507 {offsets = [8, 32], sizes = [8, 32], strides = [1, 1]} : vector<16x96xf32> to vector<8x32xf32>
    %594 = vector.extract_strided_slice %507 {offsets = [8, 64], sizes = [8, 32], strides = [1, 1]} : vector<16x96xf32> to vector<8x32xf32>
    %595 = vector.extract_strided_slice %592 {offsets = [0, 0], sizes = [8, 8], strides = [1, 1]} : vector<8x32xf32> to vector<8x8xf32>
    %596 = arith.truncf %595 : vector<8x8xf32> to vector<8x8xbf16>
    %597 = vector.extract_strided_slice %593 {offsets = [0, 0], sizes = [8, 8], strides = [1, 1]} : vector<8x32xf32> to vector<8x8xf32>
    %598 = arith.truncf %597 : vector<8x8xf32> to vector<8x8xbf16>
    %599 = vector.extract_strided_slice %594 {offsets = [0, 0], sizes = [8, 8], strides = [1, 1]} : vector<8x32xf32> to vector<8x8xf32>
    %600 = arith.truncf %599 : vector<8x8xf32> to vector<8x8xbf16>
    %cst_186 = arith.constant dense<0.000000e+00> : vector<8x8xf32>
    %601 = tpu.matmul %596, %598, %cst_186 {dimension_numbers = #tpu.dot_dimension_numbers<[1], [1], [0], [0], [0, 0, 1, 0], [], []>} : vector<8x8xbf16>, vector<8x8xbf16>, vector<8x8xf32> -> vector<8x8xf32>
    %602 = arith.addf %601, %10 : vector<8x8xf32>
    %cst_187 = arith.constant dense<0xFF800000> : vector<8xf32>
    %603 = vector.multi_reduction <maximumf>, %602, %cst_187 [1] : vector<8x8xf32> to vector<8xf32>
    %604 = vector.shape_cast %603 : vector<8xf32> to vector<8x1xf32>
    %605 = vector.broadcast %604 : vector<8x1xf32> to vector<8x8xf32>
    %606 = arith.subf %602, %605 : vector<8x8xf32>
    %607 = math.exp %606 : vector<8x8xf32>
    %cst_188 = arith.constant dense<0.000000e+00> : vector<8xf32>
    %608 = vector.multi_reduction <add>, %607, %cst_188 [1] : vector<8x8xf32> to vector<8xf32>
    %609 = vector.shape_cast %608 : vector<8xf32> to vector<8x1xf32>
    %610 = tpu.reciprocal %609 {approx = true} : vector<8x1xf32> -> vector<8x1xf32>
    %611 = vector.broadcast %610 : vector<8x1xf32> to vector<8x8xf32>
    %612 = arith.mulf %607, %611 : vector<8x8xf32>
    %613 = arith.truncf %612 : vector<8x8xf32> to vector<8x8xbf16>
    %cst_189 = arith.constant dense<0.000000e+00> : vector<8x8xf32>
    %614 = tpu.matmul %613, %600, %cst_189 {dimension_numbers = #tpu.dot_dimension_numbers<[1], [0], [0], [1], [0, 0, 1, 1], [], []>} : vector<8x8xbf16>, vector<8x8xbf16>, vector<8x8xf32> -> vector<8x8xf32>
    %615 = vector.extract_strided_slice %592 {offsets = [0, 8], sizes = [8, 8], strides = [1, 1]} : vector<8x32xf32> to vector<8x8xf32>
    %616 = arith.truncf %615 : vector<8x8xf32> to vector<8x8xbf16>
    %617 = vector.extract_strided_slice %593 {offsets = [0, 8], sizes = [8, 8], strides = [1, 1]} : vector<8x32xf32> to vector<8x8xf32>
    %618 = arith.truncf %617 : vector<8x8xf32> to vector<8x8xbf16>
    %619 = vector.extract_strided_slice %594 {offsets = [0, 8], sizes = [8, 8], strides = [1, 1]} : vector<8x32xf32> to vector<8x8xf32>
    %620 = arith.truncf %619 : vector<8x8xf32> to vector<8x8xbf16>
    %cst_190 = arith.constant dense<0.000000e+00> : vector<8x8xf32>
    %621 = tpu.matmul %616, %618, %cst_190 {dimension_numbers = #tpu.dot_dimension_numbers<[1], [1], [0], [0], [0, 0, 1, 0], [], []>} : vector<8x8xbf16>, vector<8x8xbf16>, vector<8x8xf32> -> vector<8x8xf32>
    %622 = arith.addf %621, %10 : vector<8x8xf32>
    %cst_191 = arith.constant dense<0xFF800000> : vector<8xf32>
    %623 = vector.multi_reduction <maximumf>, %622, %cst_191 [1] : vector<8x8xf32> to vector<8xf32>
    %624 = vector.shape_cast %623 : vector<8xf32> to vector<8x1xf32>
    %625 = vector.broadcast %624 : vector<8x1xf32> to vector<8x8xf32>
    %626 = arith.subf %622, %625 : vector<8x8xf32>
    %627 = math.exp %626 : vector<8x8xf32>
    %cst_192 = arith.constant dense<0.000000e+00> : vector<8xf32>
    %628 = vector.multi_reduction <add>, %627, %cst_192 [1] : vector<8x8xf32> to vector<8xf32>
    %629 = vector.shape_cast %628 : vector<8xf32> to vector<8x1xf32>
    %630 = tpu.reciprocal %629 {approx = true} : vector<8x1xf32> -> vector<8x1xf32>
    %631 = vector.broadcast %630 : vector<8x1xf32> to vector<8x8xf32>
    %632 = arith.mulf %627, %631 : vector<8x8xf32>
    %633 = arith.truncf %632 : vector<8x8xf32> to vector<8x8xbf16>
    %cst_193 = arith.constant dense<0.000000e+00> : vector<8x8xf32>
    %634 = tpu.matmul %633, %620, %cst_193 {dimension_numbers = #tpu.dot_dimension_numbers<[1], [0], [0], [1], [0, 0, 1, 1], [], []>} : vector<8x8xbf16>, vector<8x8xbf16>, vector<8x8xf32> -> vector<8x8xf32>
    %635 = vector.extract_strided_slice %592 {offsets = [0, 16], sizes = [8, 8], strides = [1, 1]} : vector<8x32xf32> to vector<8x8xf32>
    %636 = arith.truncf %635 : vector<8x8xf32> to vector<8x8xbf16>
    %637 = vector.extract_strided_slice %593 {offsets = [0, 16], sizes = [8, 8], strides = [1, 1]} : vector<8x32xf32> to vector<8x8xf32>
    %638 = arith.truncf %637 : vector<8x8xf32> to vector<8x8xbf16>
    %639 = vector.extract_strided_slice %594 {offsets = [0, 16], sizes = [8, 8], strides = [1, 1]} : vector<8x32xf32> to vector<8x8xf32>
    %640 = arith.truncf %639 : vector<8x8xf32> to vector<8x8xbf16>
    %cst_194 = arith.constant dense<0.000000e+00> : vector<8x8xf32>
    %641 = tpu.matmul %636, %638, %cst_194 {dimension_numbers = #tpu.dot_dimension_numbers<[1], [1], [0], [0], [0, 0, 1, 0], [], []>} : vector<8x8xbf16>, vector<8x8xbf16>, vector<8x8xf32> -> vector<8x8xf32>
    %642 = arith.addf %641, %10 : vector<8x8xf32>
    %cst_195 = arith.constant dense<0xFF800000> : vector<8xf32>
    %643 = vector.multi_reduction <maximumf>, %642, %cst_195 [1] : vector<8x8xf32> to vector<8xf32>
    %644 = vector.shape_cast %643 : vector<8xf32> to vector<8x1xf32>
    %645 = vector.broadcast %644 : vector<8x1xf32> to vector<8x8xf32>
    %646 = arith.subf %642, %645 : vector<8x8xf32>
    %647 = math.exp %646 : vector<8x8xf32>
    %cst_196 = arith.constant dense<0.000000e+00> : vector<8xf32>
    %648 = vector.multi_reduction <add>, %647, %cst_196 [1] : vector<8x8xf32> to vector<8xf32>
    %649 = vector.shape_cast %648 : vector<8xf32> to vector<8x1xf32>
    %650 = tpu.reciprocal %649 {approx = true} : vector<8x1xf32> -> vector<8x1xf32>
    %651 = vector.broadcast %650 : vector<8x1xf32> to vector<8x8xf32>
    %652 = arith.mulf %647, %651 : vector<8x8xf32>
    %653 = arith.truncf %652 : vector<8x8xf32> to vector<8x8xbf16>
    %cst_197 = arith.constant dense<0.000000e+00> : vector<8x8xf32>
    %654 = tpu.matmul %653, %640, %cst_197 {dimension_numbers = #tpu.dot_dimension_numbers<[1], [0], [0], [1], [0, 0, 1, 1], [], []>} : vector<8x8xbf16>, vector<8x8xbf16>, vector<8x8xf32> -> vector<8x8xf32>
    %655 = vector.extract_strided_slice %592 {offsets = [0, 24], sizes = [8, 8], strides = [1, 1]} : vector<8x32xf32> to vector<8x8xf32>
    %656 = arith.truncf %655 : vector<8x8xf32> to vector<8x8xbf16>
    %657 = vector.extract_strided_slice %593 {offsets = [0, 24], sizes = [8, 8], strides = [1, 1]} : vector<8x32xf32> to vector<8x8xf32>
    %658 = arith.truncf %657 : vector<8x8xf32> to vector<8x8xbf16>
    %659 = vector.extract_strided_slice %594 {offsets = [0, 24], sizes = [8, 8], strides = [1, 1]} : vector<8x32xf32> to vector<8x8xf32>
    %660 = arith.truncf %659 : vector<8x8xf32> to vector<8x8xbf16>
    %cst_198 = arith.constant dense<0.000000e+00> : vector<8x8xf32>
    %661 = tpu.matmul %656, %658, %cst_198 {dimension_numbers = #tpu.dot_dimension_numbers<[1], [1], [0], [0], [0, 0, 1, 0], [], []>} : vector<8x8xbf16>, vector<8x8xbf16>, vector<8x8xf32> -> vector<8x8xf32>
    %662 = arith.addf %661, %10 : vector<8x8xf32>
    %cst_199 = arith.constant dense<0xFF800000> : vector<8xf32>
    %663 = vector.multi_reduction <maximumf>, %662, %cst_199 [1] : vector<8x8xf32> to vector<8xf32>
    %664 = vector.shape_cast %663 : vector<8xf32> to vector<8x1xf32>
    %665 = vector.broadcast %664 : vector<8x1xf32> to vector<8x8xf32>
    %666 = arith.subf %662, %665 : vector<8x8xf32>
    %667 = math.exp %666 : vector<8x8xf32>
    %cst_200 = arith.constant dense<0.000000e+00> : vector<8xf32>
    %668 = vector.multi_reduction <add>, %667, %cst_200 [1] : vector<8x8xf32> to vector<8xf32>
    %669 = vector.shape_cast %668 : vector<8xf32> to vector<8x1xf32>
    %670 = tpu.reciprocal %669 {approx = true} : vector<8x1xf32> -> vector<8x1xf32>
    %671 = vector.broadcast %670 : vector<8x1xf32> to vector<8x8xf32>
    %672 = arith.mulf %667, %671 : vector<8x8xf32>
    %673 = arith.truncf %672 : vector<8x8xf32> to vector<8x8xbf16>
    %cst_201 = arith.constant dense<0.000000e+00> : vector<8x8xf32>
    %674 = tpu.matmul %673, %660, %cst_201 {dimension_numbers = #tpu.dot_dimension_numbers<[1], [0], [0], [1], [0, 0, 1, 1], [], []>} : vector<8x8xbf16>, vector<8x8xbf16>, vector<8x8xf32> -> vector<8x8xf32>
    %675 = tpu.concatenate %614, %634, %654, %674 in 1 : vector<8x8xf32>, vector<8x8xf32>, vector<8x8xf32>, vector<8x8xf32> -> vector<8x32xf32>
    %676 = tpu.concatenate %591, %675 in 0 : vector<8x32xf32>, vector<8x32xf32> -> vector<16x32xf32>
    %677 = arith.truncf %676 : vector<16x32xf32> to vector<16x32xbf16>
    %c1_202 = arith.constant 1 : index
    %c0_203 = arith.constant 0 : index
    %c0_204 = arith.constant 0 : index
    %678 = vector.load %arg6[%c1_202, %c0_203, %c0_204] : memref<2x32x32xbf16, #tpu.memory_space<vmem>>, vector<1x32x32xbf16>
    %679 = vector.shape_cast %678 : vector<1x32x32xbf16> to vector<32x32xbf16>
    %cst_205 = arith.constant dense<0.000000e+00> : vector<16x32xf32>
    %680 = tpu.matmul %677, %679, %cst_205 {dimension_numbers = #tpu.dot_dimension_numbers<[1], [0], [0], [1], [0, 0, 1, 1], [], []>} : vector<16x32xbf16>, vector<32x32xbf16>, vector<16x32xf32> -> vector<16x32xf32>
    %c1_206 = arith.constant 1 : index
    %c0_207 = arith.constant 0 : index
    %c0_208 = arith.constant 0 : index
    %681 = vector.load %arg7[%c1_206, %c0_207, %c0_208] : memref<2x1x32xf32, #tpu.memory_space<vmem>>, vector<1x1x32xf32>
    %682 = vector.shape_cast %681 : vector<1x1x32xf32> to vector<1x32xf32>
    %683 = vector.broadcast %682 : vector<1x32xf32> to vector<16x32xf32>
    %684 = arith.addf %680, %683 : vector<16x32xf32>
    %685 = arith.addf %499, %684 : vector<16x32xf32>
    %c1_209 = arith.constant 1 : index
    %c0_210 = arith.constant 0 : index
    %c0_211 = arith.constant 0 : index
    %c0_212 = arith.constant 0 : index
    %686 = vector.load %arg18[%c1_209, %c0_210, %c0_211, %c0_212] : memref<2x3x1x32xf32, #tpu.memory_space<vmem>>, vector<1x1x1x32xf32>
    %687 = vector.shape_cast %686 : vector<1x1x1x32xf32> to vector<1x32xf32>
    %c1_213 = arith.constant 1 : index
    %c0_214 = arith.constant 0 : index
    %c0_215 = arith.constant 0 : index
    %c0_216 = arith.constant 0 : index
    %688 = vector.load %arg19[%c1_213, %c0_214, %c0_215, %c0_216] : memref<2x3x1x32xf32, #tpu.memory_space<vmem>>, vector<1x1x1x32xf32>
    %689 = vector.shape_cast %688 : vector<1x1x1x32xf32> to vector<1x32xf32>
    %cst_217 = arith.constant dense<0.000000e+00> : vector<16xf32>
    %690 = vector.multi_reduction <add>, %685, %cst_217 [1] : vector<16x32xf32> to vector<16xf32>
    %691 = vector.shape_cast %690 : vector<16xf32> to vector<16x1xf32>
    %cst_218 = arith.constant 3.200000e+01 : f32
    %692 = vector.broadcast %cst_218 : f32 to vector<16x1xf32>
    %693 = arith.divf %691, %692 : vector<16x1xf32>
    %694 = vector.broadcast %693 : vector<16x1xf32> to vector<16x32xf32>
    %695 = arith.subf %685, %694 : vector<16x32xf32>
    %696 = arith.mulf %695, %695 : vector<16x32xf32>
    %cst_219 = arith.constant dense<0.000000e+00> : vector<16xf32>
    %697 = vector.multi_reduction <add>, %696, %cst_219 [1] : vector<16x32xf32> to vector<16xf32>
    %698 = vector.shape_cast %697 : vector<16xf32> to vector<16x1xf32>
    %cst_220 = arith.constant 3.200000e+01 : f32
    %699 = vector.broadcast %cst_220 : f32 to vector<16x1xf32>
    %700 = arith.divf %698, %699 : vector<16x1xf32>
    %701 = vector.broadcast %693 : vector<16x1xf32> to vector<16x32xf32>
    %702 = arith.subf %685, %701 : vector<16x32xf32>
    %cst_221 = arith.constant 9.99999974E-6 : f32
    %703 = vector.broadcast %cst_221 : f32 to vector<16x1xf32>
    %704 = arith.addf %700, %703 : vector<16x1xf32>
    %705 = math.rsqrt %704 : vector<16x1xf32>
    %706 = vector.broadcast %705 : vector<16x1xf32> to vector<16x32xf32>
    %707 = arith.mulf %702, %706 : vector<16x32xf32>
    %708 = vector.broadcast %687 : vector<1x32xf32> to vector<16x32xf32>
    %709 = arith.mulf %707, %708 : vector<16x32xf32>
    %710 = vector.broadcast %689 : vector<1x32xf32> to vector<16x32xf32>
    %711 = arith.addf %709, %710 : vector<16x32xf32>
    %712 = arith.truncf %711 : vector<16x32xf32> to vector<16x32xbf16>
    %c1_222 = arith.constant 1 : index
    %c0_223 = arith.constant 0 : index
    %c0_224 = arith.constant 0 : index
    %713 = vector.load %arg8[%c1_222, %c0_223, %c0_224] : memref<2x32x32xbf16, #tpu.memory_space<vmem>>, vector<1x32x32xbf16>
    %714 = vector.shape_cast %713 : vector<1x32x32xbf16> to vector<32x32xbf16>
    %cst_225 = arith.constant dense<0.000000e+00> : vector<16x32xf32>
    %715 = tpu.matmul %712, %714, %cst_225 {dimension_numbers = #tpu.dot_dimension_numbers<[1], [0], [0], [1], [0, 0, 1, 1], [], []>} : vector<16x32xbf16>, vector<32x32xbf16>, vector<16x32xf32> -> vector<16x32xf32>
    %c1_226 = arith.constant 1 : index
    %c0_227 = arith.constant 0 : index
    %c0_228 = arith.constant 0 : index
    %716 = vector.load %arg9[%c1_226, %c0_227, %c0_228] : memref<2x1x32xf32, #tpu.memory_space<vmem>>, vector<1x1x32xf32>
    %717 = vector.shape_cast %716 : vector<1x1x32xf32> to vector<1x32xf32>
    %718 = vector.broadcast %717 : vector<1x32xf32> to vector<16x32xf32>
    %719 = arith.addf %715, %718 : vector<16x32xf32>
    %c1_229 = arith.constant 1 : index
    %c0_230 = arith.constant 0 : index
    %c0_231 = arith.constant 0 : index
    %720 = vector.load %arg10[%c1_229, %c0_230, %c0_231] : memref<2x32x64xbf16, #tpu.memory_space<vmem>>, vector<1x32x64xbf16>
    %721 = vector.shape_cast %720 : vector<1x32x64xbf16> to vector<32x64xbf16>
    %cst_232 = arith.constant dense<0.000000e+00> : vector<16x64xf32>
    %722 = tpu.matmul %4, %721, %cst_232 {dimension_numbers = #tpu.dot_dimension_numbers<[1], [0], [0], [1], [0, 0, 1, 1], [], []>} : vector<16x32xbf16>, vector<32x64xbf16>, vector<16x64xf32> -> vector<16x64xf32>
    %c1_233 = arith.constant 1 : index
    %c0_234 = arith.constant 0 : index
    %c0_235 = arith.constant 0 : index
    %723 = vector.load %arg11[%c1_233, %c0_234, %c0_235] : memref<2x1x64xf32, #tpu.memory_space<vmem>>, vector<1x1x64xf32>
    %724 = vector.shape_cast %723 : vector<1x1x64xf32> to vector<1x64xf32>
    %725 = vector.broadcast %724 : vector<1x64xf32> to vector<16x64xf32>
    %726 = arith.addf %722, %725 : vector<16x64xf32>
    %727 = vector.extract_strided_slice %719 {offsets = [0, 0], sizes = [8, 32], strides = [1, 1]} : vector<16x32xf32> to vector<8x32xf32>
    %728 = vector.extract_strided_slice %726 {offsets = [0, 0], sizes = [8, 32], strides = [1, 1]} : vector<16x64xf32> to vector<8x32xf32>
    %729 = vector.extract_strided_slice %726 {offsets = [0, 32], sizes = [8, 32], strides = [1, 1]} : vector<16x64xf32> to vector<8x32xf32>
    %730 = vector.extract_strided_slice %727 {offsets = [0, 0], sizes = [8, 8], strides = [1, 1]} : vector<8x32xf32> to vector<8x8xf32>
    %731 = arith.truncf %730 : vector<8x8xf32> to vector<8x8xbf16>
    %732 = vector.extract_strided_slice %728 {offsets = [0, 0], sizes = [8, 8], strides = [1, 1]} : vector<8x32xf32> to vector<8x8xf32>
    %733 = arith.truncf %732 : vector<8x8xf32> to vector<8x8xbf16>
    %734 = vector.extract_strided_slice %729 {offsets = [0, 0], sizes = [8, 8], strides = [1, 1]} : vector<8x32xf32> to vector<8x8xf32>
    %735 = arith.truncf %734 : vector<8x8xf32> to vector<8x8xbf16>
    %cst_236 = arith.constant dense<0.000000e+00> : vector<8x8xf32>
    %736 = tpu.matmul %731, %733, %cst_236 {dimension_numbers = #tpu.dot_dimension_numbers<[1], [1], [0], [0], [0, 0, 1, 0], [], []>} : vector<8x8xbf16>, vector<8x8xbf16>, vector<8x8xf32> -> vector<8x8xf32>
    %737 = arith.addf %736, %17 : vector<8x8xf32>
    %cst_237 = arith.constant dense<0xFF800000> : vector<8xf32>
    %738 = vector.multi_reduction <maximumf>, %737, %cst_237 [1] : vector<8x8xf32> to vector<8xf32>
    %739 = vector.shape_cast %738 : vector<8xf32> to vector<8x1xf32>
    %740 = vector.broadcast %739 : vector<8x1xf32> to vector<8x8xf32>
    %741 = arith.subf %737, %740 : vector<8x8xf32>
    %742 = math.exp %741 : vector<8x8xf32>
    %cst_238 = arith.constant dense<0.000000e+00> : vector<8xf32>
    %743 = vector.multi_reduction <add>, %742, %cst_238 [1] : vector<8x8xf32> to vector<8xf32>
    %744 = vector.shape_cast %743 : vector<8xf32> to vector<8x1xf32>
    %745 = tpu.reciprocal %744 {approx = true} : vector<8x1xf32> -> vector<8x1xf32>
    %746 = vector.broadcast %745 : vector<8x1xf32> to vector<8x8xf32>
    %747 = arith.mulf %742, %746 : vector<8x8xf32>
    %748 = arith.truncf %747 : vector<8x8xf32> to vector<8x8xbf16>
    %cst_239 = arith.constant dense<0.000000e+00> : vector<8x8xf32>
    %749 = tpu.matmul %748, %735, %cst_239 {dimension_numbers = #tpu.dot_dimension_numbers<[1], [0], [0], [1], [0, 0, 1, 1], [], []>} : vector<8x8xbf16>, vector<8x8xbf16>, vector<8x8xf32> -> vector<8x8xf32>
    %750 = vector.extract_strided_slice %727 {offsets = [0, 8], sizes = [8, 8], strides = [1, 1]} : vector<8x32xf32> to vector<8x8xf32>
    %751 = arith.truncf %750 : vector<8x8xf32> to vector<8x8xbf16>
    %752 = vector.extract_strided_slice %728 {offsets = [0, 8], sizes = [8, 8], strides = [1, 1]} : vector<8x32xf32> to vector<8x8xf32>
    %753 = arith.truncf %752 : vector<8x8xf32> to vector<8x8xbf16>
    %754 = vector.extract_strided_slice %729 {offsets = [0, 8], sizes = [8, 8], strides = [1, 1]} : vector<8x32xf32> to vector<8x8xf32>
    %755 = arith.truncf %754 : vector<8x8xf32> to vector<8x8xbf16>
    %cst_240 = arith.constant dense<0.000000e+00> : vector<8x8xf32>
    %756 = tpu.matmul %751, %753, %cst_240 {dimension_numbers = #tpu.dot_dimension_numbers<[1], [1], [0], [0], [0, 0, 1, 0], [], []>} : vector<8x8xbf16>, vector<8x8xbf16>, vector<8x8xf32> -> vector<8x8xf32>
    %757 = arith.addf %756, %17 : vector<8x8xf32>
    %cst_241 = arith.constant dense<0xFF800000> : vector<8xf32>
    %758 = vector.multi_reduction <maximumf>, %757, %cst_241 [1] : vector<8x8xf32> to vector<8xf32>
    %759 = vector.shape_cast %758 : vector<8xf32> to vector<8x1xf32>
    %760 = vector.broadcast %759 : vector<8x1xf32> to vector<8x8xf32>
    %761 = arith.subf %757, %760 : vector<8x8xf32>
    %762 = math.exp %761 : vector<8x8xf32>
    %cst_242 = arith.constant dense<0.000000e+00> : vector<8xf32>
    %763 = vector.multi_reduction <add>, %762, %cst_242 [1] : vector<8x8xf32> to vector<8xf32>
    %764 = vector.shape_cast %763 : vector<8xf32> to vector<8x1xf32>
    %765 = tpu.reciprocal %764 {approx = true} : vector<8x1xf32> -> vector<8x1xf32>
    %766 = vector.broadcast %765 : vector<8x1xf32> to vector<8x8xf32>
    %767 = arith.mulf %762, %766 : vector<8x8xf32>
    %768 = arith.truncf %767 : vector<8x8xf32> to vector<8x8xbf16>
    %cst_243 = arith.constant dense<0.000000e+00> : vector<8x8xf32>
    %769 = tpu.matmul %768, %755, %cst_243 {dimension_numbers = #tpu.dot_dimension_numbers<[1], [0], [0], [1], [0, 0, 1, 1], [], []>} : vector<8x8xbf16>, vector<8x8xbf16>, vector<8x8xf32> -> vector<8x8xf32>
    %770 = vector.extract_strided_slice %727 {offsets = [0, 16], sizes = [8, 8], strides = [1, 1]} : vector<8x32xf32> to vector<8x8xf32>
    %771 = arith.truncf %770 : vector<8x8xf32> to vector<8x8xbf16>
    %772 = vector.extract_strided_slice %728 {offsets = [0, 16], sizes = [8, 8], strides = [1, 1]} : vector<8x32xf32> to vector<8x8xf32>
    %773 = arith.truncf %772 : vector<8x8xf32> to vector<8x8xbf16>
    %774 = vector.extract_strided_slice %729 {offsets = [0, 16], sizes = [8, 8], strides = [1, 1]} : vector<8x32xf32> to vector<8x8xf32>
    %775 = arith.truncf %774 : vector<8x8xf32> to vector<8x8xbf16>
    %cst_244 = arith.constant dense<0.000000e+00> : vector<8x8xf32>
    %776 = tpu.matmul %771, %773, %cst_244 {dimension_numbers = #tpu.dot_dimension_numbers<[1], [1], [0], [0], [0, 0, 1, 0], [], []>} : vector<8x8xbf16>, vector<8x8xbf16>, vector<8x8xf32> -> vector<8x8xf32>
    %777 = arith.addf %776, %17 : vector<8x8xf32>
    %cst_245 = arith.constant dense<0xFF800000> : vector<8xf32>
    %778 = vector.multi_reduction <maximumf>, %777, %cst_245 [1] : vector<8x8xf32> to vector<8xf32>
    %779 = vector.shape_cast %778 : vector<8xf32> to vector<8x1xf32>
    %780 = vector.broadcast %779 : vector<8x1xf32> to vector<8x8xf32>
    %781 = arith.subf %777, %780 : vector<8x8xf32>
    %782 = math.exp %781 : vector<8x8xf32>
    %cst_246 = arith.constant dense<0.000000e+00> : vector<8xf32>
    %783 = vector.multi_reduction <add>, %782, %cst_246 [1] : vector<8x8xf32> to vector<8xf32>
    %784 = vector.shape_cast %783 : vector<8xf32> to vector<8x1xf32>
    %785 = tpu.reciprocal %784 {approx = true} : vector<8x1xf32> -> vector<8x1xf32>
    %786 = vector.broadcast %785 : vector<8x1xf32> to vector<8x8xf32>
    %787 = arith.mulf %782, %786 : vector<8x8xf32>
    %788 = arith.truncf %787 : vector<8x8xf32> to vector<8x8xbf16>
    %cst_247 = arith.constant dense<0.000000e+00> : vector<8x8xf32>
    %789 = tpu.matmul %788, %775, %cst_247 {dimension_numbers = #tpu.dot_dimension_numbers<[1], [0], [0], [1], [0, 0, 1, 1], [], []>} : vector<8x8xbf16>, vector<8x8xbf16>, vector<8x8xf32> -> vector<8x8xf32>
    %790 = vector.extract_strided_slice %727 {offsets = [0, 24], sizes = [8, 8], strides = [1, 1]} : vector<8x32xf32> to vector<8x8xf32>
    %791 = arith.truncf %790 : vector<8x8xf32> to vector<8x8xbf16>
    %792 = vector.extract_strided_slice %728 {offsets = [0, 24], sizes = [8, 8], strides = [1, 1]} : vector<8x32xf32> to vector<8x8xf32>
    %793 = arith.truncf %792 : vector<8x8xf32> to vector<8x8xbf16>
    %794 = vector.extract_strided_slice %729 {offsets = [0, 24], sizes = [8, 8], strides = [1, 1]} : vector<8x32xf32> to vector<8x8xf32>
    %795 = arith.truncf %794 : vector<8x8xf32> to vector<8x8xbf16>
    %cst_248 = arith.constant dense<0.000000e+00> : vector<8x8xf32>
    %796 = tpu.matmul %791, %793, %cst_248 {dimension_numbers = #tpu.dot_dimension_numbers<[1], [1], [0], [0], [0, 0, 1, 0], [], []>} : vector<8x8xbf16>, vector<8x8xbf16>, vector<8x8xf32> -> vector<8x8xf32>
    %797 = arith.addf %796, %17 : vector<8x8xf32>
    %cst_249 = arith.constant dense<0xFF800000> : vector<8xf32>
    %798 = vector.multi_reduction <maximumf>, %797, %cst_249 [1] : vector<8x8xf32> to vector<8xf32>
    %799 = vector.shape_cast %798 : vector<8xf32> to vector<8x1xf32>
    %800 = vector.broadcast %799 : vector<8x1xf32> to vector<8x8xf32>
    %801 = arith.subf %797, %800 : vector<8x8xf32>
    %802 = math.exp %801 : vector<8x8xf32>
    %cst_250 = arith.constant dense<0.000000e+00> : vector<8xf32>
    %803 = vector.multi_reduction <add>, %802, %cst_250 [1] : vector<8x8xf32> to vector<8xf32>
    %804 = vector.shape_cast %803 : vector<8xf32> to vector<8x1xf32>
    %805 = tpu.reciprocal %804 {approx = true} : vector<8x1xf32> -> vector<8x1xf32>
    %806 = vector.broadcast %805 : vector<8x1xf32> to vector<8x8xf32>
    %807 = arith.mulf %802, %806 : vector<8x8xf32>
    %808 = arith.truncf %807 : vector<8x8xf32> to vector<8x8xbf16>
    %cst_251 = arith.constant dense<0.000000e+00> : vector<8x8xf32>
    %809 = tpu.matmul %808, %795, %cst_251 {dimension_numbers = #tpu.dot_dimension_numbers<[1], [0], [0], [1], [0, 0, 1, 1], [], []>} : vector<8x8xbf16>, vector<8x8xbf16>, vector<8x8xf32> -> vector<8x8xf32>
    %810 = tpu.concatenate %749, %769, %789, %809 in 1 : vector<8x8xf32>, vector<8x8xf32>, vector<8x8xf32>, vector<8x8xf32> -> vector<8x32xf32>
    %811 = vector.extract_strided_slice %719 {offsets = [8, 0], sizes = [8, 32], strides = [1, 1]} : vector<16x32xf32> to vector<8x32xf32>
    %812 = vector.extract_strided_slice %726 {offsets = [8, 0], sizes = [8, 32], strides = [1, 1]} : vector<16x64xf32> to vector<8x32xf32>
    %813 = vector.extract_strided_slice %726 {offsets = [8, 32], sizes = [8, 32], strides = [1, 1]} : vector<16x64xf32> to vector<8x32xf32>
    %814 = vector.extract_strided_slice %811 {offsets = [0, 0], sizes = [8, 8], strides = [1, 1]} : vector<8x32xf32> to vector<8x8xf32>
    %815 = arith.truncf %814 : vector<8x8xf32> to vector<8x8xbf16>
    %816 = vector.extract_strided_slice %812 {offsets = [0, 0], sizes = [8, 8], strides = [1, 1]} : vector<8x32xf32> to vector<8x8xf32>
    %817 = arith.truncf %816 : vector<8x8xf32> to vector<8x8xbf16>
    %818 = vector.extract_strided_slice %813 {offsets = [0, 0], sizes = [8, 8], strides = [1, 1]} : vector<8x32xf32> to vector<8x8xf32>
    %819 = arith.truncf %818 : vector<8x8xf32> to vector<8x8xbf16>
    %cst_252 = arith.constant dense<0.000000e+00> : vector<8x8xf32>
    %820 = tpu.matmul %815, %817, %cst_252 {dimension_numbers = #tpu.dot_dimension_numbers<[1], [1], [0], [0], [0, 0, 1, 0], [], []>} : vector<8x8xbf16>, vector<8x8xbf16>, vector<8x8xf32> -> vector<8x8xf32>
    %821 = arith.addf %820, %23 : vector<8x8xf32>
    %cst_253 = arith.constant dense<0xFF800000> : vector<8xf32>
    %822 = vector.multi_reduction <maximumf>, %821, %cst_253 [1] : vector<8x8xf32> to vector<8xf32>
    %823 = vector.shape_cast %822 : vector<8xf32> to vector<8x1xf32>
    %824 = vector.broadcast %823 : vector<8x1xf32> to vector<8x8xf32>
    %825 = arith.subf %821, %824 : vector<8x8xf32>
    %826 = math.exp %825 : vector<8x8xf32>
    %cst_254 = arith.constant dense<0.000000e+00> : vector<8xf32>
    %827 = vector.multi_reduction <add>, %826, %cst_254 [1] : vector<8x8xf32> to vector<8xf32>
    %828 = vector.shape_cast %827 : vector<8xf32> to vector<8x1xf32>
    %829 = tpu.reciprocal %828 {approx = true} : vector<8x1xf32> -> vector<8x1xf32>
    %830 = vector.broadcast %829 : vector<8x1xf32> to vector<8x8xf32>
    %831 = arith.mulf %826, %830 : vector<8x8xf32>
    %832 = arith.truncf %831 : vector<8x8xf32> to vector<8x8xbf16>
    %cst_255 = arith.constant dense<0.000000e+00> : vector<8x8xf32>
    %833 = tpu.matmul %832, %819, %cst_255 {dimension_numbers = #tpu.dot_dimension_numbers<[1], [0], [0], [1], [0, 0, 1, 1], [], []>} : vector<8x8xbf16>, vector<8x8xbf16>, vector<8x8xf32> -> vector<8x8xf32>
    %834 = vector.extract_strided_slice %811 {offsets = [0, 8], sizes = [8, 8], strides = [1, 1]} : vector<8x32xf32> to vector<8x8xf32>
    %835 = arith.truncf %834 : vector<8x8xf32> to vector<8x8xbf16>
    %836 = vector.extract_strided_slice %812 {offsets = [0, 8], sizes = [8, 8], strides = [1, 1]} : vector<8x32xf32> to vector<8x8xf32>
    %837 = arith.truncf %836 : vector<8x8xf32> to vector<8x8xbf16>
    %838 = vector.extract_strided_slice %813 {offsets = [0, 8], sizes = [8, 8], strides = [1, 1]} : vector<8x32xf32> to vector<8x8xf32>
    %839 = arith.truncf %838 : vector<8x8xf32> to vector<8x8xbf16>
    %cst_256 = arith.constant dense<0.000000e+00> : vector<8x8xf32>
    %840 = tpu.matmul %835, %837, %cst_256 {dimension_numbers = #tpu.dot_dimension_numbers<[1], [1], [0], [0], [0, 0, 1, 0], [], []>} : vector<8x8xbf16>, vector<8x8xbf16>, vector<8x8xf32> -> vector<8x8xf32>
    %841 = arith.addf %840, %23 : vector<8x8xf32>
    %cst_257 = arith.constant dense<0xFF800000> : vector<8xf32>
    %842 = vector.multi_reduction <maximumf>, %841, %cst_257 [1] : vector<8x8xf32> to vector<8xf32>
    %843 = vector.shape_cast %842 : vector<8xf32> to vector<8x1xf32>
    %844 = vector.broadcast %843 : vector<8x1xf32> to vector<8x8xf32>
    %845 = arith.subf %841, %844 : vector<8x8xf32>
    %846 = math.exp %845 : vector<8x8xf32>
    %cst_258 = arith.constant dense<0.000000e+00> : vector<8xf32>
    %847 = vector.multi_reduction <add>, %846, %cst_258 [1] : vector<8x8xf32> to vector<8xf32>
    %848 = vector.shape_cast %847 : vector<8xf32> to vector<8x1xf32>
    %849 = tpu.reciprocal %848 {approx = true} : vector<8x1xf32> -> vector<8x1xf32>
    %850 = vector.broadcast %849 : vector<8x1xf32> to vector<8x8xf32>
    %851 = arith.mulf %846, %850 : vector<8x8xf32>
    %852 = arith.truncf %851 : vector<8x8xf32> to vector<8x8xbf16>
    %cst_259 = arith.constant dense<0.000000e+00> : vector<8x8xf32>
    %853 = tpu.matmul %852, %839, %cst_259 {dimension_numbers = #tpu.dot_dimension_numbers<[1], [0], [0], [1], [0, 0, 1, 1], [], []>} : vector<8x8xbf16>, vector<8x8xbf16>, vector<8x8xf32> -> vector<8x8xf32>
    %854 = vector.extract_strided_slice %811 {offsets = [0, 16], sizes = [8, 8], strides = [1, 1]} : vector<8x32xf32> to vector<8x8xf32>
    %855 = arith.truncf %854 : vector<8x8xf32> to vector<8x8xbf16>
    %856 = vector.extract_strided_slice %812 {offsets = [0, 16], sizes = [8, 8], strides = [1, 1]} : vector<8x32xf32> to vector<8x8xf32>
    %857 = arith.truncf %856 : vector<8x8xf32> to vector<8x8xbf16>
    %858 = vector.extract_strided_slice %813 {offsets = [0, 16], sizes = [8, 8], strides = [1, 1]} : vector<8x32xf32> to vector<8x8xf32>
    %859 = arith.truncf %858 : vector<8x8xf32> to vector<8x8xbf16>
    %cst_260 = arith.constant dense<0.000000e+00> : vector<8x8xf32>
    %860 = tpu.matmul %855, %857, %cst_260 {dimension_numbers = #tpu.dot_dimension_numbers<[1], [1], [0], [0], [0, 0, 1, 0], [], []>} : vector<8x8xbf16>, vector<8x8xbf16>, vector<8x8xf32> -> vector<8x8xf32>
    %861 = arith.addf %860, %23 : vector<8x8xf32>
    %cst_261 = arith.constant dense<0xFF800000> : vector<8xf32>
    %862 = vector.multi_reduction <maximumf>, %861, %cst_261 [1] : vector<8x8xf32> to vector<8xf32>
    %863 = vector.shape_cast %862 : vector<8xf32> to vector<8x1xf32>
    %864 = vector.broadcast %863 : vector<8x1xf32> to vector<8x8xf32>
    %865 = arith.subf %861, %864 : vector<8x8xf32>
    %866 = math.exp %865 : vector<8x8xf32>
    %cst_262 = arith.constant dense<0.000000e+00> : vector<8xf32>
    %867 = vector.multi_reduction <add>, %866, %cst_262 [1] : vector<8x8xf32> to vector<8xf32>
    %868 = vector.shape_cast %867 : vector<8xf32> to vector<8x1xf32>
    %869 = tpu.reciprocal %868 {approx = true} : vector<8x1xf32> -> vector<8x1xf32>
    %870 = vector.broadcast %869 : vector<8x1xf32> to vector<8x8xf32>
    %871 = arith.mulf %866, %870 : vector<8x8xf32>
    %872 = arith.truncf %871 : vector<8x8xf32> to vector<8x8xbf16>
    %cst_263 = arith.constant dense<0.000000e+00> : vector<8x8xf32>
    %873 = tpu.matmul %872, %859, %cst_263 {dimension_numbers = #tpu.dot_dimension_numbers<[1], [0], [0], [1], [0, 0, 1, 1], [], []>} : vector<8x8xbf16>, vector<8x8xbf16>, vector<8x8xf32> -> vector<8x8xf32>
    %874 = vector.extract_strided_slice %811 {offsets = [0, 24], sizes = [8, 8], strides = [1, 1]} : vector<8x32xf32> to vector<8x8xf32>
    %875 = arith.truncf %874 : vector<8x8xf32> to vector<8x8xbf16>
    %876 = vector.extract_strided_slice %812 {offsets = [0, 24], sizes = [8, 8], strides = [1, 1]} : vector<8x32xf32> to vector<8x8xf32>
    %877 = arith.truncf %876 : vector<8x8xf32> to vector<8x8xbf16>
    %878 = vector.extract_strided_slice %813 {offsets = [0, 24], sizes = [8, 8], strides = [1, 1]} : vector<8x32xf32> to vector<8x8xf32>
    %879 = arith.truncf %878 : vector<8x8xf32> to vector<8x8xbf16>
    %cst_264 = arith.constant dense<0.000000e+00> : vector<8x8xf32>
    %880 = tpu.matmul %875, %877, %cst_264 {dimension_numbers = #tpu.dot_dimension_numbers<[1], [1], [0], [0], [0, 0, 1, 0], [], []>} : vector<8x8xbf16>, vector<8x8xbf16>, vector<8x8xf32> -> vector<8x8xf32>
    %881 = arith.addf %880, %23 : vector<8x8xf32>
    %cst_265 = arith.constant dense<0xFF800000> : vector<8xf32>
    %882 = vector.multi_reduction <maximumf>, %881, %cst_265 [1] : vector<8x8xf32> to vector<8xf32>
    %883 = vector.shape_cast %882 : vector<8xf32> to vector<8x1xf32>
    %884 = vector.broadcast %883 : vector<8x1xf32> to vector<8x8xf32>
    %885 = arith.subf %881, %884 : vector<8x8xf32>
    %886 = math.exp %885 : vector<8x8xf32>
    %cst_266 = arith.constant dense<0.000000e+00> : vector<8xf32>
    %887 = vector.multi_reduction <add>, %886, %cst_266 [1] : vector<8x8xf32> to vector<8xf32>
    %888 = vector.shape_cast %887 : vector<8xf32> to vector<8x1xf32>
    %889 = tpu.reciprocal %888 {approx = true} : vector<8x1xf32> -> vector<8x1xf32>
    %890 = vector.broadcast %889 : vector<8x1xf32> to vector<8x8xf32>
    %891 = arith.mulf %886, %890 : vector<8x8xf32>
    %892 = arith.truncf %891 : vector<8x8xf32> to vector<8x8xbf16>
    %cst_267 = arith.constant dense<0.000000e+00> : vector<8x8xf32>
    %893 = tpu.matmul %892, %879, %cst_267 {dimension_numbers = #tpu.dot_dimension_numbers<[1], [0], [0], [1], [0, 0, 1, 1], [], []>} : vector<8x8xbf16>, vector<8x8xbf16>, vector<8x8xf32> -> vector<8x8xf32>
    %894 = tpu.concatenate %833, %853, %873, %893 in 1 : vector<8x8xf32>, vector<8x8xf32>, vector<8x8xf32>, vector<8x8xf32> -> vector<8x32xf32>
    %895 = tpu.concatenate %810, %894 in 0 : vector<8x32xf32>, vector<8x32xf32> -> vector<16x32xf32>
    %896 = arith.truncf %895 : vector<16x32xf32> to vector<16x32xbf16>
    %c1_268 = arith.constant 1 : index
    %c0_269 = arith.constant 0 : index
    %c0_270 = arith.constant 0 : index
    %897 = vector.load %arg12[%c1_268, %c0_269, %c0_270] : memref<2x32x32xbf16, #tpu.memory_space<vmem>>, vector<1x32x32xbf16>
    %898 = vector.shape_cast %897 : vector<1x32x32xbf16> to vector<32x32xbf16>
    %cst_271 = arith.constant dense<0.000000e+00> : vector<16x32xf32>
    %899 = tpu.matmul %896, %898, %cst_271 {dimension_numbers = #tpu.dot_dimension_numbers<[1], [0], [0], [1], [0, 0, 1, 1], [], []>} : vector<16x32xbf16>, vector<32x32xbf16>, vector<16x32xf32> -> vector<16x32xf32>
    %c1_272 = arith.constant 1 : index
    %c0_273 = arith.constant 0 : index
    %c0_274 = arith.constant 0 : index
    %900 = vector.load %arg13[%c1_272, %c0_273, %c0_274] : memref<2x1x32xf32, #tpu.memory_space<vmem>>, vector<1x1x32xf32>
    %901 = vector.shape_cast %900 : vector<1x1x32xf32> to vector<1x32xf32>
    %902 = vector.broadcast %901 : vector<1x32xf32> to vector<16x32xf32>
    %903 = arith.addf %899, %902 : vector<16x32xf32>
    %904 = arith.addf %711, %903 : vector<16x32xf32>
    %c1_275 = arith.constant 1 : index
    %c1_276 = arith.constant 1 : index
    %c0_277 = arith.constant 0 : index
    %c0_278 = arith.constant 0 : index
    %905 = vector.load %arg18[%c1_275, %c1_276, %c0_277, %c0_278] : memref<2x3x1x32xf32, #tpu.memory_space<vmem>>, vector<1x1x1x32xf32>
    %906 = vector.shape_cast %905 : vector<1x1x1x32xf32> to vector<1x32xf32>
    %c1_279 = arith.constant 1 : index
    %c1_280 = arith.constant 1 : index
    %c0_281 = arith.constant 0 : index
    %c0_282 = arith.constant 0 : index
    %907 = vector.load %arg19[%c1_279, %c1_280, %c0_281, %c0_282] : memref<2x3x1x32xf32, #tpu.memory_space<vmem>>, vector<1x1x1x32xf32>
    %908 = vector.shape_cast %907 : vector<1x1x1x32xf32> to vector<1x32xf32>
    %cst_283 = arith.constant dense<0.000000e+00> : vector<16xf32>
    %909 = vector.multi_reduction <add>, %904, %cst_283 [1] : vector<16x32xf32> to vector<16xf32>
    %910 = vector.shape_cast %909 : vector<16xf32> to vector<16x1xf32>
    %cst_284 = arith.constant 3.200000e+01 : f32
    %911 = vector.broadcast %cst_284 : f32 to vector<16x1xf32>
    %912 = arith.divf %910, %911 : vector<16x1xf32>
    %913 = vector.broadcast %912 : vector<16x1xf32> to vector<16x32xf32>
    %914 = arith.subf %904, %913 : vector<16x32xf32>
    %915 = arith.mulf %914, %914 : vector<16x32xf32>
    %cst_285 = arith.constant dense<0.000000e+00> : vector<16xf32>
    %916 = vector.multi_reduction <add>, %915, %cst_285 [1] : vector<16x32xf32> to vector<16xf32>
    %917 = vector.shape_cast %916 : vector<16xf32> to vector<16x1xf32>
    %cst_286 = arith.constant 3.200000e+01 : f32
    %918 = vector.broadcast %cst_286 : f32 to vector<16x1xf32>
    %919 = arith.divf %917, %918 : vector<16x1xf32>
    %920 = vector.broadcast %912 : vector<16x1xf32> to vector<16x32xf32>
    %921 = arith.subf %904, %920 : vector<16x32xf32>
    %cst_287 = arith.constant 9.99999974E-6 : f32
    %922 = vector.broadcast %cst_287 : f32 to vector<16x1xf32>
    %923 = arith.addf %919, %922 : vector<16x1xf32>
    %924 = math.rsqrt %923 : vector<16x1xf32>
    %925 = vector.broadcast %924 : vector<16x1xf32> to vector<16x32xf32>
    %926 = arith.mulf %921, %925 : vector<16x32xf32>
    %927 = vector.broadcast %906 : vector<1x32xf32> to vector<16x32xf32>
    %928 = arith.mulf %926, %927 : vector<16x32xf32>
    %929 = vector.broadcast %908 : vector<1x32xf32> to vector<16x32xf32>
    %930 = arith.addf %928, %929 : vector<16x32xf32>
    %931 = arith.truncf %930 : vector<16x32xf32> to vector<16x32xbf16>
    %c1_288 = arith.constant 1 : index
    %c0_289 = arith.constant 0 : index
    %c0_290 = arith.constant 0 : index
    %932 = vector.load %arg14[%c1_288, %c0_289, %c0_290] : memref<2x32x32xbf16, #tpu.memory_space<vmem>>, vector<1x32x32xbf16>
    %933 = vector.shape_cast %932 : vector<1x32x32xbf16> to vector<32x32xbf16>
    %cst_291 = arith.constant dense<0.000000e+00> : vector<16x32xf32>
    %934 = tpu.matmul %931, %933, %cst_291 {dimension_numbers = #tpu.dot_dimension_numbers<[1], [0], [0], [1], [0, 0, 1, 1], [], []>} : vector<16x32xbf16>, vector<32x32xbf16>, vector<16x32xf32> -> vector<16x32xf32>
    %c1_292 = arith.constant 1 : index
    %c0_293 = arith.constant 0 : index
    %c0_294 = arith.constant 0 : index
    %935 = vector.load %arg15[%c1_292, %c0_293, %c0_294] : memref<2x1x32xf32, #tpu.memory_space<vmem>>, vector<1x1x32xf32>
    %936 = vector.shape_cast %935 : vector<1x1x32xf32> to vector<1x32xf32>
    %937 = vector.broadcast %936 : vector<1x32xf32> to vector<16x32xf32>
    %938 = arith.addf %934, %937 : vector<16x32xf32>
    %cst_295 = arith.constant 0.000000e+00 : f32
    %939 = vector.broadcast %cst_295 : f32 to vector<16x32xf32>
    %940 = arith.maximumf %938, %939 : vector<16x32xf32>
    %941 = arith.truncf %940 : vector<16x32xf32> to vector<16x32xbf16>
    %c1_296 = arith.constant 1 : index
    %c0_297 = arith.constant 0 : index
    %c0_298 = arith.constant 0 : index
    %942 = vector.load %arg16[%c1_296, %c0_297, %c0_298] : memref<2x32x32xbf16, #tpu.memory_space<vmem>>, vector<1x32x32xbf16>
    %943 = vector.shape_cast %942 : vector<1x32x32xbf16> to vector<32x32xbf16>
    %cst_299 = arith.constant dense<0.000000e+00> : vector<16x32xf32>
    %944 = tpu.matmul %941, %943, %cst_299 {dimension_numbers = #tpu.dot_dimension_numbers<[1], [0], [0], [1], [0, 0, 1, 1], [], []>} : vector<16x32xbf16>, vector<32x32xbf16>, vector<16x32xf32> -> vector<16x32xf32>
    %c1_300 = arith.constant 1 : index
    %c0_301 = arith.constant 0 : index
    %c0_302 = arith.constant 0 : index
    %945 = vector.load %arg17[%c1_300, %c0_301, %c0_302] : memref<2x1x32xf32, #tpu.memory_space<vmem>>, vector<1x1x32xf32>
    %946 = vector.shape_cast %945 : vector<1x1x32xf32> to vector<1x32xf32>
    %947 = vector.broadcast %946 : vector<1x32xf32> to vector<16x32xf32>
    %948 = arith.addf %944, %947 : vector<16x32xf32>
    %949 = arith.addf %930, %948 : vector<16x32xf32>
    %c1_303 = arith.constant 1 : index
    %c2_304 = arith.constant 2 : index
    %c0_305 = arith.constant 0 : index
    %c0_306 = arith.constant 0 : index
    %950 = vector.load %arg18[%c1_303, %c2_304, %c0_305, %c0_306] : memref<2x3x1x32xf32, #tpu.memory_space<vmem>>, vector<1x1x1x32xf32>
    %951 = vector.shape_cast %950 : vector<1x1x1x32xf32> to vector<1x32xf32>
    %c1_307 = arith.constant 1 : index
    %c2_308 = arith.constant 2 : index
    %c0_309 = arith.constant 0 : index
    %c0_310 = arith.constant 0 : index
    %952 = vector.load %arg19[%c1_307, %c2_308, %c0_309, %c0_310] : memref<2x3x1x32xf32, #tpu.memory_space<vmem>>, vector<1x1x1x32xf32>
    %953 = vector.shape_cast %952 : vector<1x1x1x32xf32> to vector<1x32xf32>
    %cst_311 = arith.constant dense<0.000000e+00> : vector<16xf32>
    %954 = vector.multi_reduction <add>, %949, %cst_311 [1] : vector<16x32xf32> to vector<16xf32>
    %955 = vector.shape_cast %954 : vector<16xf32> to vector<16x1xf32>
    %cst_312 = arith.constant 3.200000e+01 : f32
    %956 = vector.broadcast %cst_312 : f32 to vector<16x1xf32>
    %957 = arith.divf %955, %956 : vector<16x1xf32>
    %958 = vector.broadcast %957 : vector<16x1xf32> to vector<16x32xf32>
    %959 = arith.subf %949, %958 : vector<16x32xf32>
    %960 = arith.mulf %959, %959 : vector<16x32xf32>
    %cst_313 = arith.constant dense<0.000000e+00> : vector<16xf32>
    %961 = vector.multi_reduction <add>, %960, %cst_313 [1] : vector<16x32xf32> to vector<16xf32>
    %962 = vector.shape_cast %961 : vector<16xf32> to vector<16x1xf32>
    %cst_314 = arith.constant 3.200000e+01 : f32
    %963 = vector.broadcast %cst_314 : f32 to vector<16x1xf32>
    %964 = arith.divf %962, %963 : vector<16x1xf32>
    %965 = vector.broadcast %957 : vector<16x1xf32> to vector<16x32xf32>
    %966 = arith.subf %949, %965 : vector<16x32xf32>
    %cst_315 = arith.constant 9.99999974E-6 : f32
    %967 = vector.broadcast %cst_315 : f32 to vector<16x1xf32>
    %968 = arith.addf %964, %967 : vector<16x1xf32>
    %969 = math.rsqrt %968 : vector<16x1xf32>
    %970 = vector.broadcast %969 : vector<16x1xf32> to vector<16x32xf32>
    %971 = arith.mulf %966, %970 : vector<16x32xf32>
    %972 = vector.broadcast %951 : vector<1x32xf32> to vector<16x32xf32>
    %973 = arith.mulf %971, %972 : vector<16x32xf32>
    %974 = vector.broadcast %953 : vector<1x32xf32> to vector<16x32xf32>
    %975 = arith.addf %973, %974 : vector<16x32xf32>
    %976 = arith.truncf %975 : vector<16x32xf32> to vector<16x32xbf16>
    %c0_316 = arith.constant 0 : index
    %c0_317 = arith.constant 0 : index
    %977 = vector.load %arg20[%c0_316, %c0_317] : memref<32x128xbf16, #tpu.memory_space<vmem>>, vector<32x128xbf16>
    %cst_318 = arith.constant dense<0.000000e+00> : vector<16x128xf32>
    %978 = tpu.matmul %976, %977, %cst_318 {dimension_numbers = #tpu.dot_dimension_numbers<[1], [0], [0], [1], [0, 0, 1, 1], [], []>} : vector<16x32xbf16>, vector<32x128xbf16>, vector<16x128xf32> -> vector<16x128xf32>
    %c0_319 = arith.constant 0 : index
    %c0_320 = arith.constant 0 : index
    %979 = vector.load %arg21[%c0_319, %c0_320] : memref<1x128xf32, #tpu.memory_space<vmem>>, vector<1x128xf32>
    %980 = vector.broadcast %979 : vector<1x128xf32> to vector<16x128xf32>
    %981 = arith.addf %978, %980 : vector<16x128xf32>
    %982 = vector.shape_cast %981 : vector<16x128xf32> to vector<2x8x128xf32>
    %c0_321 = arith.constant 0 : index
    %c0_322 = arith.constant 0 : index
    %c0_323 = arith.constant 0 : index
    %983 = vector.load %arg22[%c0_321, %c0_322, %c0_323] : memref<2x8x128xf32, #tpu.memory_space<vmem>>, vector<2x8x128xf32>
    tpu.vector_store %arg22[%c0_321, %c0_322, %c0_323], %982 {strides = array<i32>} : memref<2x8x128xf32, #tpu.memory_space<vmem>>, vector<2x8x128xf32>,
    return
  }
  func.func @transform_0(%arg0: i32, %arg1: memref<2xi32, #tpu.memory_space<smem>>) -> (i32, i32, i32) {
    %c0_i32 = arith.constant 0 : i32
    %c0_i32_0 = arith.constant 0 : i32
    %c0_i32_1 = arith.constant 0 : i32
    %c0_i32_2 = arith.constant 0 : i32
    return %c0_i32, %c0_i32_0, %c0_i32_1 : i32, i32, i32
  }
  func.func @transform_1(%arg0: i32, %arg1: memref<2xi32, #tpu.memory_space<smem>>) -> (i32, i32, i32) {
    %c0_i32 = arith.constant 0 : i32
    %c0_i32_0 = arith.constant 0 : i32
    %c0_i32_1 = arith.constant 0 : i32
    %c0_i32_2 = arith.constant 0 : i32
    return %c0_i32, %c0_i32_0, %c0_i32_1 : i32, i32, i32
  }
  func.func @transform_2(%arg0: i32, %arg1: memref<2xi32, #tpu.memory_space<smem>>) -> (i32, i32, i32) {
    %c0_i32 = arith.constant 0 : i32
    %c0_i32_0 = arith.constant 0 : i32
    %c0_i32_1 = arith.constant 0 : i32
    %c0_i32_2 = arith.constant 0 : i32
    return %c0_i32, %c0_i32_0, %c0_i32_1 : i32, i32, i32
  }
  func.func @transform_3(%arg0: i32, %arg1: memref<2xi32, #tpu.memory_space<smem>>) -> (i32, i32, i32) {
    %c0_i32 = arith.constant 0 : i32
    %c0_i32_0 = arith.constant 0 : i32
    %c0_i32_1 = arith.constant 0 : i32
    %c0_i32_2 = arith.constant 0 : i32
    return %c0_i32, %c0_i32_0, %c0_i32_1 : i32, i32, i32
  }
  func.func @transform_4(%arg0: i32, %arg1: memref<2xi32, #tpu.memory_space<smem>>) -> (i32, i32, i32) {
    %c0_i32 = arith.constant 0 : i32
    %c0_i32_0 = arith.constant 0 : i32
    %c0_i32_1 = arith.constant 0 : i32
    %c0_i32_2 = arith.constant 0 : i32
    return %c0_i32, %c0_i32_0, %c0_i32_1 : i32, i32, i32
  }
  func.func @transform_5(%arg0: i32, %arg1: memref<2xi32, #tpu.memory_space<smem>>) -> (i32, i32, i32) {
    %c0_i32 = arith.constant 0 : i32
    %c0_i32_0 = arith.constant 0 : i32
    %c0_i32_1 = arith.constant 0 : i32
    %c0_i32_2 = arith.constant 0 : i32
    return %c0_i32, %c0_i32_0, %c0_i32_1 : i32, i32, i32
  }
  func.func @transform_6(%arg0: i32, %arg1: memref<2xi32, #tpu.memory_space<smem>>) -> (i32, i32, i32) {
    %c0_i32 = arith.constant 0 : i32
    %c0_i32_0 = arith.constant 0 : i32
    %c0_i32_1 = arith.constant 0 : i32
    %c0_i32_2 = arith.constant 0 : i32
    return %c0_i32, %c0_i32_0, %c0_i32_1 : i32, i32, i32
  }
  func.func @transform_7(%arg0: i32, %arg1: memref<2xi32, #tpu.memory_space<smem>>) -> (i32, i32, i32) {
    %c0_i32 = arith.constant 0 : i32
    %c0_i32_0 = arith.constant 0 : i32
    %c0_i32_1 = arith.constant 0 : i32
    %c0_i32_2 = arith.constant 0 : i32
    return %c0_i32, %c0_i32_0, %c0_i32_1 : i32, i32, i32
  }
  func.func @transform_8(%arg0: i32, %arg1: memref<2xi32, #tpu.memory_space<smem>>) -> (i32, i32, i32) {
    %c0_i32 = arith.constant 0 : i32
    %c0_i32_0 = arith.constant 0 : i32
    %c0_i32_1 = arith.constant 0 : i32
    %c0_i32_2 = arith.constant 0 : i32
    return %c0_i32, %c0_i32_0, %c0_i32_1 : i32, i32, i32
  }
  func.func @transform_9(%arg0: i32, %arg1: memref<2xi32, #tpu.memory_space<smem>>) -> (i32, i32, i32) {
    %c0_i32 = arith.constant 0 : i32
    %c0_i32_0 = arith.constant 0 : i32
    %c0_i32_1 = arith.constant 0 : i32
    %c0_i32_2 = arith.constant 0 : i32
    return %c0_i32, %c0_i32_0, %c0_i32_1 : i32, i32, i32
  }
  func.func @transform_10(%arg0: i32, %arg1: memref<2xi32, #tpu.memory_space<smem>>) -> (i32, i32, i32) {
    %c0_i32 = arith.constant 0 : i32
    %c0_i32_0 = arith.constant 0 : i32
    %c0_i32_1 = arith.constant 0 : i32
    %c0_i32_2 = arith.constant 0 : i32
    return %c0_i32, %c0_i32_0, %c0_i32_1 : i32, i32, i32
  }
  func.func @transform_11(%arg0: i32, %arg1: memref<2xi32, #tpu.memory_space<smem>>) -> (i32, i32, i32) {
    %c0_i32 = arith.constant 0 : i32
    %c0_i32_0 = arith.constant 0 : i32
    %c0_i32_1 = arith.constant 0 : i32
    %c0_i32_2 = arith.constant 0 : i32
    return %c0_i32, %c0_i32_0, %c0_i32_1 : i32, i32, i32
  }
  func.func @transform_12(%arg0: i32, %arg1: memref<2xi32, #tpu.memory_space<smem>>) -> (i32, i32, i32) {
    %c0_i32 = arith.constant 0 : i32
    %c0_i32_0 = arith.constant 0 : i32
    %c0_i32_1 = arith.constant 0 : i32
    %c0_i32_2 = arith.constant 0 : i32
    return %c0_i32, %c0_i32_0, %c0_i32_1 : i32, i32, i32
  }
  func.func @transform_13(%arg0: i32, %arg1: memref<2xi32, #tpu.memory_space<smem>>) -> (i32, i32, i32) {
    %c0_i32 = arith.constant 0 : i32
    %c0_i32_0 = arith.constant 0 : i32
    %c0_i32_1 = arith.constant 0 : i32
    %c0_i32_2 = arith.constant 0 : i32
    return %c0_i32, %c0_i32_0, %c0_i32_1 : i32, i32, i32
  }
  func.func @transform_14(%arg0: i32, %arg1: memref<2xi32, #tpu.memory_space<smem>>) -> (i32, i32, i32) {
    %c0_i32 = arith.constant 0 : i32
    %c0_i32_0 = arith.constant 0 : i32
    %c0_i32_1 = arith.constant 0 : i32
    %c0_i32_2 = arith.constant 0 : i32
    return %c0_i32, %c0_i32_0, %c0_i32_1 : i32, i32, i32
  }
  func.func @transform_15(%arg0: i32, %arg1: memref<2xi32, #tpu.memory_space<smem>>) -> (i32, i32, i32) {
    %c0_i32 = arith.constant 0 : i32
    %c0_i32_0 = arith.constant 0 : i32
    %c0_i32_1 = arith.constant 0 : i32
    %c0_i32_2 = arith.constant 0 : i32
    return %c0_i32, %c0_i32_0, %c0_i32_1 : i32, i32, i32
  }
  func.func @transform_16(%arg0: i32, %arg1: memref<2xi32, #tpu.memory_space<smem>>) -> (i32, i32, i32, i32) {
    %c0_i32 = arith.constant 0 : i32
    %c0_i32_0 = arith.constant 0 : i32
    %c0_i32_1 = arith.constant 0 : i32
    %c0_i32_2 = arith.constant 0 : i32
    %c0_i32_3 = arith.constant 0 : i32
    return %c0_i32, %c0_i32_0, %c0_i32_1, %c0_i32_2 : i32, i32, i32, i32
  }
  func.func @transform_17(%arg0: i32, %arg1: memref<2xi32, #tpu.memory_space<smem>>) -> (i32, i32, i32, i32) {
    %c0_i32 = arith.constant 0 : i32
    %c0_i32_0 = arith.constant 0 : i32
    %c0_i32_1 = arith.constant 0 : i32
    %c0_i32_2 = arith.constant 0 : i32
    %c0_i32_3 = arith.constant 0 : i32
    return %c0_i32, %c0_i32_0, %c0_i32_1, %c0_i32_2 : i32, i32, i32, i32
  }
  func.func @transform_18(%arg0: i32, %arg1: memref<2xi32, #tpu.memory_space<smem>>) -> (i32, i32) {
    %c0_i32 = arith.constant 0 : i32
    %c0_i32_0 = arith.constant 0 : i32
    %c0_i32_1 = arith.constant 0 : i32
    return %c0_i32, %c0_i32_0 : i32, i32
  }
  func.func @transform_19(%arg0: i32, %arg1: memref<2xi32, #tpu.memory_space<smem>>) -> (i32, i32) {
    %c0_i32 = arith.constant 0 : i32
    %c0_i32_0 = arith.constant 0 : i32
    %c0_i32_1 = arith.constant 0 : i32
    return %c0_i32, %c0_i32_0 : i32, i32
  }
  func.func @transform_20(%arg0: i32, %arg1: memref<2xi32, #tpu.memory_space<smem>>) -> (i32, i32, i32) {
    %c0_i32 = arith.constant 0 : i32
    %c0_i32_0 = arith.constant 0 : i32
    %c0_i32_1 = arith.constant 0 : i32
    %c0_i32_2 = arith.constant 0 : i32
    return %c0_i32, %c0_i32_0, %c0_i32_1 : i32, i32, i32
  }
}

</mosaic_0001>

<llo_original>
// kernel: tpu_custom_call.1
$region0: #{tpu_custom_call.1}
  #allocation0 [shape = 'u32[]', space=smem, size = 0x4, offset = 0x4, fixed_abs, tag = 'smem constant byte address 0x4 - core index']
  #allocation1 [shape = 'u32[144,128]{1,0:T(1,128)}', space=vmem, size = 0x12000, scoped, tag = 'internal scratch']
  #allocation2 [shape = 's32[1]{0}', space=sflag, size = 0x4, scoped, tag = 'scoped memory for tpu_custom_call.1']
  #allocation3 [shape = 'u8[512]{0}', space=smem, size = 0x200, scoped, tag = 'prefetched SMEM operand 0']
  %s0 = inlined_call_operand.hbm [shape: s32[2], index: 0, kind: input, shape index: {}]
  %s1 = inlined_call_operand.hbm [shape: f32[2,8,32], index: 1, kind: input, shape index: {}]
  %s2 = inlined_call_operand.hbm [shape: f32[2,8,32], index: 2, kind: input, shape index: {}]
  %s3 = inlined_call_operand.hbm [shape: bf16[2,32,96], index: 3, kind: input, shape index: {}]
  %s4 = inlined_call_operand.hbm [shape: f32[2,1,96], index: 4, kind: input, shape index: {}]
  %s5 = inlined_call_operand.hbm [shape: bf16[2,32,32], index: 5, kind: input, shape index: {}]
  %s6 = inlined_call_operand.hbm [shape: f32[2,1,32], index: 6, kind: input, shape index: {}]
  %s7 = inlined_call_operand.hbm [shape: bf16[2,32,32], index: 7, kind: input, shape index: {}]
  %s8 = inlined_call_operand.vmem [shape: f32[2,1,32], index: 8, kind: input, shape index: {}]
  %s9 = inlined_call_operand.hbm [shape: bf16[2,32,64], index: 9, kind: input, shape index: {}]
  %s10 = inlined_call_operand.vmem [shape: f32[2,1,64], index: 10, kind: input, shape index: {}]
  %s11 = inlined_call_operand.hbm [shape: bf16[2,32,32], index: 11, kind: input, shape index: {}]
  %s12 = inlined_call_operand.hbm [shape: f32[2,1,32], index: 12, kind: input, shape index: {}]
  %s13 = inlined_call_operand.hbm [shape: bf16[2,32,32], index: 13, kind: input, shape index: {}]
  %s14 = inlined_call_operand.hbm [shape: f32[2,1,32], index: 14, kind: input, shape index: {}]
  %s15 = inlined_call_operand.hbm [shape: bf16[2,32,32], index: 15, kind: input, shape index: {}]
  %s16 = inlined_call_operand.hbm [shape: f32[2,1,32], index: 16, kind: input, shape index: {}]
  %s17 = inlined_call_operand.vmem [shape: f32[2,3,1,32], index: 17, kind: input, shape index: {}]
  %s18 = inlined_call_operand.vmem [shape: f32[2,3,1,32], index: 18, kind: input, shape index: {}]
  %s19 = inlined_call_operand.vmem [shape: bf16[32,128], index: 19, kind: input, shape index: {}]
  %s20 = inlined_call_operand.vmem [shape: f32[1,128], index: 20, kind: input, shape index: {}]
  %s21 = inlined_call_operand.hbm [shape: f32[2,8,128], index: 21, kind: output, shape index: {}]
  %s22 = sld [smem:[#allocation0]]
  $region146: #{tpu_custom_call.1} parent=0
    _
  %s24 = ssub.s32 1, %s22
  %s25 = scalar_select 0, %s24, %s22
  %27 = dma.hbm_to_smem %s0, 16, [#allocation3], [#allocation2]
  %28 = dma.done [#allocation2], 16
  %29 = sfence
  $region1: #{tpu_custom_call.1} parent=0
    #allocation4 [shape = 'u8[8192]{0}', space=vmem, size = 0x2000, scoped, tag = 'input window, operand 1, single buffered']
    #allocation5 [shape = 's32[1]{0}', space=sflag, size = 0x4, scoped, tag = 'scoped memory for tpu_custom_call.1']
    #allocation6 [shape = 's32[1]{0}', space=sflag, size = 0x4, scoped, tag = 'scoped memory for tpu_custom_call.1']
    #allocation7 [shape = 'u8[8192]{0}', space=vmem, size = 0x2000, scoped, tag = 'input window, operand 2, single buffered']
    #allocation8 [shape = 's32[1]{0}', space=sflag, size = 0x4, scoped, tag = 'scoped memory for tpu_custom_call.1']
    #allocation9 [shape = 'u8[16384]{0}', space=vmem, size = 0x4000, scoped, tag = 'input window, operand 3, single buffered']
    #allocation10 [shape = 'u8[1024]{0}', space=vmem, size = 0x400, scoped, tag = 'input window, operand 4, single buffered']
    #allocation11 [shape = 's32[1]{0}', space=sflag, size = 0x4, scoped, tag = 'scoped memory for tpu_custom_call.1']
    #allocation12 [shape = 'u8[16384]{0}', space=vmem, size = 0x4000, scoped, tag = 'input window, operand 5, single buffered']
    #allocation13 [shape = 'u8[1024]{0}', space=vmem, size = 0x400, scoped, tag = 'input window, operand 6, single buffered']
    #allocation14 [shape = 's32[1]{0}', space=sflag, size = 0x4, scoped, tag = 'scoped memory for tpu_custom_call.1']
    #allocation15 [shape = 'u8[16384]{0}', space=vmem, size = 0x4000, scoped, tag = 'input window, operand 7, single buffered']
    #allocation16 [shape = 'u8[16384]{0}', space=vmem, size = 0x4000, scoped, tag = 'input window, operand 9, single buffered']
    #allocation17 [shape = 's32[1]{0}', space=sflag, size = 0x4, scoped, tag = 'scoped memory for tpu_custom_call.1']
    #allocation18 [shape = 'u8[16384]{0}', space=vmem, size = 0x4000, scoped, tag = 'input window, operand 11, single buffered']
    #allocation19 [shape = 'u8[1024]{0}', space=vmem, size = 0x400, scoped, tag = 'input window, operand 12, single buffered']
    #allocation20 [shape = 's32[1]{0}', space=sflag, size = 0x4, scoped, tag = 'scoped memory for tpu_custom_call.1']
    #allocation21 [shape = 'u8[16384]{0}', space=vmem, size = 0x4000, scoped, tag = 'input window, operand 13, single buffered']
    #allocation22 [shape = 'u8[1024]{0}', space=vmem, size = 0x400, scoped, tag = 'input window, operand 14, single buffered']
    #allocation23 [shape = 's32[1]{0}', space=sflag, size = 0x4, scoped, tag = 'scoped memory for tpu_custom_call.1']
    #allocation24 [shape = 'u8[16384]{0}', space=vmem, size = 0x4000, scoped, tag = 'input window, operand 15, single buffered']
    #allocation25 [shape = 'u8[1024]{0}', space=vmem, size = 0x400, scoped, tag = 'input window, operand 16, single buffered']
    #allocation26 [shape = 's32[1]{0}', space=sflag, size = 0x4, scoped, tag = 'scoped memory for tpu_custom_call.1']
    #allocation27 [shape = 'u8[8192]{0}', space=vmem, size = 0x2000, scoped, tag = 'output window, operand 0, single buffered']
    %30 = vsyncpa [#allocation5], 0
    %31 = vsyncpa [#allocation8], 0
    %32 = vsyncpa [#allocation11], 0
    %33 = vsyncpa [#allocation14], 0
    %34 = vsyncpa [#allocation17], 0
    %35 = vsyncpa [#allocation20], 0
    %36 = vsyncpa [#allocation23], 0
    %37 = vsyncpa [#allocation26], 0
    %38 = vsyncpa [#allocation6], 0
    // Predicated region
    $region2: #{tpu_custom_call.1} parent=1 // pred_check
      _
    $region3: #{tpu_custom_call.1} parent=1 // pred_check_branch
      %40 = sbr.rel (0) target = $region5
    $region4: #{tpu_custom_call.1} parent=1 // pred_region
      %s42 = ssub.s32 256, 256
      %43 = vsyncadd [#allocation5], %s42
      %s44 = sshll.u32 [#allocation4], 4
      %s45 = int_to_ptr.vmem [resolvable:$true] %s44
      %50 = dma.hbm_to_vmem [thread:$0]  %s1, 256, %s45, [#allocation5], 128, 128, 8
    $region5: #{tpu_custom_call.1} parent=1 // pred_fallthru
      _
    // Predicated region
    $region6: #{tpu_custom_call.1} parent=1 // pred_check
      _
    $region7: #{tpu_custom_call.1} parent=1 // pred_check_branch
      %52 = sbr.rel (0) target = $region9
    $region8: #{tpu_custom_call.1} parent=1 // pred_region
      %s54 = ssub.s32 256, 256
      %55 = vsyncadd [#allocation8], %s54
      %s56 = sshll.u32 [#allocation7], 4
      %s57 = int_to_ptr.vmem [resolvable:$true] %s56
      %62 = dma.hbm_to_vmem [thread:$0]  %s2, 256, %s57, [#allocation8], 128, 128, 8
    $region9: #{tpu_custom_call.1} parent=1 // pred_fallthru
      _
    // Predicated region
    $region10: #{tpu_custom_call.1} parent=1 // pred_check
      _
    $region11: #{tpu_custom_call.1} parent=1 // pred_check_branch
      %64 = sbr.rel (0) target = $region13
    $region12: #{tpu_custom_call.1} parent=1 // pred_region
      %s66 = ssub.s32 512, 512
      %67 = vsyncadd [#allocation8], %s66
      %s68 = sshll.u32 [#allocation9], 4
      %s69 = int_to_ptr.vmem [resolvable:$true] %s68
      %74 = dma.hbm_to_vmem [thread:$0]  %s3, 512, %s69, [#allocation8], 64, 64, 4
    $region13: #{tpu_custom_call.1} parent=1 // pred_fallthru
      _
    // Predicated region
    $region14: #{tpu_custom_call.1} parent=1 // pred_check
      _
    $region15: #{tpu_custom_call.1} parent=1 // pred_check_branch
      %76 = sbr.rel (0) target = $region17
    $region16: #{tpu_custom_call.1} parent=1 // pred_region
      %s78 = ssub.s32 32, 32
      %79 = vsyncadd [#allocation11], %s78
      %s80 = sshll.u32 [#allocation10], 4
      %s81 = int_to_ptr.vmem [resolvable:$true] %s80
      %86 = dma.hbm_to_vmem [thread:$0]  %s4, 32, %s81, [#allocation11], 16, 16, 1
    $region17: #{tpu_custom_call.1} parent=1 // pred_fallthru
      _
    // Predicated region
    $region18: #{tpu_custom_call.1} parent=1 // pred_check
      _
    $region19: #{tpu_custom_call.1} parent=1 // pred_check_branch
      %88 = sbr.rel (0) target = $region21
    $region20: #{tpu_custom_call.1} parent=1 // pred_region
      %s90 = ssub.s32 512, 512
      %91 = vsyncadd [#allocation11], %s90
      %s92 = sshll.u32 [#allocation12], 4
      %s93 = int_to_ptr.vmem [resolvable:$true] %s92
      %98 = dma.hbm_to_vmem [thread:$0]  %s5, 512, %s93, [#allocation11], 64, 64, 4
    $region21: #{tpu_custom_call.1} parent=1 // pred_fallthru
      _
    // Predicated region
    $region22: #{tpu_custom_call.1} parent=1 // pred_check
      _
    $region23: #{tpu_custom_call.1} parent=1 // pred_check_branch
      %100 = sbr.rel (0) target = $region25
    $region24: #{tpu_custom_call.1} parent=1 // pred_region
      %s102 = ssub.s32 32, 32
      %103 = vsyncadd [#allocation14], %s102
      %s104 = sshll.u32 [#allocation13], 4
      %s105 = int_to_ptr.vmem [resolvable:$true] %s104
      %110 = dma.hbm_to_vmem [thread:$0]  %s6, 32, %s105, [#allocation14], 16, 16, 1
    $region25: #{tpu_custom_call.1} parent=1 // pred_fallthru
      _
    // Predicated region
    $region26: #{tpu_custom_call.1} parent=1 // pred_check
      _
    $region27: #{tpu_custom_call.1} parent=1 // pred_check_branch
      %112 = sbr.rel (0) target = $region29
    $region28: #{tpu_custom_call.1} parent=1 // pred_region
      %s114 = ssub.s32 512, 512
      %115 = vsyncadd [#allocation14], %s114
      %s116 = sshll.u32 [#allocation15], 4
      %s117 = int_to_ptr.vmem [resolvable:$true] %s116
      %122 = dma.hbm_to_vmem [thread:$0]  %s7, 512, %s117, [#allocation14], 64, 64, 4
    $region29: #{tpu_custom_call.1} parent=1 // pred_fallthru
      _
    // Predicated region
    $region30: #{tpu_custom_call.1} parent=1 // pred_check
      _
    $region31: #{tpu_custom_call.1} parent=1 // pred_check_branch
      %124 = sbr.rel (0) target = $region33
    $region32: #{tpu_custom_call.1} parent=1 // pred_region
      _
    $region33: #{tpu_custom_call.1} parent=1 // pred_fallthru
      _
    // Predicated region
    $region34: #{tpu_custom_call.1} parent=1 // pred_check
      _
    $region35: #{tpu_custom_call.1} parent=1 // pred_check_branch
      %126 = sbr.rel (0) target = $region37
    $region36: #{tpu_custom_call.1} parent=1 // pred_region
      %s128 = ssub.s32 512, 512
      %129 = vsyncadd [#allocation17], %s128
      %s130 = sshll.u32 [#allocation16], 4
      %s131 = int_to_ptr.vmem [resolvable:$true] %s130
      %136 = dma.hbm_to_vmem [thread:$0]  %s9, 512, %s131, [#allocation17], 64, 64, 4
    $region37: #{tpu_custom_call.1} parent=1 // pred_fallthru
      _
    // Predicated region
    $region38: #{tpu_custom_call.1} parent=1 // pred_check
      _
    $region39: #{tpu_custom_call.1} parent=1 // pred_check_branch
      %138 = sbr.rel (0) target = $region41
    $region40: #{tpu_custom_call.1} parent=1 // pred_region
      _
    $region41: #{tpu_custom_call.1} parent=1 // pred_fallthru
      _
    // Predicated region
    $region42: #{tpu_custom_call.1} parent=1 // pred_check
      _
    $region43: #{tpu_custom_call.1} parent=1 // pred_check_branch
      %140 = sbr.rel (0) target = $region45
    $region44: #{tpu_custom_call.1} parent=1 // pred_region
      %s142 = ssub.s32 512, 512
      %143 = vsyncadd [#allocation17], %s142
      %s144 = sshll.u32 [#allocation18], 4
      %s145 = int_to_ptr.vmem [resolvable:$true] %s144
      %150 = dma.hbm_to_vmem [thread:$0]  %s11, 512, %s145, [#allocation17], 64, 64, 4
    $region45: #{tpu_custom_call.1} parent=1 // pred_fallthru
      _
    // Predicated region
    $region46: #{tpu_custom_call.1} parent=1 // pred_check
      _
    $region47: #{tpu_custom_call.1} parent=1 // pred_check_branch
      %152 = sbr.rel (0) target = $region49
    $region48: #{tpu_custom_call.1} parent=1 // pred_region
      %s154 = ssub.s32 32, 32
      %155 = vsyncadd [#allocation20], %s154
      %s156 = sshll.u32 [#allocation19], 4
      %s157 = int_to_ptr.vmem [resolvable:$true] %s156
      %162 = dma.hbm_to_vmem [thread:$0]  %s12, 32, %s157, [#allocation20], 16, 16, 1
    $region49: #{tpu_custom_call.1} parent=1 // pred_fallthru
      _
    // Predicated region
    $region50: #{tpu_custom_call.1} parent=1 // pred_check
      _
    $region51: #{tpu_custom_call.1} parent=1 // pred_check_branch
      %164 = sbr.rel (0) target = $region53
    $region52: #{tpu_custom_call.1} parent=1 // pred_region
      %s166 = ssub.s32 512, 512
      %167 = vsyncadd [#allocation20], %s166
      %s168 = sshll.u32 [#allocation21], 4
      %s169 = int_to_ptr.vmem [resolvable:$true] %s168
      %174 = dma.hbm_to_vmem [thread:$0]  %s13, 512, %s169, [#allocation20], 64, 64, 4
    $region53: #{tpu_custom_call.1} parent=1 // pred_fallthru
      _
    // Predicated region
    $region54: #{tpu_custom_call.1} parent=1 // pred_check
      _
    $region55: #{tpu_custom_call.1} parent=1 // pred_check_branch
      %176 = sbr.rel (0) target = $region57
    $region56: #{tpu_custom_call.1} parent=1 // pred_region
      %s178 = ssub.s32 32, 32
      %179 = vsyncadd [#allocation23], %s178
      %s180 = sshll.u32 [#allocation22], 4
      %s181 = int_to_ptr.vmem [resolvable:$true] %s180
      %186 = dma.hbm_to_vmem [thread:$0]  %s14, 32, %s181, [#allocation23], 16, 16, 1
    $region57: #{tpu_custom_call.1} parent=1 // pred_fallthru
      _
    // Predicated region
    $region58: #{tpu_custom_call.1} parent=1 // pred_check
      _
    $region59: #{tpu_custom_call.1} parent=1 // pred_check_branch
      %188 = sbr.rel (0) target = $region61
    $region60: #{tpu_custom_call.1} parent=1 // pred_region
      %s190 = ssub.s32 512, 512
      %191 = vsyncadd [#allocation23], %s190
      %s192 = sshll.u32 [#allocation24], 4
      %s193 = int_to_ptr.vmem [resolvable:$true] %s192
      %198 = dma.hbm_to_vmem [thread:$0]  %s15, 512, %s193, [#allocation23], 64, 64, 4
    $region61: #{tpu_custom_call.1} parent=1 // pred_fallthru
      _
    // Predicated region
    $region62: #{tpu_custom_call.1} parent=1 // pred_check
      _
    $region63: #{tpu_custom_call.1} parent=1 // pred_check_branch
      %200 = sbr.rel (0) target = $region65
    $region64: #{tpu_custom_call.1} parent=1 // pred_region
      %s202 = ssub.s32 32, 32
      %203 = vsyncadd [#allocation26], %s202
      %s204 = sshll.u32 [#allocation25], 4
      %s205 = int_to_ptr.vmem [resolvable:$true] %s204
      %210 = dma.hbm_to_vmem [thread:$0]  %s16, 32, %s205, [#allocation26], 16, 16, 1
    $region65: #{tpu_custom_call.1} parent=1 // pred_fallthru
      _
    // Predicated region
    $region66: #{tpu_custom_call.1} parent=1 // pred_check
      _
    $region67: #{tpu_custom_call.1} parent=1 // pred_check_branch
      %212 = sbr.rel (0) target = $region69
    $region68: #{tpu_custom_call.1} parent=1 // pred_region
      _
    $region69: #{tpu_custom_call.1} parent=1 // pred_fallthru
      _
    // Predicated region
    $region70: #{tpu_custom_call.1} parent=1 // pred_check
      _
    $region71: #{tpu_custom_call.1} parent=1 // pred_check_branch
      %214 = sbr.rel (0) target = $region73
    $region72: #{tpu_custom_call.1} parent=1 // pred_region
      _
    $region73: #{tpu_custom_call.1} parent=1 // pred_fallthru
      _
    // Predicated region
    $region74: #{tpu_custom_call.1} parent=1 // pred_check
      _
    $region75: #{tpu_custom_call.1} parent=1 // pred_check_branch
      %216 = sbr.rel (0) target = $region77
    $region76: #{tpu_custom_call.1} parent=1 // pred_region
      _
    $region77: #{tpu_custom_call.1} parent=1 // pred_fallthru
      _
    // Predicated region
    $region78: #{tpu_custom_call.1} parent=1 // pred_check
      _
    $region79: #{tpu_custom_call.1} parent=1 // pred_check_branch
      %218 = sbr.rel (0) target = $region81
    $region80: #{tpu_custom_call.1} parent=1 // pred_region
      _
    $region81: #{tpu_custom_call.1} parent=1 // pred_fallthru
      _
    // Predicated region
    $region82: #{tpu_custom_call.1} parent=1 // pred_check
      _
    $region83: #{tpu_custom_call.1} parent=1 // pred_check_branch
      %220 = sbr.rel (0) target = $region85
    $region84: #{tpu_custom_call.1} parent=1 // pred_region
      %221 = dma.done [#allocation5], 256
    $region85: #{tpu_custom_call.1} parent=1 // pred_fallthru
      _
    // Predicated region
    $region86: #{tpu_custom_call.1} parent=1 // pred_check
      _
    $region87: #{tpu_custom_call.1} parent=1 // pred_check_branch
      %223 = sbr.rel (0) target = $region89
    $region88: #{tpu_custom_call.1} parent=1 // pred_region
      %224 = dma.done [#allocation8], 256
    $region89: #{tpu_custom_call.1} parent=1 // pred_fallthru
      _
    // Predicated region
    $region90: #{tpu_custom_call.1} parent=1 // pred_check
      _
    $region91: #{tpu_custom_call.1} parent=1 // pred_check_branch
      %226 = sbr.rel (0) target = $region93
    $region92: #{tpu_custom_call.1} parent=1 // pred_region
      %227 = dma.done [#allocation8], 512
    $region93: #{tpu_custom_call.1} parent=1 // pred_fallthru
      _
    // Predicated region
    $region94: #{tpu_custom_call.1} parent=1 // pred_check
      _
    $region95: #{tpu_custom_call.1} parent=1 // pred_check_branch
      %229 = sbr.rel (0) target = $region97
    $region96: #{tpu_custom_call.1} parent=1 // pred_region
      %230 = dma.done [#allocation11], 32
    $region97: #{tpu_custom_call.1} parent=1 // pred_fallthru
      _
    // Predicated region
    $region98: #{tpu_custom_call.1} parent=1 // pred_check
      _
    $region99: #{tpu_custom_call.1} parent=1 // pred_check_branch
      %232 = sbr.rel (0) target = $region101
    $region100: #{tpu_custom_call.1} parent=1 // pred_region
      %233 = dma.done [#allocation11], 512
    $region101: #{tpu_custom_call.1} parent=1 // pred_fallthru
      _
    // Predicated region
    $region102: #{tpu_custom_call.1} parent=1 // pred_check
      _
    $region103: #{tpu_custom_call.1} parent=1 // pred_check_branch
      %235 = sbr.rel (0) target = $region105
    $region104: #{tpu_custom_call.1} parent=1 // pred_region
      %236 = dma.done [#allocation14], 32
    $region105: #{tpu_custom_call.1} parent=1 // pred_fallthru
      _
    // Predicated region
    $region106: #{tpu_custom_call.1} parent=1 // pred_check
      _
    $region107: #{tpu_custom_call.1} parent=1 // pred_check_branch
      %238 = sbr.rel (0) target = $region109
    $region108: #{tpu_custom_call.1} parent=1 // pred_region
      %239 = dma.done [#allocation14], 512
    $region109: #{tpu_custom_call.1} parent=1 // pred_fallthru
      _
    // Predicated region
    $region110: #{tpu_custom_call.1} parent=1 // pred_check
      _
    $region111: #{tpu_custom_call.1} parent=1 // pred_check_branch
      %241 = sbr.rel (0) target = $region113
    $region112: #{tpu_custom_call.1} parent=1 // pred_region
      %242 = dma.done [#allocation17], 512
    $region113: #{tpu_custom_call.1} parent=1 // pred_fallthru
      _
    // Predicated region
    $region114: #{tpu_custom_call.1} parent=1 // pred_check
      _
    $region115: #{tpu_custom_call.1} parent=1 // pred_check_branch
      %244 = sbr.rel (0) target = $region117
    $region116: #{tpu_custom_call.1} parent=1 // pred_region
      %245 = dma.done [#allocation17], 512
    $region117: #{tpu_custom_call.1} parent=1 // pred_fallthru
      _
    // Predicated region
    $region118: #{tpu_custom_call.1} parent=1 // pred_check
      _
    $region119: #{tpu_custom_call.1} parent=1 // pred_check_branch
      %247 = sbr.rel (0) target = $region121
    $region120: #{tpu_custom_call.1} parent=1 // pred_region
      %248 = dma.done [#allocation20], 32
    $region121: #{tpu_custom_call.1} parent=1 // pred_fallthru
      _
    // Predicated region
    $region122: #{tpu_custom_call.1} parent=1 // pred_check
      _
    $region123: #{tpu_custom_call.1} parent=1 // pred_check_branch
      %250 = sbr.rel (0) target = $region125
    $region124: #{tpu_custom_call.1} parent=1 // pred_region
      %251 = dma.done [#allocation20], 512
    $region125: #{tpu_custom_call.1} parent=1 // pred_fallthru
      _
    // Predicated region
    $region126: #{tpu_custom_call.1} parent=1 // pred_check
      _
    $region127: #{tpu_custom_call.1} parent=1 // pred_check_branch
      %253 = sbr.rel (0) target = $region129
    $region128: #{tpu_custom_call.1} parent=1 // pred_region
      %254 = dma.done [#allocation23], 32
    $region129: #{tpu_custom_call.1} parent=1 // pred_fallthru
      _
    // Predicated region
    $region130: #{tpu_custom_call.1} parent=1 // pred_check
      _
    $region131: #{tpu_custom_call.1} parent=1 // pred_check_branch
      %256 = sbr.rel (0) target = $region133
    $region132: #{tpu_custom_call.1} parent=1 // pred_region
      %257 = dma.done [#allocation23], 512
    $region133: #{tpu_custom_call.1} parent=1 // pred_fallthru
      _
    // Predicated region
    $region134: #{tpu_custom_call.1} parent=1 // pred_check
      _
    $region135: #{tpu_custom_call.1} parent=1 // pred_check_branch
      %259 = sbr.rel (0) target = $region137
    $region136: #{tpu_custom_call.1} parent=1 // pred_region
      %260 = dma.done [#allocation26], 32
    $region137: #{tpu_custom_call.1} parent=1 // pred_fallthru
      _
    %v262 = vld [vmem:[#allocation4] sm:$0xff]
    %v263 = vld [vmem:[#allocation4 + $0x8] sm:$0xff]
    %v264 = vld [vmem:[#allocation7] sm:$0xff]
    %v265 = vld [vmem:[#allocation7 + $0x8] sm:$0xff]
    %v266 = vpack.c.bf16 %v265, %v264
    %v267 = vlaneseq
    %v268 = vshrl.u32 %v267, 7
    %v269 = vlaneseq
    %v270 = vand.u32 %v269, 127
    %vm271 = vcmp.gt.s32.totalorder %v270, %v268
    %v272 = vsel %vm271, -1e+09, 0.0
    %s273 = sld [smem:[#allocation3]]
    %v274 = vstv %s273
    %vm275 = vcmp.ge.s32.totalorder %v270, %v274
    %v276 = vsel %vm275, -1e+09, 0.0
    %s277 = sld [smem:[#allocation3 + $0x1]]
    %v278 = vstv %s277
    %vm279 = vcmp.ge.s32.totalorder %v270, %v278
    %v280 = vsel %vm279, -1e+09, 0.0
    %v281 = vpack.c.bf16 %v263, %v262
    %v282 = vld [vmem:[#allocation9] sm:$0xf]
    %v283 = vld [vmem:[#allocation9 + $0x4] sm:$0xf]
    %v284 = vld [vmem:[#allocation9 + $0x8] sm:$0xf]
    %v285 = vld [vmem:[#allocation9 + $0xc] sm:$0xf]
    %v286 = vld [vmem:[#allocation10] sm:$0x1]
    %v288 = vlaneseq
    %v289 = vshrl.u32 %v288, 7
    %v290 = vsub.s32 0, %v289
    %v291 = vrot.slane %v286, %v290
    %v297 = vunpack.c.l.b16 %v282
    %v298 = vunpack.c.l.b16 %v283
    %v299 = vunpack.c.l.b16 %v284
    %v300 = vunpack.c.l.b16 %v285
    %v301 = vpack.c.b16 %v298, %v297
    %v302 = vpack.c.b16 %v300, %v299
    %vm305 = vcmask 261120
    %v307 = vsel %vm305, %v281, 0
    %309 = vmatprep.subr.bf16.mxu0 0
    %310 = vmatpush1.bf16.msra.mxu0 0
    %311 = vmatprep.subr.bf16.mxu0 0
    %312 = vmatpush1.bf16.msra.mxu0 0
    %313 = vmatprep.subr.bf16.mxu0 0
    %314 = vmatpush1.bf16.msra.mxu0 0
    %315 = vmatprep.subr.bf16.mxu0 0
    %316 = vmatpush1.bf16.msra.mxu0 0
    %317 = vmatprep.subr.bf16.mxu0 0
    %318 = vmatpush1.bf16.msra.mxu0 0
    %319 = vmatprep.subr.bf16.mxu0 0
    %320 = vmatpush1.bf16.msra.mxu0 0
    %321 = vmatprep.subr.bf16.mxu0 0
    %322 = vmatpush1.bf16.msra.mxu0 %v302
    %323 = vmatprep.subr.bf16.mxu0 0
    %324 = vmatpush1.bf16.msra.mxu0 %v301
    %325 = vmatprep.subr.bf16.mxu0 0
    %326 = vmatpush2.bf16.msra.mxu0 0
    %327 = vmatprep.subr.bf16.mxu0 0
    %328 = vmatpush2.bf16.msra.mxu0 0
    %329 = vmatprep.subr.bf16.mxu0 0
    %330 = vmatpush2.bf16.msra.mxu0 0
    %331 = vmatprep.subr.bf16.mxu0 0
    %332 = vmatpush2.bf16.msra.mxu0 0
    %333 = vmatprep.subr.bf16.mxu0 0
    %334 = vmatpush2.bf16.msra.mxu0 0
    %335 = vmatprep.subr.bf16.mxu0 0
    %336 = vmatpush2.bf16.msra.mxu0 0
    %337 = vmatprep.subr.bf16.mxu0 0
    %338 = vmatpush2.bf16.msra.mxu0 0
    %339 = vmatprep.subr.bf16.mxu0 0
    %340 = vmatpush2.bf16.msra.mxu0 0
    %341 = vmatprep.mubr.bf16.mxu0 0
    %342 = vmatmul.mubr.bf16.gmra.mxu0 %v307
    %v343 = vpop.f32.mrf.mxu0
    %v344 = vadd.f32 %v291, %v343
    %v345 = vpop.f32.mrf.mxu0
    %v346 = vpop.f32.mrf.mxu0
    %v347 = vadd.f32 %v291, %v346
    %v348 = vpop.f32.mrf.mxu0
    %349 = vdwg.mxu0
    %v350 = vpack.c.bf16 %v344, %v344
    %352 = vrot.lane.b32.xlu0 %v350, 96
    %v353 = vpop.permute.xlu0 %352
    %vm354 = vcmask 64512
    %v356 = vsel %vm354, %v350, 0
    %v359 = vsel %vm354, %v353, 0
    %361 = vmatprep.subr.bf16.mxu0 0
    %362 = vmatpush1.bf16.xpose.msra.mxu0 0
    %363 = vmatprep.subr.bf16.mxu0 0
    %364 = vmatpush1.bf16.xpose.msra.mxu0 0
    %365 = vmatprep.subr.bf16.mxu0 0
    %366 = vmatpush1.bf16.xpose.msra.mxu0 0
    %367 = vmatprep.subr.bf16.mxu0 0
    %368 = vmatpush1.bf16.xpose.msra.mxu0 0
    %369 = vmatprep.subr.bf16.mxu0 0
    %370 = vmatpush1.bf16.xpose.msra.mxu0 0
    %371 = vmatprep.subr.bf16.mxu0 0
    %372 = vmatpush1.bf16.xpose.msra.mxu0 0
    %373 = vmatprep.subr.bf16.mxu0 0
    %374 = vmatpush1.bf16.xpose.msra.mxu0 0
    %375 = vmatprep.subr.bf16.mxu0 0
    %376 = vmatpush1.bf16.xpose.msra.mxu0 %v359
    %377 = vmatprep.subr.bf16.mxu0 0
    %378 = vmatpush2.bf16.xpose.msra.mxu0 0
    %379 = vmatprep.subr.bf16.mxu0 0
    %380 = vmatpush2.bf16.xpose.msra.mxu0 0
    %381 = vmatprep.subr.bf16.mxu0 0
    %382 = vmatpush2.bf16.xpose.msra.mxu0 0
    %383 = vmatprep.subr.bf16.mxu0 0
    %384 = vmatpush2.bf16.xpose.msra.mxu0 0
    %385 = vmatprep.subr.bf16.mxu0 0
    %386 = vmatpush2.bf16.xpose.msra.mxu0 0
    %387 = vmatprep.subr.bf16.mxu0 0
    %388 = vmatpush2.bf16.xpose.msra.mxu0 0
    %389 = vmatprep.subr.bf16.mxu0 0
    %390 = vmatpush2.bf16.xpose.msra.mxu0 0
    %391 = vmatprep.subr.bf16.mxu0 0
    %392 = vmatpush2.bf16.xpose.msra.mxu0 0
    %393 = vmatprep.mubr.bf16.mxu0 0
    %394 = vmatmul.mubr.bf16.gmra.mxu0 %v356
    %v395 = vpop.f32.mrf.mxu0
    %v396 = vadd.f32 %v272, %v395
    %v397 = vpop.f32.mrf.mxu0
    %v398 = vpop.f32.mrf.mxu0
    %v399 = vpop.f32.mrf.mxu0
    %400 = vdwg.mxu0
    %v401 = vsel %vm354, %v396, -inf
    %402 = vmax.xlane.f32.xlu0 %v401
    %v403 = vpop.xlane.xlu0 %402
    %v404 = vsub.f32 %v396, %v403
    %v405 = vmul.f32 %v404, 1.442695
    %v406 = vpow.pop %v405
    %v407 = vsel %vm354, %v406, 0.0
    %408 = vadd.xlane.f32.xlu0 %v407
    %v409 = vpop.xlane.xlu0 %408
    %v410 = vrcp.pop %v409
    %v411 = vmul.f32 %v406, %v410
    %v412 = vpack.c.bf16 %v411, %v411
    %413 = vrot.lane.b32.xlu0 %v350, 64
    %v414 = vpop.permute.xlu0 %413
    %v416 = vsel %vm354, %v412, 0
    %vm418 = vcmask 1043456
    %v420 = vsel %vm418, %v414, 0
    %422 = vmatprep.subr.bf16.mxu0 0
    %423 = vmatpush1.bf16.msra.mxu0 0
    %424 = vmatprep.subr.bf16.mxu0 0
    %425 = vmatpush1.bf16.msra.mxu0 0
    %426 = vmatprep.subr.bf16.mxu0 0
    %427 = vmatpush1.bf16.msra.mxu0 0
    %428 = vmatprep.subr.bf16.mxu0 0
    %429 = vmatpush1.bf16.msra.mxu0 0
    %430 = vmatprep.subr.bf16.mxu0 0
    %431 = vmatpush1.bf16.msra.mxu0 0
    %432 = vmatprep.subr.bf16.mxu0 0
    %433 = vmatpush1.bf16.msra.mxu0 0
    %434 = vmatprep.subr.bf16.mxu0 0
    %435 = vmatpush1.bf16.msra.mxu0 0
    %436 = vmatprep.subr.bf16.mxu0 0
    %437 = vmatpush1.bf16.msra.mxu0 %v420
    %438 = vmatprep.subr.bf16.mxu0 0
    %439 = vmatpush2.bf16.msra.mxu0 0
    %440 = vmatprep.subr.bf16.mxu0 0
    %441 = vmatpush2.bf16.msra.mxu0 0
    %442 = vmatprep.subr.bf16.mxu0 0
    %443 = vmatpush2.bf16.msra.mxu0 0
    %444 = vmatprep.subr.bf16.mxu0 0
    %445 = vmatpush2.bf16.msra.mxu0 0
    %446 = vmatprep.subr.bf16.mxu0 0
    %447 = vmatpush2.bf16.msra.mxu0 0
    %448 = vmatprep.subr.bf16.mxu0 0
    %449 = vmatpush2.bf16.msra.mxu0 0
    %450 = vmatprep.subr.bf16.mxu0 0
    %451 = vmatpush2.bf16.msra.mxu0 0
    %452 = vmatprep.subr.bf16.mxu0 0
    %453 = vmatpush2.bf16.msra.mxu0 0
    %454 = vmatprep.mubr.bf16.mxu0 0
    %455 = vmatmul.mubr.bf16.gmra.mxu0 %v416
    %v456 = vpop.f32.mrf.mxu0
    %v457 = vadd.f32 0.0, %v456
    %v458 = vpop.f32.mrf.mxu0
    %v459 = vpop.f32.mrf.mxu0
    %v460 = vpop.f32.mrf.mxu0
    %461 = vdwg.mxu0
    %462 = vrot.lane.b32.xlu0 %v350, 120
    %v463 = vpop.permute.xlu0 %462
    %464 = vrot.lane.b32.xlu0 %v350, 88
    %v465 = vpop.permute.xlu0 %464
    %v467 = vsel %vm354, %v463, 0
    %v470 = vsel %vm354, %v465, 0
    %472 = vmatprep.subr.bf16.mxu0 0
    %473 = vmatpush1.bf16.xpose.msra.mxu0 0
    %474 = vmatprep.subr.bf16.mxu0 0
    %475 = vmatpush1.bf16.xpose.msra.mxu0 0
    %476 = vmatprep.subr.bf16.mxu0 0
    %477 = vmatpush1.bf16.xpose.msra.mxu0 0
    %478 = vmatprep.subr.bf16.mxu0 0
    %479 = vmatpush1.bf16.xpose.msra.mxu0 0
    %480 = vmatprep.subr.bf16.mxu0 0
    %481 = vmatpush1.bf16.xpose.msra.mxu0 0
    %482 = vmatprep.subr.bf16.mxu0 0
    %483 = vmatpush1.bf16.xpose.msra.mxu0 0
    %484 = vmatprep.subr.bf16.mxu0 0
    %485 = vmatpush1.bf16.xpose.msra.mxu0 0
    %486 = vmatprep.subr.bf16.mxu0 0
    %487 = vmatpush1.bf16.xpose.msra.mxu0 %v470
    %488 = vmatprep.subr.bf16.mxu0 0
    %489 = vmatpush2.bf16.xpose.msra.mxu0 0
    %490 = vmatprep.subr.bf16.mxu0 0
    %491 = vmatpush2.bf16.xpose.msra.mxu0 0
    %492 = vmatprep.subr.bf16.mxu0 0
    %493 = vmatpush2.bf16.xpose.msra.mxu0 0
    %494 = vmatprep.subr.bf16.mxu0 0
    %495 = vmatpush2.bf16.xpose.msra.mxu0 0
    %496 = vmatprep.subr.bf16.mxu0 0
    %497 = vmatpush2.bf16.xpose.msra.mxu0 0
    %498 = vmatprep.subr.bf16.mxu0 0
    %499 = vmatpush2.bf16.xpose.msra.mxu0 0
    %500 = vmatprep.subr.bf16.mxu0 0
    %501 = vmatpush2.bf16.xpose.msra.mxu0 0
    %502 = vmatprep.subr.bf16.mxu0 0
    %503 = vmatpush2.bf16.xpose.msra.mxu0 0
    %504 = vmatprep.mubr.bf16.mxu0 0
    %505 = vmatmul.mubr.bf16.gmra.mxu0 %v467
    %v506 = vpop.f32.mrf.mxu0
    %v507 = vadd.f32 %v272, %v506
    %v508 = vpop.f32.mrf.mxu0
    %v509 = vpop.f32.mrf.mxu0
    %v510 = vpop.f32.mrf.mxu0
    %511 = vdwg.mxu0
    %v512 = vsel %vm354, %v507, -inf
    %513 = vmax.xlane.f32.xlu0 %v512
    %v514 = vpop.xlane.xlu0 %513
    %v515 = vsub.f32 %v507, %v514
    %v516 = vmul.f32 %v515, 1.442695
    %v517 = vpow.pop %v516
    %v518 = vsel %vm354, %v517, 0.0
    %519 = vadd.xlane.f32.xlu0 %v518
    %v520 = vpop.xlane.xlu0 %519
    %v521 = vrcp.pop %v520
    %v522 = vmul.f32 %v517, %v521
    %v523 = vpack.c.bf16 %v522, %v522
    %524 = vrot.lane.b32.xlu0 %v350, 56
    %v525 = vpop.permute.xlu0 %524
    %v527 = vsel %vm354, %v523, 0
    %v530 = vsel %vm418, %v525, 0
    %532 = vmatprep.subr.bf16.mxu0 0
    %533 = vmatpush1.bf16.msra.mxu0 0
    %534 = vmatprep.subr.bf16.mxu0 0
    %535 = vmatpush1.bf16.msra.mxu0 0
    %536 = vmatprep.subr.bf16.mxu0 0
    %537 = vmatpush1.bf16.msra.mxu0 0
    %538 = vmatprep.subr.bf16.mxu0 0
    %539 = vmatpush1.bf16.msra.mxu0 0
    %540 = vmatprep.subr.bf16.mxu0 0
    %541 = vmatpush1.bf16.msra.mxu0 0
    %542 = vmatprep.subr.bf16.mxu0 0
    %543 = vmatpush1.bf16.msra.mxu0 0
    %544 = vmatprep.subr.bf16.mxu0 0
    %545 = vmatpush1.bf16.msra.mxu0 0
    %546 = vmatprep.subr.bf16.mxu0 0
    %547 = vmatpush1.bf16.msra.mxu0 %v530
    %548 = vmatprep.subr.bf16.mxu0 0
    %549 = vmatpush2.bf16.msra.mxu0 0
    %550 = vmatprep.subr.bf16.mxu0 0
    %551 = vmatpush2.bf16.msra.mxu0 0
    %552 = vmatprep.subr.bf16.mxu0 0
    %553 = vmatpush2.bf16.msra.mxu0 0
    %554 = vmatprep.subr.bf16.mxu0 0
    %555 = vmatpush2.bf16.msra.mxu0 0
    %556 = vmatprep.subr.bf16.mxu0 0
    %557 = vmatpush2.bf16.msra.mxu0 0
    %558 = vmatprep.subr.bf16.mxu0 0
    %559 = vmatpush2.bf16.msra.mxu0 0
    %560 = vmatprep.subr.bf16.mxu0 0
    %561 = vmatpush2.bf16.msra.mxu0 0
    %562 = vmatprep.subr.bf16.mxu0 0
    %563 = vmatpush2.bf16.msra.mxu0 0
    %564 = vmatprep.mubr.bf16.mxu0 0
    %565 = vmatmul.mubr.bf16.gmra.mxu0 %v527
    %v566 = vpop.f32.mrf.mxu0
    %v567 = vadd.f32 0.0, %v566
    %v568 = vpop.f32.mrf.mxu0
    %v569 = vpop.f32.mrf.mxu0
    %v570 = vpop.f32.mrf.mxu0
    %571 = vdwg.mxu0
    %572 = vrot.lane.b32.xlu0 %v350, 112
    %v573 = vpop.permute.xlu0 %572
    %574 = vrot.lane.b32.xlu0 %v350, 80
    %v575 = vpop.permute.xlu0 %574
    %v577 = vsel %vm354, %v573, 0
    %v580 = vsel %vm354, %v575, 0
    %582 = vmatprep.subr.bf16.mxu0 0
    %583 = vmatpush1.bf16.xpose.msra.mxu0 0
    %584 = vmatprep.subr.bf16.mxu0 0
    %585 = vmatpush1.bf16.xpose.msra.mxu0 0
    %586 = vmatprep.subr.bf16.mxu0 0
    %587 = vmatpush1.bf16.xpose.msra.mxu0 0
    %588 = vmatprep.subr.bf16.mxu0 0
    %589 = vmatpush1.bf16.xpose.msra.mxu0 0
    %590 = vmatprep.subr.bf16.mxu0 0
    %591 = vmatpush1.bf16.xpose.msra.mxu0 0
    %592 = vmatprep.subr.bf16.mxu0 0
    %593 = vmatpush1.bf16.xpose.msra.mxu0 0
    %594 = vmatprep.subr.bf16.mxu0 0
    %595 = vmatpush1.bf16.xpose.msra.mxu0 0
    %596 = vmatprep.subr.bf16.mxu0 0
    %597 = vmatpush1.bf16.xpose.msra.mxu0 %v580
    %598 = vmatprep.subr.bf16.mxu0 0
    %599 = vmatpush2.bf16.xpose.msra.mxu0 0
    %600 = vmatprep.subr.bf16.mxu0 0
    %601 = vmatpush2.bf16.xpose.msra.mxu0 0
    %602 = vmatprep.subr.bf16.mxu0 0
    %603 = vmatpush2.bf16.xpose.msra.mxu0 0
    %604 = vmatprep.subr.bf16.mxu0 0
    %605 = vmatpush2.bf16.xpose.msra.mxu0 0
    %606 = vmatprep.subr.bf16.mxu0 0
    %607 = vmatpush2.bf16.xpose.msra.mxu0 0
    %608 = vmatprep.subr.bf16.mxu0 0
    %609 = vmatpush2.bf16.xpose.msra.mxu0 0
    %610 = vmatprep.subr.bf16.mxu0 0
    %611 = vmatpush2.bf16.xpose.msra.mxu0 0
    %612 = vmatprep.subr.bf16.mxu0 0
    %613 = vmatpush2.bf16.xpose.msra.mxu0 0
    %614 = vmatprep.mubr.bf16.mxu0 0
    %615 = vmatmul.mubr.bf16.gmra.mxu0 %v577
    %v616 = vpop.f32.mrf.mxu0
    %v617 = vadd.f32 %v272, %v616
    %v618 = vpop.f32.mrf.mxu0
    %v619 = vpop.f32.mrf.mxu0
    %v620 = vpop.f32.mrf.mxu0
    %621 = vdwg.mxu0
    %v622 = vsel %vm354, %v617, -inf
    %623 = vmax.xlane.f32.xlu0 %v622
    %v624 = vpop.xlane.xlu0 %623
    %v625 = vsub.f32 %v617, %v624
    %v626 = vmul.f32 %v625, 1.442695
    %v627 = vpow.pop %v626
    %v628 = vsel %vm354, %v627, 0.0
    %629 = vadd.xlane.f32.xlu0 %v628
    %v630 = vpop.xlane.xlu0 %629
    %v631 = vrcp.pop %v630
    %v632 = vmul.f32 %v627, %v631
    %v633 = vpack.c.bf16 %v632, %v632
    %634 = vrot.lane.b32.xlu0 %v350, 48
    %v635 = vpop.permute.xlu0 %634
    %v637 = vsel %vm354, %v633, 0
    %v640 = vsel %vm418, %v635, 0
    %642 = vmatprep.subr.bf16.mxu0 0
    %643 = vmatpush1.bf16.msra.mxu0 0
    %644 = vmatprep.subr.bf16.mxu0 0
    %645 = vmatpush1.bf16.msra.mxu0 0
    %646 = vmatprep.subr.bf16.mxu0 0
    %647 = vmatpush1.bf16.msra.mxu0 0
    %648 = vmatprep.subr.bf16.mxu0 0
    %649 = vmatpush1.bf16.msra.mxu0 0
    %650 = vmatprep.subr.bf16.mxu0 0
    %651 = vmatpush1.bf16.msra.mxu0 0
    %652 = vmatprep.subr.bf16.mxu0 0
    %653 = vmatpush1.bf16.msra.mxu0 0
    %654 = vmatprep.subr.bf16.mxu0 0
    %655 = vmatpush1.bf16.msra.mxu0 0
    %656 = vmatprep.subr.bf16.mxu0 0
    %657 = vmatpush1.bf16.msra.mxu0 %v640
    %658 = vmatprep.subr.bf16.mxu0 0
    %659 = vmatpush2.bf16.msra.mxu0 0
    %660 = vmatprep.subr.bf16.mxu0 0
    %661 = vmatpush2.bf16.msra.mxu0 0
    %662 = vmatprep.subr.bf16.mxu0 0
    %663 = vmatpush2.bf16.msra.mxu0 0
    %664 = vmatprep.subr.bf16.mxu0 0
    %665 = vmatpush2.bf16.msra.mxu0 0
    %666 = vmatprep.subr.bf16.mxu0 0
    %667 = vmatpush2.bf16.msra.mxu0 0
    %668 = vmatprep.subr.bf16.mxu0 0
    %669 = vmatpush2.bf16.msra.mxu0 0
    %670 = vmatprep.subr.bf16.mxu0 0
    %671 = vmatpush2.bf16.msra.mxu0 0
    %672 = vmatprep.subr.bf16.mxu0 0
    %673 = vmatpush2.bf16.msra.mxu0 0
    %674 = vmatprep.mubr.bf16.mxu0 0
    %675 = vmatmul.mubr.bf16.gmra.mxu0 %v637
    %v676 = vpop.f32.mrf.mxu0
    %v677 = vadd.f32 0.0, %v676
    %v678 = vpop.f32.mrf.mxu0
    %v679 = vpop.f32.mrf.mxu0
    %v680 = vpop.f32.mrf.mxu0
    %681 = vdwg.mxu0
    %682 = vrot.lane.b32.xlu0 %v350, 104
    %v683 = vpop.permute.xlu0 %682
    %684 = vrot.lane.b32.xlu0 %v350, 72
    %v685 = vpop.permute.xlu0 %684
    %v687 = vsel %vm354, %v683, 0
    %v690 = vsel %vm354, %v685, 0
    %692 = vmatprep.subr.bf16.mxu0 0
    %693 = vmatpush1.bf16.xpose.msra.mxu0 0
    %694 = vmatprep.subr.bf16.mxu0 0
    %695 = vmatpush1.bf16.xpose.msra.mxu0 0
    %696 = vmatprep.subr.bf16.mxu0 0
    %697 = vmatpush1.bf16.xpose.msra.mxu0 0
    %698 = vmatprep.subr.bf16.mxu0 0
    %699 = vmatpush1.bf16.xpose.msra.mxu0 0
    %700 = vmatprep.subr.bf16.mxu0 0
    %701 = vmatpush1.bf16.xpose.msra.mxu0 0
    %702 = vmatprep.subr.bf16.mxu0 0
    %703 = vmatpush1.bf16.xpose.msra.mxu0 0
    %704 = vmatprep.subr.bf16.mxu0 0
    %705 = vmatpush1.bf16.xpose.msra.mxu0 0
    %706 = vmatprep.subr.bf16.mxu0 0
    %707 = vmatpush1.bf16.xpose.msra.mxu0 %v690
    %708 = vmatprep.subr.bf16.mxu0 0
    %709 = vmatpush2.bf16.xpose.msra.mxu0 0
    %710 = vmatprep.subr.bf16.mxu0 0
    %711 = vmatpush2.bf16.xpose.msra.mxu0 0
    %712 = vmatprep.subr.bf16.mxu0 0
    %713 = vmatpush2.bf16.xpose.msra.mxu0 0
    %714 = vmatprep.subr.bf16.mxu0 0
    %715 = vmatpush2.bf16.xpose.msra.mxu0 0
    %716 = vmatprep.subr.bf16.mxu0 0
    %717 = vmatpush2.bf16.xpose.msra.mxu0 0
    %718 = vmatprep.subr.bf16.mxu0 0
    %719 = vmatpush2.bf16.xpose.msra.mxu0 0
    %720 = vmatprep.subr.bf16.mxu0 0
    %721 = vmatpush2.bf16.xpose.msra.mxu0 0
    %722 = vmatprep.subr.bf16.mxu0 0
    %723 = vmatpush2.bf16.xpose.msra.mxu0 0
    %724 = vmatprep.mubr.bf16.mxu0 0
    %725 = vmatmul.mubr.bf16.gmra.mxu0 %v687
    %v726 = vpop.f32.mrf.mxu0
    %v727 = vadd.f32 %v272, %v726
    %v728 = vpop.f32.mrf.mxu0
    %v729 = vpop.f32.mrf.mxu0
    %v730 = vpop.f32.mrf.mxu0
    %731 = vdwg.mxu0
    %v732 = vsel %vm354, %v727, -inf
    %733 = vmax.xlane.f32.xlu0 %v732
    %v734 = vpop.xlane.xlu0 %733
    %v735 = vsub.f32 %v727, %v734
    %v736 = vmul.f32 %v735, 1.442695
    %v737 = vpow.pop %v736
    %v738 = vsel %vm354, %v737, 0.0
    %739 = vadd.xlane.f32.xlu0 %v738
    %v740 = vpop.xlane.xlu0 %739
    %v741 = vrcp.pop %v740
    %v742 = vmul.f32 %v737, %v741
    %v743 = vpack.c.bf16 %v742, %v742
    %744 = vrot.lane.b32.xlu0 %v350, 40
    %v745 = vpop.permute.xlu0 %744
    %v747 = vsel %vm354, %v743, 0
    %v750 = vsel %vm418, %v745, 0
    %752 = vmatprep.subr.bf16.mxu0 0
    %753 = vmatpush1.bf16.msra.mxu0 0
    %754 = vmatprep.subr.bf16.mxu0 0
    %755 = vmatpush1.bf16.msra.mxu0 0
    %756 = vmatprep.subr.bf16.mxu0 0
    %757 = vmatpush1.bf16.msra.mxu0 0
    %758 = vmatprep.subr.bf16.mxu0 0
    %759 = vmatpush1.bf16.msra.mxu0 0
    %760 = vmatprep.subr.bf16.mxu0 0
    %761 = vmatpush1.bf16.msra.mxu0 0
    %762 = vmatprep.subr.bf16.mxu0 0
    %763 = vmatpush1.bf16.msra.mxu0 0
    %764 = vmatprep.subr.bf16.mxu0 0
    %765 = vmatpush1.bf16.msra.mxu0 0
    %766 = vmatprep.subr.bf16.mxu0 0
    %767 = vmatpush1.bf16.msra.mxu0 %v750
    %768 = vmatprep.subr.bf16.mxu0 0
    %769 = vmatpush2.bf16.msra.mxu0 0
    %770 = vmatprep.subr.bf16.mxu0 0
    %771 = vmatpush2.bf16.msra.mxu0 0
    %772 = vmatprep.subr.bf16.mxu0 0
    %773 = vmatpush2.bf16.msra.mxu0 0
    %774 = vmatprep.subr.bf16.mxu0 0
    %775 = vmatpush2.bf16.msra.mxu0 0
    %776 = vmatprep.subr.bf16.mxu0 0
    %777 = vmatpush2.bf16.msra.mxu0 0
    %778 = vmatprep.subr.bf16.mxu0 0
    %779 = vmatpush2.bf16.msra.mxu0 0
    %780 = vmatprep.subr.bf16.mxu0 0
    %781 = vmatpush2.bf16.msra.mxu0 0
    %782 = vmatprep.subr.bf16.mxu0 0
    %783 = vmatpush2.bf16.msra.mxu0 0
    %784 = vmatprep.mubr.bf16.mxu0 0
    %785 = vmatmul.mubr.bf16.gmra.mxu0 %v747
    %v786 = vpop.f32.mrf.mxu0
    %v787 = vadd.f32 0.0, %v786
    %v788 = vpop.f32.mrf.mxu0
    %v789 = vpop.f32.mrf.mxu0
    %v790 = vpop.f32.mrf.mxu0
    %791 = vdwg.mxu0
    %793 = vrot.lane.b32.xlu0 %v567, 8
    %v794 = vpop.permute.xlu0 %793
    %797 = vrot.lane.b32.xlu0 %v677, 16
    %v798 = vpop.permute.xlu0 %797
    %801 = vrot.lane.b32.xlu0 %v787, 24
    %v802 = vpop.permute.xlu0 %801
    %v804 = vsel %vm354, %v457, %v794
    %vm805 = vcmask 130048
    %v806 = vsel %vm805, %v804, %v798
    %vm807 = vcmask 195584
    %v808 = vsel %vm807, %v806, %v802
    %v809 = vpack.c.bf16 %v347, %v347
    %811 = vrot.lane.b32.xlu0 %v809, 96
    %v812 = vpop.permute.xlu0 %811
    %v814 = vsel %vm354, %v809, 0
    %v817 = vsel %vm354, %v812, 0
    %819 = vmatprep.subr.bf16.mxu0 0
    %820 = vmatpush1.bf16.xpose.msra.mxu0 0
    %821 = vmatprep.subr.bf16.mxu0 0
    %822 = vmatpush1.bf16.xpose.msra.mxu0 0
    %823 = vmatprep.subr.bf16.mxu0 0
    %824 = vmatpush1.bf16.xpose.msra.mxu0 0
    %825 = vmatprep.subr.bf16.mxu0 0
    %826 = vmatpush1.bf16.xpose.msra.mxu0 0
    %827 = vmatprep.subr.bf16.mxu0 0
    %828 = vmatpush1.bf16.xpose.msra.mxu0 0
    %829 = vmatprep.subr.bf16.mxu0 0
    %830 = vmatpush1.bf16.xpose.msra.mxu0 0
    %831 = vmatprep.subr.bf16.mxu0 0
    %832 = vmatpush1.bf16.xpose.msra.mxu0 0
    %833 = vmatprep.subr.bf16.mxu0 0
    %834 = vmatpush1.bf16.xpose.msra.mxu0 %v817
    %835 = vmatprep.subr.bf16.mxu0 0
    %836 = vmatpush2.bf16.xpose.msra.mxu0 0
    %837 = vmatprep.subr.bf16.mxu0 0
    %838 = vmatpush2.bf16.xpose.msra.mxu0 0
    %839 = vmatprep.subr.bf16.mxu0 0
    %840 = vmatpush2.bf16.xpose.msra.mxu0 0
    %841 = vmatprep.subr.bf16.mxu0 0
    %842 = vmatpush2.bf16.xpose.msra.mxu0 0
    %843 = vmatprep.subr.bf16.mxu0 0
    %844 = vmatpush2.bf16.xpose.msra.mxu0 0
    %845 = vmatprep.subr.bf16.mxu0 0
    %846 = vmatpush2.bf16.xpose.msra.mxu0 0
    %847 = vmatprep.subr.bf16.mxu0 0
    %848 = vmatpush2.bf16.xpose.msra.mxu0 0
    %849 = vmatprep.subr.bf16.mxu0 0
    %850 = vmatpush2.bf16.xpose.msra.mxu0 0
    %851 = vmatprep.mubr.bf16.mxu0 0
    %852 = vmatmul.mubr.bf16.gmra.mxu0 %v814
    %v853 = vpop.f32.mrf.mxu0
    %v854 = vadd.f32 %v272, %v853
    %v855 = vpop.f32.mrf.mxu0
    %v856 = vpop.f32.mrf.mxu0
    %v857 = vpop.f32.mrf.mxu0
    %858 = vdwg.mxu0
    %v859 = vsel %vm354, %v854, -inf
    %860 = vmax.xlane.f32.xlu0 %v859
    %v861 = vpop.xlane.xlu0 %860
    %v862 = vsub.f32 %v854, %v861
    %v863 = vmul.f32 %v862, 1.442695
    %v864 = vpow.pop %v863
    %v865 = vsel %vm354, %v864, 0.0
    %866 = vadd.xlane.f32.xlu0 %v865
    %v867 = vpop.xlane.xlu0 %866
    %v868 = vrcp.pop %v867
    %v869 = vmul.f32 %v864, %v868
    %v870 = vpack.c.bf16 %v869, %v869
    %871 = vrot.lane.b32.xlu0 %v809, 64
    %v872 = vpop.permute.xlu0 %871
    %v874 = vsel %vm354, %v870, 0
    %v877 = vsel %vm418, %v872, 0
    %879 = vmatprep.subr.bf16.mxu0 0
    %880 = vmatpush1.bf16.msra.mxu0 0
    %881 = vmatprep.subr.bf16.mxu0 0
    %882 = vmatpush1.bf16.msra.mxu0 0
    %883 = vmatprep.subr.bf16.mxu0 0
    %884 = vmatpush1.bf16.msra.mxu0 0
    %885 = vmatprep.subr.bf16.mxu0 0
    %886 = vmatpush1.bf16.msra.mxu0 0
    %887 = vmatprep.subr.bf16.mxu0 0
    %888 = vmatpush1.bf16.msra.mxu0 0
    %889 = vmatprep.subr.bf16.mxu0 0
    %890 = vmatpush1.bf16.msra.mxu0 0
    %891 = vmatprep.subr.bf16.mxu0 0
    %892 = vmatpush1.bf16.msra.mxu0 0
    %893 = vmatprep.subr.bf16.mxu0 0
    %894 = vmatpush1.bf16.msra.mxu0 %v877
    %895 = vmatprep.subr.bf16.mxu0 0
    %896 = vmatpush2.bf16.msra.mxu0 0
    %897 = vmatprep.subr.bf16.mxu0 0
    %898 = vmatpush2.bf16.msra.mxu0 0
    %899 = vmatprep.subr.bf16.mxu0 0
    %900 = vmatpush2.bf16.msra.mxu0 0
    %901 = vmatprep.subr.bf16.mxu0 0
    %902 = vmatpush2.bf16.msra.mxu0 0
    %903 = vmatprep.subr.bf16.mxu0 0
    %904 = vmatpush2.bf16.msra.mxu0 0
    %905 = vmatprep.subr.bf16.mxu0 0
    %906 = vmatpush2.bf16.msra.mxu0 0
    %907 = vmatprep.subr.bf16.mxu0 0
    %908 = vmatpush2.bf16.msra.mxu0 0
    %909 = vmatprep.subr.bf16.mxu0 0
    %910 = vmatpush2.bf16.msra.mxu0 0
    %911 = vmatprep.mubr.bf16.mxu0 0
    %912 = vmatmul.mubr.bf16.gmra.mxu0 %v874
    %v913 = vpop.f32.mrf.mxu0
    %v914 = vadd.f32 0.0, %v913
    %v915 = vpop.f32.mrf.mxu0
    %v916 = vpop.f32.mrf.mxu0
    %v917 = vpop.f32.mrf.mxu0
    %918 = vdwg.mxu0
    %919 = vrot.lane.b32.xlu0 %v809, 120
    %v920 = vpop.permute.xlu0 %919
    %921 = vrot.lane.b32.xlu0 %v809, 88
    %v922 = vpop.permute.xlu0 %921
    %v924 = vsel %vm354, %v920, 0
    %v927 = vsel %vm354, %v922, 0
    %929 = vmatprep.subr.bf16.mxu0 0
    %930 = vmatpush1.bf16.xpose.msra.mxu0 0
    %931 = vmatprep.subr.bf16.mxu0 0
    %932 = vmatpush1.bf16.xpose.msra.mxu0 0
    %933 = vmatprep.subr.bf16.mxu0 0
    %934 = vmatpush1.bf16.xpose.msra.mxu0 0
    %935 = vmatprep.subr.bf16.mxu0 0
    %936 = vmatpush1.bf16.xpose.msra.mxu0 0
    %937 = vmatprep.subr.bf16.mxu0 0
    %938 = vmatpush1.bf16.xpose.msra.mxu0 0
    %939 = vmatprep.subr.bf16.mxu0 0
    %940 = vmatpush1.bf16.xpose.msra.mxu0 0
    %941 = vmatprep.subr.bf16.mxu0 0
    %942 = vmatpush1.bf16.xpose.msra.mxu0 0
    %943 = vmatprep.subr.bf16.mxu0 0
    %944 = vmatpush1.bf16.xpose.msra.mxu0 %v927
    %945 = vmatprep.subr.bf16.mxu0 0
    %946 = vmatpush2.bf16.xpose.msra.mxu0 0
    %947 = vmatprep.subr.bf16.mxu0 0
    %948 = vmatpush2.bf16.xpose.msra.mxu0 0
    %949 = vmatprep.subr.bf16.mxu0 0
    %950 = vmatpush2.bf16.xpose.msra.mxu0 0
    %951 = vmatprep.subr.bf16.mxu0 0
    %952 = vmatpush2.bf16.xpose.msra.mxu0 0
    %953 = vmatprep.subr.bf16.mxu0 0
    %954 = vmatpush2.bf16.xpose.msra.mxu0 0
    %955 = vmatprep.subr.bf16.mxu0 0
    %956 = vmatpush2.bf16.xpose.msra.mxu0 0
    %957 = vmatprep.subr.bf16.mxu0 0
    %958 = vmatpush2.bf16.xpose.msra.mxu0 0
    %959 = vmatprep.subr.bf16.mxu0 0
    %960 = vmatpush2.bf16.xpose.msra.mxu0 0
    %961 = vmatprep.mubr.bf16.mxu0 0
    %962 = vmatmul.mubr.bf16.gmra.mxu0 %v924
    %v963 = vpop.f32.mrf.mxu0
    %v964 = vadd.f32 %v272, %v963
    %v965 = vpop.f32.mrf.mxu0
    %v966 = vpop.f32.mrf.mxu0
    %v967 = vpop.f32.mrf.mxu0
    %968 = vdwg.mxu0
    %v969 = vsel %vm354, %v964, -inf
    %970 = vmax.xlane.f32.xlu0 %v969
    %v971 = vpop.xlane.xlu0 %970
    %v972 = vsub.f32 %v964, %v971
    %v973 = vmul.f32 %v972, 1.442695
    %v974 = vpow.pop %v973
    %v975 = vsel %vm354, %v974, 0.0
    %976 = vadd.xlane.f32.xlu0 %v975
    %v977 = vpop.xlane.xlu0 %976
    %v978 = vrcp.pop %v977
    %v979 = vmul.f32 %v974, %v978
    %v980 = vpack.c.bf16 %v979, %v979
    %981 = vrot.lane.b32.xlu0 %v809, 56
    %v982 = vpop.permute.xlu0 %981
    %v984 = vsel %vm354, %v980, 0
    %v987 = vsel %vm418, %v982, 0
    %989 = vmatprep.subr.bf16.mxu0 0
    %990 = vmatpush1.bf16.msra.mxu0 0
    %991 = vmatprep.subr.bf16.mxu0 0
    %992 = vmatpush1.bf16.msra.mxu0 0
    %993 = vmatprep.subr.bf16.mxu0 0
    %994 = vmatpush1.bf16.msra.mxu0 0
    %995 = vmatprep.subr.bf16.mxu0 0
    %996 = vmatpush1.bf16.msra.mxu0 0
    %997 = vmatprep.subr.bf16.mxu0 0
    %998 = vmatpush1.bf16.msra.mxu0 0
    %999 = vmatprep.subr.bf16.mxu0 0
    %1000 = vmatpush1.bf16.msra.mxu0 0
    %1001 = vmatprep.subr.bf16.mxu0 0
    %1002 = vmatpush1.bf16.msra.mxu0 0
    %1003 = vmatprep.subr.bf16.mxu0 0
    %1004 = vmatpush1.bf16.msra.mxu0 %v987
    %1005 = vmatprep.subr.bf16.mxu0 0
    %1006 = vmatpush2.bf16.msra.mxu0 0
    %1007 = vmatprep.subr.bf16.mxu0 0
    %1008 = vmatpush2.bf16.msra.mxu0 0
    %1009 = vmatprep.subr.bf16.mxu0 0
    %1010 = vmatpush2.bf16.msra.mxu0 0
    %1011 = vmatprep.subr.bf16.mxu0 0
    %1012 = vmatpush2.bf16.msra.mxu0 0
    %1013 = vmatprep.subr.bf16.mxu0 0
    %1014 = vmatpush2.bf16.msra.mxu0 0
    %1015 = vmatprep.subr.bf16.mxu0 0
    %1016 = vmatpush2.bf16.msra.mxu0 0
    %1017 = vmatprep.subr.bf16.mxu0 0
    %1018 = vmatpush2.bf16.msra.mxu0 0
    %1019 = vmatprep.subr.bf16.mxu0 0
    %1020 = vmatpush2.bf16.msra.mxu0 0
    %1021 = vmatprep.mubr.bf16.mxu0 0
    %1022 = vmatmul.mubr.bf16.gmra.mxu0 %v984
    %v1023 = vpop.f32.mrf.mxu0
    %v1024 = vadd.f32 0.0, %v1023
    %v1025 = vpop.f32.mrf.mxu0
    %v1026 = vpop.f32.mrf.mxu0
    %v1027 = vpop.f32.mrf.mxu0
    %1028 = vdwg.mxu0
    %1029 = vrot.lane.b32.xlu0 %v809, 112
    %v1030 = vpop.permute.xlu0 %1029
    %1031 = vrot.lane.b32.xlu0 %v809, 80
    %v1032 = vpop.permute.xlu0 %1031
    %v1034 = vsel %vm354, %v1030, 0
    %v1037 = vsel %vm354, %v1032, 0
    %1039 = vmatprep.subr.bf16.mxu0 0
    %1040 = vmatpush1.bf16.xpose.msra.mxu0 0
    %1041 = vmatprep.subr.bf16.mxu0 0
    %1042 = vmatpush1.bf16.xpose.msra.mxu0 0
    %1043 = vmatprep.subr.bf16.mxu0 0
    %1044 = vmatpush1.bf16.xpose.msra.mxu0 0
    %1045 = vmatprep.subr.bf16.mxu0 0
    %1046 = vmatpush1.bf16.xpose.msra.mxu0 0
    %1047 = vmatprep.subr.bf16.mxu0 0
    %1048 = vmatpush1.bf16.xpose.msra.mxu0 0
    %1049 = vmatprep.subr.bf16.mxu0 0
    %1050 = vmatpush1.bf16.xpose.msra.mxu0 0
    %1051 = vmatprep.subr.bf16.mxu0 0
    %1052 = vmatpush1.bf16.xpose.msra.mxu0 0
    %1053 = vmatprep.subr.bf16.mxu0 0
    %1054 = vmatpush1.bf16.xpose.msra.mxu0 %v1037
    %1055 = vmatprep.subr.bf16.mxu0 0
    %1056 = vmatpush2.bf16.xpose.msra.mxu0 0
    %1057 = vmatprep.subr.bf16.mxu0 0
    %1058 = vmatpush2.bf16.xpose.msra.mxu0 0
    %1059 = vmatprep.subr.bf16.mxu0 0
    %1060 = vmatpush2.bf16.xpose.msra.mxu0 0
    %1061 = vmatprep.subr.bf16.mxu0 0
    %1062 = vmatpush2.bf16.xpose.msra.mxu0 0
    %1063 = vmatprep.subr.bf16.mxu0 0
    %1064 = vmatpush2.bf16.xpose.msra.mxu0 0
    %1065 = vmatprep.subr.bf16.mxu0 0
    %1066 = vmatpush2.bf16.xpose.msra.mxu0 0
    %1067 = vmatprep.subr.bf16.mxu0 0
    %1068 = vmatpush2.bf16.xpose.msra.mxu0 0
    %1069 = vmatprep.subr.bf16.mxu0 0
    %1070 = vmatpush2.bf16.xpose.msra.mxu0 0
    %1071 = vmatprep.mubr.bf16.mxu0 0
    %1072 = vmatmul.mubr.bf16.gmra.mxu0 %v1034
    %v1073 = vpop.f32.mrf.mxu0
    %v1074 = vadd.f32 %v272, %v1073
    %v1075 = vpop.f32.mrf.mxu0
    %v1076 = vpop.f32.mrf.mxu0
    %v1077 = vpop.f32.mrf.mxu0
    %1078 = vdwg.mxu0
    %v1079 = vsel %vm354, %v1074, -inf
    %1080 = vmax.xlane.f32.xlu0 %v1079
    %v1081 = vpop.xlane.xlu0 %1080
    %v1082 = vsub.f32 %v1074, %v1081
    %v1083 = vmul.f32 %v1082, 1.442695
    %v1084 = vpow.pop %v1083
    %v1085 = vsel %vm354, %v1084, 0.0
    %1086 = vadd.xlane.f32.xlu0 %v1085
    %v1087 = vpop.xlane.xlu0 %1086
    %v1088 = vrcp.pop %v1087
    %v1089 = vmul.f32 %v1084, %v1088
    %v1090 = vpack.c.bf16 %v1089, %v1089
    %1091 = vrot.lane.b32.xlu0 %v809, 48
    %v1092 = vpop.permute.xlu0 %1091
    %v1094 = vsel %vm354, %v1090, 0
    %v1097 = vsel %vm418, %v1092, 0
    %1099 = vmatprep.subr.bf16.mxu0 0
    %1100 = vmatpush1.bf16.msra.mxu0 0
    %1101 = vmatprep.subr.bf16.mxu0 0
    %1102 = vmatpush1.bf16.msra.mxu0 0
    %1103 = vmatprep.subr.bf16.mxu0 0
    %1104 = vmatpush1.bf16.msra.mxu0 0
    %1105 = vmatprep.subr.bf16.mxu0 0
    %1106 = vmatpush1.bf16.msra.mxu0 0
    %1107 = vmatprep.subr.bf16.mxu0 0
    %1108 = vmatpush1.bf16.msra.mxu0 0
    %1109 = vmatprep.subr.bf16.mxu0 0
    %1110 = vmatpush1.bf16.msra.mxu0 0
    %1111 = vmatprep.subr.bf16.mxu0 0
    %1112 = vmatpush1.bf16.msra.mxu0 0
    %1113 = vmatprep.subr.bf16.mxu0 0
    %1114 = vmatpush1.bf16.msra.mxu0 %v1097
    %1115 = vmatprep.subr.bf16.mxu0 0
    %1116 = vmatpush2.bf16.msra.mxu0 0
    %1117 = vmatprep.subr.bf16.mxu0 0
    %1118 = vmatpush2.bf16.msra.mxu0 0
    %1119 = vmatprep.subr.bf16.mxu0 0
    %1120 = vmatpush2.bf16.msra.mxu0 0
    %1121 = vmatprep.subr.bf16.mxu0 0
    %1122 = vmatpush2.bf16.msra.mxu0 0
    %1123 = vmatprep.subr.bf16.mxu0 0
    %1124 = vmatpush2.bf16.msra.mxu0 0
    %1125 = vmatprep.subr.bf16.mxu0 0
    %1126 = vmatpush2.bf16.msra.mxu0 0
    %1127 = vmatprep.subr.bf16.mxu0 0
    %1128 = vmatpush2.bf16.msra.mxu0 0
    %1129 = vmatprep.subr.bf16.mxu0 0
    %1130 = vmatpush2.bf16.msra.mxu0 0
    %1131 = vmatprep.mubr.bf16.mxu0 0
    %1132 = vmatmul.mubr.bf16.gmra.mxu0 %v1094
    %v1133 = vpop.f32.mrf.mxu0
    %v1134 = vadd.f32 0.0, %v1133
    %v1135 = vpop.f32.mrf.mxu0
    %v1136 = vpop.f32.mrf.mxu0
    %v1137 = vpop.f32.mrf.mxu0
    %1138 = vdwg.mxu0
    %1139 = vrot.lane.b32.xlu0 %v809, 104
    %v1140 = vpop.permute.xlu0 %1139
    %1141 = vrot.lane.b32.xlu0 %v809, 72
    %v1142 = vpop.permute.xlu0 %1141
    %v1144 = vsel %vm354, %v1140, 0
    %v1147 = vsel %vm354, %v1142, 0
    %1149 = vmatprep.subr.bf16.mxu0 0
    %1150 = vmatpush1.bf16.xpose.msra.mxu0 0
    %1151 = vmatprep.subr.bf16.mxu0 0
    %1152 = vmatpush1.bf16.xpose.msra.mxu0 0
    %1153 = vmatprep.subr.bf16.mxu0 0
    %1154 = vmatpush1.bf16.xpose.msra.mxu0 0
    %1155 = vmatprep.subr.bf16.mxu0 0
    %1156 = vmatpush1.bf16.xpose.msra.mxu0 0
    %1157 = vmatprep.subr.bf16.mxu0 0
    %1158 = vmatpush1.bf16.xpose.msra.mxu0 0
    %1159 = vmatprep.subr.bf16.mxu0 0
    %1160 = vmatpush1.bf16.xpose.msra.mxu0 0
    %1161 = vmatprep.subr.bf16.mxu0 0
    %1162 = vmatpush1.bf16.xpose.msra.mxu0 0
    %1163 = vmatprep.subr.bf16.mxu0 0
    %1164 = vmatpush1.bf16.xpose.msra.mxu0 %v1147
    %1165 = vmatprep.subr.bf16.mxu0 0
    %1166 = vmatpush2.bf16.xpose.msra.mxu0 0
    %1167 = vmatprep.subr.bf16.mxu0 0
    %1168 = vmatpush2.bf16.xpose.msra.mxu0 0
    %1169 = vmatprep.subr.bf16.mxu0 0
    %1170 = vmatpush2.bf16.xpose.msra.mxu0 0
    %1171 = vmatprep.subr.bf16.mxu0 0
    %1172 = vmatpush2.bf16.xpose.msra.mxu0 0
    %1173 = vmatprep.subr.bf16.mxu0 0
    %1174 = vmatpush2.bf16.xpose.msra.mxu0 0
    %1175 = vmatprep.subr.bf16.mxu0 0
    %1176 = vmatpush2.bf16.xpose.msra.mxu0 0
    %1177 = vmatprep.subr.bf16.mxu0 0
    %1178 = vmatpush2.bf16.xpose.msra.mxu0 0
    %1179 = vmatprep.subr.bf16.mxu0 0
    %1180 = vmatpush2.bf16.xpose.msra.mxu0 0
    %1181 = vmatprep.mubr.bf16.mxu0 0
    %1182 = vmatmul.mubr.bf16.gmra.mxu0 %v1144
    %v1183 = vpop.f32.mrf.mxu0
    %v1184 = vadd.f32 %v272, %v1183
    %v1185 = vpop.f32.mrf.mxu0
    %v1186 = vpop.f32.mrf.mxu0
    %v1187 = vpop.f32.mrf.mxu0
    %1188 = vdwg.mxu0
    %v1189 = vsel %vm354, %v1184, -inf
    %1190 = vmax.xlane.f32.xlu0 %v1189
    %v1191 = vpop.xlane.xlu0 %1190
    %v1192 = vsub.f32 %v1184, %v1191
    %v1193 = vmul.f32 %v1192, 1.442695
    %v1194 = vpow.pop %v1193
    %v1195 = vsel %vm354, %v1194, 0.0
    %1196 = vadd.xlane.f32.xlu0 %v1195
    %v1197 = vpop.xlane.xlu0 %1196
    %v1198 = vrcp.pop %v1197
    %v1199 = vmul.f32 %v1194, %v1198
    %v1200 = vpack.c.bf16 %v1199, %v1199
    %1201 = vrot.lane.b32.xlu0 %v809, 40
    %v1202 = vpop.permute.xlu0 %1201
    %v1204 = vsel %vm354, %v1200, 0
    %v1207 = vsel %vm418, %v1202, 0
    %1209 = vmatprep.subr.bf16.mxu0 0
    %1210 = vmatpush1.bf16.msra.mxu0 0
    %1211 = vmatprep.subr.bf16.mxu0 0
    %1212 = vmatpush1.bf16.msra.mxu0 0
    %1213 = vmatprep.subr.bf16.mxu0 0
    %1214 = vmatpush1.bf16.msra.mxu0 0
    %1215 = vmatprep.subr.bf16.mxu0 0
    %1216 = vmatpush1.bf16.msra.mxu0 0
    %1217 = vmatprep.subr.bf16.mxu0 0
    %1218 = vmatpush1.bf16.msra.mxu0 0
    %1219 = vmatprep.subr.bf16.mxu0 0
    %1220 = vmatpush1.bf16.msra.mxu0 0
    %1221 = vmatprep.subr.bf16.mxu0 0
    %1222 = vmatpush1.bf16.msra.mxu0 0
    %1223 = vmatprep.subr.bf16.mxu0 0
    %1224 = vmatpush1.bf16.msra.mxu0 %v1207
    %1225 = vmatprep.subr.bf16.mxu0 0
    %1226 = vmatpush2.bf16.msra.mxu0 0
    %1227 = vmatprep.subr.bf16.mxu0 0
    %1228 = vmatpush2.bf16.msra.mxu0 0
    %1229 = vmatprep.subr.bf16.mxu0 0
    %1230 = vmatpush2.bf16.msra.mxu0 0
    %1231 = vmatprep.subr.bf16.mxu0 0
    %1232 = vmatpush2.bf16.msra.mxu0 0
    %1233 = vmatprep.subr.bf16.mxu0 0
    %1234 = vmatpush2.bf16.msra.mxu0 0
    %1235 = vmatprep.subr.bf16.mxu0 0
    %1236 = vmatpush2.bf16.msra.mxu0 0
    %1237 = vmatprep.subr.bf16.mxu0 0
    %1238 = vmatpush2.bf16.msra.mxu0 0
    %1239 = vmatprep.subr.bf16.mxu0 0
    %1240 = vmatpush2.bf16.msra.mxu0 0
    %1241 = vmatprep.mubr.bf16.mxu0 0
    %1242 = vmatmul.mubr.bf16.gmra.mxu0 %v1204
    %v1243 = vpop.f32.mrf.mxu0
    %v1244 = vadd.f32 0.0, %v1243
    %v1245 = vpop.f32.mrf.mxu0
    %v1246 = vpop.f32.mrf.mxu0
    %v1247 = vpop.f32.mrf.mxu0
    %1248 = vdwg.mxu0
    %1250 = vrot.lane.b32.xlu0 %v1024, 8
    %v1251 = vpop.permute.xlu0 %1250
    %1254 = vrot.lane.b32.xlu0 %v1134, 16
    %v1255 = vpop.permute.xlu0 %1254
    %1258 = vrot.lane.b32.xlu0 %v1244, 24
    %v1259 = vpop.permute.xlu0 %1258
    %v1261 = vsel %vm354, %v914, %v1251
    %v1262 = vsel %vm805, %v1261, %v1255
    %v1263 = vsel %vm807, %v1262, %v1259
    %v1264 = vpack.c.bf16 %v1263, %v808
    %v1265 = vld [vmem:[#allocation12] sm:$0xf]
    %v1266 = vld [vmem:[#allocation12 + $0x4] sm:$0xf]
    %v1267 = vld [vmem:[#allocation12 + $0x8] sm:$0xf]
    %v1268 = vld [vmem:[#allocation12 + $0xc] sm:$0xf]
    %v1269 = vld [vmem:[#allocation13] sm:$0x1]
    %v1271 = vlaneseq
    %v1272 = vshrl.u32 %v1271, 7
    %v1273 = vsub.s32 0, %v1272
    %v1274 = vrot.slane %v1269, %v1273
    %v1280 = vunpack.c.l.b16 %v1265
    %v1281 = vunpack.c.l.b16 %v1266
    %v1282 = vunpack.c.l.b16 %v1267
    %v1283 = vunpack.c.l.b16 %v1268
    %v1284 = vpack.c.b16 %v1281, %v1280
    %v1285 = vpack.c.b16 %v1283, %v1282
    %v1289 = vsel %vm305, %v1264, 0
    %1291 = vmatprep.subr.bf16.mxu0 0
    %1292 = vmatpush1.bf16.msra.mxu0 0
    %1293 = vmatprep.subr.bf16.mxu0 0
    %1294 = vmatpush1.bf16.msra.mxu0 0
    %1295 = vmatprep.subr.bf16.mxu0 0
    %1296 = vmatpush1.bf16.msra.mxu0 0
    %1297 = vmatprep.subr.bf16.mxu0 0
    %1298 = vmatpush1.bf16.msra.mxu0 0
    %1299 = vmatprep.subr.bf16.mxu0 0
    %1300 = vmatpush1.bf16.msra.mxu0 0
    %1301 = vmatprep.subr.bf16.mxu0 0
    %1302 = vmatpush1.bf16.msra.mxu0 0
    %1303 = vmatprep.subr.bf16.mxu0 0
    %1304 = vmatpush1.bf16.msra.mxu0 %v1285
    %1305 = vmatprep.subr.bf16.mxu0 0
    %1306 = vmatpush1.bf16.msra.mxu0 %v1284
    %1307 = vmatprep.subr.bf16.mxu0 0
    %1308 = vmatpush2.bf16.msra.mxu0 0
    %1309 = vmatprep.subr.bf16.mxu0 0
    %1310 = vmatpush2.bf16.msra.mxu0 0
    %1311 = vmatprep.subr.bf16.mxu0 0
    %1312 = vmatpush2.bf16.msra.mxu0 0
    %1313 = vmatprep.subr.bf16.mxu0 0
    %1314 = vmatpush2.bf16.msra.mxu0 0
    %1315 = vmatprep.subr.bf16.mxu0 0
    %1316 = vmatpush2.bf16.msra.mxu0 0
    %1317 = vmatprep.subr.bf16.mxu0 0
    %1318 = vmatpush2.bf16.msra.mxu0 0
    %1319 = vmatprep.subr.bf16.mxu0 0
    %1320 = vmatpush2.bf16.msra.mxu0 0
    %1321 = vmatprep.subr.bf16.mxu0 0
    %1322 = vmatpush2.bf16.msra.mxu0 0
    %1323 = vmatprep.mubr.bf16.mxu0 0
    %1324 = vmatmul.mubr.bf16.gmra.mxu0 %v1289
    %v1325 = vpop.f32.mrf.mxu0
    %v1326 = vadd.f32 %v1274, %v1325
    %v1327 = vpop.f32.mrf.mxu0
    %v1328 = vpop.f32.mrf.mxu0
    %v1329 = vadd.f32 %v1274, %v1328
    %v1330 = vpop.f32.mrf.mxu0
    %1331 = vdwg.mxu0
    %v1332 = vadd.f32 %v262, %v1326
    %v1333 = vadd.f32 %v263, %v1329
    %v1334 = vld [vmem:[%s17] sm:$0x1]
    %v1335 = vld [vmem:[%s18] sm:$0x1]
    %v1336 = vsel %vm305, %v1332, 0.0
    %1337 = vadd.xlane.f32.xlu0 %v1336
    %v1338 = vpop.xlane.xlu0 %1337
    %v1339 = vsel %vm305, %v1333, 0.0
    %1340 = vadd.xlane.f32.xlu0 %v1339
    %v1341 = vpop.xlane.xlu0 %1340
    %v1342 = vrcp.pop 32.0
    %v1343 = vmul.f32 %v1338, %v1342
    %v1344 = vmul.f32 %v1341, %v1342
    %v1345 = vsub.f32 %v1332, %v1343
    %v1346 = vsub.f32 %v1333, %v1344
    %v1347 = vmul.f32 %v1345, %v1345
    %v1348 = vmul.f32 %v1346, %v1346
    %v1349 = vsel %vm305, %v1347, 0.0
    %1350 = vadd.xlane.f32.xlu0 %v1349
    %v1351 = vpop.xlane.xlu0 %1350
    %v1352 = vsel %vm305, %v1348, 0.0
    %1353 = vadd.xlane.f32.xlu0 %v1352
    %v1354 = vpop.xlane.xlu0 %1353
    %v1355 = vmul.f32 %v1351, %v1342
    %v1356 = vmul.f32 %v1354, %v1342
    %v1357 = vadd.f32 %v1355, 1e-05
    %v1358 = vadd.f32 %v1356, 1e-05
    %v1359 = vrsqrt.pop %v1357
    %v1360 = vrsqrt.pop %v1358
    %v1361 = vmul.f32 %v1345, %v1359
    %v1362 = vmul.f32 %v1346, %v1360
    %v1364 = vlaneseq
    %v1365 = vshrl.u32 %v1364, 7
    %v1366 = vsub.s32 0, %v1365
    %v1367 = vrot.slane %v1334, %v1366
    %v1369 = vmul.f32 %v1361, %v1367
    %v1370 = vmul.f32 %v1362, %v1367
    %v1372 = vlaneseq
    %v1373 = vshrl.u32 %v1372, 7
    %v1374 = vsub.s32 0, %v1373
    %v1375 = vrot.slane %v1335, %v1374
    %v1377 = vadd.f32 %v1369, %v1375
    %v1378 = vadd.f32 %v1370, %v1375
    %v1379 = vpack.c.bf16 %v1378, %v1377
    %v1380 = vld [vmem:[#allocation15] sm:$0xf]
    %v1381 = vld [vmem:[#allocation15 + $0x4] sm:$0xf]
    %v1382 = vld [vmem:[#allocation15 + $0x8] sm:$0xf]
    %v1383 = vld [vmem:[#allocation15 + $0xc] sm:$0xf]
    %v1384 = vld [vmem:[%s8] sm:$0x1]
    %v1386 = vlaneseq
    %v1387 = vshrl.u32 %v1386, 7
    %v1388 = vsub.s32 0, %v1387
    %v1389 = vrot.slane %v1384, %v1388
    %v1395 = vunpack.c.l.b16 %v1380
    %v1396 = vunpack.c.l.b16 %v1381
    %v1397 = vunpack.c.l.b16 %v1382
    %v1398 = vunpack.c.l.b16 %v1383
    %v1399 = vpack.c.b16 %v1396, %v1395
    %v1400 = vpack.c.b16 %v1398, %v1397
    %v1404 = vsel %vm305, %v1379, 0
    %1406 = vmatprep.subr.bf16.mxu0 0
    %1407 = vmatpush1.bf16.msra.mxu0 0
    %1408 = vmatprep.subr.bf16.mxu0 0
    %1409 = vmatpush1.bf16.msra.mxu0 0
    %1410 = vmatprep.subr.bf16.mxu0 0
    %1411 = vmatpush1.bf16.msra.mxu0 0
    %1412 = vmatprep.subr.bf16.mxu0 0
    %1413 = vmatpush1.bf16.msra.mxu0 0
    %1414 = vmatprep.subr.bf16.mxu0 0
    %1415 = vmatpush1.bf16.msra.mxu0 0
    %1416 = vmatprep.subr.bf16.mxu0 0
    %1417 = vmatpush1.bf16.msra.mxu0 0
    %1418 = vmatprep.subr.bf16.mxu0 0
    %1419 = vmatpush1.bf16.msra.mxu0 %v1400
    %1420 = vmatprep.subr.bf16.mxu0 0
    %1421 = vmatpush1.bf16.msra.mxu0 %v1399
    %1422 = vmatprep.subr.bf16.mxu0 0
    %1423 = vmatpush2.bf16.msra.mxu0 0
    %1424 = vmatprep.subr.bf16.mxu0 0
    %1425 = vmatpush2.bf16.msra.mxu0 0
    %1426 = vmatprep.subr.bf16.mxu0 0
    %1427 = vmatpush2.bf16.msra.mxu0 0
    %1428 = vmatprep.subr.bf16.mxu0 0
    %1429 = vmatpush2.bf16.msra.mxu0 0
    %1430 = vmatprep.subr.bf16.mxu0 0
    %1431 = vmatpush2.bf16.msra.mxu0 0
    %1432 = vmatprep.subr.bf16.mxu0 0
    %1433 = vmatpush2.bf16.msra.mxu0 0
    %1434 = vmatprep.subr.bf16.mxu0 0
    %1435 = vmatpush2.bf16.msra.mxu0 0
    %1436 = vmatprep.subr.bf16.mxu0 0
    %1437 = vmatpush2.bf16.msra.mxu0 0
    %1438 = vmatprep.mubr.bf16.mxu0 0
    %1439 = vmatmul.mubr.bf16.gmra.mxu0 %v1404
    %v1440 = vpop.f32.mrf.mxu0
    %v1441 = vadd.f32 %v1389, %v1440
    %v1442 = vpop.f32.mrf.mxu0
    %v1443 = vpop.f32.mrf.mxu0
    %v1444 = vadd.f32 %v1389, %v1443
    %v1445 = vpop.f32.mrf.mxu0
    %1446 = vdwg.mxu0
    %v1447 = vld [vmem:[#allocation16] sm:$0xf]
    %v1448 = vld [vmem:[#allocation16 + $0x4] sm:$0xf]
    %v1449 = vld [vmem:[#allocation16 + $0x8] sm:$0xf]
    %v1450 = vld [vmem:[#allocation16 + $0xc] sm:$0xf]
    %v1451 = vld [vmem:[%s10] sm:$0x1]
    %v1453 = vlaneseq
    %v1454 = vshrl.u32 %v1453, 7
    %v1455 = vsub.s32 0, %v1454
    %v1456 = vrot.slane %v1451, %v1455
    %v1462 = vunpack.c.l.b16 %v1447
    %v1463 = vunpack.c.l.b16 %v1448
    %v1464 = vunpack.c.l.b16 %v1449
    %v1465 = vunpack.c.l.b16 %v1450
    %v1466 = vpack.c.b16 %v1463, %v1462
    %v1467 = vpack.c.b16 %v1465, %v1464
    %v1471 = vsel %vm305, %v266, 0
    %1473 = vmatprep.subr.bf16.mxu0 0
    %1474 = vmatpush1.bf16.msra.mxu0 0
    %1475 = vmatprep.subr.bf16.mxu0 0
    %1476 = vmatpush1.bf16.msra.mxu0 0
    %1477 = vmatprep.subr.bf16.mxu0 0
    %1478 = vmatpush1.bf16.msra.mxu0 0
    %1479 = vmatprep.subr.bf16.mxu0 0
    %1480 = vmatpush1.bf16.msra.mxu0 0
    %1481 = vmatprep.subr.bf16.mxu0 0
    %1482 = vmatpush1.bf16.msra.mxu0 0
    %1483 = vmatprep.subr.bf16.mxu0 0
    %1484 = vmatpush1.bf16.msra.mxu0 0
    %1485 = vmatprep.subr.bf16.mxu0 0
    %1486 = vmatpush1.bf16.msra.mxu0 %v1467
    %1487 = vmatprep.subr.bf16.mxu0 0
    %1488 = vmatpush1.bf16.msra.mxu0 %v1466
    %1489 = vmatprep.subr.bf16.mxu0 0
    %1490 = vmatpush2.bf16.msra.mxu0 0
    %1491 = vmatprep.subr.bf16.mxu0 0
    %1492 = vmatpush2.bf16.msra.mxu0 0
    %1493 = vmatprep.subr.bf16.mxu0 0
    %1494 = vmatpush2.bf16.msra.mxu0 0
    %1495 = vmatprep.subr.bf16.mxu0 0
    %1496 = vmatpush2.bf16.msra.mxu0 0
    %1497 = vmatprep.subr.bf16.mxu0 0
    %1498 = vmatpush2.bf16.msra.mxu0 0
    %1499 = vmatprep.subr.bf16.mxu0 0
    %1500 = vmatpush2.bf16.msra.mxu0 0
    %1501 = vmatprep.subr.bf16.mxu0 0
    %1502 = vmatpush2.bf16.msra.mxu0 0
    %1503 = vmatprep.subr.bf16.mxu0 0
    %1504 = vmatpush2.bf16.msra.mxu0 0
    %1505 = vmatprep.mubr.bf16.mxu0 0
    %1506 = vmatmul.mubr.bf16.gmra.mxu0 %v1471
    %v1507 = vpop.f32.mrf.mxu0
    %v1508 = vadd.f32 %v1456, %v1507
    %v1509 = vpop.f32.mrf.mxu0
    %v1510 = vpop.f32.mrf.mxu0
    %v1511 = vadd.f32 %v1456, %v1510
    %v1512 = vpop.f32.mrf.mxu0
    %1513 = vdwg.mxu0
    %v1514 = vpack.c.bf16 %v1441, %v1441
    %v1515 = vpack.c.bf16 %v1508, %v1508
    %v1517 = vsel %vm354, %v1514, 0
    %v1520 = vsel %vm354, %v1515, 0
    %1522 = vmatprep.subr.bf16.mxu0 0
    %1523 = vmatpush1.bf16.xpose.msra.mxu0 0
    %1524 = vmatprep.subr.bf16.mxu0 0
    %1525 = vmatpush1.bf16.xpose.msra.mxu0 0
    %1526 = vmatprep.subr.bf16.mxu0 0
    %1527 = vmatpush1.bf16.xpose.msra.mxu0 0
    %1528 = vmatprep.subr.bf16.mxu0 0
    %1529 = vmatpush1.bf16.xpose.msra.mxu0 0
    %1530 = vmatprep.subr.bf16.mxu0 0
    %1531 = vmatpush1.bf16.xpose.msra.mxu0 0
    %1532 = vmatprep.subr.bf16.mxu0 0
    %1533 = vmatpush1.bf16.xpose.msra.mxu0 0
    %1534 = vmatprep.subr.bf16.mxu0 0
    %1535 = vmatpush1.bf16.xpose.msra.mxu0 0
    %1536 = vmatprep.subr.bf16.mxu0 0
    %1537 = vmatpush1.bf16.xpose.msra.mxu0 %v1520
    %1538 = vmatprep.subr.bf16.mxu0 0
    %1539 = vmatpush2.bf16.xpose.msra.mxu0 0
    %1540 = vmatprep.subr.bf16.mxu0 0
    %1541 = vmatpush2.bf16.xpose.msra.mxu0 0
    %1542 = vmatprep.subr.bf16.mxu0 0
    %1543 = vmatpush2.bf16.xpose.msra.mxu0 0
    %1544 = vmatprep.subr.bf16.mxu0 0
    %1545 = vmatpush2.bf16.xpose.msra.mxu0 0
    %1546 = vmatprep.subr.bf16.mxu0 0
    %1547 = vmatpush2.bf16.xpose.msra.mxu0 0
    %1548 = vmatprep.subr.bf16.mxu0 0
    %1549 = vmatpush2.bf16.xpose.msra.mxu0 0
    %1550 = vmatprep.subr.bf16.mxu0 0
    %1551 = vmatpush2.bf16.xpose.msra.mxu0 0
    %1552 = vmatprep.subr.bf16.mxu0 0
    %1553 = vmatpush2.bf16.xpose.msra.mxu0 0
    %1554 = vmatprep.mubr.bf16.mxu0 0
    %1555 = vmatmul.mubr.bf16.gmra.mxu0 %v1517
    %v1556 = vpop.f32.mrf.mxu0
    %v1557 = vadd.f32 %v276, %v1556
    %v1558 = vpop.f32.mrf.mxu0
    %v1559 = vpop.f32.mrf.mxu0
    %v1560 = vpop.f32.mrf.mxu0
    %1561 = vdwg.mxu0
    %v1562 = vsel %vm354, %v1557, -inf
    %1563 = vmax.xlane.f32.xlu0 %v1562
    %v1564 = vpop.xlane.xlu0 %1563
    %v1565 = vsub.f32 %v1557, %v1564
    %v1566 = vmul.f32 %v1565, 1.442695
    %v1567 = vpow.pop %v1566
    %v1568 = vsel %vm354, %v1567, 0.0
    %1569 = vadd.xlane.f32.xlu0 %v1568
    %v1570 = vpop.xlane.xlu0 %1569
    %v1571 = vrcp.pop %v1570
    %v1572 = vmul.f32 %v1567, %v1571
    %v1573 = vpack.c.bf16 %v1572, %v1572
    %1575 = vrot.lane.b32.xlu0 %v1515, 96
    %v1576 = vpop.permute.xlu0 %1575
    %v1578 = vsel %vm354, %v1573, 0
    %v1581 = vsel %vm418, %v1576, 0
    %1583 = vmatprep.subr.bf16.mxu0 0
    %1584 = vmatpush1.bf16.msra.mxu0 0
    %1585 = vmatprep.subr.bf16.mxu0 0
    %1586 = vmatpush1.bf16.msra.mxu0 0
    %1587 = vmatprep.subr.bf16.mxu0 0
    %1588 = vmatpush1.bf16.msra.mxu0 0
    %1589 = vmatprep.subr.bf16.mxu0 0
    %1590 = vmatpush1.bf16.msra.mxu0 0
    %1591 = vmatprep.subr.bf16.mxu0 0
    %1592 = vmatpush1.bf16.msra.mxu0 0
    %1593 = vmatprep.subr.bf16.mxu0 0
    %1594 = vmatpush1.bf16.msra.mxu0 0
    %1595 = vmatprep.subr.bf16.mxu0 0
    %1596 = vmatpush1.bf16.msra.mxu0 0
    %1597 = vmatprep.subr.bf16.mxu0 0
    %1598 = vmatpush1.bf16.msra.mxu0 %v1581
    %1599 = vmatprep.subr.bf16.mxu0 0
    %1600 = vmatpush2.bf16.msra.mxu0 0
    %1601 = vmatprep.subr.bf16.mxu0 0
    %1602 = vmatpush2.bf16.msra.mxu0 0
    %1603 = vmatprep.subr.bf16.mxu0 0
    %1604 = vmatpush2.bf16.msra.mxu0 0
    %1605 = vmatprep.subr.bf16.mxu0 0
    %1606 = vmatpush2.bf16.msra.mxu0 0
    %1607 = vmatprep.subr.bf16.mxu0 0
    %1608 = vmatpush2.bf16.msra.mxu0 0
    %1609 = vmatprep.subr.bf16.mxu0 0
    %1610 = vmatpush2.bf16.msra.mxu0 0
    %1611 = vmatprep.subr.bf16.mxu0 0
    %1612 = vmatpush2.bf16.msra.mxu0 0
    %1613 = vmatprep.subr.bf16.mxu0 0
    %1614 = vmatpush2.bf16.msra.mxu0 0
    %1615 = vmatprep.mubr.bf16.mxu0 0
    %1616 = vmatmul.mubr.bf16.gmra.mxu0 %v1578
    %v1617 = vpop.f32.mrf.mxu0
    %v1618 = vadd.f32 0.0, %v1617
    %v1619 = vpop.f32.mrf.mxu0
    %v1620 = vpop.f32.mrf.mxu0
    %v1621 = vpop.f32.mrf.mxu0
    %1622 = vdwg.mxu0
    %1624 = vrot.lane.b32.xlu0 %v1514, 120
    %v1625 = vpop.permute.xlu0 %1624
    %1626 = vrot.lane.b32.xlu0 %v1515, 120
    %v1627 = vpop.permute.xlu0 %1626
    %v1629 = vsel %vm354, %v1625, 0
    %v1632 = vsel %vm354, %v1627, 0
    %1634 = vmatprep.subr.bf16.mxu0 0
    %1635 = vmatpush1.bf16.xpose.msra.mxu0 0
    %1636 = vmatprep.subr.bf16.mxu0 0
    %1637 = vmatpush1.bf16.xpose.msra.mxu0 0
    %1638 = vmatprep.subr.bf16.mxu0 0
    %1639 = vmatpush1.bf16.xpose.msra.mxu0 0
    %1640 = vmatprep.subr.bf16.mxu0 0
    %1641 = vmatpush1.bf16.xpose.msra.mxu0 0
    %1642 = vmatprep.subr.bf16.mxu0 0
    %1643 = vmatpush1.bf16.xpose.msra.mxu0 0
    %1644 = vmatprep.subr.bf16.mxu0 0
    %1645 = vmatpush1.bf16.xpose.msra.mxu0 0
    %1646 = vmatprep.subr.bf16.mxu0 0
    %1647 = vmatpush1.bf16.xpose.msra.mxu0 0
    %1648 = vmatprep.subr.bf16.mxu0 0
    %1649 = vmatpush1.bf16.xpose.msra.mxu0 %v1632
    %1650 = vmatprep.subr.bf16.mxu0 0
    %1651 = vmatpush2.bf16.xpose.msra.mxu0 0
    %1652 = vmatprep.subr.bf16.mxu0 0
    %1653 = vmatpush2.bf16.xpose.msra.mxu0 0
    %1654 = vmatprep.subr.bf16.mxu0 0
    %1655 = vmatpush2.bf16.xpose.msra.mxu0 0
    %1656 = vmatprep.subr.bf16.mxu0 0
    %1657 = vmatpush2.bf16.xpose.msra.mxu0 0
    %1658 = vmatprep.subr.bf16.mxu0 0
    %1659 = vmatpush2.bf16.xpose.msra.mxu0 0
    %1660 = vmatprep.subr.bf16.mxu0 0
    %1661 = vmatpush2.bf16.xpose.msra.mxu0 0
    %1662 = vmatprep.subr.bf16.mxu0 0
    %1663 = vmatpush2.bf16.xpose.msra.mxu0 0
    %1664 = vmatprep.subr.bf16.mxu0 0
    %1665 = vmatpush2.bf16.xpose.msra.mxu0 0
    %1666 = vmatprep.mubr.bf16.mxu0 0
    %1667 = vmatmul.mubr.bf16.gmra.mxu0 %v1629
    %v1668 = vpop.f32.mrf.mxu0
    %v1669 = vadd.f32 %v276, %v1668
    %v1670 = vpop.f32.mrf.mxu0
    %v1671 = vpop.f32.mrf.mxu0
    %v1672 = vpop.f32.mrf.mxu0
    %1673 = vdwg.mxu0
    %v1674 = vsel %vm354, %v1669, -inf
    %1675 = vmax.xlane.f32.xlu0 %v1674
    %v1676 = vpop.xlane.xlu0 %1675
    %v1677 = vsub.f32 %v1669, %v1676
    %v1678 = vmul.f32 %v1677, 1.442695
    %v1679 = vpow.pop %v1678
    %v1680 = vsel %vm354, %v1679, 0.0
    %1681 = vadd.xlane.f32.xlu0 %v1680
    %v1682 = vpop.xlane.xlu0 %1681
    %v1683 = vrcp.pop %v1682
    %v1684 = vmul.f32 %v1679, %v1683
    %v1685 = vpack.c.bf16 %v1684, %v1684
    %1686 = vrot.lane.b32.xlu0 %v1515, 88
    %v1687 = vpop.permute.xlu0 %1686
    %v1689 = vsel %vm354, %v1685, 0
    %v1692 = vsel %vm418, %v1687, 0
    %1694 = vmatprep.subr.bf16.mxu0 0
    %1695 = vmatpush1.bf16.msra.mxu0 0
    %1696 = vmatprep.subr.bf16.mxu0 0
    %1697 = vmatpush1.bf16.msra.mxu0 0
    %1698 = vmatprep.subr.bf16.mxu0 0
    %1699 = vmatpush1.bf16.msra.mxu0 0
    %1700 = vmatprep.subr.bf16.mxu0 0
    %1701 = vmatpush1.bf16.msra.mxu0 0
    %1702 = vmatprep.subr.bf16.mxu0 0
    %1703 = vmatpush1.bf16.msra.mxu0 0
    %1704 = vmatprep.subr.bf16.mxu0 0
    %1705 = vmatpush1.bf16.msra.mxu0 0
    %1706 = vmatprep.subr.bf16.mxu0 0
    %1707 = vmatpush1.bf16.msra.mxu0 0
    %1708 = vmatprep.subr.bf16.mxu0 0
    %1709 = vmatpush1.bf16.msra.mxu0 %v1692
    %1710 = vmatprep.subr.bf16.mxu0 0
    %1711 = vmatpush2.bf16.msra.mxu0 0
    %1712 = vmatprep.subr.bf16.mxu0 0
    %1713 = vmatpush2.bf16.msra.mxu0 0
    %1714 = vmatprep.subr.bf16.mxu0 0
    %1715 = vmatpush2.bf16.msra.mxu0 0
    %1716 = vmatprep.subr.bf16.mxu0 0
    %1717 = vmatpush2.bf16.msra.mxu0 0
    %1718 = vmatprep.subr.bf16.mxu0 0
    %1719 = vmatpush2.bf16.msra.mxu0 0
    %1720 = vmatprep.subr.bf16.mxu0 0
    %1721 = vmatpush2.bf16.msra.mxu0 0
    %1722 = vmatprep.subr.bf16.mxu0 0
    %1723 = vmatpush2.bf16.msra.mxu0 0
    %1724 = vmatprep.subr.bf16.mxu0 0
    %1725 = vmatpush2.bf16.msra.mxu0 0
    %1726 = vmatprep.mubr.bf16.mxu0 0
    %1727 = vmatmul.mubr.bf16.gmra.mxu0 %v1689
    %v1728 = vpop.f32.mrf.mxu0
    %v1729 = vadd.f32 0.0, %v1728
    %v1730 = vpop.f32.mrf.mxu0
    %v1731 = vpop.f32.mrf.mxu0
    %v1732 = vpop.f32.mrf.mxu0
    %1733 = vdwg.mxu0
    %1734 = vrot.lane.b32.xlu0 %v1514, 112
    %v1735 = vpop.permute.xlu0 %1734
    %1736 = vrot.lane.b32.xlu0 %v1515, 112
    %v1737 = vpop.permute.xlu0 %1736
    %v1739 = vsel %vm354, %v1735, 0
    %v1742 = vsel %vm354, %v1737, 0
    %1744 = vmatprep.subr.bf16.mxu0 0
    %1745 = vmatpush1.bf16.xpose.msra.mxu0 0
    %1746 = vmatprep.subr.bf16.mxu0 0
    %1747 = vmatpush1.bf16.xpose.msra.mxu0 0
    %1748 = vmatprep.subr.bf16.mxu0 0
    %1749 = vmatpush1.bf16.xpose.msra.mxu0 0
    %1750 = vmatprep.subr.bf16.mxu0 0
    %1751 = vmatpush1.bf16.xpose.msra.mxu0 0
    %1752 = vmatprep.subr.bf16.mxu0 0
    %1753 = vmatpush1.bf16.xpose.msra.mxu0 0
    %1754 = vmatprep.subr.bf16.mxu0 0
    %1755 = vmatpush1.bf16.xpose.msra.mxu0 0
    %1756 = vmatprep.subr.bf16.mxu0 0
    %1757 = vmatpush1.bf16.xpose.msra.mxu0 0
    %1758 = vmatprep.subr.bf16.mxu0 0
    %1759 = vmatpush1.bf16.xpose.msra.mxu0 %v1742
    %1760 = vmatprep.subr.bf16.mxu0 0
    %1761 = vmatpush2.bf16.xpose.msra.mxu0 0
    %1762 = vmatprep.subr.bf16.mxu0 0
    %1763 = vmatpush2.bf16.xpose.msra.mxu0 0
    %1764 = vmatprep.subr.bf16.mxu0 0
    %1765 = vmatpush2.bf16.xpose.msra.mxu0 0
    %1766 = vmatprep.subr.bf16.mxu0 0
    %1767 = vmatpush2.bf16.xpose.msra.mxu0 0
    %1768 = vmatprep.subr.bf16.mxu0 0
    %1769 = vmatpush2.bf16.xpose.msra.mxu0 0
    %1770 = vmatprep.subr.bf16.mxu0 0
    %1771 = vmatpush2.bf16.xpose.msra.mxu0 0
    %1772 = vmatprep.subr.bf16.mxu0 0
    %1773 = vmatpush2.bf16.xpose.msra.mxu0 0
    %1774 = vmatprep.subr.bf16.mxu0 0
    %1775 = vmatpush2.bf16.xpose.msra.mxu0 0
    %1776 = vmatprep.mubr.bf16.mxu0 0
    %1777 = vmatmul.mubr.bf16.gmra.mxu0 %v1739
    %v1778 = vpop.f32.mrf.mxu0
    %v1779 = vadd.f32 %v276, %v1778
    %v1780 = vpop.f32.mrf.mxu0
    %v1781 = vpop.f32.mrf.mxu0
    %v1782 = vpop.f32.mrf.mxu0
    %1783 = vdwg.mxu0
    %v1784 = vsel %vm354, %v1779, -inf
    %1785 = vmax.xlane.f32.xlu0 %v1784
    %v1786 = vpop.xlane.xlu0 %1785
    %v1787 = vsub.f32 %v1779, %v1786
    %v1788 = vmul.f32 %v1787, 1.442695
    %v1789 = vpow.pop %v1788
    %v1790 = vsel %vm354, %v1789, 0.0
    %1791 = vadd.xlane.f32.xlu0 %v1790
    %v1792 = vpop.xlane.xlu0 %1791
    %v1793 = vrcp.pop %v1792
    %v1794 = vmul.f32 %v1789, %v1793
    %v1795 = vpack.c.bf16 %v1794, %v1794
    %1796 = vrot.lane.b32.xlu0 %v1515, 80
    %v1797 = vpop.permute.xlu0 %1796
    %v1799 = vsel %vm354, %v1795, 0
    %v1802 = vsel %vm418, %v1797, 0
    %1804 = vmatprep.subr.bf16.mxu0 0
    %1805 = vmatpush1.bf16.msra.mxu0 0
    %1806 = vmatprep.subr.bf16.mxu0 0
    %1807 = vmatpush1.bf16.msra.mxu0 0
    %1808 = vmatprep.subr.bf16.mxu0 0
    %1809 = vmatpush1.bf16.msra.mxu0 0
    %1810 = vmatprep.subr.bf16.mxu0 0
    %1811 = vmatpush1.bf16.msra.mxu0 0
    %1812 = vmatprep.subr.bf16.mxu0 0
    %1813 = vmatpush1.bf16.msra.mxu0 0
    %1814 = vmatprep.subr.bf16.mxu0 0
    %1815 = vmatpush1.bf16.msra.mxu0 0
    %1816 = vmatprep.subr.bf16.mxu0 0
    %1817 = vmatpush1.bf16.msra.mxu0 0
    %1818 = vmatprep.subr.bf16.mxu0 0
    %1819 = vmatpush1.bf16.msra.mxu0 %v1802
    %1820 = vmatprep.subr.bf16.mxu0 0
    %1821 = vmatpush2.bf16.msra.mxu0 0
    %1822 = vmatprep.subr.bf16.mxu0 0
    %1823 = vmatpush2.bf16.msra.mxu0 0
    %1824 = vmatprep.subr.bf16.mxu0 0
    %1825 = vmatpush2.bf16.msra.mxu0 0
    %1826 = vmatprep.subr.bf16.mxu0 0
    %1827 = vmatpush2.bf16.msra.mxu0 0
    %1828 = vmatprep.subr.bf16.mxu0 0
    %1829 = vmatpush2.bf16.msra.mxu0 0
    %1830 = vmatprep.subr.bf16.mxu0 0
    %1831 = vmatpush2.bf16.msra.mxu0 0
    %1832 = vmatprep.subr.bf16.mxu0 0
    %1833 = vmatpush2.bf16.msra.mxu0 0
    %1834 = vmatprep.subr.bf16.mxu0 0
    %1835 = vmatpush2.bf16.msra.mxu0 0
    %1836 = vmatprep.mubr.bf16.mxu0 0
    %1837 = vmatmul.mubr.bf16.gmra.mxu0 %v1799
    %v1838 = vpop.f32.mrf.mxu0
    %v1839 = vadd.f32 0.0, %v1838
    %v1840 = vpop.f32.mrf.mxu0
    %v1841 = vpop.f32.mrf.mxu0
    %v1842 = vpop.f32.mrf.mxu0
    %1843 = vdwg.mxu0
    %1844 = vrot.lane.b32.xlu0 %v1514, 104
    %v1845 = vpop.permute.xlu0 %1844
    %1846 = vrot.lane.b32.xlu0 %v1515, 104
    %v1847 = vpop.permute.xlu0 %1846
    %v1849 = vsel %vm354, %v1845, 0
    %v1852 = vsel %vm354, %v1847, 0
    %1854 = vmatprep.subr.bf16.mxu0 0
    %1855 = vmatpush1.bf16.xpose.msra.mxu0 0
    %1856 = vmatprep.subr.bf16.mxu0 0
    %1857 = vmatpush1.bf16.xpose.msra.mxu0 0
    %1858 = vmatprep.subr.bf16.mxu0 0
    %1859 = vmatpush1.bf16.xpose.msra.mxu0 0
    %1860 = vmatprep.subr.bf16.mxu0 0
    %1861 = vmatpush1.bf16.xpose.msra.mxu0 0
    %1862 = vmatprep.subr.bf16.mxu0 0
    %1863 = vmatpush1.bf16.xpose.msra.mxu0 0
    %1864 = vmatprep.subr.bf16.mxu0 0
    %1865 = vmatpush1.bf16.xpose.msra.mxu0 0
    %1866 = vmatprep.subr.bf16.mxu0 0
    %1867 = vmatpush1.bf16.xpose.msra.mxu0 0
    %1868 = vmatprep.subr.bf16.mxu0 0
    %1869 = vmatpush1.bf16.xpose.msra.mxu0 %v1852
    %1870 = vmatprep.subr.bf16.mxu0 0
    %1871 = vmatpush2.bf16.xpose.msra.mxu0 0
    %1872 = vmatprep.subr.bf16.mxu0 0
    %1873 = vmatpush2.bf16.xpose.msra.mxu0 0
    %1874 = vmatprep.subr.bf16.mxu0 0
    %1875 = vmatpush2.bf16.xpose.msra.mxu0 0
    %1876 = vmatprep.subr.bf16.mxu0 0
    %1877 = vmatpush2.bf16.xpose.msra.mxu0 0
    %1878 = vmatprep.subr.bf16.mxu0 0
    %1879 = vmatpush2.bf16.xpose.msra.mxu0 0
    %1880 = vmatprep.subr.bf16.mxu0 0
    %1881 = vmatpush2.bf16.xpose.msra.mxu0 0
    %1882 = vmatprep.subr.bf16.mxu0 0
    %1883 = vmatpush2.bf16.xpose.msra.mxu0 0
    %1884 = vmatprep.subr.bf16.mxu0 0
    %1885 = vmatpush2.bf16.xpose.msra.mxu0 0
    %1886 = vmatprep.mubr.bf16.mxu0 0
    %1887 = vmatmul.mubr.bf16.gmra.mxu0 %v1849
    %v1888 = vpop.f32.mrf.mxu0
    %v1889 = vadd.f32 %v276, %v1888
    %v1890 = vpop.f32.mrf.mxu0
    %v1891 = vpop.f32.mrf.mxu0
    %v1892 = vpop.f32.mrf.mxu0
    %1893 = vdwg.mxu0
    %v1894 = vsel %vm354, %v1889, -inf
    %1895 = vmax.xlane.f32.xlu0 %v1894
    %v1896 = vpop.xlane.xlu0 %1895
    %v1897 = vsub.f32 %v1889, %v1896
    %v1898 = vmul.f32 %v1897, 1.442695
    %v1899 = vpow.pop %v1898
    %v1900 = vsel %vm354, %v1899, 0.0
    %1901 = vadd.xlane.f32.xlu0 %v1900
    %v1902 = vpop.xlane.xlu0 %1901
    %v1903 = vrcp.pop %v1902
    %v1904 = vmul.f32 %v1899, %v1903
    %v1905 = vpack.c.bf16 %v1904, %v1904
    %1906 = vrot.lane.b32.xlu0 %v1515, 72
    %v1907 = vpop.permute.xlu0 %1906
    %v1909 = vsel %vm354, %v1905, 0
    %v1912 = vsel %vm418, %v1907, 0
    %1914 = vmatprep.subr.bf16.mxu0 0
    %1915 = vmatpush1.bf16.msra.mxu0 0
    %1916 = vmatprep.subr.bf16.mxu0 0
    %1917 = vmatpush1.bf16.msra.mxu0 0
    %1918 = vmatprep.subr.bf16.mxu0 0
    %1919 = vmatpush1.bf16.msra.mxu0 0
    %1920 = vmatprep.subr.bf16.mxu0 0
    %1921 = vmatpush1.bf16.msra.mxu0 0
    %1922 = vmatprep.subr.bf16.mxu0 0
    %1923 = vmatpush1.bf16.msra.mxu0 0
    %1924 = vmatprep.subr.bf16.mxu0 0
    %1925 = vmatpush1.bf16.msra.mxu0 0
    %1926 = vmatprep.subr.bf16.mxu0 0
    %1927 = vmatpush1.bf16.msra.mxu0 0
    %1928 = vmatprep.subr.bf16.mxu0 0
    %1929 = vmatpush1.bf16.msra.mxu0 %v1912
    %1930 = vmatprep.subr.bf16.mxu0 0
    %1931 = vmatpush2.bf16.msra.mxu0 0
    %1932 = vmatprep.subr.bf16.mxu0 0
    %1933 = vmatpush2.bf16.msra.mxu0 0
    %1934 = vmatprep.subr.bf16.mxu0 0
    %1935 = vmatpush2.bf16.msra.mxu0 0
    %1936 = vmatprep.subr.bf16.mxu0 0
    %1937 = vmatpush2.bf16.msra.mxu0 0
    %1938 = vmatprep.subr.bf16.mxu0 0
    %1939 = vmatpush2.bf16.msra.mxu0 0
    %1940 = vmatprep.subr.bf16.mxu0 0
    %1941 = vmatpush2.bf16.msra.mxu0 0
    %1942 = vmatprep.subr.bf16.mxu0 0
    %1943 = vmatpush2.bf16.msra.mxu0 0
    %1944 = vmatprep.subr.bf16.mxu0 0
    %1945 = vmatpush2.bf16.msra.mxu0 0
    %1946 = vmatprep.mubr.bf16.mxu0 0
    %1947 = vmatmul.mubr.bf16.gmra.mxu0 %v1909
    %v1948 = vpop.f32.mrf.mxu0
    %v1949 = vadd.f32 0.0, %v1948
    %v1950 = vpop.f32.mrf.mxu0
    %v1951 = vpop.f32.mrf.mxu0
    %v1952 = vpop.f32.mrf.mxu0
    %1953 = vdwg.mxu0
    %1955 = vrot.lane.b32.xlu0 %v1729, 8
    %v1956 = vpop.permute.xlu0 %1955
    %1959 = vrot.lane.b32.xlu0 %v1839, 16
    %v1960 = vpop.permute.xlu0 %1959
    %1963 = vrot.lane.b32.xlu0 %v1949, 24
    %v1964 = vpop.permute.xlu0 %1963
    %v1966 = vsel %vm354, %v1618, %v1956
    %v1967 = vsel %vm805, %v1966, %v1960
    %v1968 = vsel %vm807, %v1967, %v1964
    %v1969 = vpack.c.bf16 %v1444, %v1444
    %v1970 = vpack.c.bf16 %v1511, %v1511
    %v1972 = vsel %vm354, %v1969, 0
    %v1975 = vsel %vm354, %v1970, 0
    %1977 = vmatprep.subr.bf16.mxu0 0
    %1978 = vmatpush1.bf16.xpose.msra.mxu0 0
    %1979 = vmatprep.subr.bf16.mxu0 0
    %1980 = vmatpush1.bf16.xpose.msra.mxu0 0
    %1981 = vmatprep.subr.bf16.mxu0 0
    %1982 = vmatpush1.bf16.xpose.msra.mxu0 0
    %1983 = vmatprep.subr.bf16.mxu0 0
    %1984 = vmatpush1.bf16.xpose.msra.mxu0 0
    %1985 = vmatprep.subr.bf16.mxu0 0
    %1986 = vmatpush1.bf16.xpose.msra.mxu0 0
    %1987 = vmatprep.subr.bf16.mxu0 0
    %1988 = vmatpush1.bf16.xpose.msra.mxu0 0
    %1989 = vmatprep.subr.bf16.mxu0 0
    %1990 = vmatpush1.bf16.xpose.msra.mxu0 0
    %1991 = vmatprep.subr.bf16.mxu0 0
    %1992 = vmatpush1.bf16.xpose.msra.mxu0 %v1975
    %1993 = vmatprep.subr.bf16.mxu0 0
    %1994 = vmatpush2.bf16.xpose.msra.mxu0 0
    %1995 = vmatprep.subr.bf16.mxu0 0
    %1996 = vmatpush2.bf16.xpose.msra.mxu0 0
    %1997 = vmatprep.subr.bf16.mxu0 0
    %1998 = vmatpush2.bf16.xpose.msra.mxu0 0
    %1999 = vmatprep.subr.bf16.mxu0 0
    %2000 = vmatpush2.bf16.xpose.msra.mxu0 0
    %2001 = vmatprep.subr.bf16.mxu0 0
    %2002 = vmatpush2.bf16.xpose.msra.mxu0 0
    %2003 = vmatprep.subr.bf16.mxu0 0
    %2004 = vmatpush2.bf16.xpose.msra.mxu0 0
    %2005 = vmatprep.subr.bf16.mxu0 0
    %2006 = vmatpush2.bf16.xpose.msra.mxu0 0
    %2007 = vmatprep.subr.bf16.mxu0 0
    %2008 = vmatpush2.bf16.xpose.msra.mxu0 0
    %2009 = vmatprep.mubr.bf16.mxu0 0
    %2010 = vmatmul.mubr.bf16.gmra.mxu0 %v1972
    %v2011 = vpop.f32.mrf.mxu0
    %v2012 = vadd.f32 %v280, %v2011
    %v2013 = vpop.f32.mrf.mxu0
    %v2014 = vpop.f32.mrf.mxu0
    %v2015 = vpop.f32.mrf.mxu0
    %2016 = vdwg.mxu0
    %v2017 = vsel %vm354, %v2012, -inf
    %2018 = vmax.xlane.f32.xlu0 %v2017
    %v2019 = vpop.xlane.xlu0 %2018
    %v2020 = vsub.f32 %v2012, %v2019
    %v2021 = vmul.f32 %v2020, 1.442695
    %v2022 = vpow.pop %v2021
    %v2023 = vsel %vm354, %v2022, 0.0
    %2024 = vadd.xlane.f32.xlu0 %v2023
    %v2025 = vpop.xlane.xlu0 %2024
    %v2026 = vrcp.pop %v2025
    %v2027 = vmul.f32 %v2022, %v2026
    %v2028 = vpack.c.bf16 %v2027, %v2027
    %2030 = vrot.lane.b32.xlu0 %v1970, 96
    %v2031 = vpop.permute.xlu0 %2030
    %v2033 = vsel %vm354, %v2028, 0
    %v2036 = vsel %vm418, %v2031, 0
    %2038 = vmatprep.subr.bf16.mxu0 0
    %2039 = vmatpush1.bf16.msra.mxu0 0
    %2040 = vmatprep.subr.bf16.mxu0 0
    %2041 = vmatpush1.bf16.msra.mxu0 0
    %2042 = vmatprep.subr.bf16.mxu0 0
    %2043 = vmatpush1.bf16.msra.mxu0 0
    %2044 = vmatprep.subr.bf16.mxu0 0
    %2045 = vmatpush1.bf16.msra.mxu0 0
    %2046 = vmatprep.subr.bf16.mxu0 0
    %2047 = vmatpush1.bf16.msra.mxu0 0
    %2048 = vmatprep.subr.bf16.mxu0 0
    %2049 = vmatpush1.bf16.msra.mxu0 0
    %2050 = vmatprep.subr.bf16.mxu0 0
    %2051 = vmatpush1.bf16.msra.mxu0 0
    %2052 = vmatprep.subr.bf16.mxu0 0
    %2053 = vmatpush1.bf16.msra.mxu0 %v2036
    %2054 = vmatprep.subr.bf16.mxu0 0
    %2055 = vmatpush2.bf16.msra.mxu0 0
    %2056 = vmatprep.subr.bf16.mxu0 0
    %2057 = vmatpush2.bf16.msra.mxu0 0
    %2058 = vmatprep.subr.bf16.mxu0 0
    %2059 = vmatpush2.bf16.msra.mxu0 0
    %2060 = vmatprep.subr.bf16.mxu0 0
    %2061 = vmatpush2.bf16.msra.mxu0 0
    %2062 = vmatprep.subr.bf16.mxu0 0
    %2063 = vmatpush2.bf16.msra.mxu0 0
    %2064 = vmatprep.subr.bf16.mxu0 0
    %2065 = vmatpush2.bf16.msra.mxu0 0
    %2066 = vmatprep.subr.bf16.mxu0 0
    %2067 = vmatpush2.bf16.msra.mxu0 0
    %2068 = vmatprep.subr.bf16.mxu0 0
    %2069 = vmatpush2.bf16.msra.mxu0 0
    %2070 = vmatprep.mubr.bf16.mxu0 0
    %2071 = vmatmul.mubr.bf16.gmra.mxu0 %v2033
    %v2072 = vpop.f32.mrf.mxu0
    %v2073 = vadd.f32 0.0, %v2072
    %v2074 = vpop.f32.mrf.mxu0
    %v2075 = vpop.f32.mrf.mxu0
    %v2076 = vpop.f32.mrf.mxu0
    %2077 = vdwg.mxu0
    %2079 = vrot.lane.b32.xlu0 %v1969, 120
    %v2080 = vpop.permute.xlu0 %2079
    %2081 = vrot.lane.b32.xlu0 %v1970, 120
    %v2082 = vpop.permute.xlu0 %2081
    %v2084 = vsel %vm354, %v2080, 0
    %v2087 = vsel %vm354, %v2082, 0
    %2089 = vmatprep.subr.bf16.mxu0 0
    %2090 = vmatpush1.bf16.xpose.msra.mxu0 0
    %2091 = vmatprep.subr.bf16.mxu0 0
    %2092 = vmatpush1.bf16.xpose.msra.mxu0 0
    %2093 = vmatprep.subr.bf16.mxu0 0
    %2094 = vmatpush1.bf16.xpose.msra.mxu0 0
    %2095 = vmatprep.subr.bf16.mxu0 0
    %2096 = vmatpush1.bf16.xpose.msra.mxu0 0
    %2097 = vmatprep.subr.bf16.mxu0 0
    %2098 = vmatpush1.bf16.xpose.msra.mxu0 0
    %2099 = vmatprep.subr.bf16.mxu0 0
    %2100 = vmatpush1.bf16.xpose.msra.mxu0 0
    %2101 = vmatprep.subr.bf16.mxu0 0
    %2102 = vmatpush1.bf16.xpose.msra.mxu0 0
    %2103 = vmatprep.subr.bf16.mxu0 0
    %2104 = vmatpush1.bf16.xpose.msra.mxu0 %v2087
    %2105 = vmatprep.subr.bf16.mxu0 0
    %2106 = vmatpush2.bf16.xpose.msra.mxu0 0
    %2107 = vmatprep.subr.bf16.mxu0 0
    %2108 = vmatpush2.bf16.xpose.msra.mxu0 0
    %2109 = vmatprep.subr.bf16.mxu0 0
    %2110 = vmatpush2.bf16.xpose.msra.mxu0 0
    %2111 = vmatprep.subr.bf16.mxu0 0
    %2112 = vmatpush2.bf16.xpose.msra.mxu0 0
    %2113 = vmatprep.subr.bf16.mxu0 0
    %2114 = vmatpush2.bf16.xpose.msra.mxu0 0
    %2115 = vmatprep.subr.bf16.mxu0 0
    %2116 = vmatpush2.bf16.xpose.msra.mxu0 0
    %2117 = vmatprep.subr.bf16.mxu0 0
    %2118 = vmatpush2.bf16.xpose.msra.mxu0 0
    %2119 = vmatprep.subr.bf16.mxu0 0
    %2120 = vmatpush2.bf16.xpose.msra.mxu0 0
    %2121 = vmatprep.mubr.bf16.mxu0 0
    %2122 = vmatmul.mubr.bf16.gmra.mxu0 %v2084
    %v2123 = vpop.f32.mrf.mxu0
    %v2124 = vadd.f32 %v280, %v2123
    %v2125 = vpop.f32.mrf.mxu0
    %v2126 = vpop.f32.mrf.mxu0
    %v2127 = vpop.f32.mrf.mxu0
    %2128 = vdwg.mxu0
    %v2129 = vsel %vm354, %v2124, -inf
    %2130 = vmax.xlane.f32.xlu0 %v2129
    %v2131 = vpop.xlane.xlu0 %2130
    %v2132 = vsub.f32 %v2124, %v2131
    %v2133 = vmul.f32 %v2132, 1.442695
    %v2134 = vpow.pop %v2133
    %v2135 = vsel %vm354, %v2134, 0.0
    %2136 = vadd.xlane.f32.xlu0 %v2135
    %v2137 = vpop.xlane.xlu0 %2136
    %v2138 = vrcp.pop %v2137
    %v2139 = vmul.f32 %v2134, %v2138
    %v2140 = vpack.c.bf16 %v2139, %v2139
    %2141 = vrot.lane.b32.xlu0 %v1970, 88
    %v2142 = vpop.permute.xlu0 %2141
    %v2144 = vsel %vm354, %v2140, 0
    %v2147 = vsel %vm418, %v2142, 0
    %2149 = vmatprep.subr.bf16.mxu0 0
    %2150 = vmatpush1.bf16.msra.mxu0 0
    %2151 = vmatprep.subr.bf16.mxu0 0
    %2152 = vmatpush1.bf16.msra.mxu0 0
    %2153 = vmatprep.subr.bf16.mxu0 0
    %2154 = vmatpush1.bf16.msra.mxu0 0
    %2155 = vmatprep.subr.bf16.mxu0 0
    %2156 = vmatpush1.bf16.msra.mxu0 0
    %2157 = vmatprep.subr.bf16.mxu0 0
    %2158 = vmatpush1.bf16.msra.mxu0 0
    %2159 = vmatprep.subr.bf16.mxu0 0
    %2160 = vmatpush1.bf16.msra.mxu0 0
    %2161 = vmatprep.subr.bf16.mxu0 0
    %2162 = vmatpush1.bf16.msra.mxu0 0
    %2163 = vmatprep.subr.bf16.mxu0 0
    %2164 = vmatpush1.bf16.msra.mxu0 %v2147
    %2165 = vmatprep.subr.bf16.mxu0 0
    %2166 = vmatpush2.bf16.msra.mxu0 0
    %2167 = vmatprep.subr.bf16.mxu0 0
    %2168 = vmatpush2.bf16.msra.mxu0 0
    %2169 = vmatprep.subr.bf16.mxu0 0
    %2170 = vmatpush2.bf16.msra.mxu0 0
    %2171 = vmatprep.subr.bf16.mxu0 0
    %2172 = vmatpush2.bf16.msra.mxu0 0
    %2173 = vmatprep.subr.bf16.mxu0 0
    %2174 = vmatpush2.bf16.msra.mxu0 0
    %2175 = vmatprep.subr.bf16.mxu0 0
    %2176 = vmatpush2.bf16.msra.mxu0 0
    %2177 = vmatprep.subr.bf16.mxu0 0
    %2178 = vmatpush2.bf16.msra.mxu0 0
    %2179 = vmatprep.subr.bf16.mxu0 0
    %2180 = vmatpush2.bf16.msra.mxu0 0
    %2181 = vmatprep.mubr.bf16.mxu0 0
    %2182 = vmatmul.mubr.bf16.gmra.mxu0 %v2144
    %v2183 = vpop.f32.mrf.mxu0
    %v2184 = vadd.f32 0.0, %v2183
    %v2185 = vpop.f32.mrf.mxu0
    %v2186 = vpop.f32.mrf.mxu0
    %v2187 = vpop.f32.mrf.mxu0
    %2188 = vdwg.mxu0
    %2189 = vrot.lane.b32.xlu0 %v1969, 112
    %v2190 = vpop.permute.xlu0 %2189
    %2191 = vrot.lane.b32.xlu0 %v1970, 112
    %v2192 = vpop.permute.xlu0 %2191
    %v2194 = vsel %vm354, %v2190, 0
    %v2197 = vsel %vm354, %v2192, 0
    %2199 = vmatprep.subr.bf16.mxu0 0
    %2200 = vmatpush1.bf16.xpose.msra.mxu0 0
    %2201 = vmatprep.subr.bf16.mxu0 0
    %2202 = vmatpush1.bf16.xpose.msra.mxu0 0
    %2203 = vmatprep.subr.bf16.mxu0 0
    %2204 = vmatpush1.bf16.xpose.msra.mxu0 0
    %2205 = vmatprep.subr.bf16.mxu0 0
    %2206 = vmatpush1.bf16.xpose.msra.mxu0 0
    %2207 = vmatprep.subr.bf16.mxu0 0
    %2208 = vmatpush1.bf16.xpose.msra.mxu0 0
    %2209 = vmatprep.subr.bf16.mxu0 0
    %2210 = vmatpush1.bf16.xpose.msra.mxu0 0
    %2211 = vmatprep.subr.bf16.mxu0 0
    %2212 = vmatpush1.bf16.xpose.msra.mxu0 0
    %2213 = vmatprep.subr.bf16.mxu0 0
    %2214 = vmatpush1.bf16.xpose.msra.mxu0 %v2197
    %2215 = vmatprep.subr.bf16.mxu0 0
    %2216 = vmatpush2.bf16.xpose.msra.mxu0 0
    %2217 = vmatprep.subr.bf16.mxu0 0
    %2218 = vmatpush2.bf16.xpose.msra.mxu0 0
    %2219 = vmatprep.subr.bf16.mxu0 0
    %2220 = vmatpush2.bf16.xpose.msra.mxu0 0
    %2221 = vmatprep.subr.bf16.mxu0 0
    %2222 = vmatpush2.bf16.xpose.msra.mxu0 0
    %2223 = vmatprep.subr.bf16.mxu0 0
    %2224 = vmatpush2.bf16.xpose.msra.mxu0 0
    %2225 = vmatprep.subr.bf16.mxu0 0
    %2226 = vmatpush2.bf16.xpose.msra.mxu0 0
    %2227 = vmatprep.subr.bf16.mxu0 0
    %2228 = vmatpush2.bf16.xpose.msra.mxu0 0
    %2229 = vmatprep.subr.bf16.mxu0 0
    %2230 = vmatpush2.bf16.xpose.msra.mxu0 0
    %2231 = vmatprep.mubr.bf16.mxu0 0
    %2232 = vmatmul.mubr.bf16.gmra.mxu0 %v2194
    %v2233 = vpop.f32.mrf.mxu0
    %v2234 = vadd.f32 %v280, %v2233
    %v2235 = vpop.f32.mrf.mxu0
    %v2236 = vpop.f32.mrf.mxu0
    %v2237 = vpop.f32.mrf.mxu0
    %2238 = vdwg.mxu0
    %v2239 = vsel %vm354, %v2234, -inf
    %2240 = vmax.xlane.f32.xlu0 %v2239
    %v2241 = vpop.xlane.xlu0 %2240
    %v2242 = vsub.f32 %v2234, %v2241
    %v2243 = vmul.f32 %v2242, 1.442695
    %v2244 = vpow.pop %v2243
    %v2245 = vsel %vm354, %v2244, 0.0
    %2246 = vadd.xlane.f32.xlu0 %v2245
    %v2247 = vpop.xlane.xlu0 %2246
    %v2248 = vrcp.pop %v2247
    %v2249 = vmul.f32 %v2244, %v2248
    %v2250 = vpack.c.bf16 %v2249, %v2249
    %2251 = vrot.lane.b32.xlu0 %v1970, 80
    %v2252 = vpop.permute.xlu0 %2251
    %v2254 = vsel %vm354, %v2250, 0
    %v2257 = vsel %vm418, %v2252, 0
    %2259 = vmatprep.subr.bf16.mxu0 0
    %2260 = vmatpush1.bf16.msra.mxu0 0
    %2261 = vmatprep.subr.bf16.mxu0 0
    %2262 = vmatpush1.bf16.msra.mxu0 0
    %2263 = vmatprep.subr.bf16.mxu0 0
    %2264 = vmatpush1.bf16.msra.mxu0 0
    %2265 = vmatprep.subr.bf16.mxu0 0
    %2266 = vmatpush1.bf16.msra.mxu0 0
    %2267 = vmatprep.subr.bf16.mxu0 0
    %2268 = vmatpush1.bf16.msra.mxu0 0
    %2269 = vmatprep.subr.bf16.mxu0 0
    %2270 = vmatpush1.bf16.msra.mxu0 0
    %2271 = vmatprep.subr.bf16.mxu0 0
    %2272 = vmatpush1.bf16.msra.mxu0 0
    %2273 = vmatprep.subr.bf16.mxu0 0
    %2274 = vmatpush1.bf16.msra.mxu0 %v2257
    %2275 = vmatprep.subr.bf16.mxu0 0
    %2276 = vmatpush2.bf16.msra.mxu0 0
    %2277 = vmatprep.subr.bf16.mxu0 0
    %2278 = vmatpush2.bf16.msra.mxu0 0
    %2279 = vmatprep.subr.bf16.mxu0 0
    %2280 = vmatpush2.bf16.msra.mxu0 0
    %2281 = vmatprep.subr.bf16.mxu0 0
    %2282 = vmatpush2.bf16.msra.mxu0 0
    %2283 = vmatprep.subr.bf16.mxu0 0
    %2284 = vmatpush2.bf16.msra.mxu0 0
    %2285 = vmatprep.subr.bf16.mxu0 0
    %2286 = vmatpush2.bf16.msra.mxu0 0
    %2287 = vmatprep.subr.bf16.mxu0 0
    %2288 = vmatpush2.bf16.msra.mxu0 0
    %2289 = vmatprep.subr.bf16.mxu0 0
    %2290 = vmatpush2.bf16.msra.mxu0 0
    %2291 = vmatprep.mubr.bf16.mxu0 0
    %2292 = vmatmul.mubr.bf16.gmra.mxu0 %v2254
    %v2293 = vpop.f32.mrf.mxu0
    %v2294 = vadd.f32 0.0, %v2293
    %v2295 = vpop.f32.mrf.mxu0
    %v2296 = vpop.f32.mrf.mxu0
    %v2297 = vpop.f32.mrf.mxu0
    %2298 = vdwg.mxu0
    %2299 = vrot.lane.b32.xlu0 %v1969, 104
    %v2300 = vpop.permute.xlu0 %2299
    %2301 = vrot.lane.b32.xlu0 %v1970, 104
    %v2302 = vpop.permute.xlu0 %2301
    %v2304 = vsel %vm354, %v2300, 0
    %v2307 = vsel %vm354, %v2302, 0
    %2309 = vmatprep.subr.bf16.mxu0 0
    %2310 = vmatpush1.bf16.xpose.msra.mxu0 0
    %2311 = vmatprep.subr.bf16.mxu0 0
    %2312 = vmatpush1.bf16.xpose.msra.mxu0 0
    %2313 = vmatprep.subr.bf16.mxu0 0
    %2314 = vmatpush1.bf16.xpose.msra.mxu0 0
    %2315 = vmatprep.subr.bf16.mxu0 0
    %2316 = vmatpush1.bf16.xpose.msra.mxu0 0
    %2317 = vmatprep.subr.bf16.mxu0 0
    %2318 = vmatpush1.bf16.xpose.msra.mxu0 0
    %2319 = vmatprep.subr.bf16.mxu0 0
    %2320 = vmatpush1.bf16.xpose.msra.mxu0 0
    %2321 = vmatprep.subr.bf16.mxu0 0
    %2322 = vmatpush1.bf16.xpose.msra.mxu0 0
    %2323 = vmatprep.subr.bf16.mxu0 0
    %2324 = vmatpush1.bf16.xpose.msra.mxu0 %v2307
    %2325 = vmatprep.subr.bf16.mxu0 0
    %2326 = vmatpush2.bf16.xpose.msra.mxu0 0
    %2327 = vmatprep.subr.bf16.mxu0 0
    %2328 = vmatpush2.bf16.xpose.msra.mxu0 0
    %2329 = vmatprep.subr.bf16.mxu0 0
    %2330 = vmatpush2.bf16.xpose.msra.mxu0 0
    %2331 = vmatprep.subr.bf16.mxu0 0
    %2332 = vmatpush2.bf16.xpose.msra.mxu0 0
    %2333 = vmatprep.subr.bf16.mxu0 0
    %2334 = vmatpush2.bf16.xpose.msra.mxu0 0
    %2335 = vmatprep.subr.bf16.mxu0 0
    %2336 = vmatpush2.bf16.xpose.msra.mxu0 0
    %2337 = vmatprep.subr.bf16.mxu0 0
    %2338 = vmatpush2.bf16.xpose.msra.mxu0 0
    %2339 = vmatprep.subr.bf16.mxu0 0
    %2340 = vmatpush2.bf16.xpose.msra.mxu0 0
    %2341 = vmatprep.mubr.bf16.mxu0 0
    %2342 = vmatmul.mubr.bf16.gmra.mxu0 %v2304
    %v2343 = vpop.f32.mrf.mxu0
    %v2344 = vadd.f32 %v280, %v2343
    %v2345 = vpop.f32.mrf.mxu0
    %v2346 = vpop.f32.mrf.mxu0
    %v2347 = vpop.f32.mrf.mxu0
    %2348 = vdwg.mxu0
    %v2349 = vsel %vm354, %v2344, -inf
    %2350 = vmax.xlane.f32.xlu0 %v2349
    %v2351 = vpop.xlane.xlu0 %2350
    %v2352 = vsub.f32 %v2344, %v2351
    %v2353 = vmul.f32 %v2352, 1.442695
    %v2354 = vpow.pop %v2353
    %v2355 = vsel %vm354, %v2354, 0.0
    %2356 = vadd.xlane.f32.xlu0 %v2355
    %v2357 = vpop.xlane.xlu0 %2356
    %v2358 = vrcp.pop %v2357
    %v2359 = vmul.f32 %v2354, %v2358
    %v2360 = vpack.c.bf16 %v2359, %v2359
    %2361 = vrot.lane.b32.xlu0 %v1970, 72
    %v2362 = vpop.permute.xlu0 %2361
    %v2364 = vsel %vm354, %v2360, 0
    %v2367 = vsel %vm418, %v2362, 0
    %2369 = vmatprep.subr.bf16.mxu0 0
    %2370 = vmatpush1.bf16.msra.mxu0 0
    %2371 = vmatprep.subr.bf16.mxu0 0
    %2372 = vmatpush1.bf16.msra.mxu0 0
    %2373 = vmatprep.subr.bf16.mxu0 0
    %2374 = vmatpush1.bf16.msra.mxu0 0
    %2375 = vmatprep.subr.bf16.mxu0 0
    %2376 = vmatpush1.bf16.msra.mxu0 0
    %2377 = vmatprep.subr.bf16.mxu0 0
    %2378 = vmatpush1.bf16.msra.mxu0 0
    %2379 = vmatprep.subr.bf16.mxu0 0
    %2380 = vmatpush1.bf16.msra.mxu0 0
    %2381 = vmatprep.subr.bf16.mxu0 0
    %2382 = vmatpush1.bf16.msra.mxu0 0
    %2383 = vmatprep.subr.bf16.mxu0 0
    %2384 = vmatpush1.bf16.msra.mxu0 %v2367
    %2385 = vmatprep.subr.bf16.mxu0 0
    %2386 = vmatpush2.bf16.msra.mxu0 0
    %2387 = vmatprep.subr.bf16.mxu0 0
    %2388 = vmatpush2.bf16.msra.mxu0 0
    %2389 = vmatprep.subr.bf16.mxu0 0
    %2390 = vmatpush2.bf16.msra.mxu0 0
    %2391 = vmatprep.subr.bf16.mxu0 0
    %2392 = vmatpush2.bf16.msra.mxu0 0
    %2393 = vmatprep.subr.bf16.mxu0 0
    %2394 = vmatpush2.bf16.msra.mxu0 0
    %2395 = vmatprep.subr.bf16.mxu0 0
    %2396 = vmatpush2.bf16.msra.mxu0 0
    %2397 = vmatprep.subr.bf16.mxu0 0
    %2398 = vmatpush2.bf16.msra.mxu0 0
    %2399 = vmatprep.subr.bf16.mxu0 0
    %2400 = vmatpush2.bf16.msra.mxu0 0
    %2401 = vmatprep.mubr.bf16.mxu0 0
    %2402 = vmatmul.mubr.bf16.gmra.mxu0 %v2364
    %v2403 = vpop.f32.mrf.mxu0
    %v2404 = vadd.f32 0.0, %v2403
    %v2405 = vpop.f32.mrf.mxu0
    %v2406 = vpop.f32.mrf.mxu0
    %v2407 = vpop.f32.mrf.mxu0
    %2408 = vdwg.mxu0
    %2410 = vrot.lane.b32.xlu0 %v2184, 8
    %v2411 = vpop.permute.xlu0 %2410
    %2414 = vrot.lane.b32.xlu0 %v2294, 16
    %v2415 = vpop.permute.xlu0 %2414
    %2418 = vrot.lane.b32.xlu0 %v2404, 24
    %v2419 = vpop.permute.xlu0 %2418
    %v2421 = vsel %vm354, %v2073, %v2411
    %v2422 = vsel %vm805, %v2421, %v2415
    %v2423 = vsel %vm807, %v2422, %v2419
    %v2424 = vpack.c.bf16 %v2423, %v1968
    %v2425 = vld [vmem:[#allocation18] sm:$0xf]
    %v2426 = vld [vmem:[#allocation18 + $0x4] sm:$0xf]
    %v2427 = vld [vmem:[#allocation18 + $0x8] sm:$0xf]
    %v2428 = vld [vmem:[#allocation18 + $0xc] sm:$0xf]
    %v2429 = vld [vmem:[#allocation19] sm:$0x1]
    %v2431 = vlaneseq
    %v2432 = vshrl.u32 %v2431, 7
    %v2433 = vsub.s32 0, %v2432
    %v2434 = vrot.slane %v2429, %v2433
    %v2440 = vunpack.c.l.b16 %v2425
    %v2441 = vunpack.c.l.b16 %v2426
    %v2442 = vunpack.c.l.b16 %v2427
    %v2443 = vunpack.c.l.b16 %v2428
    %v2444 = vpack.c.b16 %v2441, %v2440
    %v2445 = vpack.c.b16 %v2443, %v2442
    %v2449 = vsel %vm305, %v2424, 0
    %2451 = vmatprep.subr.bf16.mxu0 0
    %2452 = vmatpush1.bf16.msra.mxu0 0
    %2453 = vmatprep.subr.bf16.mxu0 0
    %2454 = vmatpush1.bf16.msra.mxu0 0
    %2455 = vmatprep.subr.bf16.mxu0 0
    %2456 = vmatpush1.bf16.msra.mxu0 0
    %2457 = vmatprep.subr.bf16.mxu0 0
    %2458 = vmatpush1.bf16.msra.mxu0 0
    %2459 = vmatprep.subr.bf16.mxu0 0
    %2460 = vmatpush1.bf16.msra.mxu0 0
    %2461 = vmatprep.subr.bf16.mxu0 0
    %2462 = vmatpush1.bf16.msra.mxu0 0
    %2463 = vmatprep.subr.bf16.mxu0 0
    %2464 = vmatpush1.bf16.msra.mxu0 %v2445
    %2465 = vmatprep.subr.bf16.mxu0 0
    %2466 = vmatpush1.bf16.msra.mxu0 %v2444
    %2467 = vmatprep.subr.bf16.mxu0 0
    %2468 = vmatpush2.bf16.msra.mxu0 0
    %2469 = vmatprep.subr.bf16.mxu0 0
    %2470 = vmatpush2.bf16.msra.mxu0 0
    %2471 = vmatprep.subr.bf16.mxu0 0
    %2472 = vmatpush2.bf16.msra.mxu0 0
    %2473 = vmatprep.subr.bf16.mxu0 0
    %2474 = vmatpush2.bf16.msra.mxu0 0
    %2475 = vmatprep.subr.bf16.mxu0 0
    %2476 = vmatpush2.bf16.msra.mxu0 0
    %2477 = vmatprep.subr.bf16.mxu0 0
    %2478 = vmatpush2.bf16.msra.mxu0 0
    %2479 = vmatprep.subr.bf16.mxu0 0
    %2480 = vmatpush2.bf16.msra.mxu0 0
    %2481 = vmatprep.subr.bf16.mxu0 0
    %2482 = vmatpush2.bf16.msra.mxu0 0
    %2483 = vmatprep.mubr.bf16.mxu0 0
    %2484 = vmatmul.mubr.bf16.gmra.mxu0 %v2449
    %v2485 = vpop.f32.mrf.mxu0
    %v2486 = vadd.f32 %v2434, %v2485
    %v2487 = vpop.f32.mrf.mxu0
    %v2488 = vpop.f32.mrf.mxu0
    %v2489 = vadd.f32 %v2434, %v2488
    %v2490 = vpop.f32.mrf.mxu0
    %2491 = vdwg.mxu0
    %v2492 = vadd.f32 %v1377, %v2486
    %v2493 = vadd.f32 %v1378, %v2489
    %s2494 = scalar_lea.vmem %s17, 1
    %v2495 = vld [vmem:[%s2494] sm:$0x1]
    %s2496 = scalar_lea.vmem %s18, 1
    %v2497 = vld [vmem:[%s2496] sm:$0x1]
    %v2498 = vsel %vm305, %v2492, 0.0
    %2499 = vadd.xlane.f32.xlu0 %v2498
    %v2500 = vpop.xlane.xlu0 %2499
    %v2501 = vsel %vm305, %v2493, 0.0
    %2502 = vadd.xlane.f32.xlu0 %v2501
    %v2503 = vpop.xlane.xlu0 %2502
    %v2504 = vmul.f32 %v2500, %v1342
    %v2505 = vmul.f32 %v2503, %v1342
    %v2506 = vsub.f32 %v2492, %v2504
    %v2507 = vsub.f32 %v2493, %v2505
    %v2508 = vmul.f32 %v2506, %v2506
    %v2509 = vmul.f32 %v2507, %v2507
    %v2510 = vsel %vm305, %v2508, 0.0
    %2511 = vadd.xlane.f32.xlu0 %v2510
    %v2512 = vpop.xlane.xlu0 %2511
    %v2513 = vsel %vm305, %v2509, 0.0
    %2514 = vadd.xlane.f32.xlu0 %v2513
    %v2515 = vpop.xlane.xlu0 %2514
    %v2516 = vmul.f32 %v2512, %v1342
    %v2517 = vmul.f32 %v2515, %v1342
    %v2518 = vadd.f32 %v2516, 1e-05
    %v2519 = vadd.f32 %v2517, 1e-05
    %v2520 = vrsqrt.pop %v2518
    %v2521 = vrsqrt.pop %v2519
    %v2522 = vmul.f32 %v2506, %v2520
    %v2523 = vmul.f32 %v2507, %v2521
    %v2525 = vlaneseq
    %v2526 = vshrl.u32 %v2525, 7
    %v2527 = vsub.s32 0, %v2526
    %v2528 = vrot.slane %v2495, %v2527
    %v2530 = vmul.f32 %v2522, %v2528
    %v2531 = vmul.f32 %v2523, %v2528
    %v2533 = vlaneseq
    %v2534 = vshrl.u32 %v2533, 7
    %v2535 = vsub.s32 0, %v2534
    %v2536 = vrot.slane %v2497, %v2535
    %v2538 = vadd.f32 %v2530, %v2536
    %v2539 = vadd.f32 %v2531, %v2536
    %v2540 = vpack.c.bf16 %v2539, %v2538
    %v2541 = vld [vmem:[#allocation21] sm:$0xf]
    %v2542 = vld [vmem:[#allocation21 + $0x4] sm:$0xf]
    %v2543 = vld [vmem:[#allocation21 + $0x8] sm:$0xf]
    %v2544 = vld [vmem:[#allocation21 + $0xc] sm:$0xf]
    %v2545 = vld [vmem:[#allocation22] sm:$0x1]
    %v2547 = vlaneseq
    %v2548 = vshrl.u32 %v2547, 7
    %v2549 = vsub.s32 0, %v2548
    %v2550 = vrot.slane %v2545, %v2549
    %v2556 = vunpack.c.l.b16 %v2541
    %v2557 = vunpack.c.l.b16 %v2542
    %v2558 = vunpack.c.l.b16 %v2543
    %v2559 = vunpack.c.l.b16 %v2544
    %v2560 = vpack.c.b16 %v2557, %v2556
    %v2561 = vpack.c.b16 %v2559, %v2558
    %v2565 = vsel %vm305, %v2540, 0
    %2567 = vmatprep.subr.bf16.mxu0 0
    %2568 = vmatpush1.bf16.msra.mxu0 0
    %2569 = vmatprep.subr.bf16.mxu0 0
    %2570 = vmatpush1.bf16.msra.mxu0 0
    %2571 = vmatprep.subr.bf16.mxu0 0
    %2572 = vmatpush1.bf16.msra.mxu0 0
    %2573 = vmatprep.subr.bf16.mxu0 0
    %2574 = vmatpush1.bf16.msra.mxu0 0
    %2575 = vmatprep.subr.bf16.mxu0 0
    %2576 = vmatpush1.bf16.msra.mxu0 0
    %2577 = vmatprep.subr.bf16.mxu0 0
    %2578 = vmatpush1.bf16.msra.mxu0 0
    %2579 = vmatprep.subr.bf16.mxu0 0
    %2580 = vmatpush1.bf16.msra.mxu0 %v2561
    %2581 = vmatprep.subr.bf16.mxu0 0
    %2582 = vmatpush1.bf16.msra.mxu0 %v2560
    %2583 = vmatprep.subr.bf16.mxu0 0
    %2584 = vmatpush2.bf16.msra.mxu0 0
    %2585 = vmatprep.subr.bf16.mxu0 0
    %2586 = vmatpush2.bf16.msra.mxu0 0
    %2587 = vmatprep.subr.bf16.mxu0 0
    %2588 = vmatpush2.bf16.msra.mxu0 0
    %2589 = vmatprep.subr.bf16.mxu0 0
    %2590 = vmatpush2.bf16.msra.mxu0 0
    %2591 = vmatprep.subr.bf16.mxu0 0
    %2592 = vmatpush2.bf16.msra.mxu0 0
    %2593 = vmatprep.subr.bf16.mxu0 0
    %2594 = vmatpush2.bf16.msra.mxu0 0
    %2595 = vmatprep.subr.bf16.mxu0 0
    %2596 = vmatpush2.bf16.msra.mxu0 0
    %2597 = vmatprep.subr.bf16.mxu0 0
    %2598 = vmatpush2.bf16.msra.mxu0 0
    %2599 = vmatprep.mubr.bf16.mxu0 0
    %2600 = vmatmul.mubr.bf16.gmra.mxu0 %v2565
    %v2601 = vpop.f32.mrf.mxu0
    %v2602 = vadd.f32 %v2550, %v2601
    %v2603 = vpop.f32.mrf.mxu0
    %v2604 = vpop.f32.mrf.mxu0
    %v2605 = vadd.f32 %v2550, %v2604
    %v2606 = vpop.f32.mrf.mxu0
    %2607 = vdwg.mxu0
    %v2608 = vmax.f32 %v2602, 0.0
    %v2609 = vmax.f32 %v2605, 0.0
    %v2610 = vpack.c.bf16 %v2609, %v2608
    %v2611 = vld [vmem:[#allocation24] sm:$0xf]
    %v2612 = vld [vmem:[#allocation24 + $0x4] sm:$0xf]
    %v2613 = vld [vmem:[#allocation24 + $0x8] sm:$0xf]
    %v2614 = vld [vmem:[#allocation24 + $0xc] sm:$0xf]
    %v2615 = vld [vmem:[#allocation25] sm:$0x1]
    %v2617 = vlaneseq
    %v2618 = vshrl.u32 %v2617, 7
    %v2619 = vsub.s32 0, %v2618
    %v2620 = vrot.slane %v2615, %v2619
    %v2626 = vunpack.c.l.b16 %v2611
    %v2627 = vunpack.c.l.b16 %v2612
    %v2628 = vunpack.c.l.b16 %v2613
    %v2629 = vunpack.c.l.b16 %v2614
    %v2630 = vpack.c.b16 %v2627, %v2626
    %v2631 = vpack.c.b16 %v2629, %v2628
    %v2635 = vsel %vm305, %v2610, 0
    %2637 = vmatprep.subr.bf16.mxu0 0
    %2638 = vmatpush1.bf16.msra.mxu0 0
    %2639 = vmatprep.subr.bf16.mxu0 0
    %2640 = vmatpush1.bf16.msra.mxu0 0
    %2641 = vmatprep.subr.bf16.mxu0 0
    %2642 = vmatpush1.bf16.msra.mxu0 0
    %2643 = vmatprep.subr.bf16.mxu0 0
    %2644 = vmatpush1.bf16.msra.mxu0 0
    %2645 = vmatprep.subr.bf16.mxu0 0
    %2646 = vmatpush1.bf16.msra.mxu0 0
    %2647 = vmatprep.subr.bf16.mxu0 0
    %2648 = vmatpush1.bf16.msra.mxu0 0
    %2649 = vmatprep.subr.bf16.mxu0 0
    %2650 = vmatpush1.bf16.msra.mxu0 %v2631
    %2651 = vmatprep.subr.bf16.mxu0 0
    %2652 = vmatpush1.bf16.msra.mxu0 %v2630
    %2653 = vmatprep.subr.bf16.mxu0 0
    %2654 = vmatpush2.bf16.msra.mxu0 0
    %2655 = vmatprep.subr.bf16.mxu0 0
    %2656 = vmatpush2.bf16.msra.mxu0 0
    %2657 = vmatprep.subr.bf16.mxu0 0
    %2658 = vmatpush2.bf16.msra.mxu0 0
    %2659 = vmatprep.subr.bf16.mxu0 0
    %2660 = vmatpush2.bf16.msra.mxu0 0
    %2661 = vmatprep.subr.bf16.mxu0 0
    %2662 = vmatpush2.bf16.msra.mxu0 0
    %2663 = vmatprep.subr.bf16.mxu0 0
    %2664 = vmatpush2.bf16.msra.mxu0 0
    %2665 = vmatprep.subr.bf16.mxu0 0
    %2666 = vmatpush2.bf16.msra.mxu0 0
    %2667 = vmatprep.subr.bf16.mxu0 0
    %2668 = vmatpush2.bf16.msra.mxu0 0
    %2669 = vmatprep.mubr.bf16.mxu0 0
    %2670 = vmatmul.mubr.bf16.gmra.mxu0 %v2635
    %v2671 = vpop.f32.mrf.mxu0
    %v2672 = vadd.f32 %v2620, %v2671
    %v2673 = vpop.f32.mrf.mxu0
    %v2674 = vpop.f32.mrf.mxu0
    %v2675 = vadd.f32 %v2620, %v2674
    %v2676 = vpop.f32.mrf.mxu0
    %2677 = vdwg.mxu0
    %v2678 = vadd.f32 %v2538, %v2672
    %v2679 = vadd.f32 %v2539, %v2675
    %s2680 = scalar_lea.vmem %s17, 2
    %v2681 = vld [vmem:[%s2680] sm:$0x1]
    %s2682 = scalar_lea.vmem %s18, 2
    %v2683 = vld [vmem:[%s2682] sm:$0x1]
    %v2684 = vsel %vm305, %v2678, 0.0
    %2685 = vadd.xlane.f32.xlu0 %v2684
    %v2686 = vpop.xlane.xlu0 %2685
    %v2687 = vsel %vm305, %v2679, 0.0
    %2688 = vadd.xlane.f32.xlu0 %v2687
    %v2689 = vpop.xlane.xlu0 %2688
    %v2690 = vmul.f32 %v2686, %v1342
    %v2691 = vmul.f32 %v2689, %v1342
    %v2692 = vsub.f32 %v2678, %v2690
    %v2693 = vsub.f32 %v2679, %v2691
    %v2694 = vmul.f32 %v2692, %v2692
    %v2695 = vmul.f32 %v2693, %v2693
    %v2696 = vsel %vm305, %v2694, 0.0
    %2697 = vadd.xlane.f32.xlu0 %v2696
    %v2698 = vpop.xlane.xlu0 %2697
    %v2699 = vsel %vm305, %v2695, 0.0
    %2700 = vadd.xlane.f32.xlu0 %v2699
    %v2701 = vpop.xlane.xlu0 %2700
    %v2702 = vmul.f32 %v2698, %v1342
    %v2703 = vmul.f32 %v2701, %v1342
    %v2704 = vadd.f32 %v2702, 1e-05
    %v2705 = vadd.f32 %v2703, 1e-05
    %v2706 = vrsqrt.pop %v2704
    %v2707 = vrsqrt.pop %v2705
    %v2708 = vmul.f32 %v2692, %v2706
    %v2709 = vmul.f32 %v2693, %v2707
    %v2711 = vlaneseq
    %v2712 = vshrl.u32 %v2711, 7
    %v2713 = vsub.s32 0, %v2712
    %v2714 = vrot.slane %v2681, %v2713
    %v2716 = vmul.f32 %v2708, %v2714
    %v2717 = vmul.f32 %v2709, %v2714
    %v2719 = vlaneseq
    %v2720 = vshrl.u32 %v2719, 7
    %v2721 = vsub.s32 0, %v2720
    %v2722 = vrot.slane %v2683, %v2721
    %v2724 = vadd.f32 %v2716, %v2722
    %v2725 = vadd.f32 %v2717, %v2722
    %v2726 = vpack.c.bf16 %v2725, %v2724
    %s2727 = scalar_lea.vmem [#allocation9], 16
    %v2728 = vld [vmem:[%s2727] sm:$0xf]
    %v2729 = vld [vmem:[%s2727 + $0x4] sm:$0xf]
    %v2730 = vld [vmem:[%s2727 + $0x8] sm:$0xf]
    %v2731 = vld [vmem:[%s2727 + $0xc] sm:$0xf]
    %s2732 = scalar_lea.vmem [#allocation10], 1
    %v2733 = vld [vmem:[%s2732] sm:$0x1]
    %v2735 = vlaneseq
    %v2736 = vshrl.u32 %v2735, 7
    %v2737 = vsub.s32 0, %v2736
    %v2738 = vrot.slane %v2733, %v2737
    %v2744 = vunpack.c.l.b16 %v2728
    %v2745 = vunpack.c.l.b16 %v2729
    %v2746 = vunpack.c.l.b16 %v2730
    %v2747 = vunpack.c.l.b16 %v2731
    %v2748 = vpack.c.b16 %v2745, %v2744
    %v2749 = vpack.c.b16 %v2747, %v2746
    %v2753 = vsel %vm305, %v2726, 0
    %2755 = vmatprep.subr.bf16.mxu0 0
    %2756 = vmatpush1.bf16.msra.mxu0 0
    %2757 = vmatprep.subr.bf16.mxu0 0
    %2758 = vmatpush1.bf16.msra.mxu0 0
    %2759 = vmatprep.subr.bf16.mxu0 0
    %2760 = vmatpush1.bf16.msra.mxu0 0
    %2761 = vmatprep.subr.bf16.mxu0 0
    %2762 = vmatpush1.bf16.msra.mxu0 0
    %2763 = vmatprep.subr.bf16.mxu0 0
    %2764 = vmatpush1.bf16.msra.mxu0 0
    %2765 = vmatprep.subr.bf16.mxu0 0
    %2766 = vmatpush1.bf16.msra.mxu0 0
    %2767 = vmatprep.subr.bf16.mxu0 0
    %2768 = vmatpush1.bf16.msra.mxu0 %v2749
    %2769 = vmatprep.subr.bf16.mxu0 0
    %2770 = vmatpush1.bf16.msra.mxu0 %v2748
    %2771 = vmatprep.subr.bf16.mxu0 0
    %2772 = vmatpush2.bf16.msra.mxu0 0
    %2773 = vmatprep.subr.bf16.mxu0 0
    %2774 = vmatpush2.bf16.msra.mxu0 0
    %2775 = vmatprep.subr.bf16.mxu0 0
    %2776 = vmatpush2.bf16.msra.mxu0 0
    %2777 = vmatprep.subr.bf16.mxu0 0
    %2778 = vmatpush2.bf16.msra.mxu0 0
    %2779 = vmatprep.subr.bf16.mxu0 0
    %2780 = vmatpush2.bf16.msra.mxu0 0
    %2781 = vmatprep.subr.bf16.mxu0 0
    %2782 = vmatpush2.bf16.msra.mxu0 0
    %2783 = vmatprep.subr.bf16.mxu0 0
    %2784 = vmatpush2.bf16.msra.mxu0 0
    %2785 = vmatprep.subr.bf16.mxu0 0
    %2786 = vmatpush2.bf16.msra.mxu0 0
    %2787 = vmatprep.mubr.bf16.mxu0 0
    %2788 = vmatmul.mubr.bf16.gmra.mxu0 %v2753
    %v2789 = vpop.f32.mrf.mxu0
    %v2790 = vadd.f32 %v2738, %v2789
    %v2791 = vpop.f32.mrf.mxu0
    %v2792 = vpop.f32.mrf.mxu0
    %v2793 = vadd.f32 %v2738, %v2792
    %v2794 = vpop.f32.mrf.mxu0
    %2795 = vdwg.mxu0
    %v2796 = vpack.c.bf16 %v2790, %v2790
    %2798 = vrot.lane.b32.xlu0 %v2796, 96
    %v2799 = vpop.permute.xlu0 %2798
    %v2801 = vsel %vm354, %v2796, 0
    %v2804 = vsel %vm354, %v2799, 0
    %2806 = vmatprep.subr.bf16.mxu0 0
    %2807 = vmatpush1.bf16.xpose.msra.mxu0 0
    %2808 = vmatprep.subr.bf16.mxu0 0
    %2809 = vmatpush1.bf16.xpose.msra.mxu0 0
    %2810 = vmatprep.subr.bf16.mxu0 0
    %2811 = vmatpush1.bf16.xpose.msra.mxu0 0
    %2812 = vmatprep.subr.bf16.mxu0 0
    %2813 = vmatpush1.bf16.xpose.msra.mxu0 0
    %2814 = vmatprep.subr.bf16.mxu0 0
    %2815 = vmatpush1.bf16.xpose.msra.mxu0 0
    %2816 = vmatprep.subr.bf16.mxu0 0
    %2817 = vmatpush1.bf16.xpose.msra.mxu0 0
    %2818 = vmatprep.subr.bf16.mxu0 0
    %2819 = vmatpush1.bf16.xpose.msra.mxu0 0
    %2820 = vmatprep.subr.bf16.mxu0 0
    %2821 = vmatpush1.bf16.xpose.msra.mxu0 %v2804
    %2822 = vmatprep.subr.bf16.mxu0 0
    %2823 = vmatpush2.bf16.xpose.msra.mxu0 0
    %2824 = vmatprep.subr.bf16.mxu0 0
    %2825 = vmatpush2.bf16.xpose.msra.mxu0 0
    %2826 = vmatprep.subr.bf16.mxu0 0
    %2827 = vmatpush2.bf16.xpose.msra.mxu0 0
    %2828 = vmatprep.subr.bf16.mxu0 0
    %2829 = vmatpush2.bf16.xpose.msra.mxu0 0
    %2830 = vmatprep.subr.bf16.mxu0 0
    %2831 = vmatpush2.bf16.xpose.msra.mxu0 0
    %2832 = vmatprep.subr.bf16.mxu0 0
    %2833 = vmatpush2.bf16.xpose.msra.mxu0 0
    %2834 = vmatprep.subr.bf16.mxu0 0
    %2835 = vmatpush2.bf16.xpose.msra.mxu0 0
    %2836 = vmatprep.subr.bf16.mxu0 0
    %2837 = vmatpush2.bf16.xpose.msra.mxu0 0
    %2838 = vmatprep.mubr.bf16.mxu0 0
    %2839 = vmatmul.mubr.bf16.gmra.mxu0 %v2801
    %v2840 = vpop.f32.mrf.mxu0
    %v2841 = vadd.f32 %v272, %v2840
    %v2842 = vpop.f32.mrf.mxu0
    %v2843 = vpop.f32.mrf.mxu0
    %v2844 = vpop.f32.mrf.mxu0
    %2845 = vdwg.mxu0
    %v2846 = vsel %vm354, %v2841, -inf
    %2847 = vmax.xlane.f32.xlu0 %v2846
    %v2848 = vpop.xlane.xlu0 %2847
    %v2849 = vsub.f32 %v2841, %v2848
    %v2850 = vmul.f32 %v2849, 1.442695
    %v2851 = vpow.pop %v2850
    %v2852 = vsel %vm354, %v2851, 0.0
    %2853 = vadd.xlane.f32.xlu0 %v2852
    %v2854 = vpop.xlane.xlu0 %2853
    %v2855 = vrcp.pop %v2854
    %v2856 = vmul.f32 %v2851, %v2855
    %v2857 = vpack.c.bf16 %v2856, %v2856
    %2858 = vrot.lane.b32.xlu0 %v2796, 64
    %v2859 = vpop.permute.xlu0 %2858
    %v2861 = vsel %vm354, %v2857, 0
    %v2864 = vsel %vm418, %v2859, 0
    %2866 = vmatprep.subr.bf16.mxu0 0
    %2867 = vmatpush1.bf16.msra.mxu0 0
    %2868 = vmatprep.subr.bf16.mxu0 0
    %2869 = vmatpush1.bf16.msra.mxu0 0
    %2870 = vmatprep.subr.bf16.mxu0 0
    %2871 = vmatpush1.bf16.msra.mxu0 0
    %2872 = vmatprep.subr.bf16.mxu0 0
    %2873 = vmatpush1.bf16.msra.mxu0 0
    %2874 = vmatprep.subr.bf16.mxu0 0
    %2875 = vmatpush1.bf16.msra.mxu0 0
    %2876 = vmatprep.subr.bf16.mxu0 0
    %2877 = vmatpush1.bf16.msra.mxu0 0
    %2878 = vmatprep.subr.bf16.mxu0 0
    %2879 = vmatpush1.bf16.msra.mxu0 0
    %2880 = vmatprep.subr.bf16.mxu0 0
    %2881 = vmatpush1.bf16.msra.mxu0 %v2864
    %2882 = vmatprep.subr.bf16.mxu0 0
    %2883 = vmatpush2.bf16.msra.mxu0 0
    %2884 = vmatprep.subr.bf16.mxu0 0
    %2885 = vmatpush2.bf16.msra.mxu0 0
    %2886 = vmatprep.subr.bf16.mxu0 0
    %2887 = vmatpush2.bf16.msra.mxu0 0
    %2888 = vmatprep.subr.bf16.mxu0 0
    %2889 = vmatpush2.bf16.msra.mxu0 0
    %2890 = vmatprep.subr.bf16.mxu0 0
    %2891 = vmatpush2.bf16.msra.mxu0 0
    %2892 = vmatprep.subr.bf16.mxu0 0
    %2893 = vmatpush2.bf16.msra.mxu0 0
    %2894 = vmatprep.subr.bf16.mxu0 0
    %2895 = vmatpush2.bf16.msra.mxu0 0
    %2896 = vmatprep.subr.bf16.mxu0 0
    %2897 = vmatpush2.bf16.msra.mxu0 0
    %2898 = vmatprep.mubr.bf16.mxu0 0
    %2899 = vmatmul.mubr.bf16.gmra.mxu0 %v2861
    %v2900 = vpop.f32.mrf.mxu0
    %v2901 = vadd.f32 0.0, %v2900
    %v2902 = vpop.f32.mrf.mxu0
    %v2903 = vpop.f32.mrf.mxu0
    %v2904 = vpop.f32.mrf.mxu0
    %2905 = vdwg.mxu0
    %2906 = vrot.lane.b32.xlu0 %v2796, 120
    %v2907 = vpop.permute.xlu0 %2906
    %2908 = vrot.lane.b32.xlu0 %v2796, 88
    %v2909 = vpop.permute.xlu0 %2908
    %v2911 = vsel %vm354, %v2907, 0
    %v2914 = vsel %vm354, %v2909, 0
    %2916 = vmatprep.subr.bf16.mxu0 0
    %2917 = vmatpush1.bf16.xpose.msra.mxu0 0
    %2918 = vmatprep.subr.bf16.mxu0 0
    %2919 = vmatpush1.bf16.xpose.msra.mxu0 0
    %2920 = vmatprep.subr.bf16.mxu0 0
    %2921 = vmatpush1.bf16.xpose.msra.mxu0 0
    %2922 = vmatprep.subr.bf16.mxu0 0
    %2923 = vmatpush1.bf16.xpose.msra.mxu0 0
    %2924 = vmatprep.subr.bf16.mxu0 0
    %2925 = vmatpush1.bf16.xpose.msra.mxu0 0
    %2926 = vmatprep.subr.bf16.mxu0 0
    %2927 = vmatpush1.bf16.xpose.msra.mxu0 0
    %2928 = vmatprep.subr.bf16.mxu0 0
    %2929 = vmatpush1.bf16.xpose.msra.mxu0 0
    %2930 = vmatprep.subr.bf16.mxu0 0
    %2931 = vmatpush1.bf16.xpose.msra.mxu0 %v2914
    %2932 = vmatprep.subr.bf16.mxu0 0
    %2933 = vmatpush2.bf16.xpose.msra.mxu0 0
    %2934 = vmatprep.subr.bf16.mxu0 0
    %2935 = vmatpush2.bf16.xpose.msra.mxu0 0
    %2936 = vmatprep.subr.bf16.mxu0 0
    %2937 = vmatpush2.bf16.xpose.msra.mxu0 0
    %2938 = vmatprep.subr.bf16.mxu0 0
    %2939 = vmatpush2.bf16.xpose.msra.mxu0 0
    %2940 = vmatprep.subr.bf16.mxu0 0
    %2941 = vmatpush2.bf16.xpose.msra.mxu0 0
    %2942 = vmatprep.subr.bf16.mxu0 0
    %2943 = vmatpush2.bf16.xpose.msra.mxu0 0
    %2944 = vmatprep.subr.bf16.mxu0 0
    %2945 = vmatpush2.bf16.xpose.msra.mxu0 0
    %2946 = vmatprep.subr.bf16.mxu0 0
    %2947 = vmatpush2.bf16.xpose.msra.mxu0 0
    %2948 = vmatprep.mubr.bf16.mxu0 0
    %2949 = vmatmul.mubr.bf16.gmra.mxu0 %v2911
    %v2950 = vpop.f32.mrf.mxu0
    %v2951 = vadd.f32 %v272, %v2950
    %v2952 = vpop.f32.mrf.mxu0
    %v2953 = vpop.f32.mrf.mxu0
    %v2954 = vpop.f32.mrf.mxu0
    %2955 = vdwg.mxu0
    %v2956 = vsel %vm354, %v2951, -inf
    %2957 = vmax.xlane.f32.xlu0 %v2956
    %v2958 = vpop.xlane.xlu0 %2957
    %v2959 = vsub.f32 %v2951, %v2958
    %v2960 = vmul.f32 %v2959, 1.442695
    %v2961 = vpow.pop %v2960
    %v2962 = vsel %vm354, %v2961, 0.0
    %2963 = vadd.xlane.f32.xlu0 %v2962
    %v2964 = vpop.xlane.xlu0 %2963
    %v2965 = vrcp.pop %v2964
    %v2966 = vmul.f32 %v2961, %v2965
    %v2967 = vpack.c.bf16 %v2966, %v2966
    %2968 = vrot.lane.b32.xlu0 %v2796, 56
    %v2969 = vpop.permute.xlu0 %2968
    %v2971 = vsel %vm354, %v2967, 0
    %v2974 = vsel %vm418, %v2969, 0
    %2976 = vmatprep.subr.bf16.mxu0 0
    %2977 = vmatpush1.bf16.msra.mxu0 0
    %2978 = vmatprep.subr.bf16.mxu0 0
    %2979 = vmatpush1.bf16.msra.mxu0 0
    %2980 = vmatprep.subr.bf16.mxu0 0
    %2981 = vmatpush1.bf16.msra.mxu0 0
    %2982 = vmatprep.subr.bf16.mxu0 0
    %2983 = vmatpush1.bf16.msra.mxu0 0
    %2984 = vmatprep.subr.bf16.mxu0 0
    %2985 = vmatpush1.bf16.msra.mxu0 0
    %2986 = vmatprep.subr.bf16.mxu0 0
    %2987 = vmatpush1.bf16.msra.mxu0 0
    %2988 = vmatprep.subr.bf16.mxu0 0
    %2989 = vmatpush1.bf16.msra.mxu0 0
    %2990 = vmatprep.subr.bf16.mxu0 0
    %2991 = vmatpush1.bf16.msra.mxu0 %v2974
    %2992 = vmatprep.subr.bf16.mxu0 0
    %2993 = vmatpush2.bf16.msra.mxu0 0
    %2994 = vmatprep.subr.bf16.mxu0 0
    %2995 = vmatpush2.bf16.msra.mxu0 0
    %2996 = vmatprep.subr.bf16.mxu0 0
    %2997 = vmatpush2.bf16.msra.mxu0 0
    %2998 = vmatprep.subr.bf16.mxu0 0
    %2999 = vmatpush2.bf16.msra.mxu0 0
    %3000 = vmatprep.subr.bf16.mxu0 0
    %3001 = vmatpush2.bf16.msra.mxu0 0
    %3002 = vmatprep.subr.bf16.mxu0 0
    %3003 = vmatpush2.bf16.msra.mxu0 0
    %3004 = vmatprep.subr.bf16.mxu0 0
    %3005 = vmatpush2.bf16.msra.mxu0 0
    %3006 = vmatprep.subr.bf16.mxu0 0
    %3007 = vmatpush2.bf16.msra.mxu0 0
    %3008 = vmatprep.mubr.bf16.mxu0 0
    %3009 = vmatmul.mubr.bf16.gmra.mxu0 %v2971
    %v3010 = vpop.f32.mrf.mxu0
    %v3011 = vadd.f32 0.0, %v3010
    %v3012 = vpop.f32.mrf.mxu0
    %v3013 = vpop.f32.mrf.mxu0
    %v3014 = vpop.f32.mrf.mxu0
    %3015 = vdwg.mxu0
    %3016 = vrot.lane.b32.xlu0 %v2796, 112
    %v3017 = vpop.permute.xlu0 %3016
    %3018 = vrot.lane.b32.xlu0 %v2796, 80
    %v3019 = vpop.permute.xlu0 %3018
    %v3021 = vsel %vm354, %v3017, 0
    %v3024 = vsel %vm354, %v3019, 0
    %3026 = vmatprep.subr.bf16.mxu0 0
    %3027 = vmatpush1.bf16.xpose.msra.mxu0 0
    %3028 = vmatprep.subr.bf16.mxu0 0
    %3029 = vmatpush1.bf16.xpose.msra.mxu0 0
    %3030 = vmatprep.subr.bf16.mxu0 0
    %3031 = vmatpush1.bf16.xpose.msra.mxu0 0
    %3032 = vmatprep.subr.bf16.mxu0 0
    %3033 = vmatpush1.bf16.xpose.msra.mxu0 0
    %3034 = vmatprep.subr.bf16.mxu0 0
    %3035 = vmatpush1.bf16.xpose.msra.mxu0 0
    %3036 = vmatprep.subr.bf16.mxu0 0
    %3037 = vmatpush1.bf16.xpose.msra.mxu0 0
    %3038 = vmatprep.subr.bf16.mxu0 0
    %3039 = vmatpush1.bf16.xpose.msra.mxu0 0
    %3040 = vmatprep.subr.bf16.mxu0 0
    %3041 = vmatpush1.bf16.xpose.msra.mxu0 %v3024
    %3042 = vmatprep.subr.bf16.mxu0 0
    %3043 = vmatpush2.bf16.xpose.msra.mxu0 0
    %3044 = vmatprep.subr.bf16.mxu0 0
    %3045 = vmatpush2.bf16.xpose.msra.mxu0 0
    %3046 = vmatprep.subr.bf16.mxu0 0
    %3047 = vmatpush2.bf16.xpose.msra.mxu0 0
    %3048 = vmatprep.subr.bf16.mxu0 0
    %3049 = vmatpush2.bf16.xpose.msra.mxu0 0
    %3050 = vmatprep.subr.bf16.mxu0 0
    %3051 = vmatpush2.bf16.xpose.msra.mxu0 0
    %3052 = vmatprep.subr.bf16.mxu0 0
    %3053 = vmatpush2.bf16.xpose.msra.mxu0 0
    %3054 = vmatprep.subr.bf16.mxu0 0
    %3055 = vmatpush2.bf16.xpose.msra.mxu0 0
    %3056 = vmatprep.subr.bf16.mxu0 0
    %3057 = vmatpush2.bf16.xpose.msra.mxu0 0
    %3058 = vmatprep.mubr.bf16.mxu0 0
    %3059 = vmatmul.mubr.bf16.gmra.mxu0 %v3021
    %v3060 = vpop.f32.mrf.mxu0
    %v3061 = vadd.f32 %v272, %v3060
    %v3062 = vpop.f32.mrf.mxu0
    %v3063 = vpop.f32.mrf.mxu0
    %v3064 = vpop.f32.mrf.mxu0
    %3065 = vdwg.mxu0
    %v3066 = vsel %vm354, %v3061, -inf
    %3067 = vmax.xlane.f32.xlu0 %v3066
    %v3068 = vpop.xlane.xlu0 %3067
    %v3069 = vsub.f32 %v3061, %v3068
    %v3070 = vmul.f32 %v3069, 1.442695
    %v3071 = vpow.pop %v3070
    %v3072 = vsel %vm354, %v3071, 0.0
    %3073 = vadd.xlane.f32.xlu0 %v3072
    %v3074 = vpop.xlane.xlu0 %3073
    %v3075 = vrcp.pop %v3074
    %v3076 = vmul.f32 %v3071, %v3075
    %v3077 = vpack.c.bf16 %v3076, %v3076
    %3078 = vrot.lane.b32.xlu0 %v2796, 48
    %v3079 = vpop.permute.xlu0 %3078
    %v3081 = vsel %vm354, %v3077, 0
    %v3084 = vsel %vm418, %v3079, 0
    %3086 = vmatprep.subr.bf16.mxu0 0
    %3087 = vmatpush1.bf16.msra.mxu0 0
    %3088 = vmatprep.subr.bf16.mxu0 0
    %3089 = vmatpush1.bf16.msra.mxu0 0
    %3090 = vmatprep.subr.bf16.mxu0 0
    %3091 = vmatpush1.bf16.msra.mxu0 0
    %3092 = vmatprep.subr.bf16.mxu0 0
    %3093 = vmatpush1.bf16.msra.mxu0 0
    %3094 = vmatprep.subr.bf16.mxu0 0
    %3095 = vmatpush1.bf16.msra.mxu0 0
    %3096 = vmatprep.subr.bf16.mxu0 0
    %3097 = vmatpush1.bf16.msra.mxu0 0
    %3098 = vmatprep.subr.bf16.mxu0 0
    %3099 = vmatpush1.bf16.msra.mxu0 0
    %3100 = vmatprep.subr.bf16.mxu0 0
    %3101 = vmatpush1.bf16.msra.mxu0 %v3084
    %3102 = vmatprep.subr.bf16.mxu0 0
    %3103 = vmatpush2.bf16.msra.mxu0 0
    %3104 = vmatprep.subr.bf16.mxu0 0
    %3105 = vmatpush2.bf16.msra.mxu0 0
    %3106 = vmatprep.subr.bf16.mxu0 0
    %3107 = vmatpush2.bf16.msra.mxu0 0
    %3108 = vmatprep.subr.bf16.mxu0 0
    %3109 = vmatpush2.bf16.msra.mxu0 0
    %3110 = vmatprep.subr.bf16.mxu0 0
    %3111 = vmatpush2.bf16.msra.mxu0 0
    %3112 = vmatprep.subr.bf16.mxu0 0
    %3113 = vmatpush2.bf16.msra.mxu0 0
    %3114 = vmatprep.subr.bf16.mxu0 0
    %3115 = vmatpush2.bf16.msra.mxu0 0
    %3116 = vmatprep.subr.bf16.mxu0 0
    %3117 = vmatpush2.bf16.msra.mxu0 0
    %3118 = vmatprep.mubr.bf16.mxu0 0
    %3119 = vmatmul.mubr.bf16.gmra.mxu0 %v3081
    %v3120 = vpop.f32.mrf.mxu0
    %v3121 = vadd.f32 0.0, %v3120
    %v3122 = vpop.f32.mrf.mxu0
    %v3123 = vpop.f32.mrf.mxu0
    %v3124 = vpop.f32.mrf.mxu0
    %3125 = vdwg.mxu0
    %3126 = vrot.lane.b32.xlu0 %v2796, 104
    %v3127 = vpop.permute.xlu0 %3126
    %3128 = vrot.lane.b32.xlu0 %v2796, 72
    %v3129 = vpop.permute.xlu0 %3128
    %v3131 = vsel %vm354, %v3127, 0
    %v3134 = vsel %vm354, %v3129, 0
    %3136 = vmatprep.subr.bf16.mxu0 0
    %3137 = vmatpush1.bf16.xpose.msra.mxu0 0
    %3138 = vmatprep.subr.bf16.mxu0 0
    %3139 = vmatpush1.bf16.xpose.msra.mxu0 0
    %3140 = vmatprep.subr.bf16.mxu0 0
    %3141 = vmatpush1.bf16.xpose.msra.mxu0 0
    %3142 = vmatprep.subr.bf16.mxu0 0
    %3143 = vmatpush1.bf16.xpose.msra.mxu0 0
    %3144 = vmatprep.subr.bf16.mxu0 0
    %3145 = vmatpush1.bf16.xpose.msra.mxu0 0
    %3146 = vmatprep.subr.bf16.mxu0 0
    %3147 = vmatpush1.bf16.xpose.msra.mxu0 0
    %3148 = vmatprep.subr.bf16.mxu0 0
    %3149 = vmatpush1.bf16.xpose.msra.mxu0 0
    %3150 = vmatprep.subr.bf16.mxu0 0
    %3151 = vmatpush1.bf16.xpose.msra.mxu0 %v3134
    %3152 = vmatprep.subr.bf16.mxu0 0
    %3153 = vmatpush2.bf16.xpose.msra.mxu0 0
    %3154 = vmatprep.subr.bf16.mxu0 0
    %3155 = vmatpush2.bf16.xpose.msra.mxu0 0
    %3156 = vmatprep.subr.bf16.mxu0 0
    %3157 = vmatpush2.bf16.xpose.msra.mxu0 0
    %3158 = vmatprep.subr.bf16.mxu0 0
    %3159 = vmatpush2.bf16.xpose.msra.mxu0 0
    %3160 = vmatprep.subr.bf16.mxu0 0
    %3161 = vmatpush2.bf16.xpose.msra.mxu0 0
    %3162 = vmatprep.subr.bf16.mxu0 0
    %3163 = vmatpush2.bf16.xpose.msra.mxu0 0
    %3164 = vmatprep.subr.bf16.mxu0 0
    %3165 = vmatpush2.bf16.xpose.msra.mxu0 0
    %3166 = vmatprep.subr.bf16.mxu0 0
    %3167 = vmatpush2.bf16.xpose.msra.mxu0 0
    %3168 = vmatprep.mubr.bf16.mxu0 0
    %3169 = vmatmul.mubr.bf16.gmra.mxu0 %v3131
    %v3170 = vpop.f32.mrf.mxu0
    %v3171 = vadd.f32 %v272, %v3170
    %v3172 = vpop.f32.mrf.mxu0
    %v3173 = vpop.f32.mrf.mxu0
    %v3174 = vpop.f32.mrf.mxu0
    %3175 = vdwg.mxu0
    %v3176 = vsel %vm354, %v3171, -inf
    %3177 = vmax.xlane.f32.xlu0 %v3176
    %v3178 = vpop.xlane.xlu0 %3177
    %v3179 = vsub.f32 %v3171, %v3178
    %v3180 = vmul.f32 %v3179, 1.442695
    %v3181 = vpow.pop %v3180
    %v3182 = vsel %vm354, %v3181, 0.0
    %3183 = vadd.xlane.f32.xlu0 %v3182
    %v3184 = vpop.xlane.xlu0 %3183
    %v3185 = vrcp.pop %v3184
    %v3186 = vmul.f32 %v3181, %v3185
    %v3187 = vpack.c.bf16 %v3186, %v3186
    %3188 = vrot.lane.b32.xlu0 %v2796, 40
    %v3189 = vpop.permute.xlu0 %3188
    %v3191 = vsel %vm354, %v3187, 0
    %v3194 = vsel %vm418, %v3189, 0
    %3196 = vmatprep.subr.bf16.mxu0 0
    %3197 = vmatpush1.bf16.msra.mxu0 0
    %3198 = vmatprep.subr.bf16.mxu0 0
    %3199 = vmatpush1.bf16.msra.mxu0 0
    %3200 = vmatprep.subr.bf16.mxu0 0
    %3201 = vmatpush1.bf16.msra.mxu0 0
    %3202 = vmatprep.subr.bf16.mxu0 0
    %3203 = vmatpush1.bf16.msra.mxu0 0
    %3204 = vmatprep.subr.bf16.mxu0 0
    %3205 = vmatpush1.bf16.msra.mxu0 0
    %3206 = vmatprep.subr.bf16.mxu0 0
    %3207 = vmatpush1.bf16.msra.mxu0 0
    %3208 = vmatprep.subr.bf16.mxu0 0
    %3209 = vmatpush1.bf16.msra.mxu0 0
    %3210 = vmatprep.subr.bf16.mxu0 0
    %3211 = vmatpush1.bf16.msra.mxu0 %v3194
    %3212 = vmatprep.subr.bf16.mxu0 0
    %3213 = vmatpush2.bf16.msra.mxu0 0
    %3214 = vmatprep.subr.bf16.mxu0 0
    %3215 = vmatpush2.bf16.msra.mxu0 0
    %3216 = vmatprep.subr.bf16.mxu0 0
    %3217 = vmatpush2.bf16.msra.mxu0 0
    %3218 = vmatprep.subr.bf16.mxu0 0
    %3219 = vmatpush2.bf16.msra.mxu0 0
    %3220 = vmatprep.subr.bf16.mxu0 0
    %3221 = vmatpush2.bf16.msra.mxu0 0
    %3222 = vmatprep.subr.bf16.mxu0 0
    %3223 = vmatpush2.bf16.msra.mxu0 0
    %3224 = vmatprep.subr.bf16.mxu0 0
    %3225 = vmatpush2.bf16.msra.mxu0 0
    %3226 = vmatprep.subr.bf16.mxu0 0
    %3227 = vmatpush2.bf16.msra.mxu0 0
    %3228 = vmatprep.mubr.bf16.mxu0 0
    %3229 = vmatmul.mubr.bf16.gmra.mxu0 %v3191
    %v3230 = vpop.f32.mrf.mxu0
    %v3231 = vadd.f32 0.0, %v3230
    %v3232 = vpop.f32.mrf.mxu0
    %v3233 = vpop.f32.mrf.mxu0
    %v3234 = vpop.f32.mrf.mxu0
    %3235 = vdwg.mxu0
    %3237 = vrot.lane.b32.xlu0 %v3011, 8
    %v3238 = vpop.permute.xlu0 %3237
    %3241 = vrot.lane.b32.xlu0 %v3121, 16
    %v3242 = vpop.permute.xlu0 %3241
    %3245 = vrot.lane.b32.xlu0 %v3231, 24
    %v3246 = vpop.permute.xlu0 %3245
    %v3248 = vsel %vm354, %v2901, %v3238
    %v3249 = vsel %vm805, %v3248, %v3242
    %v3250 = vsel %vm807, %v3249, %v3246
    %v3251 = vpack.c.bf16 %v2793, %v2793
    %3253 = vrot.lane.b32.xlu0 %v3251, 96
    %v3254 = vpop.permute.xlu0 %3253
    %v3256 = vsel %vm354, %v3251, 0
    %v3259 = vsel %vm354, %v3254, 0
    %3261 = vmatprep.subr.bf16.mxu0 0
    %3262 = vmatpush1.bf16.xpose.msra.mxu0 0
    %3263 = vmatprep.subr.bf16.mxu0 0
    %3264 = vmatpush1.bf16.xpose.msra.mxu0 0
    %3265 = vmatprep.subr.bf16.mxu0 0
    %3266 = vmatpush1.bf16.xpose.msra.mxu0 0
    %3267 = vmatprep.subr.bf16.mxu0 0
    %3268 = vmatpush1.bf16.xpose.msra.mxu0 0
    %3269 = vmatprep.subr.bf16.mxu0 0
    %3270 = vmatpush1.bf16.xpose.msra.mxu0 0
    %3271 = vmatprep.subr.bf16.mxu0 0
    %3272 = vmatpush1.bf16.xpose.msra.mxu0 0
    %3273 = vmatprep.subr.bf16.mxu0 0
    %3274 = vmatpush1.bf16.xpose.msra.mxu0 0
    %3275 = vmatprep.subr.bf16.mxu0 0
    %3276 = vmatpush1.bf16.xpose.msra.mxu0 %v3259
    %3277 = vmatprep.subr.bf16.mxu0 0
    %3278 = vmatpush2.bf16.xpose.msra.mxu0 0
    %3279 = vmatprep.subr.bf16.mxu0 0
    %3280 = vmatpush2.bf16.xpose.msra.mxu0 0
    %3281 = vmatprep.subr.bf16.mxu0 0
    %3282 = vmatpush2.bf16.xpose.msra.mxu0 0
    %3283 = vmatprep.subr.bf16.mxu0 0
    %3284 = vmatpush2.bf16.xpose.msra.mxu0 0
    %3285 = vmatprep.subr.bf16.mxu0 0
    %3286 = vmatpush2.bf16.xpose.msra.mxu0 0
    %3287 = vmatprep.subr.bf16.mxu0 0
    %3288 = vmatpush2.bf16.xpose.msra.mxu0 0
    %3289 = vmatprep.subr.bf16.mxu0 0
    %3290 = vmatpush2.bf16.xpose.msra.mxu0 0
    %3291 = vmatprep.subr.bf16.mxu0 0
    %3292 = vmatpush2.bf16.xpose.msra.mxu0 0
    %3293 = vmatprep.mubr.bf16.mxu0 0
    %3294 = vmatmul.mubr.bf16.gmra.mxu0 %v3256
    %v3295 = vpop.f32.mrf.mxu0
    %v3296 = vadd.f32 %v272, %v3295
    %v3297 = vpop.f32.mrf.mxu0
    %v3298 = vpop.f32.mrf.mxu0
    %v3299 = vpop.f32.mrf.mxu0
    %3300 = vdwg.mxu0
    %v3301 = vsel %vm354, %v3296, -inf
    %3302 = vmax.xlane.f32.xlu0 %v3301
    %v3303 = vpop.xlane.xlu0 %3302
    %v3304 = vsub.f32 %v3296, %v3303
    %v3305 = vmul.f32 %v3304, 1.442695
    %v3306 = vpow.pop %v3305
    %v3307 = vsel %vm354, %v3306, 0.0
    %3308 = vadd.xlane.f32.xlu0 %v3307
    %v3309 = vpop.xlane.xlu0 %3308
    %v3310 = vrcp.pop %v3309
    %v3311 = vmul.f32 %v3306, %v3310
    %v3312 = vpack.c.bf16 %v3311, %v3311
    %3313 = vrot.lane.b32.xlu0 %v3251, 64
    %v3314 = vpop.permute.xlu0 %3313
    %v3316 = vsel %vm354, %v3312, 0
    %v3319 = vsel %vm418, %v3314, 0
    %3321 = vmatprep.subr.bf16.mxu0 0
    %3322 = vmatpush1.bf16.msra.mxu0 0
    %3323 = vmatprep.subr.bf16.mxu0 0
    %3324 = vmatpush1.bf16.msra.mxu0 0
    %3325 = vmatprep.subr.bf16.mxu0 0
    %3326 = vmatpush1.bf16.msra.mxu0 0
    %3327 = vmatprep.subr.bf16.mxu0 0
    %3328 = vmatpush1.bf16.msra.mxu0 0
    %3329 = vmatprep.subr.bf16.mxu0 0
    %3330 = vmatpush1.bf16.msra.mxu0 0
    %3331 = vmatprep.subr.bf16.mxu0 0
    %3332 = vmatpush1.bf16.msra.mxu0 0
    %3333 = vmatprep.subr.bf16.mxu0 0
    %3334 = vmatpush1.bf16.msra.mxu0 0
    %3335 = vmatprep.subr.bf16.mxu0 0
    %3336 = vmatpush1.bf16.msra.mxu0 %v3319
    %3337 = vmatprep.subr.bf16.mxu0 0
    %3338 = vmatpush2.bf16.msra.mxu0 0
    %3339 = vmatprep.subr.bf16.mxu0 0
    %3340 = vmatpush2.bf16.msra.mxu0 0
    %3341 = vmatprep.subr.bf16.mxu0 0
    %3342 = vmatpush2.bf16.msra.mxu0 0
    %3343 = vmatprep.subr.bf16.mxu0 0
    %3344 = vmatpush2.bf16.msra.mxu0 0
    %3345 = vmatprep.subr.bf16.mxu0 0
    %3346 = vmatpush2.bf16.msra.mxu0 0
    %3347 = vmatprep.subr.bf16.mxu0 0
    %3348 = vmatpush2.bf16.msra.mxu0 0
    %3349 = vmatprep.subr.bf16.mxu0 0
    %3350 = vmatpush2.bf16.msra.mxu0 0
    %3351 = vmatprep.subr.bf16.mxu0 0
    %3352 = vmatpush2.bf16.msra.mxu0 0
    %3353 = vmatprep.mubr.bf16.mxu0 0
    %3354 = vmatmul.mubr.bf16.gmra.mxu0 %v3316
    %v3355 = vpop.f32.mrf.mxu0
    %v3356 = vadd.f32 0.0, %v3355
    %v3357 = vpop.f32.mrf.mxu0
    %v3358 = vpop.f32.mrf.mxu0
    %v3359 = vpop.f32.mrf.mxu0
    %3360 = vdwg.mxu0
    %3361 = vrot.lane.b32.xlu0 %v3251, 120
    %v3362 = vpop.permute.xlu0 %3361
    %3363 = vrot.lane.b32.xlu0 %v3251, 88
    %v3364 = vpop.permute.xlu0 %3363
    %v3366 = vsel %vm354, %v3362, 0
    %v3369 = vsel %vm354, %v3364, 0
    %3371 = vmatprep.subr.bf16.mxu0 0
    %3372 = vmatpush1.bf16.xpose.msra.mxu0 0
    %3373 = vmatprep.subr.bf16.mxu0 0
    %3374 = vmatpush1.bf16.xpose.msra.mxu0 0
    %3375 = vmatprep.subr.bf16.mxu0 0
    %3376 = vmatpush1.bf16.xpose.msra.mxu0 0
    %3377 = vmatprep.subr.bf16.mxu0 0
    %3378 = vmatpush1.bf16.xpose.msra.mxu0 0
    %3379 = vmatprep.subr.bf16.mxu0 0
    %3380 = vmatpush1.bf16.xpose.msra.mxu0 0
    %3381 = vmatprep.subr.bf16.mxu0 0
    %3382 = vmatpush1.bf16.xpose.msra.mxu0 0
    %3383 = vmatprep.subr.bf16.mxu0 0
    %3384 = vmatpush1.bf16.xpose.msra.mxu0 0
    %3385 = vmatprep.subr.bf16.mxu0 0
    %3386 = vmatpush1.bf16.xpose.msra.mxu0 %v3369
    %3387 = vmatprep.subr.bf16.mxu0 0
    %3388 = vmatpush2.bf16.xpose.msra.mxu0 0
    %3389 = vmatprep.subr.bf16.mxu0 0
    %3390 = vmatpush2.bf16.xpose.msra.mxu0 0
    %3391 = vmatprep.subr.bf16.mxu0 0
    %3392 = vmatpush2.bf16.xpose.msra.mxu0 0
    %3393 = vmatprep.subr.bf16.mxu0 0
    %3394 = vmatpush2.bf16.xpose.msra.mxu0 0
    %3395 = vmatprep.subr.bf16.mxu0 0
    %3396 = vmatpush2.bf16.xpose.msra.mxu0 0
    %3397 = vmatprep.subr.bf16.mxu0 0
    %3398 = vmatpush2.bf16.xpose.msra.mxu0 0
    %3399 = vmatprep.subr.bf16.mxu0 0
    %3400 = vmatpush2.bf16.xpose.msra.mxu0 0
    %3401 = vmatprep.subr.bf16.mxu0 0
    %3402 = vmatpush2.bf16.xpose.msra.mxu0 0
    %3403 = vmatprep.mubr.bf16.mxu0 0
    %3404 = vmatmul.mubr.bf16.gmra.mxu0 %v3366
    %v3405 = vpop.f32.mrf.mxu0
    %v3406 = vadd.f32 %v272, %v3405
    %v3407 = vpop.f32.mrf.mxu0
    %v3408 = vpop.f32.mrf.mxu0
    %v3409 = vpop.f32.mrf.mxu0
    %3410 = vdwg.mxu0
    %v3411 = vsel %vm354, %v3406, -inf
    %3412 = vmax.xlane.f32.xlu0 %v3411
    %v3413 = vpop.xlane.xlu0 %3412
    %v3414 = vsub.f32 %v3406, %v3413
    %v3415 = vmul.f32 %v3414, 1.442695
    %v3416 = vpow.pop %v3415
    %v3417 = vsel %vm354, %v3416, 0.0
    %3418 = vadd.xlane.f32.xlu0 %v3417
    %v3419 = vpop.xlane.xlu0 %3418
    %v3420 = vrcp.pop %v3419
    %v3421 = vmul.f32 %v3416, %v3420
    %v3422 = vpack.c.bf16 %v3421, %v3421
    %3423 = vrot.lane.b32.xlu0 %v3251, 56
    %v3424 = vpop.permute.xlu0 %3423
    %v3426 = vsel %vm354, %v3422, 0
    %v3429 = vsel %vm418, %v3424, 0
    %3431 = vmatprep.subr.bf16.mxu0 0
    %3432 = vmatpush1.bf16.msra.mxu0 0
    %3433 = vmatprep.subr.bf16.mxu0 0
    %3434 = vmatpush1.bf16.msra.mxu0 0
    %3435 = vmatprep.subr.bf16.mxu0 0
    %3436 = vmatpush1.bf16.msra.mxu0 0
    %3437 = vmatprep.subr.bf16.mxu0 0
    %3438 = vmatpush1.bf16.msra.mxu0 0
    %3439 = vmatprep.subr.bf16.mxu0 0
    %3440 = vmatpush1.bf16.msra.mxu0 0
    %3441 = vmatprep.subr.bf16.mxu0 0
    %3442 = vmatpush1.bf16.msra.mxu0 0
    %3443 = vmatprep.subr.bf16.mxu0 0
    %3444 = vmatpush1.bf16.msra.mxu0 0
    %3445 = vmatprep.subr.bf16.mxu0 0
    %3446 = vmatpush1.bf16.msra.mxu0 %v3429
    %3447 = vmatprep.subr.bf16.mxu0 0
    %3448 = vmatpush2.bf16.msra.mxu0 0
    %3449 = vmatprep.subr.bf16.mxu0 0
    %3450 = vmatpush2.bf16.msra.mxu0 0
    %3451 = vmatprep.subr.bf16.mxu0 0
    %3452 = vmatpush2.bf16.msra.mxu0 0
    %3453 = vmatprep.subr.bf16.mxu0 0
    %3454 = vmatpush2.bf16.msra.mxu0 0
    %3455 = vmatprep.subr.bf16.mxu0 0
    %3456 = vmatpush2.bf16.msra.mxu0 0
    %3457 = vmatprep.subr.bf16.mxu0 0
    %3458 = vmatpush2.bf16.msra.mxu0 0
    %3459 = vmatprep.subr.bf16.mxu0 0
    %3460 = vmatpush2.bf16.msra.mxu0 0
    %3461 = vmatprep.subr.bf16.mxu0 0
    %3462 = vmatpush2.bf16.msra.mxu0 0
    %3463 = vmatprep.mubr.bf16.mxu0 0
    %3464 = vmatmul.mubr.bf16.gmra.mxu0 %v3426
    %v3465 = vpop.f32.mrf.mxu0
    %v3466 = vadd.f32 0.0, %v3465
    %v3467 = vpop.f32.mrf.mxu0
    %v3468 = vpop.f32.mrf.mxu0
    %v3469 = vpop.f32.mrf.mxu0
    %3470 = vdwg.mxu0
    %3471 = vrot.lane.b32.xlu0 %v3251, 112
    %v3472 = vpop.permute.xlu0 %3471
    %3473 = vrot.lane.b32.xlu0 %v3251, 80
    %v3474 = vpop.permute.xlu0 %3473
    %v3476 = vsel %vm354, %v3472, 0
    %v3479 = vsel %vm354, %v3474, 0
    %3481 = vmatprep.subr.bf16.mxu0 0
    %3482 = vmatpush1.bf16.xpose.msra.mxu0 0
    %3483 = vmatprep.subr.bf16.mxu0 0
    %3484 = vmatpush1.bf16.xpose.msra.mxu0 0
    %3485 = vmatprep.subr.bf16.mxu0 0
    %3486 = vmatpush1.bf16.xpose.msra.mxu0 0
    %3487 = vmatprep.subr.bf16.mxu0 0
    %3488 = vmatpush1.bf16.xpose.msra.mxu0 0
    %3489 = vmatprep.subr.bf16.mxu0 0
    %3490 = vmatpush1.bf16.xpose.msra.mxu0 0
    %3491 = vmatprep.subr.bf16.mxu0 0
    %3492 = vmatpush1.bf16.xpose.msra.mxu0 0
    %3493 = vmatprep.subr.bf16.mxu0 0
    %3494 = vmatpush1.bf16.xpose.msra.mxu0 0
    %3495 = vmatprep.subr.bf16.mxu0 0
    %3496 = vmatpush1.bf16.xpose.msra.mxu0 %v3479
    %3497 = vmatprep.subr.bf16.mxu0 0
    %3498 = vmatpush2.bf16.xpose.msra.mxu0 0
    %3499 = vmatprep.subr.bf16.mxu0 0
    %3500 = vmatpush2.bf16.xpose.msra.mxu0 0
    %3501 = vmatprep.subr.bf16.mxu0 0
    %3502 = vmatpush2.bf16.xpose.msra.mxu0 0
    %3503 = vmatprep.subr.bf16.mxu0 0
    %3504 = vmatpush2.bf16.xpose.msra.mxu0 0
    %3505 = vmatprep.subr.bf16.mxu0 0
    %3506 = vmatpush2.bf16.xpose.msra.mxu0 0
    %3507 = vmatprep.subr.bf16.mxu0 0
    %3508 = vmatpush2.bf16.xpose.msra.mxu0 0
    %3509 = vmatprep.subr.bf16.mxu0 0
    %3510 = vmatpush2.bf16.xpose.msra.mxu0 0
    %3511 = vmatprep.subr.bf16.mxu0 0
    %3512 = vmatpush2.bf16.xpose.msra.mxu0 0
    %3513 = vmatprep.mubr.bf16.mxu0 0
    %3514 = vmatmul.mubr.bf16.gmra.mxu0 %v3476
    %v3515 = vpop.f32.mrf.mxu0
    %v3516 = vadd.f32 %v272, %v3515
    %v3517 = vpop.f32.mrf.mxu0
    %v3518 = vpop.f32.mrf.mxu0
    %v3519 = vpop.f32.mrf.mxu0
    %3520 = vdwg.mxu0
    %v3521 = vsel %vm354, %v3516, -inf
    %3522 = vmax.xlane.f32.xlu0 %v3521
    %v3523 = vpop.xlane.xlu0 %3522
    %v3524 = vsub.f32 %v3516, %v3523
    %v3525 = vmul.f32 %v3524, 1.442695
    %v3526 = vpow.pop %v3525
    %v3527 = vsel %vm354, %v3526, 0.0
    %3528 = vadd.xlane.f32.xlu0 %v3527
    %v3529 = vpop.xlane.xlu0 %3528
    %v3530 = vrcp.pop %v3529
    %v3531 = vmul.f32 %v3526, %v3530
    %v3532 = vpack.c.bf16 %v3531, %v3531
    %3533 = vrot.lane.b32.xlu0 %v3251, 48
    %v3534 = vpop.permute.xlu0 %3533
    %v3536 = vsel %vm354, %v3532, 0
    %v3539 = vsel %vm418, %v3534, 0
    %3541 = vmatprep.subr.bf16.mxu0 0
    %3542 = vmatpush1.bf16.msra.mxu0 0
    %3543 = vmatprep.subr.bf16.mxu0 0
    %3544 = vmatpush1.bf16.msra.mxu0 0
    %3545 = vmatprep.subr.bf16.mxu0 0
    %3546 = vmatpush1.bf16.msra.mxu0 0
    %3547 = vmatprep.subr.bf16.mxu0 0
    %3548 = vmatpush1.bf16.msra.mxu0 0
    %3549 = vmatprep.subr.bf16.mxu0 0
    %3550 = vmatpush1.bf16.msra.mxu0 0
    %3551 = vmatprep.subr.bf16.mxu0 0
    %3552 = vmatpush1.bf16.msra.mxu0 0
    %3553 = vmatprep.subr.bf16.mxu0 0
    %3554 = vmatpush1.bf16.msra.mxu0 0
    %3555 = vmatprep.subr.bf16.mxu0 0
    %3556 = vmatpush1.bf16.msra.mxu0 %v3539
    %3557 = vmatprep.subr.bf16.mxu0 0
    %3558 = vmatpush2.bf16.msra.mxu0 0
    %3559 = vmatprep.subr.bf16.mxu0 0
    %3560 = vmatpush2.bf16.msra.mxu0 0
    %3561 = vmatprep.subr.bf16.mxu0 0
    %3562 = vmatpush2.bf16.msra.mxu0 0
    %3563 = vmatprep.subr.bf16.mxu0 0
    %3564 = vmatpush2.bf16.msra.mxu0 0
    %3565 = vmatprep.subr.bf16.mxu0 0
    %3566 = vmatpush2.bf16.msra.mxu0 0
    %3567 = vmatprep.subr.bf16.mxu0 0
    %3568 = vmatpush2.bf16.msra.mxu0 0
    %3569 = vmatprep.subr.bf16.mxu0 0
    %3570 = vmatpush2.bf16.msra.mxu0 0
    %3571 = vmatprep.subr.bf16.mxu0 0
    %3572 = vmatpush2.bf16.msra.mxu0 0
    %3573 = vmatprep.mubr.bf16.mxu0 0
    %3574 = vmatmul.mubr.bf16.gmra.mxu0 %v3536
    %v3575 = vpop.f32.mrf.mxu0
    %v3576 = vadd.f32 0.0, %v3575
    %v3577 = vpop.f32.mrf.mxu0
    %v3578 = vpop.f32.mrf.mxu0
    %v3579 = vpop.f32.mrf.mxu0
    %3580 = vdwg.mxu0
    %3581 = vrot.lane.b32.xlu0 %v3251, 104
    %v3582 = vpop.permute.xlu0 %3581
    %3583 = vrot.lane.b32.xlu0 %v3251, 72
    %v3584 = vpop.permute.xlu0 %3583
    %v3586 = vsel %vm354, %v3582, 0
    %v3589 = vsel %vm354, %v3584, 0
    %3591 = vmatprep.subr.bf16.mxu0 0
    %3592 = vmatpush1.bf16.xpose.msra.mxu0 0
    %3593 = vmatprep.subr.bf16.mxu0 0
    %3594 = vmatpush1.bf16.xpose.msra.mxu0 0
    %3595 = vmatprep.subr.bf16.mxu0 0
    %3596 = vmatpush1.bf16.xpose.msra.mxu0 0
    %3597 = vmatprep.subr.bf16.mxu0 0
    %3598 = vmatpush1.bf16.xpose.msra.mxu0 0
    %3599 = vmatprep.subr.bf16.mxu0 0
    %3600 = vmatpush1.bf16.xpose.msra.mxu0 0
    %3601 = vmatprep.subr.bf16.mxu0 0
    %3602 = vmatpush1.bf16.xpose.msra.mxu0 0
    %3603 = vmatprep.subr.bf16.mxu0 0
    %3604 = vmatpush1.bf16.xpose.msra.mxu0 0
    %3605 = vmatprep.subr.bf16.mxu0 0
    %3606 = vmatpush1.bf16.xpose.msra.mxu0 %v3589
    %3607 = vmatprep.subr.bf16.mxu0 0
    %3608 = vmatpush2.bf16.xpose.msra.mxu0 0
    %3609 = vmatprep.subr.bf16.mxu0 0
    %3610 = vmatpush2.bf16.xpose.msra.mxu0 0
    %3611 = vmatprep.subr.bf16.mxu0 0
    %3612 = vmatpush2.bf16.xpose.msra.mxu0 0
    %3613 = vmatprep.subr.bf16.mxu0 0
    %3614 = vmatpush2.bf16.xpose.msra.mxu0 0
    %3615 = vmatprep.subr.bf16.mxu0 0
    %3616 = vmatpush2.bf16.xpose.msra.mxu0 0
    %3617 = vmatprep.subr.bf16.mxu0 0
    %3618 = vmatpush2.bf16.xpose.msra.mxu0 0
    %3619 = vmatprep.subr.bf16.mxu0 0
    %3620 = vmatpush2.bf16.xpose.msra.mxu0 0
    %3621 = vmatprep.subr.bf16.mxu0 0
    %3622 = vmatpush2.bf16.xpose.msra.mxu0 0
    %3623 = vmatprep.mubr.bf16.mxu0 0
    %3624 = vmatmul.mubr.bf16.gmra.mxu0 %v3586
    %v3625 = vpop.f32.mrf.mxu0
    %v3626 = vadd.f32 %v272, %v3625
    %v3627 = vpop.f32.mrf.mxu0
    %v3628 = vpop.f32.mrf.mxu0
    %v3629 = vpop.f32.mrf.mxu0
    %3630 = vdwg.mxu0
    %v3631 = vsel %vm354, %v3626, -inf
    %3632 = vmax.xlane.f32.xlu0 %v3631
    %v3633 = vpop.xlane.xlu0 %3632
    %v3634 = vsub.f32 %v3626, %v3633
    %v3635 = vmul.f32 %v3634, 1.442695
    %v3636 = vpow.pop %v3635
    %v3637 = vsel %vm354, %v3636, 0.0
    %3638 = vadd.xlane.f32.xlu0 %v3637
    %v3639 = vpop.xlane.xlu0 %3638
    %v3640 = vrcp.pop %v3639
    %v3641 = vmul.f32 %v3636, %v3640
    %v3642 = vpack.c.bf16 %v3641, %v3641
    %3643 = vrot.lane.b32.xlu0 %v3251, 40
    %v3644 = vpop.permute.xlu0 %3643
    %v3646 = vsel %vm354, %v3642, 0
    %v3649 = vsel %vm418, %v3644, 0
    %3651 = vmatprep.subr.bf16.mxu0 0
    %3652 = vmatpush1.bf16.msra.mxu0 0
    %3653 = vmatprep.subr.bf16.mxu0 0
    %3654 = vmatpush1.bf16.msra.mxu0 0
    %3655 = vmatprep.subr.bf16.mxu0 0
    %3656 = vmatpush1.bf16.msra.mxu0 0
    %3657 = vmatprep.subr.bf16.mxu0 0
    %3658 = vmatpush1.bf16.msra.mxu0 0
    %3659 = vmatprep.subr.bf16.mxu0 0
    %3660 = vmatpush1.bf16.msra.mxu0 0
    %3661 = vmatprep.subr.bf16.mxu0 0
    %3662 = vmatpush1.bf16.msra.mxu0 0
    %3663 = vmatprep.subr.bf16.mxu0 0
    %3664 = vmatpush1.bf16.msra.mxu0 0
    %3665 = vmatprep.subr.bf16.mxu0 0
    %3666 = vmatpush1.bf16.msra.mxu0 %v3649
    %3667 = vmatprep.subr.bf16.mxu0 0
    %3668 = vmatpush2.bf16.msra.mxu0 0
    %3669 = vmatprep.subr.bf16.mxu0 0
    %3670 = vmatpush2.bf16.msra.mxu0 0
    %3671 = vmatprep.subr.bf16.mxu0 0
    %3672 = vmatpush2.bf16.msra.mxu0 0
    %3673 = vmatprep.subr.bf16.mxu0 0
    %3674 = vmatpush2.bf16.msra.mxu0 0
    %3675 = vmatprep.subr.bf16.mxu0 0
    %3676 = vmatpush2.bf16.msra.mxu0 0
    %3677 = vmatprep.subr.bf16.mxu0 0
    %3678 = vmatpush2.bf16.msra.mxu0 0
    %3679 = vmatprep.subr.bf16.mxu0 0
    %3680 = vmatpush2.bf16.msra.mxu0 0
    %3681 = vmatprep.subr.bf16.mxu0 0
    %3682 = vmatpush2.bf16.msra.mxu0 0
    %3683 = vmatprep.mubr.bf16.mxu0 0
    %3684 = vmatmul.mubr.bf16.gmra.mxu0 %v3646
    %v3685 = vpop.f32.mrf.mxu0
    %v3686 = vadd.f32 0.0, %v3685
    %v3687 = vpop.f32.mrf.mxu0
    %v3688 = vpop.f32.mrf.mxu0
    %v3689 = vpop.f32.mrf.mxu0
    %3690 = vdwg.mxu0
    %3692 = vrot.lane.b32.xlu0 %v3466, 8
    %v3693 = vpop.permute.xlu0 %3692
    %3696 = vrot.lane.b32.xlu0 %v3576, 16
    %v3697 = vpop.permute.xlu0 %3696
    %3700 = vrot.lane.b32.xlu0 %v3686, 24
    %v3701 = vpop.permute.xlu0 %3700
    %v3703 = vsel %vm354, %v3356, %v3693
    %v3704 = vsel %vm805, %v3703, %v3697
    %v3705 = vsel %vm807, %v3704, %v3701
    %v3706 = vpack.c.bf16 %v3705, %v3250
    %s3707 = scalar_lea.vmem [#allocation12], 16
    %v3708 = vld [vmem:[%s3707] sm:$0xf]
    %v3709 = vld [vmem:[%s3707 + $0x4] sm:$0xf]
    %v3710 = vld [vmem:[%s3707 + $0x8] sm:$0xf]
    %v3711 = vld [vmem:[%s3707 + $0xc] sm:$0xf]
    %s3712 = scalar_lea.vmem [#allocation13], 1
    %v3713 = vld [vmem:[%s3712] sm:$0x1]
    %v3715 = vlaneseq
    %v3716 = vshrl.u32 %v3715, 7
    %v3717 = vsub.s32 0, %v3716
    %v3718 = vrot.slane %v3713, %v3717
    %v3724 = vunpack.c.l.b16 %v3708
    %v3725 = vunpack.c.l.b16 %v3709
    %v3726 = vunpack.c.l.b16 %v3710
    %v3727 = vunpack.c.l.b16 %v3711
    %v3728 = vpack.c.b16 %v3725, %v3724
    %v3729 = vpack.c.b16 %v3727, %v3726
    %v3733 = vsel %vm305, %v3706, 0
    %3735 = vmatprep.subr.bf16.mxu0 0
    %3736 = vmatpush1.bf16.msra.mxu0 0
    %3737 = vmatprep.subr.bf16.mxu0 0
    %3738 = vmatpush1.bf16.msra.mxu0 0
    %3739 = vmatprep.subr.bf16.mxu0 0
    %3740 = vmatpush1.bf16.msra.mxu0 0
    %3741 = vmatprep.subr.bf16.mxu0 0
    %3742 = vmatpush1.bf16.msra.mxu0 0
    %3743 = vmatprep.subr.bf16.mxu0 0
    %3744 = vmatpush1.bf16.msra.mxu0 0
    %3745 = vmatprep.subr.bf16.mxu0 0
    %3746 = vmatpush1.bf16.msra.mxu0 0
    %3747 = vmatprep.subr.bf16.mxu0 0
    %3748 = vmatpush1.bf16.msra.mxu0 %v3729
    %3749 = vmatprep.subr.bf16.mxu0 0
    %3750 = vmatpush1.bf16.msra.mxu0 %v3728
    %3751 = vmatprep.subr.bf16.mxu0 0
    %3752 = vmatpush2.bf16.msra.mxu0 0
    %3753 = vmatprep.subr.bf16.mxu0 0
    %3754 = vmatpush2.bf16.msra.mxu0 0
    %3755 = vmatprep.subr.bf16.mxu0 0
    %3756 = vmatpush2.bf16.msra.mxu0 0
    %3757 = vmatprep.subr.bf16.mxu0 0
    %3758 = vmatpush2.bf16.msra.mxu0 0
    %3759 = vmatprep.subr.bf16.mxu0 0
    %3760 = vmatpush2.bf16.msra.mxu0 0
    %3761 = vmatprep.subr.bf16.mxu0 0
    %3762 = vmatpush2.bf16.msra.mxu0 0
    %3763 = vmatprep.subr.bf16.mxu0 0
    %3764 = vmatpush2.bf16.msra.mxu0 0
    %3765 = vmatprep.subr.bf16.mxu0 0
    %3766 = vmatpush2.bf16.msra.mxu0 0
    %3767 = vmatprep.mubr.bf16.mxu0 0
    %3768 = vmatmul.mubr.bf16.gmra.mxu0 %v3733
    %v3769 = vpop.f32.mrf.mxu0
    %v3770 = vadd.f32 %v3718, %v3769
    %v3771 = vpop.f32.mrf.mxu0
    %v3772 = vpop.f32.mrf.mxu0
    %v3773 = vadd.f32 %v3718, %v3772
    %v3774 = vpop.f32.mrf.mxu0
    %3775 = vdwg.mxu0
    %v3776 = vadd.f32 %v2724, %v3770
    %v3777 = vadd.f32 %v2725, %v3773
    %s3778 = scalar_lea.vmem %s17, 3
    %v3779 = vld [vmem:[%s3778] sm:$0x1]
    %s3780 = scalar_lea.vmem %s18, 3
    %v3781 = vld [vmem:[%s3780] sm:$0x1]
    %v3782 = vsel %vm305, %v3776, 0.0
    %3783 = vadd.xlane.f32.xlu0 %v3782
    %v3784 = vpop.xlane.xlu0 %3783
    %v3785 = vsel %vm305, %v3777, 0.0
    %3786 = vadd.xlane.f32.xlu0 %v3785
    %v3787 = vpop.xlane.xlu0 %3786
    %v3788 = vmul.f32 %v3784, %v1342
    %v3789 = vmul.f32 %v3787, %v1342
    %v3790 = vsub.f32 %v3776, %v3788
    %v3791 = vsub.f32 %v3777, %v3789
    %v3792 = vmul.f32 %v3790, %v3790
    %v3793 = vmul.f32 %v3791, %v3791
    %v3794 = vsel %vm305, %v3792, 0.0
    %3795 = vadd.xlane.f32.xlu0 %v3794
    %v3796 = vpop.xlane.xlu0 %3795
    %v3797 = vsel %vm305, %v3793, 0.0
    %3798 = vadd.xlane.f32.xlu0 %v3797
    %v3799 = vpop.xlane.xlu0 %3798
    %v3800 = vmul.f32 %v3796, %v1342
    %v3801 = vmul.f32 %v3799, %v1342
    %v3802 = vadd.f32 %v3800, 1e-05
    %v3803 = vadd.f32 %v3801, 1e-05
    %v3804 = vrsqrt.pop %v3802
    %v3805 = vrsqrt.pop %v3803
    %v3806 = vmul.f32 %v3790, %v3804
    %v3807 = vmul.f32 %v3791, %v3805
    %v3809 = vlaneseq
    %v3810 = vshrl.u32 %v3809, 7
    %v3811 = vsub.s32 0, %v3810
    %v3812 = vrot.slane %v3779, %v3811
    %v3814 = vmul.f32 %v3806, %v3812
    %v3815 = vmul.f32 %v3807, %v3812
    %v3817 = vlaneseq
    %v3818 = vshrl.u32 %v3817, 7
    %v3819 = vsub.s32 0, %v3818
    %v3820 = vrot.slane %v3781, %v3819
    %v3822 = vadd.f32 %v3814, %v3820
    %v3823 = vadd.f32 %v3815, %v3820
    %v3824 = vpack.c.bf16 %v3823, %v3822
    %s3825 = scalar_lea.vmem [#allocation15], 16
    %v3826 = vld [vmem:[%s3825] sm:$0xf]
    %v3827 = vld [vmem:[%s3825 + $0x4] sm:$0xf]
    %v3828 = vld [vmem:[%s3825 + $0x8] sm:$0xf]
    %v3829 = vld [vmem:[%s3825 + $0xc] sm:$0xf]
    %s3830 = scalar_lea.vmem %s8, 1
    %v3831 = vld [vmem:[%s3830] sm:$0x1]
    %v3833 = vlaneseq
    %v3834 = vshrl.u32 %v3833, 7
    %v3835 = vsub.s32 0, %v3834
    %v3836 = vrot.slane %v3831, %v3835
    %v3842 = vunpack.c.l.b16 %v3826
    %v3843 = vunpack.c.l.b16 %v3827
    %v3844 = vunpack.c.l.b16 %v3828
    %v3845 = vunpack.c.l.b16 %v3829
    %v3846 = vpack.c.b16 %v3843, %v3842
    %v3847 = vpack.c.b16 %v3845, %v3844
    %v3851 = vsel %vm305, %v3824, 0
    %3853 = vmatprep.subr.bf16.mxu0 0
    %3854 = vmatpush1.bf16.msra.mxu0 0
    %3855 = vmatprep.subr.bf16.mxu0 0
    %3856 = vmatpush1.bf16.msra.mxu0 0
    %3857 = vmatprep.subr.bf16.mxu0 0
    %3858 = vmatpush1.bf16.msra.mxu0 0
    %3859 = vmatprep.subr.bf16.mxu0 0
    %3860 = vmatpush1.bf16.msra.mxu0 0
    %3861 = vmatprep.subr.bf16.mxu0 0
    %3862 = vmatpush1.bf16.msra.mxu0 0
    %3863 = vmatprep.subr.bf16.mxu0 0
    %3864 = vmatpush1.bf16.msra.mxu0 0
    %3865 = vmatprep.subr.bf16.mxu0 0
    %3866 = vmatpush1.bf16.msra.mxu0 %v3847
    %3867 = vmatprep.subr.bf16.mxu0 0
    %3868 = vmatpush1.bf16.msra.mxu0 %v3846
    %3869 = vmatprep.subr.bf16.mxu0 0
    %3870 = vmatpush2.bf16.msra.mxu0 0
    %3871 = vmatprep.subr.bf16.mxu0 0
    %3872 = vmatpush2.bf16.msra.mxu0 0
    %3873 = vmatprep.subr.bf16.mxu0 0
    %3874 = vmatpush2.bf16.msra.mxu0 0
    %3875 = vmatprep.subr.bf16.mxu0 0
    %3876 = vmatpush2.bf16.msra.mxu0 0
    %3877 = vmatprep.subr.bf16.mxu0 0
    %3878 = vmatpush2.bf16.msra.mxu0 0
    %3879 = vmatprep.subr.bf16.mxu0 0
    %3880 = vmatpush2.bf16.msra.mxu0 0
    %3881 = vmatprep.subr.bf16.mxu0 0
    %3882 = vmatpush2.bf16.msra.mxu0 0
    %3883 = vmatprep.subr.bf16.mxu0 0
    %3884 = vmatpush2.bf16.msra.mxu0 0
    %3885 = vmatprep.mubr.bf16.mxu0 0
    %3886 = vmatmul.mubr.bf16.gmra.mxu0 %v3851
    %v3887 = vpop.f32.mrf.mxu0
    %v3888 = vadd.f32 %v3836, %v3887
    %v3889 = vpop.f32.mrf.mxu0
    %v3890 = vpop.f32.mrf.mxu0
    %v3891 = vadd.f32 %v3836, %v3890
    %v3892 = vpop.f32.mrf.mxu0
    %3893 = vdwg.mxu0
    %s3894 = scalar_lea.vmem [#allocation16], 16
    %v3895 = vld [vmem:[%s3894] sm:$0xf]
    %v3896 = vld [vmem:[%s3894 + $0x4] sm:$0xf]
    %v3897 = vld [vmem:[%s3894 + $0x8] sm:$0xf]
    %v3898 = vld [vmem:[%s3894 + $0xc] sm:$0xf]
    %s3899 = scalar_lea.vmem %s10, 1
    %v3900 = vld [vmem:[%s3899] sm:$0x1]
    %v3902 = vlaneseq
    %v3903 = vshrl.u32 %v3902, 7
    %v3904 = vsub.s32 0, %v3903
    %v3905 = vrot.slane %v3900, %v3904
    %v3911 = vunpack.c.l.b16 %v3895
    %v3912 = vunpack.c.l.b16 %v3896
    %v3913 = vunpack.c.l.b16 %v3897
    %v3914 = vunpack.c.l.b16 %v3898
    %v3915 = vpack.c.b16 %v3912, %v3911
    %v3916 = vpack.c.b16 %v3914, %v3913
    %3919 = vmatprep.subr.bf16.mxu0 0
    %3920 = vmatpush1.bf16.msra.mxu0 0
    %3921 = vmatprep.subr.bf16.mxu0 0
    %3922 = vmatpush1.bf16.msra.mxu0 0
    %3923 = vmatprep.subr.bf16.mxu0 0
    %3924 = vmatpush1.bf16.msra.mxu0 0
    %3925 = vmatprep.subr.bf16.mxu0 0
    %3926 = vmatpush1.bf16.msra.mxu0 0
    %3927 = vmatprep.subr.bf16.mxu0 0
    %3928 = vmatpush1.bf16.msra.mxu0 0
    %3929 = vmatprep.subr.bf16.mxu0 0
    %3930 = vmatpush1.bf16.msra.mxu0 0
    %3931 = vmatprep.subr.bf16.mxu0 0
    %3932 = vmatpush1.bf16.msra.mxu0 %v3916
    %3933 = vmatprep.subr.bf16.mxu0 0
    %3934 = vmatpush1.bf16.msra.mxu0 %v3915
    %3935 = vmatprep.subr.bf16.mxu0 0
    %3936 = vmatpush2.bf16.msra.mxu0 0
    %3937 = vmatprep.subr.bf16.mxu0 0
    %3938 = vmatpush2.bf16.msra.mxu0 0
    %3939 = vmatprep.subr.bf16.mxu0 0
    %3940 = vmatpush2.bf16.msra.mxu0 0
    %3941 = vmatprep.subr.bf16.mxu0 0
    %3942 = vmatpush2.bf16.msra.mxu0 0
    %3943 = vmatprep.subr.bf16.mxu0 0
    %3944 = vmatpush2.bf16.msra.mxu0 0
    %3945 = vmatprep.subr.bf16.mxu0 0
    %3946 = vmatpush2.bf16.msra.mxu0 0
    %3947 = vmatprep.subr.bf16.mxu0 0
    %3948 = vmatpush2.bf16.msra.mxu0 0
    %3949 = vmatprep.subr.bf16.mxu0 0
    %3950 = vmatpush2.bf16.msra.mxu0 0
    %3951 = vmatprep.mubr.bf16.mxu0 0
    %3952 = vmatmul.mubr.bf16.gmra.mxu0 %v1471
    %v3953 = vpop.f32.mrf.mxu0
    %v3954 = vadd.f32 %v3905, %v3953
    %v3955 = vpop.f32.mrf.mxu0
    %v3956 = vpop.f32.mrf.mxu0
    %v3957 = vadd.f32 %v3905, %v3956
    %v3958 = vpop.f32.mrf.mxu0
    %3959 = vdwg.mxu0
    %v3960 = vpack.c.bf16 %v3888, %v3888
    %v3961 = vpack.c.bf16 %v3954, %v3954
    %v3963 = vsel %vm354, %v3960, 0
    %v3966 = vsel %vm354, %v3961, 0
    %3968 = vmatprep.subr.bf16.mxu0 0
    %3969 = vmatpush1.bf16.xpose.msra.mxu0 0
    %3970 = vmatprep.subr.bf16.mxu0 0
    %3971 = vmatpush1.bf16.xpose.msra.mxu0 0
    %3972 = vmatprep.subr.bf16.mxu0 0
    %3973 = vmatpush1.bf16.xpose.msra.mxu0 0
    %3974 = vmatprep.subr.bf16.mxu0 0
    %3975 = vmatpush1.bf16.xpose.msra.mxu0 0
    %3976 = vmatprep.subr.bf16.mxu0 0
    %3977 = vmatpush1.bf16.xpose.msra.mxu0 0
    %3978 = vmatprep.subr.bf16.mxu0 0
    %3979 = vmatpush1.bf16.xpose.msra.mxu0 0
    %3980 = vmatprep.subr.bf16.mxu0 0
    %3981 = vmatpush1.bf16.xpose.msra.mxu0 0
    %3982 = vmatprep.subr.bf16.mxu0 0
    %3983 = vmatpush1.bf16.xpose.msra.mxu0 %v3966
    %3984 = vmatprep.subr.bf16.mxu0 0
    %3985 = vmatpush2.bf16.xpose.msra.mxu0 0
    %3986 = vmatprep.subr.bf16.mxu0 0
    %3987 = vmatpush2.bf16.xpose.msra.mxu0 0
    %3988 = vmatprep.subr.bf16.mxu0 0
    %3989 = vmatpush2.bf16.xpose.msra.mxu0 0
    %3990 = vmatprep.subr.bf16.mxu0 0
    %3991 = vmatpush2.bf16.xpose.msra.mxu0 0
    %3992 = vmatprep.subr.bf16.mxu0 0
    %3993 = vmatpush2.bf16.xpose.msra.mxu0 0
    %3994 = vmatprep.subr.bf16.mxu0 0
    %3995 = vmatpush2.bf16.xpose.msra.mxu0 0
    %3996 = vmatprep.subr.bf16.mxu0 0
    %3997 = vmatpush2.bf16.xpose.msra.mxu0 0
    %3998 = vmatprep.subr.bf16.mxu0 0
    %3999 = vmatpush2.bf16.xpose.msra.mxu0 0
    %4000 = vmatprep.mubr.bf16.mxu0 0
    %4001 = vmatmul.mubr.bf16.gmra.mxu0 %v3963
    %v4002 = vpop.f32.mrf.mxu0
    %v4003 = vadd.f32 %v276, %v4002
    %v4004 = vpop.f32.mrf.mxu0
    %v4005 = vpop.f32.mrf.mxu0
    %v4006 = vpop.f32.mrf.mxu0
    %4007 = vdwg.mxu0
    %v4008 = vsel %vm354, %v4003, -inf
    %4009 = vmax.xlane.f32.xlu0 %v4008
    %v4010 = vpop.xlane.xlu0 %4009
    %v4011 = vsub.f32 %v4003, %v4010
    %v4012 = vmul.f32 %v4011, 1.442695
    %v4013 = vpow.pop %v4012
    %v4014 = vsel %vm354, %v4013, 0.0
    %4015 = vadd.xlane.f32.xlu0 %v4014
    %v4016 = vpop.xlane.xlu0 %4015
    %v4017 = vrcp.pop %v4016
    %v4018 = vmul.f32 %v4013, %v4017
    %v4019 = vpack.c.bf16 %v4018, %v4018
    %4021 = vrot.lane.b32.xlu0 %v3961, 96
    %v4022 = vpop.permute.xlu0 %4021
    %v4024 = vsel %vm354, %v4019, 0
    %v4027 = vsel %vm418, %v4022, 0
    %4029 = vmatprep.subr.bf16.mxu0 0
    %4030 = vmatpush1.bf16.msra.mxu0 0
    %4031 = vmatprep.subr.bf16.mxu0 0
    %4032 = vmatpush1.bf16.msra.mxu0 0
    %4033 = vmatprep.subr.bf16.mxu0 0
    %4034 = vmatpush1.bf16.msra.mxu0 0
    %4035 = vmatprep.subr.bf16.mxu0 0
    %4036 = vmatpush1.bf16.msra.mxu0 0
    %4037 = vmatprep.subr.bf16.mxu0 0
    %4038 = vmatpush1.bf16.msra.mxu0 0
    %4039 = vmatprep.subr.bf16.mxu0 0
    %4040 = vmatpush1.bf16.msra.mxu0 0
    %4041 = vmatprep.subr.bf16.mxu0 0
    %4042 = vmatpush1.bf16.msra.mxu0 0
    %4043 = vmatprep.subr.bf16.mxu0 0
    %4044 = vmatpush1.bf16.msra.mxu0 %v4027
    %4045 = vmatprep.subr.bf16.mxu0 0
    %4046 = vmatpush2.bf16.msra.mxu0 0
    %4047 = vmatprep.subr.bf16.mxu0 0
    %4048 = vmatpush2.bf16.msra.mxu0 0
    %4049 = vmatprep.subr.bf16.mxu0 0
    %4050 = vmatpush2.bf16.msra.mxu0 0
    %4051 = vmatprep.subr.bf16.mxu0 0
    %4052 = vmatpush2.bf16.msra.mxu0 0
    %4053 = vmatprep.subr.bf16.mxu0 0
    %4054 = vmatpush2.bf16.msra.mxu0 0
    %4055 = vmatprep.subr.bf16.mxu0 0
    %4056 = vmatpush2.bf16.msra.mxu0 0
    %4057 = vmatprep.subr.bf16.mxu0 0
    %4058 = vmatpush2.bf16.msra.mxu0 0
    %4059 = vmatprep.subr.bf16.mxu0 0
    %4060 = vmatpush2.bf16.msra.mxu0 0
    %4061 = vmatprep.mubr.bf16.mxu0 0
    %4062 = vmatmul.mubr.bf16.gmra.mxu0 %v4024
    %v4063 = vpop.f32.mrf.mxu0
    %v4064 = vadd.f32 0.0, %v4063
    %v4065 = vpop.f32.mrf.mxu0
    %v4066 = vpop.f32.mrf.mxu0
    %v4067 = vpop.f32.mrf.mxu0
    %4068 = vdwg.mxu0
    %4070 = vrot.lane.b32.xlu0 %v3960, 120
    %v4071 = vpop.permute.xlu0 %4070
    %4072 = vrot.lane.b32.xlu0 %v3961, 120
    %v4073 = vpop.permute.xlu0 %4072
    %v4075 = vsel %vm354, %v4071, 0
    %v4078 = vsel %vm354, %v4073, 0
    %4080 = vmatprep.subr.bf16.mxu0 0
    %4081 = vmatpush1.bf16.xpose.msra.mxu0 0
    %4082 = vmatprep.subr.bf16.mxu0 0
    %4083 = vmatpush1.bf16.xpose.msra.mxu0 0
    %4084 = vmatprep.subr.bf16.mxu0 0
    %4085 = vmatpush1.bf16.xpose.msra.mxu0 0
    %4086 = vmatprep.subr.bf16.mxu0 0
    %4087 = vmatpush1.bf16.xpose.msra.mxu0 0
    %4088 = vmatprep.subr.bf16.mxu0 0
    %4089 = vmatpush1.bf16.xpose.msra.mxu0 0
    %4090 = vmatprep.subr.bf16.mxu0 0
    %4091 = vmatpush1.bf16.xpose.msra.mxu0 0
    %4092 = vmatprep.subr.bf16.mxu0 0
    %4093 = vmatpush1.bf16.xpose.msra.mxu0 0
    %4094 = vmatprep.subr.bf16.mxu0 0
    %4095 = vmatpush1.bf16.xpose.msra.mxu0 %v4078
    %4096 = vmatprep.subr.bf16.mxu0 0
    %4097 = vmatpush2.bf16.xpose.msra.mxu0 0
    %4098 = vmatprep.subr.bf16.mxu0 0
    %4099 = vmatpush2.bf16.xpose.msra.mxu0 0
    %4100 = vmatprep.subr.bf16.mxu0 0
    %4101 = vmatpush2.bf16.xpose.msra.mxu0 0
    %4102 = vmatprep.subr.bf16.mxu0 0
    %4103 = vmatpush2.bf16.xpose.msra.mxu0 0
    %4104 = vmatprep.subr.bf16.mxu0 0
    %4105 = vmatpush2.bf16.xpose.msra.mxu0 0
    %4106 = vmatprep.subr.bf16.mxu0 0
    %4107 = vmatpush2.bf16.xpose.msra.mxu0 0
    %4108 = vmatprep.subr.bf16.mxu0 0
    %4109 = vmatpush2.bf16.xpose.msra.mxu0 0
    %4110 = vmatprep.subr.bf16.mxu0 0
    %4111 = vmatpush2.bf16.xpose.msra.mxu0 0
    %4112 = vmatprep.mubr.bf16.mxu0 0
    %4113 = vmatmul.mubr.bf16.gmra.mxu0 %v4075
    %v4114 = vpop.f32.mrf.mxu0
    %v4115 = vadd.f32 %v276, %v4114
    %v4116 = vpop.f32.mrf.mxu0
    %v4117 = vpop.f32.mrf.mxu0
    %v4118 = vpop.f32.mrf.mxu0
    %4119 = vdwg.mxu0
    %v4120 = vsel %vm354, %v4115, -inf
    %4121 = vmax.xlane.f32.xlu0 %v4120
    %v4122 = vpop.xlane.xlu0 %4121
    %v4123 = vsub.f32 %v4115, %v4122
    %v4124 = vmul.f32 %v4123, 1.442695
    %v4125 = vpow.pop %v4124
    %v4126 = vsel %vm354, %v4125, 0.0
    %4127 = vadd.xlane.f32.xlu0 %v4126
    %v4128 = vpop.xlane.xlu0 %4127
    %v4129 = vrcp.pop %v4128
    %v4130 = vmul.f32 %v4125, %v4129
    %v4131 = vpack.c.bf16 %v4130, %v4130
    %4132 = vrot.lane.b32.xlu0 %v3961, 88
    %v4133 = vpop.permute.xlu0 %4132
    %v4135 = vsel %vm354, %v4131, 0
    %v4138 = vsel %vm418, %v4133, 0
    %4140 = vmatprep.subr.bf16.mxu0 0
    %4141 = vmatpush1.bf16.msra.mxu0 0
    %4142 = vmatprep.subr.bf16.mxu0 0
    %4143 = vmatpush1.bf16.msra.mxu0 0
    %4144 = vmatprep.subr.bf16.mxu0 0
    %4145 = vmatpush1.bf16.msra.mxu0 0
    %4146 = vmatprep.subr.bf16.mxu0 0
    %4147 = vmatpush1.bf16.msra.mxu0 0
    %4148 = vmatprep.subr.bf16.mxu0 0
    %4149 = vmatpush1.bf16.msra.mxu0 0
    %4150 = vmatprep.subr.bf16.mxu0 0
    %4151 = vmatpush1.bf16.msra.mxu0 0
    %4152 = vmatprep.subr.bf16.mxu0 0
    %4153 = vmatpush1.bf16.msra.mxu0 0
    %4154 = vmatprep.subr.bf16.mxu0 0
    %4155 = vmatpush1.bf16.msra.mxu0 %v4138
    %4156 = vmatprep.subr.bf16.mxu0 0
    %4157 = vmatpush2.bf16.msra.mxu0 0
    %4158 = vmatprep.subr.bf16.mxu0 0
    %4159 = vmatpush2.bf16.msra.mxu0 0
    %4160 = vmatprep.subr.bf16.mxu0 0
    %4161 = vmatpush2.bf16.msra.mxu0 0
    %4162 = vmatprep.subr.bf16.mxu0 0
    %4163 = vmatpush2.bf16.msra.mxu0 0
    %4164 = vmatprep.subr.bf16.mxu0 0
    %4165 = vmatpush2.bf16.msra.mxu0 0
    %4166 = vmatprep.subr.bf16.mxu0 0
    %4167 = vmatpush2.bf16.msra.mxu0 0
    %4168 = vmatprep.subr.bf16.mxu0 0
    %4169 = vmatpush2.bf16.msra.mxu0 0
    %4170 = vmatprep.subr.bf16.mxu0 0
    %4171 = vmatpush2.bf16.msra.mxu0 0
    %4172 = vmatprep.mubr.bf16.mxu0 0
    %4173 = vmatmul.mubr.bf16.gmra.mxu0 %v4135
    %v4174 = vpop.f32.mrf.mxu0
    %v4175 = vadd.f32 0.0, %v4174
    %v4176 = vpop.f32.mrf.mxu0
    %v4177 = vpop.f32.mrf.mxu0
    %v4178 = vpop.f32.mrf.mxu0
    %4179 = vdwg.mxu0
    %4180 = vrot.lane.b32.xlu0 %v3960, 112
    %v4181 = vpop.permute.xlu0 %4180
    %4182 = vrot.lane.b32.xlu0 %v3961, 112
    %v4183 = vpop.permute.xlu0 %4182
    %v4185 = vsel %vm354, %v4181, 0
    %v4188 = vsel %vm354, %v4183, 0
    %4190 = vmatprep.subr.bf16.mxu0 0
    %4191 = vmatpush1.bf16.xpose.msra.mxu0 0
    %4192 = vmatprep.subr.bf16.mxu0 0
    %4193 = vmatpush1.bf16.xpose.msra.mxu0 0
    %4194 = vmatprep.subr.bf16.mxu0 0
    %4195 = vmatpush1.bf16.xpose.msra.mxu0 0
    %4196 = vmatprep.subr.bf16.mxu0 0
    %4197 = vmatpush1.bf16.xpose.msra.mxu0 0
    %4198 = vmatprep.subr.bf16.mxu0 0
    %4199 = vmatpush1.bf16.xpose.msra.mxu0 0
    %4200 = vmatprep.subr.bf16.mxu0 0
    %4201 = vmatpush1.bf16.xpose.msra.mxu0 0
    %4202 = vmatprep.subr.bf16.mxu0 0
    %4203 = vmatpush1.bf16.xpose.msra.mxu0 0
    %4204 = vmatprep.subr.bf16.mxu0 0
    %4205 = vmatpush1.bf16.xpose.msra.mxu0 %v4188
    %4206 = vmatprep.subr.bf16.mxu0 0
    %4207 = vmatpush2.bf16.xpose.msra.mxu0 0
    %4208 = vmatprep.subr.bf16.mxu0 0
    %4209 = vmatpush2.bf16.xpose.msra.mxu0 0
    %4210 = vmatprep.subr.bf16.mxu0 0
    %4211 = vmatpush2.bf16.xpose.msra.mxu0 0
    %4212 = vmatprep.subr.bf16.mxu0 0
    %4213 = vmatpush2.bf16.xpose.msra.mxu0 0
    %4214 = vmatprep.subr.bf16.mxu0 0
    %4215 = vmatpush2.bf16.xpose.msra.mxu0 0
    %4216 = vmatprep.subr.bf16.mxu0 0
    %4217 = vmatpush2.bf16.xpose.msra.mxu0 0
    %4218 = vmatprep.subr.bf16.mxu0 0
    %4219 = vmatpush2.bf16.xpose.msra.mxu0 0
    %4220 = vmatprep.subr.bf16.mxu0 0
    %4221 = vmatpush2.bf16.xpose.msra.mxu0 0
    %4222 = vmatprep.mubr.bf16.mxu0 0
    %4223 = vmatmul.mubr.bf16.gmra.mxu0 %v4185
    %v4224 = vpop.f32.mrf.mxu0
    %v4225 = vadd.f32 %v276, %v4224
    %v4226 = vpop.f32.mrf.mxu0
    %v4227 = vpop.f32.mrf.mxu0
    %v4228 = vpop.f32.mrf.mxu0
    %4229 = vdwg.mxu0
    %v4230 = vsel %vm354, %v4225, -inf
    %4231 = vmax.xlane.f32.xlu0 %v4230
    %v4232 = vpop.xlane.xlu0 %4231
    %v4233 = vsub.f32 %v4225, %v4232
    %v4234 = vmul.f32 %v4233, 1.442695
    %v4235 = vpow.pop %v4234
    %v4236 = vsel %vm354, %v4235, 0.0
    %4237 = vadd.xlane.f32.xlu0 %v4236
    %v4238 = vpop.xlane.xlu0 %4237
    %v4239 = vrcp.pop %v4238
    %v4240 = vmul.f32 %v4235, %v4239
    %v4241 = vpack.c.bf16 %v4240, %v4240
    %4242 = vrot.lane.b32.xlu0 %v3961, 80
    %v4243 = vpop.permute.xlu0 %4242
    %v4245 = vsel %vm354, %v4241, 0
    %v4248 = vsel %vm418, %v4243, 0
    %4250 = vmatprep.subr.bf16.mxu0 0
    %4251 = vmatpush1.bf16.msra.mxu0 0
    %4252 = vmatprep.subr.bf16.mxu0 0
    %4253 = vmatpush1.bf16.msra.mxu0 0
    %4254 = vmatprep.subr.bf16.mxu0 0
    %4255 = vmatpush1.bf16.msra.mxu0 0
    %4256 = vmatprep.subr.bf16.mxu0 0
    %4257 = vmatpush1.bf16.msra.mxu0 0
    %4258 = vmatprep.subr.bf16.mxu0 0
    %4259 = vmatpush1.bf16.msra.mxu0 0
    %4260 = vmatprep.subr.bf16.mxu0 0
    %4261 = vmatpush1.bf16.msra.mxu0 0
    %4262 = vmatprep.subr.bf16.mxu0 0
    %4263 = vmatpush1.bf16.msra.mxu0 0
    %4264 = vmatprep.subr.bf16.mxu0 0
    %4265 = vmatpush1.bf16.msra.mxu0 %v4248
    %4266 = vmatprep.subr.bf16.mxu0 0
    %4267 = vmatpush2.bf16.msra.mxu0 0
    %4268 = vmatprep.subr.bf16.mxu0 0
    %4269 = vmatpush2.bf16.msra.mxu0 0
    %4270 = vmatprep.subr.bf16.mxu0 0
    %4271 = vmatpush2.bf16.msra.mxu0 0
    %4272 = vmatprep.subr.bf16.mxu0 0
    %4273 = vmatpush2.bf16.msra.mxu0 0
    %4274 = vmatprep.subr.bf16.mxu0 0
    %4275 = vmatpush2.bf16.msra.mxu0 0
    %4276 = vmatprep.subr.bf16.mxu0 0
    %4277 = vmatpush2.bf16.msra.mxu0 0
    %4278 = vmatprep.subr.bf16.mxu0 0
    %4279 = vmatpush2.bf16.msra.mxu0 0
    %4280 = vmatprep.subr.bf16.mxu0 0
    %4281 = vmatpush2.bf16.msra.mxu0 0
    %4282 = vmatprep.mubr.bf16.mxu0 0
    %4283 = vmatmul.mubr.bf16.gmra.mxu0 %v4245
    %v4284 = vpop.f32.mrf.mxu0
    %v4285 = vadd.f32 0.0, %v4284
    %v4286 = vpop.f32.mrf.mxu0
    %v4287 = vpop.f32.mrf.mxu0
    %v4288 = vpop.f32.mrf.mxu0
    %4289 = vdwg.mxu0
    %4290 = vrot.lane.b32.xlu0 %v3960, 104
    %v4291 = vpop.permute.xlu0 %4290
    %4292 = vrot.lane.b32.xlu0 %v3961, 104
    %v4293 = vpop.permute.xlu0 %4292
    %v4295 = vsel %vm354, %v4291, 0
    %v4298 = vsel %vm354, %v4293, 0
    %4300 = vmatprep.subr.bf16.mxu0 0
    %4301 = vmatpush1.bf16.xpose.msra.mxu0 0
    %4302 = vmatprep.subr.bf16.mxu0 0
    %4303 = vmatpush1.bf16.xpose.msra.mxu0 0
    %4304 = vmatprep.subr.bf16.mxu0 0
    %4305 = vmatpush1.bf16.xpose.msra.mxu0 0
    %4306 = vmatprep.subr.bf16.mxu0 0
    %4307 = vmatpush1.bf16.xpose.msra.mxu0 0
    %4308 = vmatprep.subr.bf16.mxu0 0
    %4309 = vmatpush1.bf16.xpose.msra.mxu0 0
    %4310 = vmatprep.subr.bf16.mxu0 0
    %4311 = vmatpush1.bf16.xpose.msra.mxu0 0
    %4312 = vmatprep.subr.bf16.mxu0 0
    %4313 = vmatpush1.bf16.xpose.msra.mxu0 0
    %4314 = vmatprep.subr.bf16.mxu0 0
    %4315 = vmatpush1.bf16.xpose.msra.mxu0 %v4298
    %4316 = vmatprep.subr.bf16.mxu0 0
    %4317 = vmatpush2.bf16.xpose.msra.mxu0 0
    %4318 = vmatprep.subr.bf16.mxu0 0
    %4319 = vmatpush2.bf16.xpose.msra.mxu0 0
    %4320 = vmatprep.subr.bf16.mxu0 0
    %4321 = vmatpush2.bf16.xpose.msra.mxu0 0
    %4322 = vmatprep.subr.bf16.mxu0 0
    %4323 = vmatpush2.bf16.xpose.msra.mxu0 0
    %4324 = vmatprep.subr.bf16.mxu0 0
    %4325 = vmatpush2.bf16.xpose.msra.mxu0 0
    %4326 = vmatprep.subr.bf16.mxu0 0
    %4327 = vmatpush2.bf16.xpose.msra.mxu0 0
    %4328 = vmatprep.subr.bf16.mxu0 0
    %4329 = vmatpush2.bf16.xpose.msra.mxu0 0
    %4330 = vmatprep.subr.bf16.mxu0 0
    %4331 = vmatpush2.bf16.xpose.msra.mxu0 0
    %4332 = vmatprep.mubr.bf16.mxu0 0
    %4333 = vmatmul.mubr.bf16.gmra.mxu0 %v4295
    %v4334 = vpop.f32.mrf.mxu0
    %v4335 = vadd.f32 %v276, %v4334
    %v4336 = vpop.f32.mrf.mxu0
    %v4337 = vpop.f32.mrf.mxu0
    %v4338 = vpop.f32.mrf.mxu0
    %4339 = vdwg.mxu0
    %v4340 = vsel %vm354, %v4335, -inf
    %4341 = vmax.xlane.f32.xlu0 %v4340
    %v4342 = vpop.xlane.xlu0 %4341
    %v4343 = vsub.f32 %v4335, %v4342
    %v4344 = vmul.f32 %v4343, 1.442695
    %v4345 = vpow.pop %v4344
    %v4346 = vsel %vm354, %v4345, 0.0
    %4347 = vadd.xlane.f32.xlu0 %v4346
    %v4348 = vpop.xlane.xlu0 %4347
    %v4349 = vrcp.pop %v4348
    %v4350 = vmul.f32 %v4345, %v4349
    %v4351 = vpack.c.bf16 %v4350, %v4350
    %4352 = vrot.lane.b32.xlu0 %v3961, 72
    %v4353 = vpop.permute.xlu0 %4352
    %v4355 = vsel %vm354, %v4351, 0
    %v4358 = vsel %vm418, %v4353, 0
    %4360 = vmatprep.subr.bf16.mxu0 0
    %4361 = vmatpush1.bf16.msra.mxu0 0
    %4362 = vmatprep.subr.bf16.mxu0 0
    %4363 = vmatpush1.bf16.msra.mxu0 0
    %4364 = vmatprep.subr.bf16.mxu0 0
    %4365 = vmatpush1.bf16.msra.mxu0 0
    %4366 = vmatprep.subr.bf16.mxu0 0
    %4367 = vmatpush1.bf16.msra.mxu0 0
    %4368 = vmatprep.subr.bf16.mxu0 0
    %4369 = vmatpush1.bf16.msra.mxu0 0
    %4370 = vmatprep.subr.bf16.mxu0 0
    %4371 = vmatpush1.bf16.msra.mxu0 0
    %4372 = vmatprep.subr.bf16.mxu0 0
    %4373 = vmatpush1.bf16.msra.mxu0 0
    %4374 = vmatprep.subr.bf16.mxu0 0
    %4375 = vmatpush1.bf16.msra.mxu0 %v4358
    %4376 = vmatprep.subr.bf16.mxu0 0
    %4377 = vmatpush2.bf16.msra.mxu0 0
    %4378 = vmatprep.subr.bf16.mxu0 0
    %4379 = vmatpush2.bf16.msra.mxu0 0
    %4380 = vmatprep.subr.bf16.mxu0 0
    %4381 = vmatpush2.bf16.msra.mxu0 0
    %4382 = vmatprep.subr.bf16.mxu0 0
    %4383 = vmatpush2.bf16.msra.mxu0 0
    %4384 = vmatprep.subr.bf16.mxu0 0
    %4385 = vmatpush2.bf16.msra.mxu0 0
    %4386 = vmatprep.subr.bf16.mxu0 0
    %4387 = vmatpush2.bf16.msra.mxu0 0
    %4388 = vmatprep.subr.bf16.mxu0 0
    %4389 = vmatpush2.bf16.msra.mxu0 0
    %4390 = vmatprep.subr.bf16.mxu0 0
    %4391 = vmatpush2.bf16.msra.mxu0 0
    %4392 = vmatprep.mubr.bf16.mxu0 0
    %4393 = vmatmul.mubr.bf16.gmra.mxu0 %v4355
    %v4394 = vpop.f32.mrf.mxu0
    %v4395 = vadd.f32 0.0, %v4394
    %v4396 = vpop.f32.mrf.mxu0
    %v4397 = vpop.f32.mrf.mxu0
    %v4398 = vpop.f32.mrf.mxu0
    %4399 = vdwg.mxu0
    %4401 = vrot.lane.b32.xlu0 %v4175, 8
    %v4402 = vpop.permute.xlu0 %4401
    %4405 = vrot.lane.b32.xlu0 %v4285, 16
    %v4406 = vpop.permute.xlu0 %4405
    %4409 = vrot.lane.b32.xlu0 %v4395, 24
    %v4410 = vpop.permute.xlu0 %4409
    %v4412 = vsel %vm354, %v4064, %v4402
    %v4413 = vsel %vm805, %v4412, %v4406
    %v4414 = vsel %vm807, %v4413, %v4410
    %v4415 = vpack.c.bf16 %v3891, %v3891
    %v4416 = vpack.c.bf16 %v3957, %v3957
    %v4418 = vsel %vm354, %v4415, 0
    %v4421 = vsel %vm354, %v4416, 0
    %4423 = vmatprep.subr.bf16.mxu0 0
    %4424 = vmatpush1.bf16.xpose.msra.mxu0 0
    %4425 = vmatprep.subr.bf16.mxu0 0
    %4426 = vmatpush1.bf16.xpose.msra.mxu0 0
    %4427 = vmatprep.subr.bf16.mxu0 0
    %4428 = vmatpush1.bf16.xpose.msra.mxu0 0
    %4429 = vmatprep.subr.bf16.mxu0 0
    %4430 = vmatpush1.bf16.xpose.msra.mxu0 0
    %4431 = vmatprep.subr.bf16.mxu0 0
    %4432 = vmatpush1.bf16.xpose.msra.mxu0 0
    %4433 = vmatprep.subr.bf16.mxu0 0
    %4434 = vmatpush1.bf16.xpose.msra.mxu0 0
    %4435 = vmatprep.subr.bf16.mxu0 0
    %4436 = vmatpush1.bf16.xpose.msra.mxu0 0
    %4437 = vmatprep.subr.bf16.mxu0 0
    %4438 = vmatpush1.bf16.xpose.msra.mxu0 %v4421
    %4439 = vmatprep.subr.bf16.mxu0 0
    %4440 = vmatpush2.bf16.xpose.msra.mxu0 0
    %4441 = vmatprep.subr.bf16.mxu0 0
    %4442 = vmatpush2.bf16.xpose.msra.mxu0 0
    %4443 = vmatprep.subr.bf16.mxu0 0
    %4444 = vmatpush2.bf16.xpose.msra.mxu0 0
    %4445 = vmatprep.subr.bf16.mxu0 0
    %4446 = vmatpush2.bf16.xpose.msra.mxu0 0
    %4447 = vmatprep.subr.bf16.mxu0 0
    %4448 = vmatpush2.bf16.xpose.msra.mxu0 0
    %4449 = vmatprep.subr.bf16.mxu0 0
    %4450 = vmatpush2.bf16.xpose.msra.mxu0 0
    %4451 = vmatprep.subr.bf16.mxu0 0
    %4452 = vmatpush2.bf16.xpose.msra.mxu0 0
    %4453 = vmatprep.subr.bf16.mxu0 0
    %4454 = vmatpush2.bf16.xpose.msra.mxu0 0
    %4455 = vmatprep.mubr.bf16.mxu0 0
    %4456 = vmatmul.mubr.bf16.gmra.mxu0 %v4418
    %v4457 = vpop.f32.mrf.mxu0
    %v4458 = vadd.f32 %v280, %v4457
    %v4459 = vpop.f32.mrf.mxu0
    %v4460 = vpop.f32.mrf.mxu0
    %v4461 = vpop.f32.mrf.mxu0
    %4462 = vdwg.mxu0
    %v4463 = vsel %vm354, %v4458, -inf
    %4464 = vmax.xlane.f32.xlu0 %v4463
    %v4465 = vpop.xlane.xlu0 %4464
    %v4466 = vsub.f32 %v4458, %v4465
    %v4467 = vmul.f32 %v4466, 1.442695
    %v4468 = vpow.pop %v4467
    %v4469 = vsel %vm354, %v4468, 0.0
    %4470 = vadd.xlane.f32.xlu0 %v4469
    %v4471 = vpop.xlane.xlu0 %4470
    %v4472 = vrcp.pop %v4471
    %v4473 = vmul.f32 %v4468, %v4472
    %v4474 = vpack.c.bf16 %v4473, %v4473
    %4476 = vrot.lane.b32.xlu0 %v4416, 96
    %v4477 = vpop.permute.xlu0 %4476
    %v4479 = vsel %vm354, %v4474, 0
    %v4482 = vsel %vm418, %v4477, 0
    %4484 = vmatprep.subr.bf16.mxu0 0
    %4485 = vmatpush1.bf16.msra.mxu0 0
    %4486 = vmatprep.subr.bf16.mxu0 0
    %4487 = vmatpush1.bf16.msra.mxu0 0
    %4488 = vmatprep.subr.bf16.mxu0 0
    %4489 = vmatpush1.bf16.msra.mxu0 0
    %4490 = vmatprep.subr.bf16.mxu0 0
    %4491 = vmatpush1.bf16.msra.mxu0 0
    %4492 = vmatprep.subr.bf16.mxu0 0
    %4493 = vmatpush1.bf16.msra.mxu0 0
    %4494 = vmatprep.subr.bf16.mxu0 0
    %4495 = vmatpush1.bf16.msra.mxu0 0
    %4496 = vmatprep.subr.bf16.mxu0 0
    %4497 = vmatpush1.bf16.msra.mxu0 0
    %4498 = vmatprep.subr.bf16.mxu0 0
    %4499 = vmatpush1.bf16.msra.mxu0 %v4482
    %4500 = vmatprep.subr.bf16.mxu0 0
    %4501 = vmatpush2.bf16.msra.mxu0 0
    %4502 = vmatprep.subr.bf16.mxu0 0
    %4503 = vmatpush2.bf16.msra.mxu0 0
    %4504 = vmatprep.subr.bf16.mxu0 0
    %4505 = vmatpush2.bf16.msra.mxu0 0
    %4506 = vmatprep.subr.bf16.mxu0 0
    %4507 = vmatpush2.bf16.msra.mxu0 0
    %4508 = vmatprep.subr.bf16.mxu0 0
    %4509 = vmatpush2.bf16.msra.mxu0 0
    %4510 = vmatprep.subr.bf16.mxu0 0
    %4511 = vmatpush2.bf16.msra.mxu0 0
    %4512 = vmatprep.subr.bf16.mxu0 0
    %4513 = vmatpush2.bf16.msra.mxu0 0
    %4514 = vmatprep.subr.bf16.mxu0 0
    %4515 = vmatpush2.bf16.msra.mxu0 0
    %4516 = vmatprep.mubr.bf16.mxu0 0
    %4517 = vmatmul.mubr.bf16.gmra.mxu0 %v4479
    %v4518 = vpop.f32.mrf.mxu0
    %v4519 = vadd.f32 0.0, %v4518
    %v4520 = vpop.f32.mrf.mxu0
    %v4521 = vpop.f32.mrf.mxu0
    %v4522 = vpop.f32.mrf.mxu0
    %4523 = vdwg.mxu0
    %4525 = vrot.lane.b32.xlu0 %v4415, 120
    %v4526 = vpop.permute.xlu0 %4525
    %4527 = vrot.lane.b32.xlu0 %v4416, 120
    %v4528 = vpop.permute.xlu0 %4527
    %v4530 = vsel %vm354, %v4526, 0
    %v4533 = vsel %vm354, %v4528, 0
    %4535 = vmatprep.subr.bf16.mxu0 0
    %4536 = vmatpush1.bf16.xpose.msra.mxu0 0
    %4537 = vmatprep.subr.bf16.mxu0 0
    %4538 = vmatpush1.bf16.xpose.msra.mxu0 0
    %4539 = vmatprep.subr.bf16.mxu0 0
    %4540 = vmatpush1.bf16.xpose.msra.mxu0 0
    %4541 = vmatprep.subr.bf16.mxu0 0
    %4542 = vmatpush1.bf16.xpose.msra.mxu0 0
    %4543 = vmatprep.subr.bf16.mxu0 0
    %4544 = vmatpush1.bf16.xpose.msra.mxu0 0
    %4545 = vmatprep.subr.bf16.mxu0 0
    %4546 = vmatpush1.bf16.xpose.msra.mxu0 0
    %4547 = vmatprep.subr.bf16.mxu0 0
    %4548 = vmatpush1.bf16.xpose.msra.mxu0 0
    %4549 = vmatprep.subr.bf16.mxu0 0
    %4550 = vmatpush1.bf16.xpose.msra.mxu0 %v4533
    %4551 = vmatprep.subr.bf16.mxu0 0
    %4552 = vmatpush2.bf16.xpose.msra.mxu0 0
    %4553 = vmatprep.subr.bf16.mxu0 0
    %4554 = vmatpush2.bf16.xpose.msra.mxu0 0
    %4555 = vmatprep.subr.bf16.mxu0 0
    %4556 = vmatpush2.bf16.xpose.msra.mxu0 0
    %4557 = vmatprep.subr.bf16.mxu0 0
    %4558 = vmatpush2.bf16.xpose.msra.mxu0 0
    %4559 = vmatprep.subr.bf16.mxu0 0
    %4560 = vmatpush2.bf16.xpose.msra.mxu0 0
    %4561 = vmatprep.subr.bf16.mxu0 0
    %4562 = vmatpush2.bf16.xpose.msra.mxu0 0
    %4563 = vmatprep.subr.bf16.mxu0 0
    %4564 = vmatpush2.bf16.xpose.msra.mxu0 0
    %4565 = vmatprep.subr.bf16.mxu0 0
    %4566 = vmatpush2.bf16.xpose.msra.mxu0 0
    %4567 = vmatprep.mubr.bf16.mxu0 0
    %4568 = vmatmul.mubr.bf16.gmra.mxu0 %v4530
    %v4569 = vpop.f32.mrf.mxu0
    %v4570 = vadd.f32 %v280, %v4569
    %v4571 = vpop.f32.mrf.mxu0
    %v4572 = vpop.f32.mrf.mxu0
    %v4573 = vpop.f32.mrf.mxu0
    %4574 = vdwg.mxu0
    %v4575 = vsel %vm354, %v4570, -inf
    %4576 = vmax.xlane.f32.xlu0 %v4575
    %v4577 = vpop.xlane.xlu0 %4576
    %v4578 = vsub.f32 %v4570, %v4577
    %v4579 = vmul.f32 %v4578, 1.442695
    %v4580 = vpow.pop %v4579
    %v4581 = vsel %vm354, %v4580, 0.0
    %4582 = vadd.xlane.f32.xlu0 %v4581
    %v4583 = vpop.xlane.xlu0 %4582
    %v4584 = vrcp.pop %v4583
    %v4585 = vmul.f32 %v4580, %v4584
    %v4586 = vpack.c.bf16 %v4585, %v4585
    %4587 = vrot.lane.b32.xlu0 %v4416, 88
    %v4588 = vpop.permute.xlu0 %4587
    %v4590 = vsel %vm354, %v4586, 0
    %v4593 = vsel %vm418, %v4588, 0
    %4595 = vmatprep.subr.bf16.mxu0 0
    %4596 = vmatpush1.bf16.msra.mxu0 0
    %4597 = vmatprep.subr.bf16.mxu0 0
    %4598 = vmatpush1.bf16.msra.mxu0 0
    %4599 = vmatprep.subr.bf16.mxu0 0
    %4600 = vmatpush1.bf16.msra.mxu0 0
    %4601 = vmatprep.subr.bf16.mxu0 0
    %4602 = vmatpush1.bf16.msra.mxu0 0
    %4603 = vmatprep.subr.bf16.mxu0 0
    %4604 = vmatpush1.bf16.msra.mxu0 0
    %4605 = vmatprep.subr.bf16.mxu0 0
    %4606 = vmatpush1.bf16.msra.mxu0 0
    %4607 = vmatprep.subr.bf16.mxu0 0
    %4608 = vmatpush1.bf16.msra.mxu0 0
    %4609 = vmatprep.subr.bf16.mxu0 0
    %4610 = vmatpush1.bf16.msra.mxu0 %v4593
    %4611 = vmatprep.subr.bf16.mxu0 0
    %4612 = vmatpush2.bf16.msra.mxu0 0
    %4613 = vmatprep.subr.bf16.mxu0 0
    %4614 = vmatpush2.bf16.msra.mxu0 0
    %4615 = vmatprep.subr.bf16.mxu0 0
    %4616 = vmatpush2.bf16.msra.mxu0 0
    %4617 = vmatprep.subr.bf16.mxu0 0
    %4618 = vmatpush2.bf16.msra.mxu0 0
    %4619 = vmatprep.subr.bf16.mxu0 0
    %4620 = vmatpush2.bf16.msra.mxu0 0
    %4621 = vmatprep.subr.bf16.mxu0 0
    %4622 = vmatpush2.bf16.msra.mxu0 0
    %4623 = vmatprep.subr.bf16.mxu0 0
    %4624 = vmatpush2.bf16.msra.mxu0 0
    %4625 = vmatprep.subr.bf16.mxu0 0
    %4626 = vmatpush2.bf16.msra.mxu0 0
    %4627 = vmatprep.mubr.bf16.mxu0 0
    %4628 = vmatmul.mubr.bf16.gmra.mxu0 %v4590
    %v4629 = vpop.f32.mrf.mxu0
    %v4630 = vadd.f32 0.0, %v4629
    %v4631 = vpop.f32.mrf.mxu0
    %v4632 = vpop.f32.mrf.mxu0
    %v4633 = vpop.f32.mrf.mxu0
    %4634 = vdwg.mxu0
    %4635 = vrot.lane.b32.xlu0 %v4415, 112
    %v4636 = vpop.permute.xlu0 %4635
    %4637 = vrot.lane.b32.xlu0 %v4416, 112
    %v4638 = vpop.permute.xlu0 %4637
    %v4640 = vsel %vm354, %v4636, 0
    %v4643 = vsel %vm354, %v4638, 0
    %4645 = vmatprep.subr.bf16.mxu0 0
    %4646 = vmatpush1.bf16.xpose.msra.mxu0 0
    %4647 = vmatprep.subr.bf16.mxu0 0
    %4648 = vmatpush1.bf16.xpose.msra.mxu0 0
    %4649 = vmatprep.subr.bf16.mxu0 0
    %4650 = vmatpush1.bf16.xpose.msra.mxu0 0
    %4651 = vmatprep.subr.bf16.mxu0 0
    %4652 = vmatpush1.bf16.xpose.msra.mxu0 0
    %4653 = vmatprep.subr.bf16.mxu0 0
    %4654 = vmatpush1.bf16.xpose.msra.mxu0 0
    %4655 = vmatprep.subr.bf16.mxu0 0
    %4656 = vmatpush1.bf16.xpose.msra.mxu0 0
    %4657 = vmatprep.subr.bf16.mxu0 0
    %4658 = vmatpush1.bf16.xpose.msra.mxu0 0
    %4659 = vmatprep.subr.bf16.mxu0 0
    %4660 = vmatpush1.bf16.xpose.msra.mxu0 %v4643
    %4661 = vmatprep.subr.bf16.mxu0 0
    %4662 = vmatpush2.bf16.xpose.msra.mxu0 0
    %4663 = vmatprep.subr.bf16.mxu0 0
    %4664 = vmatpush2.bf16.xpose.msra.mxu0 0
    %4665 = vmatprep.subr.bf16.mxu0 0
    %4666 = vmatpush2.bf16.xpose.msra.mxu0 0
    %4667 = vmatprep.subr.bf16.mxu0 0
    %4668 = vmatpush2.bf16.xpose.msra.mxu0 0
    %4669 = vmatprep.subr.bf16.mxu0 0
    %4670 = vmatpush2.bf16.xpose.msra.mxu0 0
    %4671 = vmatprep.subr.bf16.mxu0 0
    %4672 = vmatpush2.bf16.xpose.msra.mxu0 0
    %4673 = vmatprep.subr.bf16.mxu0 0
    %4674 = vmatpush2.bf16.xpose.msra.mxu0 0
    %4675 = vmatprep.subr.bf16.mxu0 0
    %4676 = vmatpush2.bf16.xpose.msra.mxu0 0
    %4677 = vmatprep.mubr.bf16.mxu0 0
    %4678 = vmatmul.mubr.bf16.gmra.mxu0 %v4640
    %v4679 = vpop.f32.mrf.mxu0
    %v4680 = vadd.f32 %v280, %v4679
    %v4681 = vpop.f32.mrf.mxu0
    %v4682 = vpop.f32.mrf.mxu0
    %v4683 = vpop.f32.mrf.mxu0
    %4684 = vdwg.mxu0
    %v4685 = vsel %vm354, %v4680, -inf
    %4686 = vmax.xlane.f32.xlu0 %v4685
    %v4687 = vpop.xlane.xlu0 %4686
    %v4688 = vsub.f32 %v4680, %v4687
    %v4689 = vmul.f32 %v4688, 1.442695
    %v4690 = vpow.pop %v4689
    %v4691 = vsel %vm354, %v4690, 0.0
    %4692 = vadd.xlane.f32.xlu0 %v4691
    %v4693 = vpop.xlane.xlu0 %4692
    %v4694 = vrcp.pop %v4693
    %v4695 = vmul.f32 %v4690, %v4694
    %v4696 = vpack.c.bf16 %v4695, %v4695
    %4697 = vrot.lane.b32.xlu0 %v4416, 80
    %v4698 = vpop.permute.xlu0 %4697
    %v4700 = vsel %vm354, %v4696, 0
    %v4703 = vsel %vm418, %v4698, 0
    %4705 = vmatprep.subr.bf16.mxu0 0
    %4706 = vmatpush1.bf16.msra.mxu0 0
    %4707 = vmatprep.subr.bf16.mxu0 0
    %4708 = vmatpush1.bf16.msra.mxu0 0
    %4709 = vmatprep.subr.bf16.mxu0 0
    %4710 = vmatpush1.bf16.msra.mxu0 0
    %4711 = vmatprep.subr.bf16.mxu0 0
    %4712 = vmatpush1.bf16.msra.mxu0 0
    %4713 = vmatprep.subr.bf16.mxu0 0
    %4714 = vmatpush1.bf16.msra.mxu0 0
    %4715 = vmatprep.subr.bf16.mxu0 0
    %4716 = vmatpush1.bf16.msra.mxu0 0
    %4717 = vmatprep.subr.bf16.mxu0 0
    %4718 = vmatpush1.bf16.msra.mxu0 0
    %4719 = vmatprep.subr.bf16.mxu0 0
    %4720 = vmatpush1.bf16.msra.mxu0 %v4703
    %4721 = vmatprep.subr.bf16.mxu0 0
    %4722 = vmatpush2.bf16.msra.mxu0 0
    %4723 = vmatprep.subr.bf16.mxu0 0
    %4724 = vmatpush2.bf16.msra.mxu0 0
    %4725 = vmatprep.subr.bf16.mxu0 0
    %4726 = vmatpush2.bf16.msra.mxu0 0
    %4727 = vmatprep.subr.bf16.mxu0 0
    %4728 = vmatpush2.bf16.msra.mxu0 0
    %4729 = vmatprep.subr.bf16.mxu0 0
    %4730 = vmatpush2.bf16.msra.mxu0 0
    %4731 = vmatprep.subr.bf16.mxu0 0
    %4732 = vmatpush2.bf16.msra.mxu0 0
    %4733 = vmatprep.subr.bf16.mxu0 0
    %4734 = vmatpush2.bf16.msra.mxu0 0
    %4735 = vmatprep.subr.bf16.mxu0 0
    %4736 = vmatpush2.bf16.msra.mxu0 0
    %4737 = vmatprep.mubr.bf16.mxu0 0
    %4738 = vmatmul.mubr.bf16.gmra.mxu0 %v4700
    %v4739 = vpop.f32.mrf.mxu0
    %v4740 = vadd.f32 0.0, %v4739
    %v4741 = vpop.f32.mrf.mxu0
    %v4742 = vpop.f32.mrf.mxu0
    %v4743 = vpop.f32.mrf.mxu0
    %4744 = vdwg.mxu0
    %4745 = vrot.lane.b32.xlu0 %v4415, 104
    %v4746 = vpop.permute.xlu0 %4745
    %4747 = vrot.lane.b32.xlu0 %v4416, 104
    %v4748 = vpop.permute.xlu0 %4747
    %v4750 = vsel %vm354, %v4746, 0
    %v4753 = vsel %vm354, %v4748, 0
    %4755 = vmatprep.subr.bf16.mxu0 0
    %4756 = vmatpush1.bf16.xpose.msra.mxu0 0
    %4757 = vmatprep.subr.bf16.mxu0 0
    %4758 = vmatpush1.bf16.xpose.msra.mxu0 0
    %4759 = vmatprep.subr.bf16.mxu0 0
    %4760 = vmatpush1.bf16.xpose.msra.mxu0 0
    %4761 = vmatprep.subr.bf16.mxu0 0
    %4762 = vmatpush1.bf16.xpose.msra.mxu0 0
    %4763 = vmatprep.subr.bf16.mxu0 0
    %4764 = vmatpush1.bf16.xpose.msra.mxu0 0
    %4765 = vmatprep.subr.bf16.mxu0 0
    %4766 = vmatpush1.bf16.xpose.msra.mxu0 0
    %4767 = vmatprep.subr.bf16.mxu0 0
    %4768 = vmatpush1.bf16.xpose.msra.mxu0 0
    %4769 = vmatprep.subr.bf16.mxu0 0
    %4770 = vmatpush1.bf16.xpose.msra.mxu0 %v4753
    %4771 = vmatprep.subr.bf16.mxu0 0
    %4772 = vmatpush2.bf16.xpose.msra.mxu0 0
    %4773 = vmatprep.subr.bf16.mxu0 0
    %4774 = vmatpush2.bf16.xpose.msra.mxu0 0
    %4775 = vmatprep.subr.bf16.mxu0 0
    %4776 = vmatpush2.bf16.xpose.msra.mxu0 0
    %4777 = vmatprep.subr.bf16.mxu0 0
    %4778 = vmatpush2.bf16.xpose.msra.mxu0 0
    %4779 = vmatprep.subr.bf16.mxu0 0
    %4780 = vmatpush2.bf16.xpose.msra.mxu0 0
    %4781 = vmatprep.subr.bf16.mxu0 0
    %4782 = vmatpush2.bf16.xpose.msra.mxu0 0
    %4783 = vmatprep.subr.bf16.mxu0 0
    %4784 = vmatpush2.bf16.xpose.msra.mxu0 0
    %4785 = vmatprep.subr.bf16.mxu0 0
    %4786 = vmatpush2.bf16.xpose.msra.mxu0 0
    %4787 = vmatprep.mubr.bf16.mxu0 0
    %4788 = vmatmul.mubr.bf16.gmra.mxu0 %v4750
    %v4789 = vpop.f32.mrf.mxu0
    %v4790 = vadd.f32 %v280, %v4789
    %v4791 = vpop.f32.mrf.mxu0
    %v4792 = vpop.f32.mrf.mxu0
    %v4793 = vpop.f32.mrf.mxu0
    %4794 = vdwg.mxu0
    %v4795 = vsel %vm354, %v4790, -inf
    %4796 = vmax.xlane.f32.xlu0 %v4795
    %v4797 = vpop.xlane.xlu0 %4796
    %v4798 = vsub.f32 %v4790, %v4797
    %v4799 = vmul.f32 %v4798, 1.442695
    %v4800 = vpow.pop %v4799
    %v4801 = vsel %vm354, %v4800, 0.0
    %4802 = vadd.xlane.f32.xlu0 %v4801
    %v4803 = vpop.xlane.xlu0 %4802
    %v4804 = vrcp.pop %v4803
    %v4805 = vmul.f32 %v4800, %v4804
    %v4806 = vpack.c.bf16 %v4805, %v4805
    %4807 = vrot.lane.b32.xlu0 %v4416, 72
    %v4808 = vpop.permute.xlu0 %4807
    %v4810 = vsel %vm354, %v4806, 0
    %v4813 = vsel %vm418, %v4808, 0
    %4815 = vmatprep.subr.bf16.mxu0 0
    %4816 = vmatpush1.bf16.msra.mxu0 0
    %4817 = vmatprep.subr.bf16.mxu0 0
    %4818 = vmatpush1.bf16.msra.mxu0 0
    %4819 = vmatprep.subr.bf16.mxu0 0
    %4820 = vmatpush1.bf16.msra.mxu0 0
    %4821 = vmatprep.subr.bf16.mxu0 0
    %4822 = vmatpush1.bf16.msra.mxu0 0
    %4823 = vmatprep.subr.bf16.mxu0 0
    %4824 = vmatpush1.bf16.msra.mxu0 0
    %4825 = vmatprep.subr.bf16.mxu0 0
    %4826 = vmatpush1.bf16.msra.mxu0 0
    %4827 = vmatprep.subr.bf16.mxu0 0
    %4828 = vmatpush1.bf16.msra.mxu0 0
    %4829 = vmatprep.subr.bf16.mxu0 0
    %4830 = vmatpush1.bf16.msra.mxu0 %v4813
    %4831 = vmatprep.subr.bf16.mxu0 0
    %4832 = vmatpush2.bf16.msra.mxu0 0
    %4833 = vmatprep.subr.bf16.mxu0 0
    %4834 = vmatpush2.bf16.msra.mxu0 0
    %4835 = vmatprep.subr.bf16.mxu0 0
    %4836 = vmatpush2.bf16.msra.mxu0 0
    %4837 = vmatprep.subr.bf16.mxu0 0
    %4838 = vmatpush2.bf16.msra.mxu0 0
    %4839 = vmatprep.subr.bf16.mxu0 0
    %4840 = vmatpush2.bf16.msra.mxu0 0
    %4841 = vmatprep.subr.bf16.mxu0 0
    %4842 = vmatpush2.bf16.msra.mxu0 0
    %4843 = vmatprep.subr.bf16.mxu0 0
    %4844 = vmatpush2.bf16.msra.mxu0 0
    %4845 = vmatprep.subr.bf16.mxu0 0
    %4846 = vmatpush2.bf16.msra.mxu0 0
    %4847 = vmatprep.mubr.bf16.mxu0 0
    %4848 = vmatmul.mubr.bf16.gmra.mxu0 %v4810
    %v4849 = vpop.f32.mrf.mxu0
    %v4850 = vadd.f32 0.0, %v4849
    %v4851 = vpop.f32.mrf.mxu0
    %v4852 = vpop.f32.mrf.mxu0
    %v4853 = vpop.f32.mrf.mxu0
    %4854 = vdwg.mxu0
    %4856 = vrot.lane.b32.xlu0 %v4630, 8
    %v4857 = vpop.permute.xlu0 %4856
    %4860 = vrot.lane.b32.xlu0 %v4740, 16
    %v4861 = vpop.permute.xlu0 %4860
    %4864 = vrot.lane.b32.xlu0 %v4850, 24
    %v4865 = vpop.permute.xlu0 %4864
    %v4867 = vsel %vm354, %v4519, %v4857
    %v4868 = vsel %vm805, %v4867, %v4861
    %v4869 = vsel %vm807, %v4868, %v4865
    %v4870 = vpack.c.bf16 %v4869, %v4414
    %s4871 = scalar_lea.vmem [#allocation18], 16
    %v4872 = vld [vmem:[%s4871] sm:$0xf]
    %v4873 = vld [vmem:[%s4871 + $0x4] sm:$0xf]
    %v4874 = vld [vmem:[%s4871 + $0x8] sm:$0xf]
    %v4875 = vld [vmem:[%s4871 + $0xc] sm:$0xf]
    %s4876 = scalar_lea.vmem [#allocation19], 1
    %v4877 = vld [vmem:[%s4876] sm:$0x1]
    %v4879 = vlaneseq
    %v4880 = vshrl.u32 %v4879, 7
    %v4881 = vsub.s32 0, %v4880
    %v4882 = vrot.slane %v4877, %v4881
    %v4888 = vunpack.c.l.b16 %v4872
    %v4889 = vunpack.c.l.b16 %v4873
    %v4890 = vunpack.c.l.b16 %v4874
    %v4891 = vunpack.c.l.b16 %v4875
    %v4892 = vpack.c.b16 %v4889, %v4888
    %v4893 = vpack.c.b16 %v4891, %v4890
    %v4897 = vsel %vm305, %v4870, 0
    %4899 = vmatprep.subr.bf16.mxu0 0
    %4900 = vmatpush1.bf16.msra.mxu0 0
    %4901 = vmatprep.subr.bf16.mxu0 0
    %4902 = vmatpush1.bf16.msra.mxu0 0
    %4903 = vmatprep.subr.bf16.mxu0 0
    %4904 = vmatpush1.bf16.msra.mxu0 0
    %4905 = vmatprep.subr.bf16.mxu0 0
    %4906 = vmatpush1.bf16.msra.mxu0 0
    %4907 = vmatprep.subr.bf16.mxu0 0
    %4908 = vmatpush1.bf16.msra.mxu0 0
    %4909 = vmatprep.subr.bf16.mxu0 0
    %4910 = vmatpush1.bf16.msra.mxu0 0
    %4911 = vmatprep.subr.bf16.mxu0 0
    %4912 = vmatpush1.bf16.msra.mxu0 %v4893
    %4913 = vmatprep.subr.bf16.mxu0 0
    %4914 = vmatpush1.bf16.msra.mxu0 %v4892
    %4915 = vmatprep.subr.bf16.mxu0 0
    %4916 = vmatpush2.bf16.msra.mxu0 0
    %4917 = vmatprep.subr.bf16.mxu0 0
    %4918 = vmatpush2.bf16.msra.mxu0 0
    %4919 = vmatprep.subr.bf16.mxu0 0
    %4920 = vmatpush2.bf16.msra.mxu0 0
    %4921 = vmatprep.subr.bf16.mxu0 0
    %4922 = vmatpush2.bf16.msra.mxu0 0
    %4923 = vmatprep.subr.bf16.mxu0 0
    %4924 = vmatpush2.bf16.msra.mxu0 0
    %4925 = vmatprep.subr.bf16.mxu0 0
    %4926 = vmatpush2.bf16.msra.mxu0 0
    %4927 = vmatprep.subr.bf16.mxu0 0
    %4928 = vmatpush2.bf16.msra.mxu0 0
    %4929 = vmatprep.subr.bf16.mxu0 0
    %4930 = vmatpush2.bf16.msra.mxu0 0
    %4931 = vmatprep.mubr.bf16.mxu0 0
    %4932 = vmatmul.mubr.bf16.gmra.mxu0 %v4897
    %v4933 = vpop.f32.mrf.mxu0
    %v4934 = vadd.f32 %v4882, %v4933
    %v4935 = vpop.f32.mrf.mxu0
    %v4936 = vpop.f32.mrf.mxu0
    %v4937 = vadd.f32 %v4882, %v4936
    %v4938 = vpop.f32.mrf.mxu0
    %4939 = vdwg.mxu0
    %v4940 = vadd.f32 %v3822, %v4934
    %v4941 = vadd.f32 %v3823, %v4937
    %s4942 = scalar_lea.vmem %s17, 4
    %v4943 = vld [vmem:[%s4942] sm:$0x1]
    %s4944 = scalar_lea.vmem %s18, 4
    %v4945 = vld [vmem:[%s4944] sm:$0x1]
    %v4946 = vsel %vm305, %v4940, 0.0
    %4947 = vadd.xlane.f32.xlu0 %v4946
    %v4948 = vpop.xlane.xlu0 %4947
    %v4949 = vsel %vm305, %v4941, 0.0
    %4950 = vadd.xlane.f32.xlu0 %v4949
    %v4951 = vpop.xlane.xlu0 %4950
    %v4952 = vmul.f32 %v4948, %v1342
    %v4953 = vmul.f32 %v4951, %v1342
    %v4954 = vsub.f32 %v4940, %v4952
    %v4955 = vsub.f32 %v4941, %v4953
    %v4956 = vmul.f32 %v4954, %v4954
    %v4957 = vmul.f32 %v4955, %v4955
    %v4958 = vsel %vm305, %v4956, 0.0
    %4959 = vadd.xlane.f32.xlu0 %v4958
    %v4960 = vpop.xlane.xlu0 %4959
    %v4961 = vsel %vm305, %v4957, 0.0
    %4962 = vadd.xlane.f32.xlu0 %v4961
    %v4963 = vpop.xlane.xlu0 %4962
    %v4964 = vmul.f32 %v4960, %v1342
    %v4965 = vmul.f32 %v4963, %v1342
    %v4966 = vadd.f32 %v4964, 1e-05
    %v4967 = vadd.f32 %v4965, 1e-05
    %v4968 = vrsqrt.pop %v4966
    %v4969 = vrsqrt.pop %v4967
    %v4970 = vmul.f32 %v4954, %v4968
    %v4971 = vmul.f32 %v4955, %v4969
    %v4973 = vlaneseq
    %v4974 = vshrl.u32 %v4973, 7
    %v4975 = vsub.s32 0, %v4974
    %v4976 = vrot.slane %v4943, %v4975
    %v4978 = vmul.f32 %v4970, %v4976
    %v4979 = vmul.f32 %v4971, %v4976
    %v4981 = vlaneseq
    %v4982 = vshrl.u32 %v4981, 7
    %v4983 = vsub.s32 0, %v4982
    %v4984 = vrot.slane %v4945, %v4983
    %v4986 = vadd.f32 %v4978, %v4984
    %v4987 = vadd.f32 %v4979, %v4984
    %v4988 = vpack.c.bf16 %v4987, %v4986
    %s4989 = scalar_lea.vmem [#allocation21], 16
    %v4990 = vld [vmem:[%s4989] sm:$0xf]
    %v4991 = vld [vmem:[%s4989 + $0x4] sm:$0xf]
    %v4992 = vld [vmem:[%s4989 + $0x8] sm:$0xf]
    %v4993 = vld [vmem:[%s4989 + $0xc] sm:$0xf]
    %s4994 = scalar_lea.vmem [#allocation22], 1
    %v4995 = vld [vmem:[%s4994] sm:$0x1]
    %v4997 = vlaneseq
    %v4998 = vshrl.u32 %v4997, 7
    %v4999 = vsub.s32 0, %v4998
    %v5000 = vrot.slane %v4995, %v4999
    %v5006 = vunpack.c.l.b16 %v4990
    %v5007 = vunpack.c.l.b16 %v4991
    %v5008 = vunpack.c.l.b16 %v4992
    %v5009 = vunpack.c.l.b16 %v4993
    %v5010 = vpack.c.b16 %v5007, %v5006
    %v5011 = vpack.c.b16 %v5009, %v5008
    %v5015 = vsel %vm305, %v4988, 0
    %5017 = vmatprep.subr.bf16.mxu0 0
    %5018 = vmatpush1.bf16.msra.mxu0 0
    %5019 = vmatprep.subr.bf16.mxu0 0
    %5020 = vmatpush1.bf16.msra.mxu0 0
    %5021 = vmatprep.subr.bf16.mxu0 0
    %5022 = vmatpush1.bf16.msra.mxu0 0
    %5023 = vmatprep.subr.bf16.mxu0 0
    %5024 = vmatpush1.bf16.msra.mxu0 0
    %5025 = vmatprep.subr.bf16.mxu0 0
    %5026 = vmatpush1.bf16.msra.mxu0 0
    %5027 = vmatprep.subr.bf16.mxu0 0
    %5028 = vmatpush1.bf16.msra.mxu0 0
    %5029 = vmatprep.subr.bf16.mxu0 0
    %5030 = vmatpush1.bf16.msra.mxu0 %v5011
    %5031 = vmatprep.subr.bf16.mxu0 0
    %5032 = vmatpush1.bf16.msra.mxu0 %v5010
    %5033 = vmatprep.subr.bf16.mxu0 0
    %5034 = vmatpush2.bf16.msra.mxu0 0
    %5035 = vmatprep.subr.bf16.mxu0 0
    %5036 = vmatpush2.bf16.msra.mxu0 0
    %5037 = vmatprep.subr.bf16.mxu0 0
    %5038 = vmatpush2.bf16.msra.mxu0 0
    %5039 = vmatprep.subr.bf16.mxu0 0
    %5040 = vmatpush2.bf16.msra.mxu0 0
    %5041 = vmatprep.subr.bf16.mxu0 0
    %5042 = vmatpush2.bf16.msra.mxu0 0
    %5043 = vmatprep.subr.bf16.mxu0 0
    %5044 = vmatpush2.bf16.msra.mxu0 0
    %5045 = vmatprep.subr.bf16.mxu0 0
    %5046 = vmatpush2.bf16.msra.mxu0 0
    %5047 = vmatprep.subr.bf16.mxu0 0
    %5048 = vmatpush2.bf16.msra.mxu0 0
    %5049 = vmatprep.mubr.bf16.mxu0 0
    %5050 = vmatmul.mubr.bf16.gmra.mxu0 %v5015
    %v5051 = vpop.f32.mrf.mxu0
    %v5052 = vadd.f32 %v5000, %v5051
    %v5053 = vpop.f32.mrf.mxu0
    %v5054 = vpop.f32.mrf.mxu0
    %v5055 = vadd.f32 %v5000, %v5054
    %v5056 = vpop.f32.mrf.mxu0
    %5057 = vdwg.mxu0
    %v5058 = vmax.f32 %v5052, 0.0
    %v5059 = vmax.f32 %v5055, 0.0
    %v5060 = vpack.c.bf16 %v5059, %v5058
    %s5061 = scalar_lea.vmem [#allocation24], 16
    %v5062 = vld [vmem:[%s5061] sm:$0xf]
    %v5063 = vld [vmem:[%s5061 + $0x4] sm:$0xf]
    %v5064 = vld [vmem:[%s5061 + $0x8] sm:$0xf]
    %v5065 = vld [vmem:[%s5061 + $0xc] sm:$0xf]
    %s5066 = scalar_lea.vmem [#allocation25], 1
    %v5067 = vld [vmem:[%s5066] sm:$0x1]
    %v5069 = vlaneseq
    %v5070 = vshrl.u32 %v5069, 7
    %v5071 = vsub.s32 0, %v5070
    %v5072 = vrot.slane %v5067, %v5071
    %v5078 = vunpack.c.l.b16 %v5062
    %v5079 = vunpack.c.l.b16 %v5063
    %v5080 = vunpack.c.l.b16 %v5064
    %v5081 = vunpack.c.l.b16 %v5065
    %v5082 = vpack.c.b16 %v5079, %v5078
    %v5083 = vpack.c.b16 %v5081, %v5080
    %v5087 = vsel %vm305, %v5060, 0
    %5089 = vmatprep.subr.bf16.mxu0 0
    %5090 = vmatpush1.bf16.msra.mxu0 0
    %5091 = vmatprep.subr.bf16.mxu0 0
    %5092 = vmatpush1.bf16.msra.mxu0 0
    %5093 = vmatprep.subr.bf16.mxu0 0
    %5094 = vmatpush1.bf16.msra.mxu0 0
    %5095 = vmatprep.subr.bf16.mxu0 0
    %5096 = vmatpush1.bf16.msra.mxu0 0
    %5097 = vmatprep.subr.bf16.mxu0 0
    %5098 = vmatpush1.bf16.msra.mxu0 0
    %5099 = vmatprep.subr.bf16.mxu0 0
    %5100 = vmatpush1.bf16.msra.mxu0 0
    %5101 = vmatprep.subr.bf16.mxu0 0
    %5102 = vmatpush1.bf16.msra.mxu0 %v5083
    %5103 = vmatprep.subr.bf16.mxu0 0
    %5104 = vmatpush1.bf16.msra.mxu0 %v5082
    %5105 = vmatprep.subr.bf16.mxu0 0
    %5106 = vmatpush2.bf16.msra.mxu0 0
    %5107 = vmatprep.subr.bf16.mxu0 0
    %5108 = vmatpush2.bf16.msra.mxu0 0
    %5109 = vmatprep.subr.bf16.mxu0 0
    %5110 = vmatpush2.bf16.msra.mxu0 0
    %5111 = vmatprep.subr.bf16.mxu0 0
    %5112 = vmatpush2.bf16.msra.mxu0 0
    %5113 = vmatprep.subr.bf16.mxu0 0
    %5114 = vmatpush2.bf16.msra.mxu0 0
    %5115 = vmatprep.subr.bf16.mxu0 0
    %5116 = vmatpush2.bf16.msra.mxu0 0
    %5117 = vmatprep.subr.bf16.mxu0 0
    %5118 = vmatpush2.bf16.msra.mxu0 0
    %5119 = vmatprep.subr.bf16.mxu0 0
    %5120 = vmatpush2.bf16.msra.mxu0 0
    %5121 = vmatprep.mubr.bf16.mxu0 0
    %5122 = vmatmul.mubr.bf16.gmra.mxu0 %v5087
    %v5123 = vpop.f32.mrf.mxu0
    %v5124 = vadd.f32 %v5072, %v5123
    %v5125 = vpop.f32.mrf.mxu0
    %v5126 = vpop.f32.mrf.mxu0
    %v5127 = vadd.f32 %v5072, %v5126
    %v5128 = vpop.f32.mrf.mxu0
    %5129 = vdwg.mxu0
    %v5130 = vadd.f32 %v4986, %v5124
    %v5131 = vadd.f32 %v4987, %v5127
    %s5132 = scalar_lea.vmem %s17, 5
    %v5133 = vld [vmem:[%s5132] sm:$0x1]
    %s5134 = scalar_lea.vmem %s18, 5
    %v5135 = vld [vmem:[%s5134] sm:$0x1]
    %v5136 = vsel %vm305, %v5130, 0.0
    %5137 = vadd.xlane.f32.xlu0 %v5136
    %v5138 = vpop.xlane.xlu0 %5137
    %v5139 = vsel %vm305, %v5131, 0.0
    %5140 = vadd.xlane.f32.xlu0 %v5139
    %v5141 = vpop.xlane.xlu0 %5140
    %v5142 = vmul.f32 %v5138, %v1342
    %v5143 = vmul.f32 %v5141, %v1342
    %v5144 = vsub.f32 %v5130, %v5142
    %v5145 = vsub.f32 %v5131, %v5143
    %v5146 = vmul.f32 %v5144, %v5144
    %v5147 = vmul.f32 %v5145, %v5145
    %v5148 = vsel %vm305, %v5146, 0.0
    %5149 = vadd.xlane.f32.xlu0 %v5148
    %v5150 = vpop.xlane.xlu0 %5149
    %v5151 = vsel %vm305, %v5147, 0.0
    %5152 = vadd.xlane.f32.xlu0 %v5151
    %v5153 = vpop.xlane.xlu0 %5152
    %v5154 = vmul.f32 %v5150, %v1342
    %v5155 = vmul.f32 %v5153, %v1342
    %v5156 = vadd.f32 %v5154, 1e-05
    %v5157 = vadd.f32 %v5155, 1e-05
    %v5158 = vrsqrt.pop %v5156
    %v5159 = vrsqrt.pop %v5157
    %v5160 = vmul.f32 %v5144, %v5158
    %v5161 = vmul.f32 %v5145, %v5159
    %v5163 = vlaneseq
    %v5164 = vshrl.u32 %v5163, 7
    %v5165 = vsub.s32 0, %v5164
    %v5166 = vrot.slane %v5133, %v5165
    %v5168 = vmul.f32 %v5160, %v5166
    %v5169 = vmul.f32 %v5161, %v5166
    %v5171 = vlaneseq
    %v5172 = vshrl.u32 %v5171, 7
    %v5173 = vsub.s32 0, %v5172
    %v5174 = vrot.slane %v5135, %v5173
    %v5176 = vadd.f32 %v5168, %v5174
    %v5177 = vadd.f32 %v5169, %v5174
    %v5178 = vpack.c.bf16 %v5177, %v5176
    %v5179 = vld [vmem:[%s19] sm:$0xf]
    %v5180 = vld [vmem:[%s19 + $0x4] sm:$0xf]
    %v5181 = vld [vmem:[%s19 + $0x8] sm:$0xf]
    %v5182 = vld [vmem:[%s19 + $0xc] sm:$0xf]
    %v5183 = vld [vmem:[%s20] sm:$0x1]
    %v5185 = vlaneseq
    %v5186 = vshrl.u32 %v5185, 7
    %v5187 = vsub.s32 0, %v5186
    %v5188 = vrot.slane %v5183, %v5187
    %v5194 = vunpack.c.l.b16 %v5179
    %v5195 = vunpack.c.l.b16 %v5180
    %v5196 = vunpack.c.l.b16 %v5181
    %v5197 = vunpack.c.l.b16 %v5182
    %v5198 = vpack.c.b16 %v5195, %v5194
    %v5199 = vpack.c.b16 %v5197, %v5196
    %v5203 = vsel %vm305, %v5178, 0
    %5205 = vmatprep.subr.bf16.mxu0 0
    %5206 = vmatpush1.bf16.msra.mxu0 0
    %5207 = vmatprep.subr.bf16.mxu0 0
    %5208 = vmatpush1.bf16.msra.mxu0 0
    %5209 = vmatprep.subr.bf16.mxu0 0
    %5210 = vmatpush1.bf16.msra.mxu0 0
    %5211 = vmatprep.subr.bf16.mxu0 0
    %5212 = vmatpush1.bf16.msra.mxu0 0
    %5213 = vmatprep.subr.bf16.mxu0 0
    %5214 = vmatpush1.bf16.msra.mxu0 0
    %5215 = vmatprep.subr.bf16.mxu0 0
    %5216 = vmatpush1.bf16.msra.mxu0 0
    %5217 = vmatprep.subr.bf16.mxu0 0
    %5218 = vmatpush1.bf16.msra.mxu0 %v5199
    %5219 = vmatprep.subr.bf16.mxu0 0
    %5220 = vmatpush1.bf16.msra.mxu0 %v5198
    %5221 = vmatprep.subr.bf16.mxu0 0
    %5222 = vmatpush2.bf16.msra.mxu0 0
    %5223 = vmatprep.subr.bf16.mxu0 0
    %5224 = vmatpush2.bf16.msra.mxu0 0
    %5225 = vmatprep.subr.bf16.mxu0 0
    %5226 = vmatpush2.bf16.msra.mxu0 0
    %5227 = vmatprep.subr.bf16.mxu0 0
    %5228 = vmatpush2.bf16.msra.mxu0 0
    %5229 = vmatprep.subr.bf16.mxu0 0
    %5230 = vmatpush2.bf16.msra.mxu0 0
    %5231 = vmatprep.subr.bf16.mxu0 0
    %5232 = vmatpush2.bf16.msra.mxu0 0
    %5233 = vmatprep.subr.bf16.mxu0 0
    %5234 = vmatpush2.bf16.msra.mxu0 0
    %5235 = vmatprep.subr.bf16.mxu0 0
    %5236 = vmatpush2.bf16.msra.mxu0 0
    %5237 = vmatprep.mubr.bf16.mxu0 0
    %5238 = vmatmul.mubr.bf16.gmra.mxu0 %v5203
    %v5239 = vpop.f32.mrf.mxu0
    %v5240 = vadd.f32 %v5188, %v5239
    %v5241 = vpop.f32.mrf.mxu0
    %v5242 = vpop.f32.mrf.mxu0
    %v5243 = vadd.f32 %v5188, %v5242
    %v5244 = vpop.f32.mrf.mxu0
    %5245 = vdwg.mxu0
    %5246 = vst [vmem:[#allocation27] sm:$0xff] %v5240
    %5247 = vst [vmem:[#allocation27 + $0x8] sm:$0xff] %v5243
    // Predicated region
    $region138: #{tpu_custom_call.1} parent=1 // pred_check
      _
    $region139: #{tpu_custom_call.1} parent=1 // pred_check_branch
      %5249 = sbr.rel (0) target = $region141
    $region140: #{tpu_custom_call.1} parent=1 // pred_region
      %s5251 = ssub.s32 256, 256
      %5252 = vsyncadd [#allocation6], %s5251
      %s5253 = sshll.u32 [#allocation27], 4
      %s5254 = int_to_ptr.vmem [resolvable:$true] %s5253
      %5259 = dma.vmem_to_hbm [thread:$0]  %s5254, 256, %s21, [#allocation6], 128, 128, 8
    $region141: #{tpu_custom_call.1} parent=1 // pred_fallthru
      _
    // Predicated region
    $region142: #{tpu_custom_call.1} parent=1 // pred_check
      _
    $region143: #{tpu_custom_call.1} parent=1 // pred_check_branch
      %5261 = sbr.rel (0) target = $region145
    $region144: #{tpu_custom_call.1} parent=1 // pred_region
      %5262 = dma.done [#allocation6], 256
    $region145: #{tpu_custom_call.1} parent=1 // pred_fallthru
      _
    %5263 = vsyncpa [#allocation5], 1
    %5264 = vsyncpa [#allocation8], 1
    %5265 = vsyncpa [#allocation11], 1
    %5266 = vsyncpa [#allocation14], 1
    %5267 = vsyncpa [#allocation17], 1
    %5268 = vsyncpa [#allocation20], 1
    %5269 = vsyncpa [#allocation23], 1
    %5270 = vsyncpa [#allocation26], 1
    %5271 = vsyncpa [#allocation6], 1

</llo_original>
